<compile_context>
chip_gen: v5e
topology: v5e:2x2
jax: 0.10.0
libtpu: 0.0.40
codegen_flags: <defaults>
</compile_context>

<pallas_src>
import functools

import jax
import jax.numpy as jnp
from jax.experimental import pallas as pl
from jax.experimental.pallas import tpu as pltpu


def _swap01(t):
    """(a, b, d) -> (b, a, d): move heads between the lane-split position and a
    leading batch position.  pltpu.einshape is the layout-aware relayout op;
    fall back to jnp.transpose if it is unavailable."""
    if hasattr(pltpu, "einshape"):
        return pltpu.einshape("abd->bad", t)
    return jnp.transpose(t, (1, 0, 2))


def mha_kernel(x_ref, wqkv_ref, wo_ref, bo_ref, o_ref, *, heads, dim_head, exp_dtype):
    """Multi-head self-attention for a tile of Bt batch elements.

    x_ref:    (Bt, N, E)  bf16 activations (cast in the wrapper)
    wqkv_ref: (E, 3*H*D)  bf16, q columns pre-scaled by dim_head**-0.5
    wo_ref:   (H*D, E)    bf16
    bo_ref:   (1, E)      f32
    """
    Bt, N, E = x_ref.shape
    H, D = heads, dim_head
    I = H * D
    M = Bt * N

    x = x_ref[...].reshape(M, E)                                           # (M, E) bf16

    # Fused QKV projection: ONE big MXU matmul, f32 accumulation.
    qkv = jnp.dot(x, wqkv_ref[...],
                  preferred_element_type=jnp.float32).astype(jnp.bfloat16)  # (M, 3I)

    def to_heads(t):
        # (M, I) -> (H*Bt, N, D): one lane-split reshape + one relayout, then a
        # free leading-dim split; replaces the old per-head stack of slices.
        t = t.reshape(M, H, D)
        t = _swap01(t)                       # (H, M, D)
        return t.reshape(H * Bt, N, D)       # batch index g = h*Bt + b

    # 128-aligned lane slices of the fused projection (scale already folded in).
    q3 = to_heads(qkv[:, :I])
    k3 = to_heads(qkv[:, I:2 * I])
    v3 = to_heads(qkv[:, 2 * I:])

    # Scores + softmax; max/sum in f32, exp in exp_dtype (bf16 on v6e/v7x).
    dots = jnp.einsum("gnd,gmd->gnm", q3, k3,
                      preferred_element_type=jnp.float32)                  # (G, N, N)
    m = jnp.max(dots, axis=-1, keepdims=True)
    e = jnp.exp((dots - m).astype(exp_dtype))
    denom = jnp.sum(e, axis=-1, keepdims=True, dtype=jnp.float32)          # (G, N, 1)
    # TODO(synk): dropout with p>0 not implemented (module default p=0.0 is identity).
    # TODO(synk): for long sequences (esp. v7x 64 MiB VMEM) tile the KV axis with an
    #             online-softmax (flash) loop instead of materializing (G, N, N).

    o3 = jnp.einsum("gnm,gmd->gnd", e.astype(jnp.bfloat16), v3,
                    preferred_element_type=jnp.float32)                    # (G, N, D)
    # Normalize after PV (smaller tensor than the probabilities); EUP reciprocal.
    o3 = (o3 * pl.reciprocal(denom, approx=True)).astype(jnp.bfloat16)

    # Merge heads back to (M, H*D) (h-major, d-minor == 'b h n d -> b n (h d)'),
    # then ONE output projection + single bias epilogue.
    o2 = _swap01(o3.reshape(H, M, D)).reshape(M, I)
    out = jnp.dot(o2, wo_ref[...], preferred_element_type=jnp.float32) + bo_ref[...]
    o_ref[...] = out.reshape(Bt, N, E).astype(o_ref.dtype)


def _pick_batch_tile(batch, seq, target_rows=128):
    """Pick Bt so each grid step feeds ~128 rows to the MXU and Bt divides B."""
    bt = max(1, min(batch, target_rows // max(seq, 1)))
    while batch % bt:
        bt -= 1
    return bt


def multi_head_attention(x, params, *, heads, dim_head, batch_tile=None,
                         exp_dtype=jnp.bfloat16):
    B, N, E = x.shape
    if batch_tile is None:
        batch_tile = _pick_batch_tile(B, N)
    assert B % batch_tile == 0

    x_bf16 = x.astype(jnp.bfloat16)          # halve the activation DMA bytes

    kernel = functools.partial(mha_kernel, heads=heads, dim_head=dim_head,
                               exp_dtype=exp_dtype)
    return pl.pallas_call(
        kernel,
        out_shape=jax.ShapeDtypeStruct((B, N, E), x.dtype),
        grid=(B // batch_tile,),
        in_specs=[
            pl.BlockSpec((batch_tile, N, E), lambda i: (i, 0, 0)),
            pl.BlockSpec(params["wqkv"].shape, lambda i: (0, 0)),   # resident weight
            pl.BlockSpec(params["wo"].shape, lambda i: (0, 0)),     # resident weight
            pl.BlockSpec(params["bo"].shape, lambda i: (0, 0)),     # resident bias
        ],
        out_specs=pl.BlockSpec((batch_tile, N, E), lambda i: (i, 0, 0)),
        compiler_params=pltpu.CompilerParams(
            dimension_semantics=("parallel",),           # even #steps -> both v7x TCs
            vmem_limit_bytes=48 * 1024 * 1024),          # >32 MiB default, <v7x 64 MiB
    )(x_bf16, params["wqkv"], params["wo"], params["bo"])


# ----------------- deterministic synthetic parameters -----------------
def init_params(key, emb, heads, dim_head, scale):
    inner = heads * dim_head
    k_qkv, k_wo, k_bo = jax.random.split(key, 3)
    s = 0.02
    # torch Linear weight is (out_features, in_features); forward does x @ W.T.
    w_qkv = jax.random.normal(k_qkv, (3 * inner, emb), jnp.float32) * s
    # rearrange 'b n (h d qkv) -> qkv b h n d': feature index = h*(D*3) + d*3 + qkv.
    w_t = w_qkv.T.reshape(emb, heads, dim_head, 3)
    wq = w_t[..., 0].reshape(emb, inner)
    wk = w_t[..., 1].reshape(emb, inner)
    wv = w_t[..., 2].reshape(emb, inner)
    wo = (jax.random.normal(k_wo, (emb, inner), jnp.float32) * s).T        # (inner, emb)
    bo = jax.random.normal(k_bo, (1, emb), jnp.float32) * s

    bf16 = lambda w: w.astype(jnp.bfloat16)   # bf16 weights: MXU peak, half the bytes
    kernel_params = dict(
        # fused QKV weight, softmax scale folded into the q columns (exact: scale=2^-3)
        wqkv=bf16(jnp.concatenate([wq * scale, wk, wv], axis=1)),
        wo=bf16(wo),
        bo=bo)
    ref_params = dict(wq=bf16(wq), wk=bf16(wk), wv=bf16(wv), wo=bf16(wo), bo=bo)
    return kernel_params, ref_params


# ----------------- pure-JAX reference (mirrors the PyTorch forward) -----------------
def mha_ref(x, p, heads, dim_head):
    B, N, E = x.shape
    f32 = lambda a: a.astype(jnp.float32)
    q, k, v = x @ f32(p["wq"]), x @ f32(p["wk"]), x @ f32(p["wv"])
    split = lambda t: t.reshape(B, N, heads, dim_head).transpose(0, 2, 1, 3)
    q, k, v = split(q), split(k), split(v)
    dots = jnp.einsum("bhnd,bhmd->bhnm", q, k) * dim_head ** -0.5
    att = jax.nn.softmax(dots, axis=-1)
    o = jnp.einsum("bhnm,bhmd->bhnd", att, v).transpose(0, 2, 1, 3).reshape(B, N, -1)
    return o @ f32(p["wo"]) + p["bo"][0]


if __name__ == "__main__":
    # Small shapes consistent with the module (defaults emb=768, heads=12, dim_head=64),
    # scaled down but lane/sublane friendly: E and H*D multiples of 128, N multiple of 8.
    B, N, EMB = 4, 64, 256
    HEADS, DIM_HEAD = 4, 64          # inner_dim = 256
    SCALE = DIM_HEAD ** -0.5

    key = jax.random.PRNGKey(0)
    kx, kp = jax.random.split(key)
    x = jax.random.normal(kx, (B, N, EMB), jnp.float32)
    kparams, rparams = init_params(kp, EMB, HEADS, DIM_HEAD, SCALE)

    out = multi_head_attention(x, kparams, heads=HEADS, dim_head=DIM_HEAD)
    out = jax.block_until_ready(out)

    ref = mha_ref(x, rparams, HEADS, DIM_HEAD)
    assert jnp.allclose(out, ref, atol=2e-2, rtol=2e-2), "mismatch vs reference"
    print("KERNEL_OK")
</pallas_src>

<mosaic_0001>
module attributes {stable_mosaic.version = 11 : i64} {
  func.func @mha_kernel(%arg0: i32, %arg1: memref<2x64x256xbf16, #tpu.memory_space<vmem>>, %arg2: memref<256x768xbf16, #tpu.memory_space<vmem>>, %arg3: memref<256x256xbf16, #tpu.memory_space<vmem>>, %arg4: memref<1x256xf32, #tpu.memory_space<vmem>>, %arg5: memref<2x64x256xf32, #tpu.memory_space<vmem>>) attributes {dimension_semantics = [#tpu.dimension_semantics<parallel>], iteration_bounds = array<i64: 2>, scalar_prefetch = 0 : i64, scratch_operands = 0 : i64, tpu.core_type = #tpu.core_type<tc>, window_params = [{transform_indices = @transform_0, window_bounds = array<i64: 2, 64, 256>}, {pipeline_mode = #tpu.pipeline_mode<synchronous>, transform_indices = @transform_1, window_bounds = array<i64: 256, 768>}, {pipeline_mode = #tpu.pipeline_mode<synchronous>, transform_indices = @transform_2, window_bounds = array<i64: 256, 256>}, {pipeline_mode = #tpu.pipeline_mode<synchronous>, transform_indices = @transform_3, window_bounds = array<i64: 1, 256>}, {transform_indices = @transform_4, window_bounds = array<i64: 2, 64, 256>}]} {
    %c0 = arith.constant 0 : index
    %c0_0 = arith.constant 0 : index
    %c0_1 = arith.constant 0 : index
    %0 = vector.load %arg1[%c0, %c0_0, %c0_1] : memref<2x64x256xbf16, #tpu.memory_space<vmem>>, vector<2x64x256xbf16>
    %1 = vector.shape_cast %0 : vector<2x64x256xbf16> to vector<128x256xbf16>
    %c0_2 = arith.constant 0 : index
    %c0_3 = arith.constant 0 : index
    %2 = vector.load %arg2[%c0_2, %c0_3] : memref<256x768xbf16, #tpu.memory_space<vmem>>, vector<256x768xbf16>
    %cst = arith.constant dense<0.000000e+00> : vector<128x768xf32>
    %3 = tpu.matmul %1, %2, %cst {dimension_numbers = #tpu.dot_dimension_numbers<[1], [0], [0], [1], [0, 0, 1, 1], [], []>} : vector<128x256xbf16>, vector<256x768xbf16>, vector<128x768xf32> -> vector<128x768xf32>
    %4 = arith.truncf %3 : vector<128x768xf32> to vector<128x768xbf16>
    %5 = vector.extract_strided_slice %4 {offsets = [0, 0], sizes = [128, 256], strides = [1, 1]} : vector<128x768xbf16> to vector<128x256xbf16>
    %6 = vector.shape_cast %5 : vector<128x256xbf16> to vector<128x4x64xbf16>
    %7 = tpu.transpose %6, [1, 0, 2] : vector<128x4x64xbf16> -> vector<4x128x64xbf16>
    %8 = vector.shape_cast %7 : vector<4x128x64xbf16> to vector<8x64x64xbf16>
    %9 = vector.extract_strided_slice %4 {offsets = [0, 256], sizes = [128, 256], strides = [1, 1]} : vector<128x768xbf16> to vector<128x256xbf16>
    %10 = vector.shape_cast %9 : vector<128x256xbf16> to vector<128x4x64xbf16>
    %11 = tpu.transpose %10, [1, 0, 2] : vector<128x4x64xbf16> -> vector<4x128x64xbf16>
    %12 = vector.shape_cast %11 : vector<4x128x64xbf16> to vector<8x64x64xbf16>
    %13 = vector.extract_strided_slice %4 {offsets = [0, 512], sizes = [128, 256], strides = [1, 1]} : vector<128x768xbf16> to vector<128x256xbf16>
    %14 = vector.shape_cast %13 : vector<128x256xbf16> to vector<128x4x64xbf16>
    %15 = tpu.transpose %14, [1, 0, 2] : vector<128x4x64xbf16> -> vector<4x128x64xbf16>
    %16 = vector.shape_cast %15 : vector<4x128x64xbf16> to vector<8x64x64xbf16>
    "tpu.trace_start"() <{level = 10 : i32, message = "gnd,gmd->gnm"}> : () -> ()
    %cst_4 = arith.constant dense<0.000000e+00> : vector<8x64x64xf32>
    %17 = tpu.matmul %8, %12, %cst_4 {dimension_numbers = #tpu.dot_dimension_numbers<[2], [2], [1], [1], [0, 0, 0, 1, 1, 1], [0], [0]>} : vector<8x64x64xbf16>, vector<8x64x64xbf16>, vector<8x64x64xf32> -> vector<8x64x64xf32>
    "tpu.trace_stop"() : () -> ()
    %cst_5 = arith.constant dense<0xFF800000> : vector<8x64xf32>
    %18 = vector.multi_reduction <maximumf>, %17, %cst_5 [2] : vector<8x64x64xf32> to vector<8x64xf32>
    %19 = vector.shape_cast %18 : vector<8x64xf32> to vector<8x64x1xf32>
    %20 = vector.broadcast %19 : vector<8x64x1xf32> to vector<8x64x64xf32>
    %21 = arith.subf %17, %20 : vector<8x64x64xf32>
    %22 = arith.truncf %21 : vector<8x64x64xf32> to vector<8x64x64xbf16>
    %23 = math.exp %22 : vector<8x64x64xbf16>
    %24 = arith.extf %23 : vector<8x64x64xbf16> to vector<8x64x64xf32>
    %cst_6 = arith.constant dense<0.000000e+00> : vector<8x64xf32>
    %25 = vector.multi_reduction <add>, %24, %cst_6 [2] : vector<8x64x64xf32> to vector<8x64xf32>
    %26 = vector.shape_cast %25 : vector<8x64xf32> to vector<8x64x1xf32>
    "tpu.trace_start"() <{level = 10 : i32, message = "gnm,gmd->gnd"}> : () -> ()
    %cst_7 = arith.constant dense<0.000000e+00> : vector<8x64x64xf32>
    %27 = tpu.matmul %23, %16, %cst_7 {dimension_numbers = #tpu.dot_dimension_numbers<[2], [1], [1], [2], [0, 0, 0, 1, 1, 2], [0], [0]>} : vector<8x64x64xbf16>, vector<8x64x64xbf16>, vector<8x64x64xf32> -> vector<8x64x64xf32>
    "tpu.trace_stop"() : () -> ()
    %28 = tpu.reciprocal %26 {approx = true} : vector<8x64x1xf32> -> vector<8x64x1xf32>
    %29 = vector.broadcast %28 : vector<8x64x1xf32> to vector<8x64x64xf32>
    %30 = arith.mulf %27, %29 : vector<8x64x64xf32>
    %31 = arith.truncf %30 : vector<8x64x64xf32> to vector<8x64x64xbf16>
    %32 = vector.shape_cast %31 : vector<8x64x64xbf16> to vector<4x128x64xbf16>
    %33 = tpu.transpose %32, [1, 0, 2] : vector<4x128x64xbf16> -> vector<128x4x64xbf16>
    %34 = vector.shape_cast %33 : vector<128x4x64xbf16> to vector<128x256xbf16>
    %c0_8 = arith.constant 0 : index
    %c0_9 = arith.constant 0 : index
    %35 = vector.load %arg3[%c0_8, %c0_9] : memref<256x256xbf16, #tpu.memory_space<vmem>>, vector<256x256xbf16>
    %cst_10 = arith.constant dense<0.000000e+00> : vector<128x256xf32>
    %36 = tpu.matmul %34, %35, %cst_10 {dimension_numbers = #tpu.dot_dimension_numbers<[1], [0], [0], [1], [0, 0, 1, 1], [], []>} : vector<128x256xbf16>, vector<256x256xbf16>, vector<128x256xf32> -> vector<128x256xf32>
    %c0_11 = arith.constant 0 : index
    %c0_12 = arith.constant 0 : index
    %37 = vector.load %arg4[%c0_11, %c0_12] : memref<1x256xf32, #tpu.memory_space<vmem>>, vector<1x256xf32>
    %38 = vector.broadcast %37 : vector<1x256xf32> to vector<128x256xf32>
    %39 = arith.addf %36, %38 : vector<128x256xf32>
    %40 = vector.shape_cast %39 : vector<128x256xf32> to vector<2x64x256xf32>
    %c0_13 = arith.constant 0 : index
    %c0_14 = arith.constant 0 : index
    %c0_15 = arith.constant 0 : index
    %41 = vector.load %arg5[%c0_13, %c0_14, %c0_15] : memref<2x64x256xf32, #tpu.memory_space<vmem>>, vector<2x64x256xf32>
    tpu.vector_store %arg5[%c0_13, %c0_14, %c0_15], %40 {strides = array<i32>} : memref<2x64x256xf32, #tpu.memory_space<vmem>>, vector<2x64x256xf32>,
    return
  }
  func.func @transform_0(%arg0: i32) -> (i32, i32, i32) {
    %c0_i32 = arith.constant 0 : i32
    %c0_i32_0 = arith.constant 0 : i32
    %c0_i32_1 = arith.constant 0 : i32
    return %arg0, %c0_i32, %c0_i32_0 : i32, i32, i32
  }
  func.func @transform_1(%arg0: i32) -> (i32, i32) {
    %c0_i32 = arith.constant 0 : i32
    %c0_i32_0 = arith.constant 0 : i32
    %c0_i32_1 = arith.constant 0 : i32
    return %c0_i32, %c0_i32_0 : i32, i32
  }
  func.func @transform_2(%arg0: i32) -> (i32, i32) {
    %c0_i32 = arith.constant 0 : i32
    %c0_i32_0 = arith.constant 0 : i32
    %c0_i32_1 = arith.constant 0 : i32
    return %c0_i32, %c0_i32_0 : i32, i32
  }
  func.func @transform_3(%arg0: i32) -> (i32, i32) {
    %c0_i32 = arith.constant 0 : i32
    %c0_i32_0 = arith.constant 0 : i32
    %c0_i32_1 = arith.constant 0 : i32
    return %c0_i32, %c0_i32_0 : i32, i32
  }
  func.func @transform_4(%arg0: i32) -> (i32, i32, i32) {
    %c0_i32 = arith.constant 0 : i32
    %c0_i32_0 = arith.constant 0 : i32
    %c0_i32_1 = arith.constant 0 : i32
    return %arg0, %c0_i32, %c0_i32_0 : i32, i32, i32
  }
}

</mosaic_0001>

<llo_original>
// kernel: tpu_custom_call.1
$region0: #{tpu_custom_call.1}
  #allocation0 [shape = 'u32[]', space=smem, size = 0x4, offset = 0x4, fixed_abs, tag = 'smem constant byte address 0x4 - core index']
  #allocation1 [shape = 'u32[72,128]{1,0:T(1,128)}', space=vmem, size = 0x9000, scoped, tag = 'internal scratch']
  %s0 = inlined_call_operand.hbm [shape: bf16[4,64,256], index: 0, kind: input, shape index: {}]
  %s1 = inlined_call_operand.hbm [shape: bf16[256,768], index: 1, kind: input, shape index: {}]
  %s2 = inlined_call_operand.hbm [shape: bf16[256,256], index: 2, kind: input, shape index: {}]
  %s3 = inlined_call_operand.vmem [shape: f32[1,256], index: 3, kind: input, shape index: {}]
  %s4 = inlined_call_operand.hbm [shape: f32[4,64,256], index: 4, kind: output, shape index: {}]
  %s5 = sld [smem:[#allocation0]]
  $region61: #{tpu_custom_call.1} parent=0
    _
  %s7 = ssub.s32 1, %s5
  %s8 = scalar_select 0, %s7, %s5
  $region1: #{tpu_custom_call.1} parent=0
    #allocation2 [shape = 'u8[131072]{0}', space=vmem, size = 0x20000, scoped, tag = 'input window, operand 0']
    #allocation3 [shape = 's32[2]{0}', space=sflag, size = 0x8, scoped, tag = 'scoped memory for tpu_custom_call.1']
    #allocation4 [shape = 's32[2]{0}', space=sflag, size = 0x8, scoped, tag = 'scoped memory for tpu_custom_call.1']
    #allocation5 [shape = 'u8[393216]{0}', space=vmem, size = 0x60000, scoped, tag = 'input window, operand 1, single buffered']
    #allocation6 [shape = 's32[1]{0}', space=sflag, size = 0x4, scoped, tag = 'scoped memory for tpu_custom_call.1']
    #allocation7 [shape = 'u8[131072]{0}', space=vmem, size = 0x20000, scoped, tag = 'input window, operand 2, single buffered']
    #allocation8 [shape = 'u8[262144]{0}', space=vmem, size = 0x40000, scoped, tag = 'output window, operand 0']
    %9 = vsyncpa [#allocation3], 0
    %s10 = scalar_lea.sflag [#allocation3], 1
    %11 = vsyncpa %s10, 0
    %12 = vsyncpa [#allocation6], 0
    %13 = vsyncpa [#allocation4], 0
    %s14 = scalar_lea.sflag [#allocation4], 1
    %15 = vsyncpa %s14, 0
    loop: start=0, step=1, limit=4
    $region2: #{tpu_custom_call.1} parent=1 // loop_pre_header
      _
    $region3: #{tpu_custom_call.1} parent=1 // loop_header
      %s17 = sphi 0, %s21
      %p18 = scmp.ge.s32.totalorder %s17, 4
      %s27 = sphi 0, %s29
      %s30 = sphi 0, %s27
      %s31 = sphi 0, %s30
      %s47 = sphi 0, %s31
      %s51 = sphi 0, %s51
      %s53 = sphi 0, %s51
      %s54 = sphi 0, %s53
      %s68 = sphi 0, %s54
      %s72 = sphi 0, %s72
      %s74 = sphi 0, %s72
      %s75 = sphi 0, %s74
      %s89 = sphi 0, %s75
      %s93 = sphi 0, %s93
      %s95 = sphi 0, %s93
      %s96 = sphi 0, %s95
      %s110 = sphi 0, %s96
      %s116 = sphi 0, %s118
      %s119 = sphi 0, %s116
      %s120 = sphi 0, %s119
      %s136 = sphi 0, %s120
    $region4: #{tpu_custom_call.1} parent=1 // loop_header_branch
      %20 = sbr.rel (%p18) target = $region8
    $region5: #{tpu_custom_call.1} parent=1 // loop_body
      %s22 = ssub.s32 %s17, 1
      %s23 = ssub.s32 %s17, 2
      %s24 = sadd.s32 %s17, 1
      %s25 = ssub.s32 %s17, %s24
      %p26 = scmp.eq.s32.totalorder %s25, 0
      %s28 = sadd.s32 %s27, 1
      %s29 = scalar_select %p26, %s27, %s28
      %p32 = pneg %p26
      %p33 = scmp.eq.s32.totalorder %s17, 1
      %p34 = por %p32, %p33
      %p35 = scmp.ne.s32.totalorder %s27, %s30
      %p36 = scmp.eq.s32.totalorder %s17, 0
      %p37 = por %p35, %p36
      %p38 = scmp.ne.s32.totalorder %s27, %s30
      %p39 = scmp.eq.s32.totalorder %s22, 1
      %p40 = por %p38, %p39
      %p41 = scmp.ne.s32.totalorder %s30, %s31
      %p42 = scmp.eq.s32.totalorder %s22, 0
      %p43 = por %p41, %p42
      %p44 = scmp.ne.s32.totalorder %s30, %s31
      %p45 = scmp.eq.s32.totalorder %s23, 1
      %p46 = por %p44, %p45
      %p48 = scmp.ne.s32.totalorder %s31, %s47
      %p49 = scmp.eq.s32.totalorder %s23, 0
      %p50 = por %p48, %p49
      %s52 = sadd.s32 %s51, 1
      %p55 = scmp.eq.s32.totalorder %s17, 1
      %p56 = scmp.ne.s32.totalorder %s51, %s53
      %p57 = scmp.eq.s32.totalorder %s17, 0
      %p58 = por %p56, %p57
      %p59 = scmp.ne.s32.totalorder %s51, %s53
      %p60 = scmp.eq.s32.totalorder %s22, 1
      %p61 = por %p59, %p60
      %p62 = scmp.ne.s32.totalorder %s53, %s54
      %p63 = scmp.eq.s32.totalorder %s22, 0
      %p64 = por %p62, %p63
      %p65 = scmp.ne.s32.totalorder %s53, %s54
      %p66 = scmp.eq.s32.totalorder %s23, 1
      %p67 = por %p65, %p66
      %p69 = scmp.ne.s32.totalorder %s54, %s68
      %p70 = scmp.eq.s32.totalorder %s23, 0
      %p71 = por %p69, %p70
      %s73 = sadd.s32 %s72, 1
      %p76 = scmp.eq.s32.totalorder %s17, 1
      %p77 = scmp.ne.s32.totalorder %s72, %s74
      %p78 = scmp.eq.s32.totalorder %s17, 0
      %p79 = por %p77, %p78
      %p80 = scmp.ne.s32.totalorder %s72, %s74
      %p81 = scmp.eq.s32.totalorder %s22, 1
      %p82 = por %p80, %p81
      %p83 = scmp.ne.s32.totalorder %s74, %s75
      %p84 = scmp.eq.s32.totalorder %s22, 0
      %p85 = por %p83, %p84
      %p86 = scmp.ne.s32.totalorder %s74, %s75
      %p87 = scmp.eq.s32.totalorder %s23, 1
      %p88 = por %p86, %p87
      %p90 = scmp.ne.s32.totalorder %s75, %s89
      %p91 = scmp.eq.s32.totalorder %s23, 0
      %p92 = por %p90, %p91
      %s94 = sadd.s32 %s93, 1
      %p97 = scmp.eq.s32.totalorder %s17, 1
      %p98 = scmp.ne.s32.totalorder %s93, %s95
      %p99 = scmp.eq.s32.totalorder %s17, 0
      %p100 = por %p98, %p99
      %p101 = scmp.ne.s32.totalorder %s93, %s95
      %p102 = scmp.eq.s32.totalorder %s22, 1
      %p103 = por %p101, %p102
      %p104 = scmp.ne.s32.totalorder %s95, %s96
      %p105 = scmp.eq.s32.totalorder %s22, 0
      %p106 = por %p104, %p105
      %p107 = scmp.ne.s32.totalorder %s95, %s96
      %p108 = scmp.eq.s32.totalorder %s23, 1
      %p109 = por %p107, %p108
      %p111 = scmp.ne.s32.totalorder %s96, %s110
      %p112 = scmp.eq.s32.totalorder %s23, 0
      %p113 = por %p111, %p112
      %s114 = ssub.s32 %s17, %s24
      %p115 = scmp.eq.s32.totalorder %s114, 0
      %s117 = sadd.s32 %s116, 1
      %s118 = scalar_select %p115, %s116, %s117
      %p121 = pneg %p115
      %p122 = scmp.eq.s32.totalorder %s17, 1
      %p123 = por %p121, %p122
      %p124 = scmp.ne.s32.totalorder %s116, %s119
      %p125 = scmp.eq.s32.totalorder %s17, 0
      %p126 = por %p124, %p125
      %p127 = scmp.ne.s32.totalorder %s116, %s119
      %p128 = scmp.eq.s32.totalorder %s22, 1
      %p129 = por %p127, %p128
      %p130 = scmp.ne.s32.totalorder %s119, %s120
      %p131 = scmp.eq.s32.totalorder %s22, 0
      %p132 = por %p130, %p131
      %p133 = scmp.ne.s32.totalorder %s119, %s120
      %p134 = scmp.eq.s32.totalorder %s23, 1
      %p135 = por %p133, %p134
      %p137 = scmp.ne.s32.totalorder %s120, %s136
      %p138 = scmp.eq.s32.totalorder %s23, 0
      %p139 = por %p137, %p138
      %p140 = scmp.le.s32.totalorder 1, %s17
      %p141 = scmp.lt.s32.totalorder %s17, 3
      %p142 = pnand %p140, %p141
      %p143 = pneg %p142
      // Predicated region
      $region9: #{tpu_custom_call.1} parent=5 // pred_check
        _
      $region10: #{tpu_custom_call.1} parent=5 // pred_check_branch
        %145 = sbr.rel (%p142) target = $region12
      $region11: #{tpu_custom_call.1} parent=5 // pred_region
        %s146 = ssub.s32 %s17, 1
        // Predicated region
        $region13: #{tpu_custom_call.1} parent=11 // pred_check
          %p147 = pneg %p64
        $region14: #{tpu_custom_call.1} parent=11 // pred_check_branch
          %149 = sbr.rel (%p147) target = $region16
        $region15: #{tpu_custom_call.1} parent=11 // pred_region
          %151 = vsyncadd [#allocation6], 0
          %s152 = sshll.u32 %s1, 4
          %s153 = int_to_ptr.hbm [resolvable:$true] %s152
          %s154 = sshll.u32 [#allocation5], 4
          %s155 = int_to_ptr.vmem [resolvable:$true] %s154
          %160 = dma.hbm_to_vmem [thread:$0]  %s153, 12288, %s155, [#allocation6], 384, 384, 24
        $region16: #{tpu_custom_call.1} parent=11 // pred_fallthru
          _
        // Predicated region
        $region17: #{tpu_custom_call.1} parent=11 // pred_check
          %p161 = pneg %p85
        $region18: #{tpu_custom_call.1} parent=11 // pred_check_branch
          %163 = sbr.rel (%p161) target = $region20
        $region19: #{tpu_custom_call.1} parent=11 // pred_region
          %165 = vsyncadd [#allocation6], 0
          %s166 = sshll.u32 %s2, 4
          %s167 = int_to_ptr.hbm [resolvable:$true] %s166
          %s168 = sshll.u32 [#allocation7], 4
          %s169 = int_to_ptr.vmem [resolvable:$true] %s168
          %174 = dma.hbm_to_vmem [thread:$0]  %s167, 4096, %s169, [#allocation6], 128, 128, 8
        $region20: #{tpu_custom_call.1} parent=11 // pred_fallthru
          _
        // Predicated region
        $region21: #{tpu_custom_call.1} parent=11 // pred_check
          %p175 = pneg %p106
        $region22: #{tpu_custom_call.1} parent=11 // pred_check_branch
          %177 = sbr.rel (%p175) target = $region24
        $region23: #{tpu_custom_call.1} parent=11 // pred_region
          _
        $region24: #{tpu_custom_call.1} parent=11 // pred_fallthru
          _
      $region12: #{tpu_custom_call.1} parent=5 // pred_fallthru
        _
      %p178 = scmp.lt.s32.totalorder %s17, 2
      // Predicated region
      $region25: #{tpu_custom_call.1} parent=5 // pred_check
        %p179 = pneg %p178
      $region26: #{tpu_custom_call.1} parent=5 // pred_check_branch
        %181 = sbr.rel (%p179) target = $region28
      $region27: #{tpu_custom_call.1} parent=5 // pred_region
        // Predicated region
        $region29: #{tpu_custom_call.1} parent=27 // pred_check
          %p182 = pneg %p37
        $region30: #{tpu_custom_call.1} parent=27 // pred_check_branch
          %184 = sbr.rel (%p182) target = $region32
        $region31: #{tpu_custom_call.1} parent=27 // pred_region
          %s185 = sand.u32 %s27, 1
          %s186 = scalar_lea.sflag [#allocation3], %s185
          %s187 = sand.u32 %s27, 1
          %s188 = smul.addr %s187, 128
          %s189 = scalar_lea.vmem [#allocation2], %s188
          %s190 = smul.u32 2, %s17
          %192 = vsyncadd %s186, 0
          %s193 = smul.addr %s190, 16
          %s194 = smul.addr %s193, 4
          %s195 = scalar_lea.hbm %s0, %s194
          %s196 = sshll.u32 %s195, 4
          %s197 = int_to_ptr.hbm [resolvable:$true] %s196
          %s198 = sshll.u32 %s189, 4
          %s199 = int_to_ptr.vmem [resolvable:$true] %s198
          %204 = dma.hbm_to_vmem [thread:$0]  %s197, 2048, %s199, %s186, 128, 128, 8
        $region32: #{tpu_custom_call.1} parent=27 // pred_fallthru
          _
      $region28: #{tpu_custom_call.1} parent=5 // pred_fallthru
        _
      %p205 = scmp.le.s32.totalorder 1, %s17
      %p206 = scmp.lt.s32.totalorder %s17, 3
      %p207 = pnand %p205, %p206
      %p208 = pneg %p207
      // Predicated region
      $region33: #{tpu_custom_call.1} parent=5 // pred_check
        _
      $region34: #{tpu_custom_call.1} parent=5 // pred_check_branch
        %210 = sbr.rel (%p207) target = $region36
      $region35: #{tpu_custom_call.1} parent=5 // pred_region
        %s211 = ssub.s32 %s17, 1
        %s212 = sand.u32 %s30, 1
        %s213 = scalar_lea.sflag [#allocation3], %s212
        %s214 = sand.u32 %s30, 1
        %s215 = smul.addr %s214, 128
        %s216 = scalar_lea.vmem [#allocation2], %s215
        // Predicated region
        $region37: #{tpu_custom_call.1} parent=35 // pred_check
          %p217 = pneg %p43
        $region38: #{tpu_custom_call.1} parent=35 // pred_check_branch
          %219 = sbr.rel (%p217) target = $region40
        $region39: #{tpu_custom_call.1} parent=35 // pred_region
          %221 = dma.done %s213, 2048
        $region40: #{tpu_custom_call.1} parent=35 // pred_fallthru
          _
        // Predicated region
        $region41: #{tpu_custom_call.1} parent=35 // pred_check
          %p222 = pneg %p64
        $region42: #{tpu_custom_call.1} parent=35 // pred_check_branch
          %224 = sbr.rel (%p222) target = $region44
        $region43: #{tpu_custom_call.1} parent=35 // pred_region
          %226 = dma.done [#allocation6], 12288
        $region44: #{tpu_custom_call.1} parent=35 // pred_fallthru
          _
        // Predicated region
        $region45: #{tpu_custom_call.1} parent=35 // pred_check
          %p227 = pneg %p85
        $region46: #{tpu_custom_call.1} parent=35 // pred_check_branch
          %229 = sbr.rel (%p227) target = $region48
        $region47: #{tpu_custom_call.1} parent=35 // pred_region
          %231 = dma.done [#allocation6], 4096
        $region48: #{tpu_custom_call.1} parent=35 // pred_fallthru
          _
        %s232 = sand.u32 %s30, 1
        %s233 = scalar_lea.sflag [#allocation3], %s232
        %s234 = sand.u32 %s30, 1
        %s235 = smul.addr %s234, 128
        %s236 = scalar_lea.vmem [#allocation2], %s235
        %p237 = pneg %p43
        %p238 = pneg %p40
        %p239 = pneg %p64
        %p240 = pneg %p61
        %p241 = pneg %p85
        %p242 = pneg %p82
        %p243 = pneg %p106
        %p244 = pneg %p103
        %p245 = pneg %p132
        %p246 = pneg %p129
        %s247 = sand.u32 %s119, 1
        %s248 = scalar_lea.sflag [#allocation4], %s247
        %s249 = sand.u32 %s119, 1
        %s250 = smul.addr %s249, 256
        %s251 = scalar_lea.vmem [#allocation8], %s250
        %s252 = smul.u32 2, %s22
        %s253 = smul.u32 2, %s22
        %v255 = vld [vmem:[%s216] sm:$0xff]
        %v256 = vld [vmem:[%s216 + $0x8] sm:$0xff]
        %v257 = vld [vmem:[%s216 + $0x10] sm:$0xff]
        %v258 = vld [vmem:[%s216 + $0x18] sm:$0xff]
        %v259 = vld [vmem:[%s216 + $0x20] sm:$0xff]
        %v260 = vld [vmem:[%s216 + $0x28] sm:$0xff]
        %v261 = vld [vmem:[%s216 + $0x30] sm:$0xff]
        %v262 = vld [vmem:[%s216 + $0x38] sm:$0xff]
        %v263 = vld [vmem:[%s216 + $0x40] sm:$0xff]
        %v264 = vld [vmem:[%s216 + $0x48] sm:$0xff]
        %v265 = vld [vmem:[%s216 + $0x50] sm:$0xff]
        %v266 = vld [vmem:[%s216 + $0x58] sm:$0xff]
        %v267 = vld [vmem:[%s216 + $0x60] sm:$0xff]
        %v268 = vld [vmem:[%s216 + $0x68] sm:$0xff]
        %v269 = vld [vmem:[%s216 + $0x70] sm:$0xff]
        %v270 = vld [vmem:[%s216 + $0x78] sm:$0xff]
        %v271 = vld [vmem:[#allocation5] sm:$0xff]
        %v272 = vld [vmem:[#allocation5 + $0x8] sm:$0xff]
        %v273 = vld [vmem:[#allocation5 + $0x10] sm:$0xff]
        %v274 = vld [vmem:[#allocation5 + $0x18] sm:$0xff]
        %v275 = vld [vmem:[#allocation5 + $0x20] sm:$0xff]
        %v276 = vld [vmem:[#allocation5 + $0x28] sm:$0xff]
        %v277 = vld [vmem:[#allocation5 + $0x30] sm:$0xff]
        %v278 = vld [vmem:[#allocation5 + $0x38] sm:$0xff]
        %v279 = vld [vmem:[#allocation5 + $0x40] sm:$0xff]
        %v280 = vld [vmem:[#allocation5 + $0x48] sm:$0xff]
        %v281 = vld [vmem:[#allocation5 + $0x50] sm:$0xff]
        %v282 = vld [vmem:[#allocation5 + $0x58] sm:$0xff]
        %v283 = vld [vmem:[#allocation5 + $0x60] sm:$0xff]
        %v284 = vld [vmem:[#allocation5 + $0x68] sm:$0xff]
        %v285 = vld [vmem:[#allocation5 + $0x70] sm:$0xff]
        %v286 = vld [vmem:[#allocation5 + $0x78] sm:$0xff]
        %v287 = vld [vmem:[#allocation5 + $0x80] sm:$0xff]
        %v288 = vld [vmem:[#allocation5 + $0x88] sm:$0xff]
        %v289 = vld [vmem:[#allocation5 + $0x90] sm:$0xff]
        %v290 = vld [vmem:[#allocation5 + $0x98] sm:$0xff]
        %v291 = vld [vmem:[#allocation5 + $0xa0] sm:$0xff]
        %v292 = vld [vmem:[#allocation5 + $0xa8] sm:$0xff]
        %v293 = vld [vmem:[#allocation5 + $0xb0] sm:$0xff]
        %v294 = vld [vmem:[#allocation5 + $0xb8] sm:$0xff]
        %v295 = vld [vmem:[#allocation5 + $0xc0] sm:$0xff]
        %v296 = vld [vmem:[#allocation5 + $0xc8] sm:$0xff]
        %v297 = vld [vmem:[#allocation5 + $0xd0] sm:$0xff]
        %v298 = vld [vmem:[#allocation5 + $0xd8] sm:$0xff]
        %v299 = vld [vmem:[#allocation5 + $0xe0] sm:$0xff]
        %v300 = vld [vmem:[#allocation5 + $0xe8] sm:$0xff]
        %v301 = vld [vmem:[#allocation5 + $0xf0] sm:$0xff]
        %v302 = vld [vmem:[#allocation5 + $0xf8] sm:$0xff]
        %v303 = vld [vmem:[#allocation5 + $0x100] sm:$0xff]
        %v304 = vld [vmem:[#allocation5 + $0x108] sm:$0xff]
        %v305 = vld [vmem:[#allocation5 + $0x110] sm:$0xff]
        %v306 = vld [vmem:[#allocation5 + $0x118] sm:$0xff]
        %v307 = vld [vmem:[#allocation5 + $0x120] sm:$0xff]
        %v308 = vld [vmem:[#allocation5 + $0x128] sm:$0xff]
        %v309 = vld [vmem:[#allocation5 + $0x130] sm:$0xff]
        %v310 = vld [vmem:[#allocation5 + $0x138] sm:$0xff]
        %v311 = vld [vmem:[#allocation5 + $0x140] sm:$0xff]
        %v312 = vld [vmem:[#allocation5 + $0x148] sm:$0xff]
        %v313 = vld [vmem:[#allocation5 + $0x150] sm:$0xff]
        %v314 = vld [vmem:[#allocation5 + $0x158] sm:$0xff]
        %v315 = vld [vmem:[#allocation5 + $0x160] sm:$0xff]
        %v316 = vld [vmem:[#allocation5 + $0x168] sm:$0xff]
        %v317 = vld [vmem:[#allocation5 + $0x170] sm:$0xff]
        %v318 = vld [vmem:[#allocation5 + $0x178] sm:$0xff]
        %v319 = vld [vmem:[#allocation5 + $0x180] sm:$0xff]
        %v320 = vld [vmem:[#allocation5 + $0x188] sm:$0xff]
        %v321 = vld [vmem:[#allocation5 + $0x190] sm:$0xff]
        %v322 = vld [vmem:[#allocation5 + $0x198] sm:$0xff]
        %v323 = vld [vmem:[#allocation5 + $0x1a0] sm:$0xff]
        %v324 = vld [vmem:[#allocation5 + $0x1a8] sm:$0xff]
        %v325 = vld [vmem:[#allocation5 + $0x1b0] sm:$0xff]
        %v326 = vld [vmem:[#allocation5 + $0x1b8] sm:$0xff]
        %v327 = vld [vmem:[#allocation5 + $0x1c0] sm:$0xff]
        %v328 = vld [vmem:[#allocation5 + $0x1c8] sm:$0xff]
        %v329 = vld [vmem:[#allocation5 + $0x1d0] sm:$0xff]
        %v330 = vld [vmem:[#allocation5 + $0x1d8] sm:$0xff]
        %v331 = vld [vmem:[#allocation5 + $0x1e0] sm:$0xff]
        %v332 = vld [vmem:[#allocation5 + $0x1e8] sm:$0xff]
        %v333 = vld [vmem:[#allocation5 + $0x1f0] sm:$0xff]
        %v334 = vld [vmem:[#allocation5 + $0x1f8] sm:$0xff]
        %v335 = vld [vmem:[#allocation5 + $0x200] sm:$0xff]
        %v336 = vld [vmem:[#allocation5 + $0x208] sm:$0xff]
        %v337 = vld [vmem:[#allocation5 + $0x210] sm:$0xff]
        %v338 = vld [vmem:[#allocation5 + $0x218] sm:$0xff]
        %v339 = vld [vmem:[#allocation5 + $0x220] sm:$0xff]
        %v340 = vld [vmem:[#allocation5 + $0x228] sm:$0xff]
        %v341 = vld [vmem:[#allocation5 + $0x230] sm:$0xff]
        %v342 = vld [vmem:[#allocation5 + $0x238] sm:$0xff]
        %v343 = vld [vmem:[#allocation5 + $0x240] sm:$0xff]
        %v344 = vld [vmem:[#allocation5 + $0x248] sm:$0xff]
        %v345 = vld [vmem:[#allocation5 + $0x250] sm:$0xff]
        %v346 = vld [vmem:[#allocation5 + $0x258] sm:$0xff]
        %v347 = vld [vmem:[#allocation5 + $0x260] sm:$0xff]
        %v348 = vld [vmem:[#allocation5 + $0x268] sm:$0xff]
        %v349 = vld [vmem:[#allocation5 + $0x270] sm:$0xff]
        %v350 = vld [vmem:[#allocation5 + $0x278] sm:$0xff]
        %v351 = vld [vmem:[#allocation5 + $0x280] sm:$0xff]
        %v352 = vld [vmem:[#allocation5 + $0x288] sm:$0xff]
        %v353 = vld [vmem:[#allocation5 + $0x290] sm:$0xff]
        %v354 = vld [vmem:[#allocation5 + $0x298] sm:$0xff]
        %v355 = vld [vmem:[#allocation5 + $0x2a0] sm:$0xff]
        %v356 = vld [vmem:[#allocation5 + $0x2a8] sm:$0xff]
        %v357 = vld [vmem:[#allocation5 + $0x2b0] sm:$0xff]
        %v358 = vld [vmem:[#allocation5 + $0x2b8] sm:$0xff]
        %v359 = vld [vmem:[#allocation5 + $0x2c0] sm:$0xff]
        %v360 = vld [vmem:[#allocation5 + $0x2c8] sm:$0xff]
        %v361 = vld [vmem:[#allocation5 + $0x2d0] sm:$0xff]
        %v362 = vld [vmem:[#allocation5 + $0x2d8] sm:$0xff]
        %v363 = vld [vmem:[#allocation5 + $0x2e0] sm:$0xff]
        %v364 = vld [vmem:[#allocation5 + $0x2e8] sm:$0xff]
        %v365 = vld [vmem:[#allocation5 + $0x2f0] sm:$0xff]
        %v366 = vld [vmem:[#allocation5 + $0x2f8] sm:$0xff]
        %v383 = vunpack.c.l.b16 %v255
        %v384 = vunpack.c.h.b16 %v255
        %v385 = vunpack.c.l.b16 %v256
        %v386 = vunpack.c.h.b16 %v256
        %v387 = vunpack.c.l.b16 %v257
        %v388 = vunpack.c.h.b16 %v257
        %v389 = vunpack.c.l.b16 %v258
        %v390 = vunpack.c.h.b16 %v258
        %v391 = vunpack.c.l.b16 %v259
        %v392 = vunpack.c.h.b16 %v259
        %v393 = vunpack.c.l.b16 %v260
        %v394 = vunpack.c.h.b16 %v260
        %v395 = vunpack.c.l.b16 %v261
        %v396 = vunpack.c.h.b16 %v261
        %v397 = vunpack.c.l.b16 %v262
        %v398 = vunpack.c.h.b16 %v262
        %v399 = vunpack.c.l.b16 %v263
        %v400 = vunpack.c.h.b16 %v263
        %v401 = vunpack.c.l.b16 %v264
        %v402 = vunpack.c.h.b16 %v264
        %v403 = vunpack.c.l.b16 %v265
        %v404 = vunpack.c.h.b16 %v265
        %v405 = vunpack.c.l.b16 %v266
        %v406 = vunpack.c.h.b16 %v266
        %v407 = vunpack.c.l.b16 %v267
        %v408 = vunpack.c.h.b16 %v267
        %v409 = vunpack.c.l.b16 %v268
        %v410 = vunpack.c.h.b16 %v268
        %v411 = vunpack.c.l.b16 %v269
        %v412 = vunpack.c.h.b16 %v269
        %v413 = vunpack.c.l.b16 %v270
        %v414 = vunpack.c.h.b16 %v270
        %v415 = vpack.c.b16 %v385, %v383
        %v416 = vpack.c.b16 %v386, %v384
        %v417 = vpack.c.b16 %v389, %v387
        %v418 = vpack.c.b16 %v390, %v388
        %v419 = vpack.c.b16 %v393, %v391
        %v420 = vpack.c.b16 %v394, %v392
        %v421 = vpack.c.b16 %v397, %v395
        %v422 = vpack.c.b16 %v398, %v396
        %v423 = vpack.c.b16 %v401, %v399
        %v424 = vpack.c.b16 %v402, %v400
        %v425 = vpack.c.b16 %v405, %v403
        %v426 = vpack.c.b16 %v406, %v404
        %v427 = vpack.c.b16 %v409, %v407
        %v428 = vpack.c.b16 %v410, %v408
        %v429 = vpack.c.b16 %v413, %v411
        %v430 = vpack.c.b16 %v414, %v412
        %v543 = vunpack.c.l.b16 %v271
        %v544 = vunpack.c.h.b16 %v271
        %v545 = vunpack.c.l.b16 %v272
        %v546 = vunpack.c.h.b16 %v272
        %v547 = vunpack.c.l.b16 %v273
        %v548 = vunpack.c.h.b16 %v273
        %v549 = vunpack.c.l.b16 %v274
        %v550 = vunpack.c.h.b16 %v274
        %v551 = vunpack.c.l.b16 %v275
        %v552 = vunpack.c.h.b16 %v275
        %v553 = vunpack.c.l.b16 %v276
        %v554 = vunpack.c.h.b16 %v276
        %v555 = vunpack.c.l.b16 %v277
        %v556 = vunpack.c.h.b16 %v277
        %v557 = vunpack.c.l.b16 %v278
        %v558 = vunpack.c.h.b16 %v278
        %v559 = vunpack.c.l.b16 %v279
        %v560 = vunpack.c.h.b16 %v279
        %v561 = vunpack.c.l.b16 %v280
        %v562 = vunpack.c.h.b16 %v280
        %v563 = vunpack.c.l.b16 %v281
        %v564 = vunpack.c.h.b16 %v281
        %v565 = vunpack.c.l.b16 %v282
        %v566 = vunpack.c.h.b16 %v282
        %v567 = vunpack.c.l.b16 %v283
        %v568 = vunpack.c.h.b16 %v283
        %v569 = vunpack.c.l.b16 %v284
        %v570 = vunpack.c.h.b16 %v284
        %v571 = vunpack.c.l.b16 %v285
        %v572 = vunpack.c.h.b16 %v285
        %v573 = vunpack.c.l.b16 %v286
        %v574 = vunpack.c.h.b16 %v286
        %v575 = vunpack.c.l.b16 %v287
        %v576 = vunpack.c.h.b16 %v287
        %v577 = vunpack.c.l.b16 %v288
        %v578 = vunpack.c.h.b16 %v288
        %v579 = vunpack.c.l.b16 %v289
        %v580 = vunpack.c.h.b16 %v289
        %v581 = vunpack.c.l.b16 %v290
        %v582 = vunpack.c.h.b16 %v290
        %v583 = vunpack.c.l.b16 %v291
        %v584 = vunpack.c.h.b16 %v291
        %v585 = vunpack.c.l.b16 %v292
        %v586 = vunpack.c.h.b16 %v292
        %v587 = vunpack.c.l.b16 %v293
        %v588 = vunpack.c.h.b16 %v293
        %v589 = vunpack.c.l.b16 %v294
        %v590 = vunpack.c.h.b16 %v294
        %v591 = vunpack.c.l.b16 %v295
        %v592 = vunpack.c.h.b16 %v295
        %v593 = vunpack.c.l.b16 %v296
        %v594 = vunpack.c.h.b16 %v296
        %v595 = vunpack.c.l.b16 %v297
        %v596 = vunpack.c.h.b16 %v297
        %v597 = vunpack.c.l.b16 %v298
        %v598 = vunpack.c.h.b16 %v298
        %v599 = vunpack.c.l.b16 %v299
        %v600 = vunpack.c.h.b16 %v299
        %v601 = vunpack.c.l.b16 %v300
        %v602 = vunpack.c.h.b16 %v300
        %v603 = vunpack.c.l.b16 %v301
        %v604 = vunpack.c.h.b16 %v301
        %v605 = vunpack.c.l.b16 %v302
        %v606 = vunpack.c.h.b16 %v302
        %v607 = vunpack.c.l.b16 %v303
        %v608 = vunpack.c.h.b16 %v303
        %v609 = vunpack.c.l.b16 %v304
        %v610 = vunpack.c.h.b16 %v304
        %v611 = vunpack.c.l.b16 %v305
        %v612 = vunpack.c.h.b16 %v305
        %v613 = vunpack.c.l.b16 %v306
        %v614 = vunpack.c.h.b16 %v306
        %v615 = vunpack.c.l.b16 %v307
        %v616 = vunpack.c.h.b16 %v307
        %v617 = vunpack.c.l.b16 %v308
        %v618 = vunpack.c.h.b16 %v308
        %v619 = vunpack.c.l.b16 %v309
        %v620 = vunpack.c.h.b16 %v309
        %v621 = vunpack.c.l.b16 %v310
        %v622 = vunpack.c.h.b16 %v310
        %v623 = vunpack.c.l.b16 %v311
        %v624 = vunpack.c.h.b16 %v311
        %v625 = vunpack.c.l.b16 %v312
        %v626 = vunpack.c.h.b16 %v312
        %v627 = vunpack.c.l.b16 %v313
        %v628 = vunpack.c.h.b16 %v313
        %v629 = vunpack.c.l.b16 %v314
        %v630 = vunpack.c.h.b16 %v314
        %v631 = vunpack.c.l.b16 %v315
        %v632 = vunpack.c.h.b16 %v315
        %v633 = vunpack.c.l.b16 %v316
        %v634 = vunpack.c.h.b16 %v316
        %v635 = vunpack.c.l.b16 %v317
        %v636 = vunpack.c.h.b16 %v317
        %v637 = vunpack.c.l.b16 %v318
        %v638 = vunpack.c.h.b16 %v318
        %v639 = vunpack.c.l.b16 %v319
        %v640 = vunpack.c.h.b16 %v319
        %v641 = vunpack.c.l.b16 %v320
        %v642 = vunpack.c.h.b16 %v320
        %v643 = vunpack.c.l.b16 %v321
        %v644 = vunpack.c.h.b16 %v321
        %v645 = vunpack.c.l.b16 %v322
        %v646 = vunpack.c.h.b16 %v322
        %v647 = vunpack.c.l.b16 %v323
        %v648 = vunpack.c.h.b16 %v323
        %v649 = vunpack.c.l.b16 %v324
        %v650 = vunpack.c.h.b16 %v324
        %v651 = vunpack.c.l.b16 %v325
        %v652 = vunpack.c.h.b16 %v325
        %v653 = vunpack.c.l.b16 %v326
        %v654 = vunpack.c.h.b16 %v326
        %v655 = vunpack.c.l.b16 %v327
        %v656 = vunpack.c.h.b16 %v327
        %v657 = vunpack.c.l.b16 %v328
        %v658 = vunpack.c.h.b16 %v328
        %v659 = vunpack.c.l.b16 %v329
        %v660 = vunpack.c.h.b16 %v329
        %v661 = vunpack.c.l.b16 %v330
        %v662 = vunpack.c.h.b16 %v330
        %v663 = vunpack.c.l.b16 %v331
        %v664 = vunpack.c.h.b16 %v331
        %v665 = vunpack.c.l.b16 %v332
        %v666 = vunpack.c.h.b16 %v332
        %v667 = vunpack.c.l.b16 %v333
        %v668 = vunpack.c.h.b16 %v333
        %v669 = vunpack.c.l.b16 %v334
        %v670 = vunpack.c.h.b16 %v334
        %v671 = vunpack.c.l.b16 %v335
        %v672 = vunpack.c.h.b16 %v335
        %v673 = vunpack.c.l.b16 %v336
        %v674 = vunpack.c.h.b16 %v336
        %v675 = vunpack.c.l.b16 %v337
        %v676 = vunpack.c.h.b16 %v337
        %v677 = vunpack.c.l.b16 %v338
        %v678 = vunpack.c.h.b16 %v338
        %v679 = vunpack.c.l.b16 %v339
        %v680 = vunpack.c.h.b16 %v339
        %v681 = vunpack.c.l.b16 %v340
        %v682 = vunpack.c.h.b16 %v340
        %v683 = vunpack.c.l.b16 %v341
        %v684 = vunpack.c.h.b16 %v341
        %v685 = vunpack.c.l.b16 %v342
        %v686 = vunpack.c.h.b16 %v342
        %v687 = vunpack.c.l.b16 %v343
        %v688 = vunpack.c.h.b16 %v343
        %v689 = vunpack.c.l.b16 %v344
        %v690 = vunpack.c.h.b16 %v344
        %v691 = vunpack.c.l.b16 %v345
        %v692 = vunpack.c.h.b16 %v345
        %v693 = vunpack.c.l.b16 %v346
        %v694 = vunpack.c.h.b16 %v346
        %v695 = vunpack.c.l.b16 %v347
        %v696 = vunpack.c.h.b16 %v347
        %v697 = vunpack.c.l.b16 %v348
        %v698 = vunpack.c.h.b16 %v348
        %v699 = vunpack.c.l.b16 %v349
        %v700 = vunpack.c.h.b16 %v349
        %v701 = vunpack.c.l.b16 %v350
        %v702 = vunpack.c.h.b16 %v350
        %v703 = vunpack.c.l.b16 %v351
        %v704 = vunpack.c.h.b16 %v351
        %v705 = vunpack.c.l.b16 %v352
        %v706 = vunpack.c.h.b16 %v352
        %v707 = vunpack.c.l.b16 %v353
        %v708 = vunpack.c.h.b16 %v353
        %v709 = vunpack.c.l.b16 %v354
        %v710 = vunpack.c.h.b16 %v354
        %v711 = vunpack.c.l.b16 %v355
        %v712 = vunpack.c.h.b16 %v355
        %v713 = vunpack.c.l.b16 %v356
        %v714 = vunpack.c.h.b16 %v356
        %v715 = vunpack.c.l.b16 %v357
        %v716 = vunpack.c.h.b16 %v357
        %v717 = vunpack.c.l.b16 %v358
        %v718 = vunpack.c.h.b16 %v358
        %v719 = vunpack.c.l.b16 %v359
        %v720 = vunpack.c.h.b16 %v359
        %v721 = vunpack.c.l.b16 %v360
        %v722 = vunpack.c.h.b16 %v360
        %v723 = vunpack.c.l.b16 %v361
        %v724 = vunpack.c.h.b16 %v361
        %v725 = vunpack.c.l.b16 %v362
        %v726 = vunpack.c.h.b16 %v362
        %v727 = vunpack.c.l.b16 %v363
        %v728 = vunpack.c.h.b16 %v363
        %v729 = vunpack.c.l.b16 %v364
        %v730 = vunpack.c.h.b16 %v364
        %v731 = vunpack.c.l.b16 %v365
        %v732 = vunpack.c.h.b16 %v365
        %v733 = vunpack.c.l.b16 %v366
        %v734 = vunpack.c.h.b16 %v366
        %v735 = vpack.c.b16 %v549, %v543
        %v736 = vpack.c.b16 %v550, %v544
        %v737 = vpack.c.b16 %v551, %v545
        %v738 = vpack.c.b16 %v552, %v546
        %v739 = vpack.c.b16 %v553, %v547
        %v740 = vpack.c.b16 %v554, %v548
        %v741 = vpack.c.b16 %v561, %v555
        %v742 = vpack.c.b16 %v562, %v556
        %v743 = vpack.c.b16 %v563, %v557
        %v744 = vpack.c.b16 %v564, %v558
        %v745 = vpack.c.b16 %v565, %v559
        %v746 = vpack.c.b16 %v566, %v560
        %v747 = vpack.c.b16 %v573, %v567
        %v748 = vpack.c.b16 %v574, %v568
        %v749 = vpack.c.b16 %v575, %v569
        %v750 = vpack.c.b16 %v576, %v570
        %v751 = vpack.c.b16 %v577, %v571
        %v752 = vpack.c.b16 %v578, %v572
        %v753 = vpack.c.b16 %v585, %v579
        %v754 = vpack.c.b16 %v586, %v580
        %v755 = vpack.c.b16 %v587, %v581
        %v756 = vpack.c.b16 %v588, %v582
        %v757 = vpack.c.b16 %v589, %v583
        %v758 = vpack.c.b16 %v590, %v584
        %v759 = vpack.c.b16 %v597, %v591
        %v760 = vpack.c.b16 %v598, %v592
        %v761 = vpack.c.b16 %v599, %v593
        %v762 = vpack.c.b16 %v600, %v594
        %v763 = vpack.c.b16 %v601, %v595
        %v764 = vpack.c.b16 %v602, %v596
        %v765 = vpack.c.b16 %v609, %v603
        %v766 = vpack.c.b16 %v610, %v604
        %v767 = vpack.c.b16 %v611, %v605
        %v768 = vpack.c.b16 %v612, %v606
        %v769 = vpack.c.b16 %v613, %v607
        %v770 = vpack.c.b16 %v614, %v608
        %v771 = vpack.c.b16 %v621, %v615
        %v772 = vpack.c.b16 %v622, %v616
        %v773 = vpack.c.b16 %v623, %v617
        %v774 = vpack.c.b16 %v624, %v618
        %v775 = vpack.c.b16 %v625, %v619
        %v776 = vpack.c.b16 %v626, %v620
        %v777 = vpack.c.b16 %v633, %v627
        %v778 = vpack.c.b16 %v634, %v628
        %v779 = vpack.c.b16 %v635, %v629
        %v780 = vpack.c.b16 %v636, %v630
        %v781 = vpack.c.b16 %v637, %v631
        %v782 = vpack.c.b16 %v638, %v632
        %v783 = vpack.c.b16 %v645, %v639
        %v784 = vpack.c.b16 %v646, %v640
        %v785 = vpack.c.b16 %v647, %v641
        %v786 = vpack.c.b16 %v648, %v642
        %v787 = vpack.c.b16 %v649, %v643
        %v788 = vpack.c.b16 %v650, %v644
        %v789 = vpack.c.b16 %v657, %v651
        %v790 = vpack.c.b16 %v658, %v652
        %v791 = vpack.c.b16 %v659, %v653
        %v792 = vpack.c.b16 %v660, %v654
        %v793 = vpack.c.b16 %v661, %v655
        %v794 = vpack.c.b16 %v662, %v656
        %v795 = vpack.c.b16 %v669, %v663
        %v796 = vpack.c.b16 %v670, %v664
        %v797 = vpack.c.b16 %v671, %v665
        %v798 = vpack.c.b16 %v672, %v666
        %v799 = vpack.c.b16 %v673, %v667
        %v800 = vpack.c.b16 %v674, %v668
        %v801 = vpack.c.b16 %v681, %v675
        %v802 = vpack.c.b16 %v682, %v676
        %v803 = vpack.c.b16 %v683, %v677
        %v804 = vpack.c.b16 %v684, %v678
        %v805 = vpack.c.b16 %v685, %v679
        %v806 = vpack.c.b16 %v686, %v680
        %v807 = vpack.c.b16 %v693, %v687
        %v808 = vpack.c.b16 %v694, %v688
        %v809 = vpack.c.b16 %v695, %v689
        %v810 = vpack.c.b16 %v696, %v690
        %v811 = vpack.c.b16 %v697, %v691
        %v812 = vpack.c.b16 %v698, %v692
        %v813 = vpack.c.b16 %v705, %v699
        %v814 = vpack.c.b16 %v706, %v700
        %v815 = vpack.c.b16 %v707, %v701
        %v816 = vpack.c.b16 %v708, %v702
        %v817 = vpack.c.b16 %v709, %v703
        %v818 = vpack.c.b16 %v710, %v704
        %v819 = vpack.c.b16 %v717, %v711
        %v820 = vpack.c.b16 %v718, %v712
        %v821 = vpack.c.b16 %v719, %v713
        %v822 = vpack.c.b16 %v720, %v714
        %v823 = vpack.c.b16 %v721, %v715
        %v824 = vpack.c.b16 %v722, %v716
        %v825 = vpack.c.b16 %v729, %v723
        %v826 = vpack.c.b16 %v730, %v724
        %v827 = vpack.c.b16 %v731, %v725
        %v828 = vpack.c.b16 %v732, %v726
        %v829 = vpack.c.b16 %v733, %v727
        %v830 = vpack.c.b16 %v734, %v728
        %927 = vmatpush.bf16.msra.mxu0 %v777
        %928 = vmatpush.bf16.msra.mxu0 %v771
        %929 = vmatpush.bf16.msra.mxu0 %v765
        %930 = vmatpush.bf16.msra.mxu0 %v759
        %931 = vmatpush.bf16.msra.mxu0 %v753
        %932 = vmatpush.bf16.msra.mxu0 %v747
        %933 = vmatpush.bf16.msra.mxu0 %v741
        %934 = vmatpush.bf16.msra.mxu0 %v735
        %935 = vmatmul.bf16.gmra.mxu0 %v415
        %v936 = vpop.f32.mrf.mxu0
        %v937 = vadd.f32 0.0, %v936
        %v938 = vpop.f32.mrf.mxu0
        %v939 = vadd.f32 0.0, %v938
        %940 = vmatmul.bf16.gmra.mxu0 %v417
        %v941 = vpop.f32.mrf.mxu0
        %v942 = vadd.f32 0.0, %v941
        %v943 = vpop.f32.mrf.mxu0
        %v944 = vadd.f32 0.0, %v943
        %945 = vmatmul.bf16.gmra.mxu0 %v419
        %v946 = vpop.f32.mrf.mxu0
        %v947 = vadd.f32 0.0, %v946
        %v948 = vpop.f32.mrf.mxu0
        %v949 = vadd.f32 0.0, %v948
        %950 = vmatmul.bf16.gmra.mxu0 %v421
        %v951 = vpop.f32.mrf.mxu0
        %v952 = vadd.f32 0.0, %v951
        %v953 = vpop.f32.mrf.mxu0
        %v954 = vadd.f32 0.0, %v953
        %955 = vmatmul.bf16.gmra.mxu0 %v423
        %v956 = vpop.f32.mrf.mxu0
        %v957 = vadd.f32 0.0, %v956
        %v958 = vpop.f32.mrf.mxu0
        %v959 = vadd.f32 0.0, %v958
        %960 = vmatmul.bf16.gmra.mxu0 %v425
        %v961 = vpop.f32.mrf.mxu0
        %v962 = vadd.f32 0.0, %v961
        %v963 = vpop.f32.mrf.mxu0
        %v964 = vadd.f32 0.0, %v963
        %965 = vmatmul.bf16.gmra.mxu0 %v427
        %v966 = vpop.f32.mrf.mxu0
        %v967 = vadd.f32 0.0, %v966
        %v968 = vpop.f32.mrf.mxu0
        %v969 = vadd.f32 0.0, %v968
        %970 = vmatmul.bf16.gmra.mxu0 %v429
        %v971 = vpop.f32.mrf.mxu0
        %v972 = vadd.f32 0.0, %v971
        %v973 = vpop.f32.mrf.mxu0
        %v974 = vadd.f32 0.0, %v973
        %975 = vdwg.mxu0
        %976 = vmatpush.bf16.msra.mxu0 %v825
        %977 = vmatpush.bf16.msra.mxu0 %v819
        %978 = vmatpush.bf16.msra.mxu0 %v813
        %979 = vmatpush.bf16.msra.mxu0 %v807
        %980 = vmatpush.bf16.msra.mxu0 %v801
        %981 = vmatpush.bf16.msra.mxu0 %v795
        %982 = vmatpush.bf16.msra.mxu0 %v789
        %983 = vmatpush.bf16.msra.mxu0 %v783
        %984 = vmatmul.bf16.gmra.mxu0 %v416
        %v985 = vpop.f32.mrf.mxu0
        %v986 = vadd.f32 %v937, %v985
        %v987 = vpop.f32.mrf.mxu0
        %v988 = vadd.f32 %v939, %v987
        %989 = vmatmul.bf16.gmra.mxu0 %v418
        %v990 = vpop.f32.mrf.mxu0
        %v991 = vadd.f32 %v942, %v990
        %v992 = vpop.f32.mrf.mxu0
        %v993 = vadd.f32 %v944, %v992
        %994 = vmatmul.bf16.gmra.mxu0 %v420
        %v995 = vpop.f32.mrf.mxu0
        %v996 = vadd.f32 %v947, %v995
        %v997 = vpop.f32.mrf.mxu0
        %v998 = vadd.f32 %v949, %v997
        %999 = vmatmul.bf16.gmra.mxu0 %v422
        %v1000 = vpop.f32.mrf.mxu0
        %v1001 = vadd.f32 %v952, %v1000
        %v1002 = vpop.f32.mrf.mxu0
        %v1003 = vadd.f32 %v954, %v1002
        %1004 = vmatmul.bf16.gmra.mxu0 %v424
        %v1005 = vpop.f32.mrf.mxu0
        %v1006 = vadd.f32 %v957, %v1005
        %v1007 = vpop.f32.mrf.mxu0
        %v1008 = vadd.f32 %v959, %v1007
        %1009 = vmatmul.bf16.gmra.mxu0 %v426
        %v1010 = vpop.f32.mrf.mxu0
        %v1011 = vadd.f32 %v962, %v1010
        %v1012 = vpop.f32.mrf.mxu0
        %v1013 = vadd.f32 %v964, %v1012
        %1014 = vmatmul.bf16.gmra.mxu0 %v428
        %v1015 = vpop.f32.mrf.mxu0
        %v1016 = vadd.f32 %v967, %v1015
        %v1017 = vpop.f32.mrf.mxu0
        %v1018 = vadd.f32 %v969, %v1017
        %1019 = vmatmul.bf16.gmra.mxu0 %v430
        %v1020 = vpop.f32.mrf.mxu0
        %v1021 = vadd.f32 %v972, %v1020
        %v1022 = vpop.f32.mrf.mxu0
        %v1023 = vadd.f32 %v974, %v1022
        %1024 = vdwg.mxu0
        %1025 = vmatpush.bf16.msra.mxu0 %v778
        %1026 = vmatpush.bf16.msra.mxu0 %v772
        %1027 = vmatpush.bf16.msra.mxu0 %v766
        %1028 = vmatpush.bf16.msra.mxu0 %v760
        %1029 = vmatpush.bf16.msra.mxu0 %v754
        %1030 = vmatpush.bf16.msra.mxu0 %v748
        %1031 = vmatpush.bf16.msra.mxu0 %v742
        %1032 = vmatpush.bf16.msra.mxu0 %v736
        %1033 = vmatmul.bf16.gmra.mxu0 %v415
        %v1034 = vpop.f32.mrf.mxu0
        %v1035 = vadd.f32 0.0, %v1034
        %v1036 = vpop.f32.mrf.mxu0
        %v1037 = vadd.f32 0.0, %v1036
        %1038 = vmatmul.bf16.gmra.mxu0 %v417
        %v1039 = vpop.f32.mrf.mxu0
        %v1040 = vadd.f32 0.0, %v1039
        %v1041 = vpop.f32.mrf.mxu0
        %v1042 = vadd.f32 0.0, %v1041
        %1043 = vmatmul.bf16.gmra.mxu0 %v419
        %v1044 = vpop.f32.mrf.mxu0
        %v1045 = vadd.f32 0.0, %v1044
        %v1046 = vpop.f32.mrf.mxu0
        %v1047 = vadd.f32 0.0, %v1046
        %1048 = vmatmul.bf16.gmra.mxu0 %v421
        %v1049 = vpop.f32.mrf.mxu0
        %v1050 = vadd.f32 0.0, %v1049
        %v1051 = vpop.f32.mrf.mxu0
        %v1052 = vadd.f32 0.0, %v1051
        %1053 = vmatmul.bf16.gmra.mxu0 %v423
        %v1054 = vpop.f32.mrf.mxu0
        %v1055 = vadd.f32 0.0, %v1054
        %v1056 = vpop.f32.mrf.mxu0
        %v1057 = vadd.f32 0.0, %v1056
        %1058 = vmatmul.bf16.gmra.mxu0 %v425
        %v1059 = vpop.f32.mrf.mxu0
        %v1060 = vadd.f32 0.0, %v1059
        %v1061 = vpop.f32.mrf.mxu0
        %v1062 = vadd.f32 0.0, %v1061
        %1063 = vmatmul.bf16.gmra.mxu0 %v427
        %v1064 = vpop.f32.mrf.mxu0
        %v1065 = vadd.f32 0.0, %v1064
        %v1066 = vpop.f32.mrf.mxu0
        %v1067 = vadd.f32 0.0, %v1066
        %1068 = vmatmul.bf16.gmra.mxu0 %v429
        %v1069 = vpop.f32.mrf.mxu0
        %v1070 = vadd.f32 0.0, %v1069
        %v1071 = vpop.f32.mrf.mxu0
        %v1072 = vadd.f32 0.0, %v1071
        %1073 = vdwg.mxu0
        %1074 = vmatpush.bf16.msra.mxu0 %v826
        %1075 = vmatpush.bf16.msra.mxu0 %v820
        %1076 = vmatpush.bf16.msra.mxu0 %v814
        %1077 = vmatpush.bf16.msra.mxu0 %v808
        %1078 = vmatpush.bf16.msra.mxu0 %v802
        %1079 = vmatpush.bf16.msra.mxu0 %v796
        %1080 = vmatpush.bf16.msra.mxu0 %v790
        %1081 = vmatpush.bf16.msra.mxu0 %v784
        %1082 = vmatmul.bf16.gmra.mxu0 %v416
        %v1083 = vpop.f32.mrf.mxu0
        %v1084 = vadd.f32 %v1035, %v1083
        %v1085 = vpop.f32.mrf.mxu0
        %v1086 = vadd.f32 %v1037, %v1085
        %1087 = vmatmul.bf16.gmra.mxu0 %v418
        %v1088 = vpop.f32.mrf.mxu0
        %v1089 = vadd.f32 %v1040, %v1088
        %v1090 = vpop.f32.mrf.mxu0
        %v1091 = vadd.f32 %v1042, %v1090
        %1092 = vmatmul.bf16.gmra.mxu0 %v420
        %v1093 = vpop.f32.mrf.mxu0
        %v1094 = vadd.f32 %v1045, %v1093
        %v1095 = vpop.f32.mrf.mxu0
        %v1096 = vadd.f32 %v1047, %v1095
        %1097 = vmatmul.bf16.gmra.mxu0 %v422
        %v1098 = vpop.f32.mrf.mxu0
        %v1099 = vadd.f32 %v1050, %v1098
        %v1100 = vpop.f32.mrf.mxu0
        %v1101 = vadd.f32 %v1052, %v1100
        %1102 = vmatmul.bf16.gmra.mxu0 %v424
        %v1103 = vpop.f32.mrf.mxu0
        %v1104 = vadd.f32 %v1055, %v1103
        %v1105 = vpop.f32.mrf.mxu0
        %v1106 = vadd.f32 %v1057, %v1105
        %1107 = vmatmul.bf16.gmra.mxu0 %v426
        %v1108 = vpop.f32.mrf.mxu0
        %v1109 = vadd.f32 %v1060, %v1108
        %v1110 = vpop.f32.mrf.mxu0
        %v1111 = vadd.f32 %v1062, %v1110
        %1112 = vmatmul.bf16.gmra.mxu0 %v428
        %v1113 = vpop.f32.mrf.mxu0
        %v1114 = vadd.f32 %v1065, %v1113
        %v1115 = vpop.f32.mrf.mxu0
        %v1116 = vadd.f32 %v1067, %v1115
        %1117 = vmatmul.bf16.gmra.mxu0 %v430
        %v1118 = vpop.f32.mrf.mxu0
        %v1119 = vadd.f32 %v1070, %v1118
        %v1120 = vpop.f32.mrf.mxu0
        %v1121 = vadd.f32 %v1072, %v1120
        %1122 = vdwg.mxu0
        %1123 = vmatpush.bf16.msra.mxu0 %v779
        %1124 = vmatpush.bf16.msra.mxu0 %v773
        %1125 = vmatpush.bf16.msra.mxu0 %v767
        %1126 = vmatpush.bf16.msra.mxu0 %v761
        %1127 = vmatpush.bf16.msra.mxu0 %v755
        %1128 = vmatpush.bf16.msra.mxu0 %v749
        %1129 = vmatpush.bf16.msra.mxu0 %v743
        %1130 = vmatpush.bf16.msra.mxu0 %v737
        %1131 = vmatmul.bf16.gmra.mxu0 %v415
        %v1132 = vpop.f32.mrf.mxu0
        %v1133 = vadd.f32 0.0, %v1132
        %v1134 = vpop.f32.mrf.mxu0
        %v1135 = vadd.f32 0.0, %v1134
        %1136 = vmatmul.bf16.gmra.mxu0 %v417
        %v1137 = vpop.f32.mrf.mxu0
        %v1138 = vadd.f32 0.0, %v1137
        %v1139 = vpop.f32.mrf.mxu0
        %v1140 = vadd.f32 0.0, %v1139
        %1141 = vmatmul.bf16.gmra.mxu0 %v419
        %v1142 = vpop.f32.mrf.mxu0
        %v1143 = vadd.f32 0.0, %v1142
        %v1144 = vpop.f32.mrf.mxu0
        %v1145 = vadd.f32 0.0, %v1144
        %1146 = vmatmul.bf16.gmra.mxu0 %v421
        %v1147 = vpop.f32.mrf.mxu0
        %v1148 = vadd.f32 0.0, %v1147
        %v1149 = vpop.f32.mrf.mxu0
        %v1150 = vadd.f32 0.0, %v1149
        %1151 = vmatmul.bf16.gmra.mxu0 %v423
        %v1152 = vpop.f32.mrf.mxu0
        %v1153 = vadd.f32 0.0, %v1152
        %v1154 = vpop.f32.mrf.mxu0
        %v1155 = vadd.f32 0.0, %v1154
        %1156 = vmatmul.bf16.gmra.mxu0 %v425
        %v1157 = vpop.f32.mrf.mxu0
        %v1158 = vadd.f32 0.0, %v1157
        %v1159 = vpop.f32.mrf.mxu0
        %v1160 = vadd.f32 0.0, %v1159
        %1161 = vmatmul.bf16.gmra.mxu0 %v427
        %v1162 = vpop.f32.mrf.mxu0
        %v1163 = vadd.f32 0.0, %v1162
        %v1164 = vpop.f32.mrf.mxu0
        %v1165 = vadd.f32 0.0, %v1164
        %1166 = vmatmul.bf16.gmra.mxu0 %v429
        %v1167 = vpop.f32.mrf.mxu0
        %v1168 = vadd.f32 0.0, %v1167
        %v1169 = vpop.f32.mrf.mxu0
        %v1170 = vadd.f32 0.0, %v1169
        %1171 = vdwg.mxu0
        %1172 = vmatpush.bf16.msra.mxu0 %v827
        %1173 = vmatpush.bf16.msra.mxu0 %v821
        %1174 = vmatpush.bf16.msra.mxu0 %v815
        %1175 = vmatpush.bf16.msra.mxu0 %v809
        %1176 = vmatpush.bf16.msra.mxu0 %v803
        %1177 = vmatpush.bf16.msra.mxu0 %v797
        %1178 = vmatpush.bf16.msra.mxu0 %v791
        %1179 = vmatpush.bf16.msra.mxu0 %v785
        %1180 = vmatmul.bf16.gmra.mxu0 %v416
        %v1181 = vpop.f32.mrf.mxu0
        %v1182 = vadd.f32 %v1133, %v1181
        %v1183 = vpop.f32.mrf.mxu0
        %v1184 = vadd.f32 %v1135, %v1183
        %1185 = vmatmul.bf16.gmra.mxu0 %v418
        %v1186 = vpop.f32.mrf.mxu0
        %v1187 = vadd.f32 %v1138, %v1186
        %v1188 = vpop.f32.mrf.mxu0
        %v1189 = vadd.f32 %v1140, %v1188
        %1190 = vmatmul.bf16.gmra.mxu0 %v420
        %v1191 = vpop.f32.mrf.mxu0
        %v1192 = vadd.f32 %v1143, %v1191
        %v1193 = vpop.f32.mrf.mxu0
        %v1194 = vadd.f32 %v1145, %v1193
        %1195 = vmatmul.bf16.gmra.mxu0 %v422
        %v1196 = vpop.f32.mrf.mxu0
        %v1197 = vadd.f32 %v1148, %v1196
        %v1198 = vpop.f32.mrf.mxu0
        %v1199 = vadd.f32 %v1150, %v1198
        %1200 = vmatmul.bf16.gmra.mxu0 %v424
        %v1201 = vpop.f32.mrf.mxu0
        %v1202 = vadd.f32 %v1153, %v1201
        %v1203 = vpop.f32.mrf.mxu0
        %v1204 = vadd.f32 %v1155, %v1203
        %1205 = vmatmul.bf16.gmra.mxu0 %v426
        %v1206 = vpop.f32.mrf.mxu0
        %v1207 = vadd.f32 %v1158, %v1206
        %v1208 = vpop.f32.mrf.mxu0
        %v1209 = vadd.f32 %v1160, %v1208
        %1210 = vmatmul.bf16.gmra.mxu0 %v428
        %v1211 = vpop.f32.mrf.mxu0
        %v1212 = vadd.f32 %v1163, %v1211
        %v1213 = vpop.f32.mrf.mxu0
        %v1214 = vadd.f32 %v1165, %v1213
        %1215 = vmatmul.bf16.gmra.mxu0 %v430
        %v1216 = vpop.f32.mrf.mxu0
        %v1217 = vadd.f32 %v1168, %v1216
        %v1218 = vpop.f32.mrf.mxu0
        %v1219 = vadd.f32 %v1170, %v1218
        %1220 = vdwg.mxu0
        %1221 = vmatpush.bf16.msra.mxu0 %v780
        %1222 = vmatpush.bf16.msra.mxu0 %v774
        %1223 = vmatpush.bf16.msra.mxu0 %v768
        %1224 = vmatpush.bf16.msra.mxu0 %v762
        %1225 = vmatpush.bf16.msra.mxu0 %v756
        %1226 = vmatpush.bf16.msra.mxu0 %v750
        %1227 = vmatpush.bf16.msra.mxu0 %v744
        %1228 = vmatpush.bf16.msra.mxu0 %v738
        %1229 = vmatmul.bf16.gmra.mxu0 %v415
        %v1230 = vpop.f32.mrf.mxu0
        %v1231 = vadd.f32 0.0, %v1230
        %v1232 = vpop.f32.mrf.mxu0
        %v1233 = vadd.f32 0.0, %v1232
        %1234 = vmatmul.bf16.gmra.mxu0 %v417
        %v1235 = vpop.f32.mrf.mxu0
        %v1236 = vadd.f32 0.0, %v1235
        %v1237 = vpop.f32.mrf.mxu0
        %v1238 = vadd.f32 0.0, %v1237
        %1239 = vmatmul.bf16.gmra.mxu0 %v419
        %v1240 = vpop.f32.mrf.mxu0
        %v1241 = vadd.f32 0.0, %v1240
        %v1242 = vpop.f32.mrf.mxu0
        %v1243 = vadd.f32 0.0, %v1242
        %1244 = vmatmul.bf16.gmra.mxu0 %v421
        %v1245 = vpop.f32.mrf.mxu0
        %v1246 = vadd.f32 0.0, %v1245
        %v1247 = vpop.f32.mrf.mxu0
        %v1248 = vadd.f32 0.0, %v1247
        %1249 = vmatmul.bf16.gmra.mxu0 %v423
        %v1250 = vpop.f32.mrf.mxu0
        %v1251 = vadd.f32 0.0, %v1250
        %v1252 = vpop.f32.mrf.mxu0
        %v1253 = vadd.f32 0.0, %v1252
        %1254 = vmatmul.bf16.gmra.mxu0 %v425
        %v1255 = vpop.f32.mrf.mxu0
        %v1256 = vadd.f32 0.0, %v1255
        %v1257 = vpop.f32.mrf.mxu0
        %v1258 = vadd.f32 0.0, %v1257
        %1259 = vmatmul.bf16.gmra.mxu0 %v427
        %v1260 = vpop.f32.mrf.mxu0
        %v1261 = vadd.f32 0.0, %v1260
        %v1262 = vpop.f32.mrf.mxu0
        %v1263 = vadd.f32 0.0, %v1262
        %1264 = vmatmul.bf16.gmra.mxu0 %v429
        %v1265 = vpop.f32.mrf.mxu0
        %v1266 = vadd.f32 0.0, %v1265
        %v1267 = vpop.f32.mrf.mxu0
        %v1268 = vadd.f32 0.0, %v1267
        %1269 = vdwg.mxu0
        %1270 = vmatpush.bf16.msra.mxu0 %v828
        %1271 = vmatpush.bf16.msra.mxu0 %v822
        %1272 = vmatpush.bf16.msra.mxu0 %v816
        %1273 = vmatpush.bf16.msra.mxu0 %v810
        %1274 = vmatpush.bf16.msra.mxu0 %v804
        %1275 = vmatpush.bf16.msra.mxu0 %v798
        %1276 = vmatpush.bf16.msra.mxu0 %v792
        %1277 = vmatpush.bf16.msra.mxu0 %v786
        %1278 = vmatmul.bf16.gmra.mxu0 %v416
        %v1279 = vpop.f32.mrf.mxu0
        %v1280 = vadd.f32 %v1231, %v1279
        %v1281 = vpop.f32.mrf.mxu0
        %v1282 = vadd.f32 %v1233, %v1281
        %1283 = vmatmul.bf16.gmra.mxu0 %v418
        %v1284 = vpop.f32.mrf.mxu0
        %v1285 = vadd.f32 %v1236, %v1284
        %v1286 = vpop.f32.mrf.mxu0
        %v1287 = vadd.f32 %v1238, %v1286
        %1288 = vmatmul.bf16.gmra.mxu0 %v420
        %v1289 = vpop.f32.mrf.mxu0
        %v1290 = vadd.f32 %v1241, %v1289
        %v1291 = vpop.f32.mrf.mxu0
        %v1292 = vadd.f32 %v1243, %v1291
        %1293 = vmatmul.bf16.gmra.mxu0 %v422
        %v1294 = vpop.f32.mrf.mxu0
        %v1295 = vadd.f32 %v1246, %v1294
        %v1296 = vpop.f32.mrf.mxu0
        %v1297 = vadd.f32 %v1248, %v1296
        %1298 = vmatmul.bf16.gmra.mxu0 %v424
        %v1299 = vpop.f32.mrf.mxu0
        %v1300 = vadd.f32 %v1251, %v1299
        %v1301 = vpop.f32.mrf.mxu0
        %v1302 = vadd.f32 %v1253, %v1301
        %1303 = vmatmul.bf16.gmra.mxu0 %v426
        %v1304 = vpop.f32.mrf.mxu0
        %v1305 = vadd.f32 %v1256, %v1304
        %v1306 = vpop.f32.mrf.mxu0
        %v1307 = vadd.f32 %v1258, %v1306
        %1308 = vmatmul.bf16.gmra.mxu0 %v428
        %v1309 = vpop.f32.mrf.mxu0
        %v1310 = vadd.f32 %v1261, %v1309
        %v1311 = vpop.f32.mrf.mxu0
        %v1312 = vadd.f32 %v1263, %v1311
        %1313 = vmatmul.bf16.gmra.mxu0 %v430
        %v1314 = vpop.f32.mrf.mxu0
        %v1315 = vadd.f32 %v1266, %v1314
        %v1316 = vpop.f32.mrf.mxu0
        %v1317 = vadd.f32 %v1268, %v1316
        %1318 = vdwg.mxu0
        %1319 = vmatpush.bf16.msra.mxu0 %v781
        %1320 = vmatpush.bf16.msra.mxu0 %v775
        %1321 = vmatpush.bf16.msra.mxu0 %v769
        %1322 = vmatpush.bf16.msra.mxu0 %v763
        %1323 = vmatpush.bf16.msra.mxu0 %v757
        %1324 = vmatpush.bf16.msra.mxu0 %v751
        %1325 = vmatpush.bf16.msra.mxu0 %v745
        %1326 = vmatpush.bf16.msra.mxu0 %v739
        %1327 = vmatmul.bf16.gmra.mxu0 %v415
        %v1328 = vpop.f32.mrf.mxu0
        %v1329 = vadd.f32 0.0, %v1328
        %v1330 = vpop.f32.mrf.mxu0
        %v1331 = vadd.f32 0.0, %v1330
        %1332 = vmatmul.bf16.gmra.mxu0 %v417
        %v1333 = vpop.f32.mrf.mxu0
        %v1334 = vadd.f32 0.0, %v1333
        %v1335 = vpop.f32.mrf.mxu0
        %v1336 = vadd.f32 0.0, %v1335
        %1337 = vmatmul.bf16.gmra.mxu0 %v419
        %v1338 = vpop.f32.mrf.mxu0
        %v1339 = vadd.f32 0.0, %v1338
        %v1340 = vpop.f32.mrf.mxu0
        %v1341 = vadd.f32 0.0, %v1340
        %1342 = vmatmul.bf16.gmra.mxu0 %v421
        %v1343 = vpop.f32.mrf.mxu0
        %v1344 = vadd.f32 0.0, %v1343
        %v1345 = vpop.f32.mrf.mxu0
        %v1346 = vadd.f32 0.0, %v1345
        %1347 = vmatmul.bf16.gmra.mxu0 %v423
        %v1348 = vpop.f32.mrf.mxu0
        %v1349 = vadd.f32 0.0, %v1348
        %v1350 = vpop.f32.mrf.mxu0
        %v1351 = vadd.f32 0.0, %v1350
        %1352 = vmatmul.bf16.gmra.mxu0 %v425
        %v1353 = vpop.f32.mrf.mxu0
        %v1354 = vadd.f32 0.0, %v1353
        %v1355 = vpop.f32.mrf.mxu0
        %v1356 = vadd.f32 0.0, %v1355
        %1357 = vmatmul.bf16.gmra.mxu0 %v427
        %v1358 = vpop.f32.mrf.mxu0
        %v1359 = vadd.f32 0.0, %v1358
        %v1360 = vpop.f32.mrf.mxu0
        %v1361 = vadd.f32 0.0, %v1360
        %1362 = vmatmul.bf16.gmra.mxu0 %v429
        %v1363 = vpop.f32.mrf.mxu0
        %v1364 = vadd.f32 0.0, %v1363
        %v1365 = vpop.f32.mrf.mxu0
        %v1366 = vadd.f32 0.0, %v1365
        %1367 = vdwg.mxu0
        %1368 = vmatpush.bf16.msra.mxu0 %v829
        %1369 = vmatpush.bf16.msra.mxu0 %v823
        %1370 = vmatpush.bf16.msra.mxu0 %v817
        %1371 = vmatpush.bf16.msra.mxu0 %v811
        %1372 = vmatpush.bf16.msra.mxu0 %v805
        %1373 = vmatpush.bf16.msra.mxu0 %v799
        %1374 = vmatpush.bf16.msra.mxu0 %v793
        %1375 = vmatpush.bf16.msra.mxu0 %v787
        %1376 = vmatmul.bf16.gmra.mxu0 %v416
        %v1377 = vpop.f32.mrf.mxu0
        %v1378 = vadd.f32 %v1329, %v1377
        %v1379 = vpop.f32.mrf.mxu0
        %v1380 = vadd.f32 %v1331, %v1379
        %1381 = vmatmul.bf16.gmra.mxu0 %v418
        %v1382 = vpop.f32.mrf.mxu0
        %v1383 = vadd.f32 %v1334, %v1382
        %v1384 = vpop.f32.mrf.mxu0
        %v1385 = vadd.f32 %v1336, %v1384
        %1386 = vmatmul.bf16.gmra.mxu0 %v420
        %v1387 = vpop.f32.mrf.mxu0
        %v1388 = vadd.f32 %v1339, %v1387
        %v1389 = vpop.f32.mrf.mxu0
        %v1390 = vadd.f32 %v1341, %v1389
        %1391 = vmatmul.bf16.gmra.mxu0 %v422
        %v1392 = vpop.f32.mrf.mxu0
        %v1393 = vadd.f32 %v1344, %v1392
        %v1394 = vpop.f32.mrf.mxu0
        %v1395 = vadd.f32 %v1346, %v1394
        %1396 = vmatmul.bf16.gmra.mxu0 %v424
        %v1397 = vpop.f32.mrf.mxu0
        %v1398 = vadd.f32 %v1349, %v1397
        %v1399 = vpop.f32.mrf.mxu0
        %v1400 = vadd.f32 %v1351, %v1399
        %1401 = vmatmul.bf16.gmra.mxu0 %v426
        %v1402 = vpop.f32.mrf.mxu0
        %v1403 = vadd.f32 %v1354, %v1402
        %v1404 = vpop.f32.mrf.mxu0
        %v1405 = vadd.f32 %v1356, %v1404
        %1406 = vmatmul.bf16.gmra.mxu0 %v428
        %v1407 = vpop.f32.mrf.mxu0
        %v1408 = vadd.f32 %v1359, %v1407
        %v1409 = vpop.f32.mrf.mxu0
        %v1410 = vadd.f32 %v1361, %v1409
        %1411 = vmatmul.bf16.gmra.mxu0 %v430
        %v1412 = vpop.f32.mrf.mxu0
        %v1413 = vadd.f32 %v1364, %v1412
        %v1414 = vpop.f32.mrf.mxu0
        %v1415 = vadd.f32 %v1366, %v1414
        %1416 = vdwg.mxu0
        %1417 = vmatpush.bf16.msra.mxu0 %v782
        %1418 = vmatpush.bf16.msra.mxu0 %v776
        %1419 = vmatpush.bf16.msra.mxu0 %v770
        %1420 = vmatpush.bf16.msra.mxu0 %v764
        %1421 = vmatpush.bf16.msra.mxu0 %v758
        %1422 = vmatpush.bf16.msra.mxu0 %v752
        %1423 = vmatpush.bf16.msra.mxu0 %v746
        %1424 = vmatpush.bf16.msra.mxu0 %v740
        %1425 = vmatmul.bf16.gmra.mxu0 %v415
        %v1426 = vpop.f32.mrf.mxu0
        %v1427 = vadd.f32 0.0, %v1426
        %v1428 = vpop.f32.mrf.mxu0
        %v1429 = vadd.f32 0.0, %v1428
        %1430 = vmatmul.bf16.gmra.mxu0 %v417
        %v1431 = vpop.f32.mrf.mxu0
        %v1432 = vadd.f32 0.0, %v1431
        %v1433 = vpop.f32.mrf.mxu0
        %v1434 = vadd.f32 0.0, %v1433
        %1435 = vmatmul.bf16.gmra.mxu0 %v419
        %v1436 = vpop.f32.mrf.mxu0
        %v1437 = vadd.f32 0.0, %v1436
        %v1438 = vpop.f32.mrf.mxu0
        %v1439 = vadd.f32 0.0, %v1438
        %1440 = vmatmul.bf16.gmra.mxu0 %v421
        %v1441 = vpop.f32.mrf.mxu0
        %v1442 = vadd.f32 0.0, %v1441
        %v1443 = vpop.f32.mrf.mxu0
        %v1444 = vadd.f32 0.0, %v1443
        %1445 = vmatmul.bf16.gmra.mxu0 %v423
        %v1446 = vpop.f32.mrf.mxu0
        %v1447 = vadd.f32 0.0, %v1446
        %v1448 = vpop.f32.mrf.mxu0
        %v1449 = vadd.f32 0.0, %v1448
        %1450 = vmatmul.bf16.gmra.mxu0 %v425
        %v1451 = vpop.f32.mrf.mxu0
        %v1452 = vadd.f32 0.0, %v1451
        %v1453 = vpop.f32.mrf.mxu0
        %v1454 = vadd.f32 0.0, %v1453
        %1455 = vmatmul.bf16.gmra.mxu0 %v427
        %v1456 = vpop.f32.mrf.mxu0
        %v1457 = vadd.f32 0.0, %v1456
        %v1458 = vpop.f32.mrf.mxu0
        %v1459 = vadd.f32 0.0, %v1458
        %1460 = vmatmul.bf16.gmra.mxu0 %v429
        %v1461 = vpop.f32.mrf.mxu0
        %v1462 = vadd.f32 0.0, %v1461
        %v1463 = vpop.f32.mrf.mxu0
        %v1464 = vadd.f32 0.0, %v1463
        %1465 = vdwg.mxu0
        %1466 = vmatpush.bf16.msra.mxu0 %v830
        %1467 = vmatpush.bf16.msra.mxu0 %v824
        %1468 = vmatpush.bf16.msra.mxu0 %v818
        %1469 = vmatpush.bf16.msra.mxu0 %v812
        %1470 = vmatpush.bf16.msra.mxu0 %v806
        %1471 = vmatpush.bf16.msra.mxu0 %v800
        %1472 = vmatpush.bf16.msra.mxu0 %v794
        %1473 = vmatpush.bf16.msra.mxu0 %v788
        %1474 = vmatmul.bf16.gmra.mxu0 %v416
        %v1475 = vpop.f32.mrf.mxu0
        %v1476 = vadd.f32 %v1427, %v1475
        %v1477 = vpop.f32.mrf.mxu0
        %v1478 = vadd.f32 %v1429, %v1477
        %1479 = vmatmul.bf16.gmra.mxu0 %v418
        %v1480 = vpop.f32.mrf.mxu0
        %v1481 = vadd.f32 %v1432, %v1480
        %v1482 = vpop.f32.mrf.mxu0
        %v1483 = vadd.f32 %v1434, %v1482
        %1484 = vmatmul.bf16.gmra.mxu0 %v420
        %v1485 = vpop.f32.mrf.mxu0
        %v1486 = vadd.f32 %v1437, %v1485
        %v1487 = vpop.f32.mrf.mxu0
        %v1488 = vadd.f32 %v1439, %v1487
        %1489 = vmatmul.bf16.gmra.mxu0 %v422
        %v1490 = vpop.f32.mrf.mxu0
        %v1491 = vadd.f32 %v1442, %v1490
        %v1492 = vpop.f32.mrf.mxu0
        %v1493 = vadd.f32 %v1444, %v1492
        %1494 = vmatmul.bf16.gmra.mxu0 %v424
        %v1495 = vpop.f32.mrf.mxu0
        %v1496 = vadd.f32 %v1447, %v1495
        %v1497 = vpop.f32.mrf.mxu0
        %v1498 = vadd.f32 %v1449, %v1497
        %1499 = vmatmul.bf16.gmra.mxu0 %v426
        %v1500 = vpop.f32.mrf.mxu0
        %v1501 = vadd.f32 %v1452, %v1500
        %v1502 = vpop.f32.mrf.mxu0
        %v1503 = vadd.f32 %v1454, %v1502
        %1504 = vmatmul.bf16.gmra.mxu0 %v428
        %v1505 = vpop.f32.mrf.mxu0
        %v1506 = vadd.f32 %v1457, %v1505
        %v1507 = vpop.f32.mrf.mxu0
        %v1508 = vadd.f32 %v1459, %v1507
        %1509 = vmatmul.bf16.gmra.mxu0 %v430
        %v1510 = vpop.f32.mrf.mxu0
        %v1511 = vadd.f32 %v1462, %v1510
        %v1512 = vpop.f32.mrf.mxu0
        %v1513 = vadd.f32 %v1464, %v1512
        %1514 = vdwg.mxu0
        %v1515 = vpack.c.bf16 %v1084, %v986
        %v1516 = vpack.c.bf16 %v1280, %v1182
        %v1517 = vpack.c.bf16 %v1476, %v1378
        %v1518 = vpack.c.bf16 %v1086, %v988
        %v1519 = vpack.c.bf16 %v1282, %v1184
        %v1520 = vpack.c.bf16 %v1478, %v1380
        %v1521 = vpack.c.bf16 %v1089, %v991
        %v1522 = vpack.c.bf16 %v1285, %v1187
        %v1523 = vpack.c.bf16 %v1481, %v1383
        %v1524 = vpack.c.bf16 %v1091, %v993
        %v1525 = vpack.c.bf16 %v1287, %v1189
        %v1526 = vpack.c.bf16 %v1483, %v1385
        %v1527 = vpack.c.bf16 %v1094, %v996
        %v1528 = vpack.c.bf16 %v1290, %v1192
        %v1529 = vpack.c.bf16 %v1486, %v1388
        %v1530 = vpack.c.bf16 %v1096, %v998
        %v1531 = vpack.c.bf16 %v1292, %v1194
        %v1532 = vpack.c.bf16 %v1488, %v1390
        %v1533 = vpack.c.bf16 %v1099, %v1001
        %v1534 = vpack.c.bf16 %v1295, %v1197
        %v1535 = vpack.c.bf16 %v1491, %v1393
        %v1536 = vpack.c.bf16 %v1101, %v1003
        %v1537 = vpack.c.bf16 %v1297, %v1199
        %v1538 = vpack.c.bf16 %v1493, %v1395
        %v1539 = vpack.c.bf16 %v1104, %v1006
        %v1540 = vpack.c.bf16 %v1300, %v1202
        %v1541 = vpack.c.bf16 %v1496, %v1398
        %v1542 = vpack.c.bf16 %v1106, %v1008
        %v1543 = vpack.c.bf16 %v1302, %v1204
        %v1544 = vpack.c.bf16 %v1498, %v1400
        %v1545 = vpack.c.bf16 %v1109, %v1011
        %v1546 = vpack.c.bf16 %v1305, %v1207
        %v1547 = vpack.c.bf16 %v1501, %v1403
        %v1548 = vpack.c.bf16 %v1111, %v1013
        %v1549 = vpack.c.bf16 %v1307, %v1209
        %v1550 = vpack.c.bf16 %v1503, %v1405
        %v1551 = vpack.c.bf16 %v1114, %v1016
        %v1552 = vpack.c.bf16 %v1310, %v1212
        %v1553 = vpack.c.bf16 %v1506, %v1408
        %v1554 = vpack.c.bf16 %v1116, %v1018
        %v1555 = vpack.c.bf16 %v1312, %v1214
        %v1556 = vpack.c.bf16 %v1508, %v1410
        %v1557 = vpack.c.bf16 %v1119, %v1021
        %v1558 = vpack.c.bf16 %v1315, %v1217
        %v1559 = vpack.c.bf16 %v1511, %v1413
        %v1560 = vpack.c.bf16 %v1121, %v1023
        %v1561 = vpack.c.bf16 %v1317, %v1219
        %v1562 = vpack.c.bf16 %v1513, %v1415
        %v1579 = vrot.slane %v1515, 4
        %v1580 = vrot.slane %v1518, 4
        %v1581 = vrot.slane %v1521, 4
        %v1582 = vrot.slane %v1524, 4
        %v1583 = vrot.slane %v1527, 4
        %v1584 = vrot.slane %v1530, 4
        %v1585 = vrot.slane %v1533, 4
        %v1586 = vrot.slane %v1536, 4
        %v1587 = vrot.slane %v1539, 4
        %v1588 = vrot.slane %v1542, 4
        %v1589 = vrot.slane %v1545, 4
        %v1590 = vrot.slane %v1548, 4
        %v1591 = vrot.slane %v1551, 4
        %v1592 = vrot.slane %v1554, 4
        %v1593 = vrot.slane %v1557, 4
        %v1594 = vrot.slane %v1560, 4
        %1595 = vrot.lane.b32.xlu0 %v1515, 64
        %v1596 = vpop.permute.xlu0 %1595
        %1597 = vrot.lane.b32.xlu0 %v1518, 64
        %v1598 = vpop.permute.xlu0 %1597
        %1599 = vrot.lane.b32.xlu0 %v1521, 64
        %v1600 = vpop.permute.xlu0 %1599
        %1601 = vrot.lane.b32.xlu0 %v1524, 64
        %v1602 = vpop.permute.xlu0 %1601
        %1603 = vrot.lane.b32.xlu0 %v1527, 64
        %v1604 = vpop.permute.xlu0 %1603
        %1605 = vrot.lane.b32.xlu0 %v1530, 64
        %v1606 = vpop.permute.xlu0 %1605
        %1607 = vrot.lane.b32.xlu0 %v1533, 64
        %v1608 = vpop.permute.xlu0 %1607
        %1609 = vrot.lane.b32.xlu0 %v1536, 64
        %v1610 = vpop.permute.xlu0 %1609
        %1611 = vrot.lane.b32.xlu0 %v1539, 64
        %v1612 = vpop.permute.xlu0 %1611
        %1613 = vrot.lane.b32.xlu0 %v1542, 64
        %v1614 = vpop.permute.xlu0 %1613
        %1615 = vrot.lane.b32.xlu0 %v1545, 64
        %v1616 = vpop.permute.xlu0 %1615
        %1617 = vrot.lane.b32.xlu0 %v1548, 64
        %v1618 = vpop.permute.xlu0 %1617
        %1619 = vrot.lane.b32.xlu0 %v1551, 64
        %v1620 = vpop.permute.xlu0 %1619
        %1621 = vrot.lane.b32.xlu0 %v1554, 64
        %v1622 = vpop.permute.xlu0 %1621
        %1623 = vrot.lane.b32.xlu0 %v1557, 64
        %v1624 = vpop.permute.xlu0 %1623
        %1625 = vrot.lane.b32.xlu0 %v1560, 64
        %v1626 = vpop.permute.xlu0 %1625
        %v1627 = vrot.slane %v1596, 4
        %v1628 = vrot.slane %v1598, 4
        %v1629 = vrot.slane %v1600, 4
        %v1630 = vrot.slane %v1602, 4
        %v1631 = vrot.slane %v1604, 4
        %v1632 = vrot.slane %v1606, 4
        %v1633 = vrot.slane %v1608, 4
        %v1634 = vrot.slane %v1610, 4
        %v1635 = vrot.slane %v1612, 4
        %v1636 = vrot.slane %v1614, 4
        %v1637 = vrot.slane %v1616, 4
        %v1638 = vrot.slane %v1618, 4
        %v1639 = vrot.slane %v1620, 4
        %v1640 = vrot.slane %v1622, 4
        %v1641 = vrot.slane %v1624, 4
        %v1642 = vrot.slane %v1626, 4
        %v1645 = vpack.i.b16 %v1596, %v1515
        %v1646 = vshrl.u32 %v1515, 16
        %v1647 = vshrl.u32 %v1596, 16
        %v1648 = vpack.i.b16 %v1647, %v1646
        %v1651 = vpack.i.b16 %v1627, %v1579
        %v1652 = vshrl.u32 %v1579, 16
        %v1653 = vshrl.u32 %v1627, 16
        %v1654 = vpack.i.b16 %v1653, %v1652
        %v1657 = vpack.i.b16 %v1598, %v1518
        %v1658 = vshrl.u32 %v1518, 16
        %v1659 = vshrl.u32 %v1598, 16
        %v1660 = vpack.i.b16 %v1659, %v1658
        %v1663 = vpack.i.b16 %v1628, %v1580
        %v1664 = vshrl.u32 %v1580, 16
        %v1665 = vshrl.u32 %v1628, 16
        %v1666 = vpack.i.b16 %v1665, %v1664
        %v1669 = vpack.i.b16 %v1600, %v1521
        %v1670 = vshrl.u32 %v1521, 16
        %v1671 = vshrl.u32 %v1600, 16
        %v1672 = vpack.i.b16 %v1671, %v1670
        %v1675 = vpack.i.b16 %v1629, %v1581
        %v1676 = vshrl.u32 %v1581, 16
        %v1677 = vshrl.u32 %v1629, 16
        %v1678 = vpack.i.b16 %v1677, %v1676
        %v1681 = vpack.i.b16 %v1602, %v1524
        %v1682 = vshrl.u32 %v1524, 16
        %v1683 = vshrl.u32 %v1602, 16
        %v1684 = vpack.i.b16 %v1683, %v1682
        %v1687 = vpack.i.b16 %v1630, %v1582
        %v1688 = vshrl.u32 %v1582, 16
        %v1689 = vshrl.u32 %v1630, 16
        %v1690 = vpack.i.b16 %v1689, %v1688
        %v1693 = vpack.i.b16 %v1604, %v1527
        %v1694 = vshrl.u32 %v1527, 16
        %v1695 = vshrl.u32 %v1604, 16
        %v1696 = vpack.i.b16 %v1695, %v1694
        %v1699 = vpack.i.b16 %v1631, %v1583
        %v1700 = vshrl.u32 %v1583, 16
        %v1701 = vshrl.u32 %v1631, 16
        %v1702 = vpack.i.b16 %v1701, %v1700
        %v1705 = vpack.i.b16 %v1606, %v1530
        %v1706 = vshrl.u32 %v1530, 16
        %v1707 = vshrl.u32 %v1606, 16
        %v1708 = vpack.i.b16 %v1707, %v1706
        %v1711 = vpack.i.b16 %v1632, %v1584
        %v1712 = vshrl.u32 %v1584, 16
        %v1713 = vshrl.u32 %v1632, 16
        %v1714 = vpack.i.b16 %v1713, %v1712
        %v1717 = vpack.i.b16 %v1608, %v1533
        %v1718 = vshrl.u32 %v1533, 16
        %v1719 = vshrl.u32 %v1608, 16
        %v1720 = vpack.i.b16 %v1719, %v1718
        %v1723 = vpack.i.b16 %v1633, %v1585
        %v1724 = vshrl.u32 %v1585, 16
        %v1725 = vshrl.u32 %v1633, 16
        %v1726 = vpack.i.b16 %v1725, %v1724
        %v1729 = vpack.i.b16 %v1610, %v1536
        %v1730 = vshrl.u32 %v1536, 16
        %v1731 = vshrl.u32 %v1610, 16
        %v1732 = vpack.i.b16 %v1731, %v1730
        %v1735 = vpack.i.b16 %v1634, %v1586
        %v1736 = vshrl.u32 %v1586, 16
        %v1737 = vshrl.u32 %v1634, 16
        %v1738 = vpack.i.b16 %v1737, %v1736
        %v1741 = vpack.i.b16 %v1612, %v1539
        %v1742 = vshrl.u32 %v1539, 16
        %v1743 = vshrl.u32 %v1612, 16
        %v1744 = vpack.i.b16 %v1743, %v1742
        %v1747 = vpack.i.b16 %v1635, %v1587
        %v1748 = vshrl.u32 %v1587, 16
        %v1749 = vshrl.u32 %v1635, 16
        %v1750 = vpack.i.b16 %v1749, %v1748
        %v1753 = vpack.i.b16 %v1614, %v1542
        %v1754 = vshrl.u32 %v1542, 16
        %v1755 = vshrl.u32 %v1614, 16
        %v1756 = vpack.i.b16 %v1755, %v1754
        %v1759 = vpack.i.b16 %v1636, %v1588
        %v1760 = vshrl.u32 %v1588, 16
        %v1761 = vshrl.u32 %v1636, 16
        %v1762 = vpack.i.b16 %v1761, %v1760
        %v1765 = vpack.i.b16 %v1616, %v1545
        %v1766 = vshrl.u32 %v1545, 16
        %v1767 = vshrl.u32 %v1616, 16
        %v1768 = vpack.i.b16 %v1767, %v1766
        %v1771 = vpack.i.b16 %v1637, %v1589
        %v1772 = vshrl.u32 %v1589, 16
        %v1773 = vshrl.u32 %v1637, 16
        %v1774 = vpack.i.b16 %v1773, %v1772
        %v1777 = vpack.i.b16 %v1618, %v1548
        %v1778 = vshrl.u32 %v1548, 16
        %v1779 = vshrl.u32 %v1618, 16
        %v1780 = vpack.i.b16 %v1779, %v1778
        %v1783 = vpack.i.b16 %v1638, %v1590
        %v1784 = vshrl.u32 %v1590, 16
        %v1785 = vshrl.u32 %v1638, 16
        %v1786 = vpack.i.b16 %v1785, %v1784
        %v1789 = vpack.i.b16 %v1620, %v1551
        %v1790 = vshrl.u32 %v1551, 16
        %v1791 = vshrl.u32 %v1620, 16
        %v1792 = vpack.i.b16 %v1791, %v1790
        %v1795 = vpack.i.b16 %v1639, %v1591
        %v1796 = vshrl.u32 %v1591, 16
        %v1797 = vshrl.u32 %v1639, 16
        %v1798 = vpack.i.b16 %v1797, %v1796
        %v1801 = vpack.i.b16 %v1622, %v1554
        %v1802 = vshrl.u32 %v1554, 16
        %v1803 = vshrl.u32 %v1622, 16
        %v1804 = vpack.i.b16 %v1803, %v1802
        %v1807 = vpack.i.b16 %v1640, %v1592
        %v1808 = vshrl.u32 %v1592, 16
        %v1809 = vshrl.u32 %v1640, 16
        %v1810 = vpack.i.b16 %v1809, %v1808
        %v1813 = vpack.i.b16 %v1624, %v1557
        %v1814 = vshrl.u32 %v1557, 16
        %v1815 = vshrl.u32 %v1624, 16
        %v1816 = vpack.i.b16 %v1815, %v1814
        %v1819 = vpack.i.b16 %v1641, %v1593
        %v1820 = vshrl.u32 %v1593, 16
        %v1821 = vshrl.u32 %v1641, 16
        %v1822 = vpack.i.b16 %v1821, %v1820
        %v1825 = vpack.i.b16 %v1626, %v1560
        %v1826 = vshrl.u32 %v1560, 16
        %v1827 = vshrl.u32 %v1626, 16
        %v1828 = vpack.i.b16 %v1827, %v1826
        %v1831 = vpack.i.b16 %v1642, %v1594
        %v1832 = vshrl.u32 %v1594, 16
        %v1833 = vshrl.u32 %v1642, 16
        %v1834 = vpack.i.b16 %v1833, %v1832
        %v1837 = vunpack.c.l.s4 1983009808
        %v1838 = vunpack.c.0.s8 %v1837
        %v1839 = vperm.slane %v1645, %v1838
        %v1842 = vunpack.c.l.s4 1983009808
        %v1843 = vunpack.c.0.s8 %v1842
        %v1844 = vperm.slane %v1651, %v1843
        %v1845 = vrot.slane %v1844, 4
        %vm1846 = vcmask 1047556
        %v1847 = vsel %vm1846, %v1845, %v1839
        %v1848 = vrot.slane %v1839, 4
        %v1849 = vsel %vm1846, %v1844, %v1848
        %v1851 = vunpack.c.l.s4 1934713408
        %v1852 = vunpack.c.0.s8 %v1851
        %v1853 = vperm.slane %v1847, %v1852
        %v1855 = vunpack.c.l.s4 1934713408
        %v1856 = vunpack.c.0.s8 %v1855
        %v1857 = vperm.slane %v1849, %v1856
        %v1858 = vrot.slane %v1853, 4
        %v1859 = vsel %vm1846, 0, %v1858
        %v1860 = vrot.slane %v1857, 4
        %v1861 = vsel %vm1846, 0, %v1860
        %v1864 = vunpack.c.l.s4 1983009808
        %v1865 = vunpack.c.0.s8 %v1864
        %v1866 = vperm.slane %v1648, %v1865
        %v1869 = vunpack.c.l.s4 1983009808
        %v1870 = vunpack.c.0.s8 %v1869
        %v1871 = vperm.slane %v1654, %v1870
        %v1872 = vrot.slane %v1871, 4
        %v1873 = vsel %vm1846, %v1872, %v1866
        %v1874 = vrot.slane %v1866, 4
        %v1875 = vsel %vm1846, %v1871, %v1874
        %v1877 = vunpack.c.l.s4 1934713408
        %v1878 = vunpack.c.0.s8 %v1877
        %v1879 = vperm.slane %v1873, %v1878
        %v1881 = vunpack.c.l.s4 1934713408
        %v1882 = vunpack.c.0.s8 %v1881
        %v1883 = vperm.slane %v1875, %v1882
        %v1884 = vrot.slane %v1879, 4
        %v1885 = vsel %vm1846, 0, %v1884
        %v1886 = vrot.slane %v1883, 4
        %v1887 = vsel %vm1846, 0, %v1886
        %v1890 = vunpack.c.l.s4 1983009808
        %v1891 = vunpack.c.0.s8 %v1890
        %v1892 = vperm.slane %v1657, %v1891
        %v1895 = vunpack.c.l.s4 1983009808
        %v1896 = vunpack.c.0.s8 %v1895
        %v1897 = vperm.slane %v1663, %v1896
        %v1898 = vrot.slane %v1897, 4
        %v1899 = vsel %vm1846, %v1898, %v1892
        %v1900 = vrot.slane %v1892, 4
        %v1901 = vsel %vm1846, %v1897, %v1900
        %v1903 = vunpack.c.l.s4 1934713408
        %v1904 = vunpack.c.0.s8 %v1903
        %v1905 = vperm.slane %v1899, %v1904
        %v1907 = vunpack.c.l.s4 1934713408
        %v1908 = vunpack.c.0.s8 %v1907
        %v1909 = vperm.slane %v1901, %v1908
        %v1910 = vrot.slane %v1905, 4
        %v1911 = vsel %vm1846, 0, %v1910
        %v1912 = vrot.slane %v1909, 4
        %v1913 = vsel %vm1846, 0, %v1912
        %v1916 = vunpack.c.l.s4 1983009808
        %v1917 = vunpack.c.0.s8 %v1916
        %v1918 = vperm.slane %v1660, %v1917
        %v1921 = vunpack.c.l.s4 1983009808
        %v1922 = vunpack.c.0.s8 %v1921
        %v1923 = vperm.slane %v1666, %v1922
        %v1924 = vrot.slane %v1923, 4
        %v1925 = vsel %vm1846, %v1924, %v1918
        %v1926 = vrot.slane %v1918, 4
        %v1927 = vsel %vm1846, %v1923, %v1926
        %v1929 = vunpack.c.l.s4 1934713408
        %v1930 = vunpack.c.0.s8 %v1929
        %v1931 = vperm.slane %v1925, %v1930
        %v1933 = vunpack.c.l.s4 1934713408
        %v1934 = vunpack.c.0.s8 %v1933
        %v1935 = vperm.slane %v1927, %v1934
        %v1936 = vrot.slane %v1931, 4
        %v1937 = vsel %vm1846, 0, %v1936
        %v1938 = vrot.slane %v1935, 4
        %v1939 = vsel %vm1846, 0, %v1938
        %v1942 = vunpack.c.l.s4 1983009808
        %v1943 = vunpack.c.0.s8 %v1942
        %v1944 = vperm.slane %v1669, %v1943
        %v1947 = vunpack.c.l.s4 1983009808
        %v1948 = vunpack.c.0.s8 %v1947
        %v1949 = vperm.slane %v1675, %v1948
        %v1950 = vrot.slane %v1949, 4
        %v1951 = vsel %vm1846, %v1950, %v1944
        %v1952 = vrot.slane %v1944, 4
        %v1953 = vsel %vm1846, %v1949, %v1952
        %v1955 = vunpack.c.l.s4 1934713408
        %v1956 = vunpack.c.0.s8 %v1955
        %v1957 = vperm.slane %v1951, %v1956
        %v1959 = vunpack.c.l.s4 1934713408
        %v1960 = vunpack.c.0.s8 %v1959
        %v1961 = vperm.slane %v1953, %v1960
        %v1962 = vrot.slane %v1957, 4
        %v1963 = vsel %vm1846, 0, %v1962
        %v1964 = vrot.slane %v1961, 4
        %v1965 = vsel %vm1846, 0, %v1964
        %v1968 = vunpack.c.l.s4 1983009808
        %v1969 = vunpack.c.0.s8 %v1968
        %v1970 = vperm.slane %v1672, %v1969
        %v1973 = vunpack.c.l.s4 1983009808
        %v1974 = vunpack.c.0.s8 %v1973
        %v1975 = vperm.slane %v1678, %v1974
        %v1976 = vrot.slane %v1975, 4
        %v1977 = vsel %vm1846, %v1976, %v1970
        %v1978 = vrot.slane %v1970, 4
        %v1979 = vsel %vm1846, %v1975, %v1978
        %v1981 = vunpack.c.l.s4 1934713408
        %v1982 = vunpack.c.0.s8 %v1981
        %v1983 = vperm.slane %v1977, %v1982
        %v1985 = vunpack.c.l.s4 1934713408
        %v1986 = vunpack.c.0.s8 %v1985
        %v1987 = vperm.slane %v1979, %v1986
        %v1988 = vrot.slane %v1983, 4
        %v1989 = vsel %vm1846, 0, %v1988
        %v1990 = vrot.slane %v1987, 4
        %v1991 = vsel %vm1846, 0, %v1990
        %v1994 = vunpack.c.l.s4 1983009808
        %v1995 = vunpack.c.0.s8 %v1994
        %v1996 = vperm.slane %v1681, %v1995
        %v1999 = vunpack.c.l.s4 1983009808
        %v2000 = vunpack.c.0.s8 %v1999
        %v2001 = vperm.slane %v1687, %v2000
        %v2002 = vrot.slane %v2001, 4
        %v2003 = vsel %vm1846, %v2002, %v1996
        %v2004 = vrot.slane %v1996, 4
        %v2005 = vsel %vm1846, %v2001, %v2004
        %v2007 = vunpack.c.l.s4 1934713408
        %v2008 = vunpack.c.0.s8 %v2007
        %v2009 = vperm.slane %v2003, %v2008
        %v2011 = vunpack.c.l.s4 1934713408
        %v2012 = vunpack.c.0.s8 %v2011
        %v2013 = vperm.slane %v2005, %v2012
        %v2014 = vrot.slane %v2009, 4
        %v2015 = vsel %vm1846, 0, %v2014
        %v2016 = vrot.slane %v2013, 4
        %v2017 = vsel %vm1846, 0, %v2016
        %v2020 = vunpack.c.l.s4 1983009808
        %v2021 = vunpack.c.0.s8 %v2020
        %v2022 = vperm.slane %v1684, %v2021
        %v2025 = vunpack.c.l.s4 1983009808
        %v2026 = vunpack.c.0.s8 %v2025
        %v2027 = vperm.slane %v1690, %v2026
        %v2028 = vrot.slane %v2027, 4
        %v2029 = vsel %vm1846, %v2028, %v2022
        %v2030 = vrot.slane %v2022, 4
        %v2031 = vsel %vm1846, %v2027, %v2030
        %v2033 = vunpack.c.l.s4 1934713408
        %v2034 = vunpack.c.0.s8 %v2033
        %v2035 = vperm.slane %v2029, %v2034
        %v2037 = vunpack.c.l.s4 1934713408
        %v2038 = vunpack.c.0.s8 %v2037
        %v2039 = vperm.slane %v2031, %v2038
        %v2040 = vrot.slane %v2035, 4
        %v2041 = vsel %vm1846, 0, %v2040
        %v2042 = vrot.slane %v2039, 4
        %v2043 = vsel %vm1846, 0, %v2042
        %v2046 = vunpack.c.l.s4 1983009808
        %v2047 = vunpack.c.0.s8 %v2046
        %v2048 = vperm.slane %v1693, %v2047
        %v2051 = vunpack.c.l.s4 1983009808
        %v2052 = vunpack.c.0.s8 %v2051
        %v2053 = vperm.slane %v1699, %v2052
        %v2054 = vrot.slane %v2053, 4
        %v2055 = vsel %vm1846, %v2054, %v2048
        %v2056 = vrot.slane %v2048, 4
        %v2057 = vsel %vm1846, %v2053, %v2056
        %v2059 = vunpack.c.l.s4 1934713408
        %v2060 = vunpack.c.0.s8 %v2059
        %v2061 = vperm.slane %v2055, %v2060
        %v2063 = vunpack.c.l.s4 1934713408
        %v2064 = vunpack.c.0.s8 %v2063
        %v2065 = vperm.slane %v2057, %v2064
        %v2066 = vrot.slane %v2061, 4
        %v2067 = vsel %vm1846, 0, %v2066
        %v2068 = vrot.slane %v2065, 4
        %v2069 = vsel %vm1846, 0, %v2068
        %v2072 = vunpack.c.l.s4 1983009808
        %v2073 = vunpack.c.0.s8 %v2072
        %v2074 = vperm.slane %v1696, %v2073
        %v2077 = vunpack.c.l.s4 1983009808
        %v2078 = vunpack.c.0.s8 %v2077
        %v2079 = vperm.slane %v1702, %v2078
        %v2080 = vrot.slane %v2079, 4
        %v2081 = vsel %vm1846, %v2080, %v2074
        %v2082 = vrot.slane %v2074, 4
        %v2083 = vsel %vm1846, %v2079, %v2082
        %v2085 = vunpack.c.l.s4 1934713408
        %v2086 = vunpack.c.0.s8 %v2085
        %v2087 = vperm.slane %v2081, %v2086
        %v2089 = vunpack.c.l.s4 1934713408
        %v2090 = vunpack.c.0.s8 %v2089
        %v2091 = vperm.slane %v2083, %v2090
        %v2092 = vrot.slane %v2087, 4
        %v2093 = vsel %vm1846, 0, %v2092
        %v2094 = vrot.slane %v2091, 4
        %v2095 = vsel %vm1846, 0, %v2094
        %v2098 = vunpack.c.l.s4 1983009808
        %v2099 = vunpack.c.0.s8 %v2098
        %v2100 = vperm.slane %v1705, %v2099
        %v2103 = vunpack.c.l.s4 1983009808
        %v2104 = vunpack.c.0.s8 %v2103
        %v2105 = vperm.slane %v1711, %v2104
        %v2106 = vrot.slane %v2105, 4
        %v2107 = vsel %vm1846, %v2106, %v2100
        %v2108 = vrot.slane %v2100, 4
        %v2109 = vsel %vm1846, %v2105, %v2108
        %v2111 = vunpack.c.l.s4 1934713408
        %v2112 = vunpack.c.0.s8 %v2111
        %v2113 = vperm.slane %v2107, %v2112
        %v2115 = vunpack.c.l.s4 1934713408
        %v2116 = vunpack.c.0.s8 %v2115
        %v2117 = vperm.slane %v2109, %v2116
        %v2118 = vrot.slane %v2113, 4
        %v2119 = vsel %vm1846, 0, %v2118
        %v2120 = vrot.slane %v2117, 4
        %v2121 = vsel %vm1846, 0, %v2120
        %v2124 = vunpack.c.l.s4 1983009808
        %v2125 = vunpack.c.0.s8 %v2124
        %v2126 = vperm.slane %v1708, %v2125
        %v2129 = vunpack.c.l.s4 1983009808
        %v2130 = vunpack.c.0.s8 %v2129
        %v2131 = vperm.slane %v1714, %v2130
        %v2132 = vrot.slane %v2131, 4
        %v2133 = vsel %vm1846, %v2132, %v2126
        %v2134 = vrot.slane %v2126, 4
        %v2135 = vsel %vm1846, %v2131, %v2134
        %v2137 = vunpack.c.l.s4 1934713408
        %v2138 = vunpack.c.0.s8 %v2137
        %v2139 = vperm.slane %v2133, %v2138
        %v2141 = vunpack.c.l.s4 1934713408
        %v2142 = vunpack.c.0.s8 %v2141
        %v2143 = vperm.slane %v2135, %v2142
        %v2144 = vrot.slane %v2139, 4
        %v2145 = vsel %vm1846, 0, %v2144
        %v2146 = vrot.slane %v2143, 4
        %v2147 = vsel %vm1846, 0, %v2146
        %v2150 = vunpack.c.l.s4 1983009808
        %v2151 = vunpack.c.0.s8 %v2150
        %v2152 = vperm.slane %v1717, %v2151
        %v2155 = vunpack.c.l.s4 1983009808
        %v2156 = vunpack.c.0.s8 %v2155
        %v2157 = vperm.slane %v1723, %v2156
        %v2158 = vrot.slane %v2157, 4
        %v2159 = vsel %vm1846, %v2158, %v2152
        %v2160 = vrot.slane %v2152, 4
        %v2161 = vsel %vm1846, %v2157, %v2160
        %v2163 = vunpack.c.l.s4 1934713408
        %v2164 = vunpack.c.0.s8 %v2163
        %v2165 = vperm.slane %v2159, %v2164
        %v2167 = vunpack.c.l.s4 1934713408
        %v2168 = vunpack.c.0.s8 %v2167
        %v2169 = vperm.slane %v2161, %v2168
        %v2170 = vrot.slane %v2165, 4
        %v2171 = vsel %vm1846, 0, %v2170
        %v2172 = vrot.slane %v2169, 4
        %v2173 = vsel %vm1846, 0, %v2172
        %v2176 = vunpack.c.l.s4 1983009808
        %v2177 = vunpack.c.0.s8 %v2176
        %v2178 = vperm.slane %v1720, %v2177
        %v2181 = vunpack.c.l.s4 1983009808
        %v2182 = vunpack.c.0.s8 %v2181
        %v2183 = vperm.slane %v1726, %v2182
        %v2184 = vrot.slane %v2183, 4
        %v2185 = vsel %vm1846, %v2184, %v2178
        %v2186 = vrot.slane %v2178, 4
        %v2187 = vsel %vm1846, %v2183, %v2186
        %v2189 = vunpack.c.l.s4 1934713408
        %v2190 = vunpack.c.0.s8 %v2189
        %v2191 = vperm.slane %v2185, %v2190
        %v2193 = vunpack.c.l.s4 1934713408
        %v2194 = vunpack.c.0.s8 %v2193
        %v2195 = vperm.slane %v2187, %v2194
        %v2196 = vrot.slane %v2191, 4
        %v2197 = vsel %vm1846, 0, %v2196
        %v2198 = vrot.slane %v2195, 4
        %v2199 = vsel %vm1846, 0, %v2198
        %v2202 = vunpack.c.l.s4 1983009808
        %v2203 = vunpack.c.0.s8 %v2202
        %v2204 = vperm.slane %v1729, %v2203
        %v2207 = vunpack.c.l.s4 1983009808
        %v2208 = vunpack.c.0.s8 %v2207
        %v2209 = vperm.slane %v1735, %v2208
        %v2210 = vrot.slane %v2209, 4
        %v2211 = vsel %vm1846, %v2210, %v2204
        %v2212 = vrot.slane %v2204, 4
        %v2213 = vsel %vm1846, %v2209, %v2212
        %v2215 = vunpack.c.l.s4 1934713408
        %v2216 = vunpack.c.0.s8 %v2215
        %v2217 = vperm.slane %v2211, %v2216
        %v2219 = vunpack.c.l.s4 1934713408
        %v2220 = vunpack.c.0.s8 %v2219
        %v2221 = vperm.slane %v2213, %v2220
        %v2222 = vrot.slane %v2217, 4
        %v2223 = vsel %vm1846, 0, %v2222
        %v2224 = vrot.slane %v2221, 4
        %v2225 = vsel %vm1846, 0, %v2224
        %v2228 = vunpack.c.l.s4 1983009808
        %v2229 = vunpack.c.0.s8 %v2228
        %v2230 = vperm.slane %v1732, %v2229
        %v2233 = vunpack.c.l.s4 1983009808
        %v2234 = vunpack.c.0.s8 %v2233
        %v2235 = vperm.slane %v1738, %v2234
        %v2236 = vrot.slane %v2235, 4
        %v2237 = vsel %vm1846, %v2236, %v2230
        %v2238 = vrot.slane %v2230, 4
        %v2239 = vsel %vm1846, %v2235, %v2238
        %v2241 = vunpack.c.l.s4 1934713408
        %v2242 = vunpack.c.0.s8 %v2241
        %v2243 = vperm.slane %v2237, %v2242
        %v2245 = vunpack.c.l.s4 1934713408
        %v2246 = vunpack.c.0.s8 %v2245
        %v2247 = vperm.slane %v2239, %v2246
        %v2248 = vrot.slane %v2243, 4
        %v2249 = vsel %vm1846, 0, %v2248
        %v2250 = vrot.slane %v2247, 4
        %v2251 = vsel %vm1846, 0, %v2250
        %v2254 = vunpack.c.l.s4 1983009808
        %v2255 = vunpack.c.0.s8 %v2254
        %v2256 = vperm.slane %v1741, %v2255
        %v2259 = vunpack.c.l.s4 1983009808
        %v2260 = vunpack.c.0.s8 %v2259
        %v2261 = vperm.slane %v1747, %v2260
        %v2262 = vrot.slane %v2261, 4
        %v2263 = vsel %vm1846, %v2262, %v2256
        %v2264 = vrot.slane %v2256, 4
        %v2265 = vsel %vm1846, %v2261, %v2264
        %v2267 = vunpack.c.l.s4 1934713408
        %v2268 = vunpack.c.0.s8 %v2267
        %v2269 = vperm.slane %v2263, %v2268
        %v2271 = vunpack.c.l.s4 1934713408
        %v2272 = vunpack.c.0.s8 %v2271
        %v2273 = vperm.slane %v2265, %v2272
        %v2274 = vrot.slane %v2269, 4
        %v2275 = vsel %vm1846, 0, %v2274
        %v2276 = vrot.slane %v2273, 4
        %v2277 = vsel %vm1846, 0, %v2276
        %v2280 = vunpack.c.l.s4 1983009808
        %v2281 = vunpack.c.0.s8 %v2280
        %v2282 = vperm.slane %v1744, %v2281
        %v2285 = vunpack.c.l.s4 1983009808
        %v2286 = vunpack.c.0.s8 %v2285
        %v2287 = vperm.slane %v1750, %v2286
        %v2288 = vrot.slane %v2287, 4
        %v2289 = vsel %vm1846, %v2288, %v2282
        %v2290 = vrot.slane %v2282, 4
        %v2291 = vsel %vm1846, %v2287, %v2290
        %v2293 = vunpack.c.l.s4 1934713408
        %v2294 = vunpack.c.0.s8 %v2293
        %v2295 = vperm.slane %v2289, %v2294
        %v2297 = vunpack.c.l.s4 1934713408
        %v2298 = vunpack.c.0.s8 %v2297
        %v2299 = vperm.slane %v2291, %v2298
        %v2300 = vrot.slane %v2295, 4
        %v2301 = vsel %vm1846, 0, %v2300
        %v2302 = vrot.slane %v2299, 4
        %v2303 = vsel %vm1846, 0, %v2302
        %v2306 = vunpack.c.l.s4 1983009808
        %v2307 = vunpack.c.0.s8 %v2306
        %v2308 = vperm.slane %v1753, %v2307
        %v2311 = vunpack.c.l.s4 1983009808
        %v2312 = vunpack.c.0.s8 %v2311
        %v2313 = vperm.slane %v1759, %v2312
        %v2314 = vrot.slane %v2313, 4
        %v2315 = vsel %vm1846, %v2314, %v2308
        %v2316 = vrot.slane %v2308, 4
        %v2317 = vsel %vm1846, %v2313, %v2316
        %v2319 = vunpack.c.l.s4 1934713408
        %v2320 = vunpack.c.0.s8 %v2319
        %v2321 = vperm.slane %v2315, %v2320
        %v2323 = vunpack.c.l.s4 1934713408
        %v2324 = vunpack.c.0.s8 %v2323
        %v2325 = vperm.slane %v2317, %v2324
        %v2326 = vrot.slane %v2321, 4
        %v2327 = vsel %vm1846, 0, %v2326
        %v2328 = vrot.slane %v2325, 4
        %v2329 = vsel %vm1846, 0, %v2328
        %v2332 = vunpack.c.l.s4 1983009808
        %v2333 = vunpack.c.0.s8 %v2332
        %v2334 = vperm.slane %v1756, %v2333
        %v2337 = vunpack.c.l.s4 1983009808
        %v2338 = vunpack.c.0.s8 %v2337
        %v2339 = vperm.slane %v1762, %v2338
        %v2340 = vrot.slane %v2339, 4
        %v2341 = vsel %vm1846, %v2340, %v2334
        %v2342 = vrot.slane %v2334, 4
        %v2343 = vsel %vm1846, %v2339, %v2342
        %v2345 = vunpack.c.l.s4 1934713408
        %v2346 = vunpack.c.0.s8 %v2345
        %v2347 = vperm.slane %v2341, %v2346
        %v2349 = vunpack.c.l.s4 1934713408
        %v2350 = vunpack.c.0.s8 %v2349
        %v2351 = vperm.slane %v2343, %v2350
        %v2352 = vrot.slane %v2347, 4
        %v2353 = vsel %vm1846, 0, %v2352
        %v2354 = vrot.slane %v2351, 4
        %v2355 = vsel %vm1846, 0, %v2354
        %v2358 = vunpack.c.l.s4 1983009808
        %v2359 = vunpack.c.0.s8 %v2358
        %v2360 = vperm.slane %v1765, %v2359
        %v2363 = vunpack.c.l.s4 1983009808
        %v2364 = vunpack.c.0.s8 %v2363
        %v2365 = vperm.slane %v1771, %v2364
        %v2366 = vrot.slane %v2365, 4
        %v2367 = vsel %vm1846, %v2366, %v2360
        %v2368 = vrot.slane %v2360, 4
        %v2369 = vsel %vm1846, %v2365, %v2368
        %v2371 = vunpack.c.l.s4 1934713408
        %v2372 = vunpack.c.0.s8 %v2371
        %v2373 = vperm.slane %v2367, %v2372
        %v2375 = vunpack.c.l.s4 1934713408
        %v2376 = vunpack.c.0.s8 %v2375
        %v2377 = vperm.slane %v2369, %v2376
        %v2378 = vrot.slane %v2373, 4
        %v2379 = vsel %vm1846, 0, %v2378
        %v2380 = vrot.slane %v2377, 4
        %v2381 = vsel %vm1846, 0, %v2380
        %v2384 = vunpack.c.l.s4 1983009808
        %v2385 = vunpack.c.0.s8 %v2384
        %v2386 = vperm.slane %v1768, %v2385
        %v2389 = vunpack.c.l.s4 1983009808
        %v2390 = vunpack.c.0.s8 %v2389
        %v2391 = vperm.slane %v1774, %v2390
        %v2392 = vrot.slane %v2391, 4
        %v2393 = vsel %vm1846, %v2392, %v2386
        %v2394 = vrot.slane %v2386, 4
        %v2395 = vsel %vm1846, %v2391, %v2394
        %v2397 = vunpack.c.l.s4 1934713408
        %v2398 = vunpack.c.0.s8 %v2397
        %v2399 = vperm.slane %v2393, %v2398
        %v2401 = vunpack.c.l.s4 1934713408
        %v2402 = vunpack.c.0.s8 %v2401
        %v2403 = vperm.slane %v2395, %v2402
        %v2404 = vrot.slane %v2399, 4
        %v2405 = vsel %vm1846, 0, %v2404
        %v2406 = vrot.slane %v2403, 4
        %v2407 = vsel %vm1846, 0, %v2406
        %v2410 = vunpack.c.l.s4 1983009808
        %v2411 = vunpack.c.0.s8 %v2410
        %v2412 = vperm.slane %v1777, %v2411
        %v2415 = vunpack.c.l.s4 1983009808
        %v2416 = vunpack.c.0.s8 %v2415
        %v2417 = vperm.slane %v1783, %v2416
        %v2418 = vrot.slane %v2417, 4
        %v2419 = vsel %vm1846, %v2418, %v2412
        %v2420 = vrot.slane %v2412, 4
        %v2421 = vsel %vm1846, %v2417, %v2420
        %v2423 = vunpack.c.l.s4 1934713408
        %v2424 = vunpack.c.0.s8 %v2423
        %v2425 = vperm.slane %v2419, %v2424
        %v2427 = vunpack.c.l.s4 1934713408
        %v2428 = vunpack.c.0.s8 %v2427
        %v2429 = vperm.slane %v2421, %v2428
        %v2430 = vrot.slane %v2425, 4
        %v2431 = vsel %vm1846, 0, %v2430
        %v2432 = vrot.slane %v2429, 4
        %v2433 = vsel %vm1846, 0, %v2432
        %v2436 = vunpack.c.l.s4 1983009808
        %v2437 = vunpack.c.0.s8 %v2436
        %v2438 = vperm.slane %v1780, %v2437
        %v2441 = vunpack.c.l.s4 1983009808
        %v2442 = vunpack.c.0.s8 %v2441
        %v2443 = vperm.slane %v1786, %v2442
        %v2444 = vrot.slane %v2443, 4
        %v2445 = vsel %vm1846, %v2444, %v2438
        %v2446 = vrot.slane %v2438, 4
        %v2447 = vsel %vm1846, %v2443, %v2446
        %v2449 = vunpack.c.l.s4 1934713408
        %v2450 = vunpack.c.0.s8 %v2449
        %v2451 = vperm.slane %v2445, %v2450
        %v2453 = vunpack.c.l.s4 1934713408
        %v2454 = vunpack.c.0.s8 %v2453
        %v2455 = vperm.slane %v2447, %v2454
        %v2456 = vrot.slane %v2451, 4
        %v2457 = vsel %vm1846, 0, %v2456
        %v2458 = vrot.slane %v2455, 4
        %v2459 = vsel %vm1846, 0, %v2458
        %v2462 = vunpack.c.l.s4 1983009808
        %v2463 = vunpack.c.0.s8 %v2462
        %v2464 = vperm.slane %v1789, %v2463
        %v2467 = vunpack.c.l.s4 1983009808
        %v2468 = vunpack.c.0.s8 %v2467
        %v2469 = vperm.slane %v1795, %v2468
        %v2470 = vrot.slane %v2469, 4
        %v2471 = vsel %vm1846, %v2470, %v2464
        %v2472 = vrot.slane %v2464, 4
        %v2473 = vsel %vm1846, %v2469, %v2472
        %v2475 = vunpack.c.l.s4 1934713408
        %v2476 = vunpack.c.0.s8 %v2475
        %v2477 = vperm.slane %v2471, %v2476
        %v2479 = vunpack.c.l.s4 1934713408
        %v2480 = vunpack.c.0.s8 %v2479
        %v2481 = vperm.slane %v2473, %v2480
        %v2482 = vrot.slane %v2477, 4
        %v2483 = vsel %vm1846, 0, %v2482
        %v2484 = vrot.slane %v2481, 4
        %v2485 = vsel %vm1846, 0, %v2484
        %v2488 = vunpack.c.l.s4 1983009808
        %v2489 = vunpack.c.0.s8 %v2488
        %v2490 = vperm.slane %v1792, %v2489
        %v2493 = vunpack.c.l.s4 1983009808
        %v2494 = vunpack.c.0.s8 %v2493
        %v2495 = vperm.slane %v1798, %v2494
        %v2496 = vrot.slane %v2495, 4
        %v2497 = vsel %vm1846, %v2496, %v2490
        %v2498 = vrot.slane %v2490, 4
        %v2499 = vsel %vm1846, %v2495, %v2498
        %v2501 = vunpack.c.l.s4 1934713408
        %v2502 = vunpack.c.0.s8 %v2501
        %v2503 = vperm.slane %v2497, %v2502
        %v2505 = vunpack.c.l.s4 1934713408
        %v2506 = vunpack.c.0.s8 %v2505
        %v2507 = vperm.slane %v2499, %v2506
        %v2508 = vrot.slane %v2503, 4
        %v2509 = vsel %vm1846, 0, %v2508
        %v2510 = vrot.slane %v2507, 4
        %v2511 = vsel %vm1846, 0, %v2510
        %v2514 = vunpack.c.l.s4 1983009808
        %v2515 = vunpack.c.0.s8 %v2514
        %v2516 = vperm.slane %v1801, %v2515
        %v2519 = vunpack.c.l.s4 1983009808
        %v2520 = vunpack.c.0.s8 %v2519
        %v2521 = vperm.slane %v1807, %v2520
        %v2522 = vrot.slane %v2521, 4
        %v2523 = vsel %vm1846, %v2522, %v2516
        %v2524 = vrot.slane %v2516, 4
        %v2525 = vsel %vm1846, %v2521, %v2524
        %v2527 = vunpack.c.l.s4 1934713408
        %v2528 = vunpack.c.0.s8 %v2527
        %v2529 = vperm.slane %v2523, %v2528
        %v2531 = vunpack.c.l.s4 1934713408
        %v2532 = vunpack.c.0.s8 %v2531
        %v2533 = vperm.slane %v2525, %v2532
        %v2534 = vrot.slane %v2529, 4
        %v2535 = vsel %vm1846, 0, %v2534
        %v2536 = vrot.slane %v2533, 4
        %v2537 = vsel %vm1846, 0, %v2536
        %v2540 = vunpack.c.l.s4 1983009808
        %v2541 = vunpack.c.0.s8 %v2540
        %v2542 = vperm.slane %v1804, %v2541
        %v2545 = vunpack.c.l.s4 1983009808
        %v2546 = vunpack.c.0.s8 %v2545
        %v2547 = vperm.slane %v1810, %v2546
        %v2548 = vrot.slane %v2547, 4
        %v2549 = vsel %vm1846, %v2548, %v2542
        %v2550 = vrot.slane %v2542, 4
        %v2551 = vsel %vm1846, %v2547, %v2550
        %v2553 = vunpack.c.l.s4 1934713408
        %v2554 = vunpack.c.0.s8 %v2553
        %v2555 = vperm.slane %v2549, %v2554
        %v2557 = vunpack.c.l.s4 1934713408
        %v2558 = vunpack.c.0.s8 %v2557
        %v2559 = vperm.slane %v2551, %v2558
        %v2560 = vrot.slane %v2555, 4
        %v2561 = vsel %vm1846, 0, %v2560
        %v2562 = vrot.slane %v2559, 4
        %v2563 = vsel %vm1846, 0, %v2562
        %v2566 = vunpack.c.l.s4 1983009808
        %v2567 = vunpack.c.0.s8 %v2566
        %v2568 = vperm.slane %v1813, %v2567
        %v2571 = vunpack.c.l.s4 1983009808
        %v2572 = vunpack.c.0.s8 %v2571
        %v2573 = vperm.slane %v1819, %v2572
        %v2574 = vrot.slane %v2573, 4
        %v2575 = vsel %vm1846, %v2574, %v2568
        %v2576 = vrot.slane %v2568, 4
        %v2577 = vsel %vm1846, %v2573, %v2576
        %v2579 = vunpack.c.l.s4 1934713408
        %v2580 = vunpack.c.0.s8 %v2579
        %v2581 = vperm.slane %v2575, %v2580
        %v2583 = vunpack.c.l.s4 1934713408
        %v2584 = vunpack.c.0.s8 %v2583
        %v2585 = vperm.slane %v2577, %v2584
        %v2586 = vrot.slane %v2581, 4
        %v2587 = vsel %vm1846, 0, %v2586
        %v2588 = vrot.slane %v2585, 4
        %v2589 = vsel %vm1846, 0, %v2588
        %v2592 = vunpack.c.l.s4 1983009808
        %v2593 = vunpack.c.0.s8 %v2592
        %v2594 = vperm.slane %v1816, %v2593
        %v2597 = vunpack.c.l.s4 1983009808
        %v2598 = vunpack.c.0.s8 %v2597
        %v2599 = vperm.slane %v1822, %v2598
        %v2600 = vrot.slane %v2599, 4
        %v2601 = vsel %vm1846, %v2600, %v2594
        %v2602 = vrot.slane %v2594, 4
        %v2603 = vsel %vm1846, %v2599, %v2602
        %v2605 = vunpack.c.l.s4 1934713408
        %v2606 = vunpack.c.0.s8 %v2605
        %v2607 = vperm.slane %v2601, %v2606
        %v2609 = vunpack.c.l.s4 1934713408
        %v2610 = vunpack.c.0.s8 %v2609
        %v2611 = vperm.slane %v2603, %v2610
        %v2612 = vrot.slane %v2607, 4
        %v2613 = vsel %vm1846, 0, %v2612
        %v2614 = vrot.slane %v2611, 4
        %v2615 = vsel %vm1846, 0, %v2614
        %v2618 = vunpack.c.l.s4 1983009808
        %v2619 = vunpack.c.0.s8 %v2618
        %v2620 = vperm.slane %v1825, %v2619
        %v2623 = vunpack.c.l.s4 1983009808
        %v2624 = vunpack.c.0.s8 %v2623
        %v2625 = vperm.slane %v1831, %v2624
        %v2626 = vrot.slane %v2625, 4
        %v2627 = vsel %vm1846, %v2626, %v2620
        %v2628 = vrot.slane %v2620, 4
        %v2629 = vsel %vm1846, %v2625, %v2628
        %v2631 = vunpack.c.l.s4 1934713408
        %v2632 = vunpack.c.0.s8 %v2631
        %v2633 = vperm.slane %v2627, %v2632
        %v2635 = vunpack.c.l.s4 1934713408
        %v2636 = vunpack.c.0.s8 %v2635
        %v2637 = vperm.slane %v2629, %v2636
        %v2638 = vrot.slane %v2633, 4
        %v2639 = vsel %vm1846, 0, %v2638
        %v2640 = vrot.slane %v2637, 4
        %v2641 = vsel %vm1846, 0, %v2640
        %v2644 = vunpack.c.l.s4 1983009808
        %v2645 = vunpack.c.0.s8 %v2644
        %v2646 = vperm.slane %v1828, %v2645
        %v2649 = vunpack.c.l.s4 1983009808
        %v2650 = vunpack.c.0.s8 %v2649
        %v2651 = vperm.slane %v1834, %v2650
        %v2652 = vrot.slane %v2651, 4
        %v2653 = vsel %vm1846, %v2652, %v2646
        %v2654 = vrot.slane %v2646, 4
        %v2655 = vsel %vm1846, %v2651, %v2654
        %v2657 = vunpack.c.l.s4 1934713408
        %v2658 = vunpack.c.0.s8 %v2657
        %v2659 = vperm.slane %v2653, %v2658
        %v2661 = vunpack.c.l.s4 1934713408
        %v2662 = vunpack.c.0.s8 %v2661
        %v2663 = vperm.slane %v2655, %v2662
        %v2664 = vrot.slane %v2659, 4
        %v2665 = vsel %vm1846, 0, %v2664
        %v2666 = vrot.slane %v2663, 4
        %v2667 = vsel %vm1846, 0, %v2666
        %v2668 = vsel %vm1846, %v1860, %v1853
        %v2670 = vunpack.c.l.s4 1983009808
        %v2671 = vunpack.c.0.s8 %v2670
        %v2672 = vperm.slane %v2668, %v2671
        %v2673 = vrot.slane %v1861, 4
        %v2674 = vsel %vm1846, %v2673, %v1859
        %v2676 = vunpack.c.l.s4 1983009808
        %v2677 = vunpack.c.0.s8 %v2676
        %v2678 = vperm.slane %v2674, %v2677
        %v2679 = vrot.slane %v2678, 4
        %v2680 = vsel %vm1846, %v2679, %v2672
        %v2682 = vunpack.c.l.s4 1934713408
        %v2683 = vunpack.c.0.s8 %v2682
        %v2684 = vperm.slane %v2680, %v2683
        %v2685 = vrot.slane %v2684, 4
        %v2686 = vsel %vm1846, 0, %v2685
        %v2687 = vsel %vm1846, %v1886, %v1879
        %v2689 = vunpack.c.l.s4 1983009808
        %v2690 = vunpack.c.0.s8 %v2689
        %v2691 = vperm.slane %v2687, %v2690
        %v2692 = vrot.slane %v1887, 4
        %v2693 = vsel %vm1846, %v2692, %v1885
        %v2695 = vunpack.c.l.s4 1983009808
        %v2696 = vunpack.c.0.s8 %v2695
        %v2697 = vperm.slane %v2693, %v2696
        %v2698 = vrot.slane %v2697, 4
        %v2699 = vsel %vm1846, %v2698, %v2691
        %v2701 = vunpack.c.l.s4 1934713408
        %v2702 = vunpack.c.0.s8 %v2701
        %v2703 = vperm.slane %v2699, %v2702
        %v2704 = vrot.slane %v2703, 4
        %v2705 = vsel %vm1846, 0, %v2704
        %v2706 = vsel %vm1846, %v1912, %v1905
        %v2708 = vunpack.c.l.s4 1983009808
        %v2709 = vunpack.c.0.s8 %v2708
        %v2710 = vperm.slane %v2706, %v2709
        %v2711 = vrot.slane %v1913, 4
        %v2712 = vsel %vm1846, %v2711, %v1911
        %v2714 = vunpack.c.l.s4 1983009808
        %v2715 = vunpack.c.0.s8 %v2714
        %v2716 = vperm.slane %v2712, %v2715
        %v2717 = vrot.slane %v2716, 4
        %v2718 = vsel %vm1846, %v2717, %v2710
        %v2720 = vunpack.c.l.s4 1934713408
        %v2721 = vunpack.c.0.s8 %v2720
        %v2722 = vperm.slane %v2718, %v2721
        %v2723 = vrot.slane %v2722, 4
        %v2724 = vsel %vm1846, 0, %v2723
        %v2725 = vsel %vm1846, %v1938, %v1931
        %v2727 = vunpack.c.l.s4 1983009808
        %v2728 = vunpack.c.0.s8 %v2727
        %v2729 = vperm.slane %v2725, %v2728
        %v2730 = vrot.slane %v1939, 4
        %v2731 = vsel %vm1846, %v2730, %v1937
        %v2733 = vunpack.c.l.s4 1983009808
        %v2734 = vunpack.c.0.s8 %v2733
        %v2735 = vperm.slane %v2731, %v2734
        %v2736 = vrot.slane %v2735, 4
        %v2737 = vsel %vm1846, %v2736, %v2729
        %v2739 = vunpack.c.l.s4 1934713408
        %v2740 = vunpack.c.0.s8 %v2739
        %v2741 = vperm.slane %v2737, %v2740
        %v2742 = vrot.slane %v2741, 4
        %v2743 = vsel %vm1846, 0, %v2742
        %v2744 = vsel %vm1846, %v1964, %v1957
        %v2746 = vunpack.c.l.s4 1983009808
        %v2747 = vunpack.c.0.s8 %v2746
        %v2748 = vperm.slane %v2744, %v2747
        %v2749 = vrot.slane %v1965, 4
        %v2750 = vsel %vm1846, %v2749, %v1963
        %v2752 = vunpack.c.l.s4 1983009808
        %v2753 = vunpack.c.0.s8 %v2752
        %v2754 = vperm.slane %v2750, %v2753
        %v2755 = vrot.slane %v2754, 4
        %v2756 = vsel %vm1846, %v2755, %v2748
        %v2758 = vunpack.c.l.s4 1934713408
        %v2759 = vunpack.c.0.s8 %v2758
        %v2760 = vperm.slane %v2756, %v2759
        %v2761 = vrot.slane %v2760, 4
        %v2762 = vsel %vm1846, 0, %v2761
        %v2763 = vsel %vm1846, %v1990, %v1983
        %v2765 = vunpack.c.l.s4 1983009808
        %v2766 = vunpack.c.0.s8 %v2765
        %v2767 = vperm.slane %v2763, %v2766
        %v2768 = vrot.slane %v1991, 4
        %v2769 = vsel %vm1846, %v2768, %v1989
        %v2771 = vunpack.c.l.s4 1983009808
        %v2772 = vunpack.c.0.s8 %v2771
        %v2773 = vperm.slane %v2769, %v2772
        %v2774 = vrot.slane %v2773, 4
        %v2775 = vsel %vm1846, %v2774, %v2767
        %v2777 = vunpack.c.l.s4 1934713408
        %v2778 = vunpack.c.0.s8 %v2777
        %v2779 = vperm.slane %v2775, %v2778
        %v2780 = vrot.slane %v2779, 4
        %v2781 = vsel %vm1846, 0, %v2780
        %v2782 = vsel %vm1846, %v2016, %v2009
        %v2784 = vunpack.c.l.s4 1983009808
        %v2785 = vunpack.c.0.s8 %v2784
        %v2786 = vperm.slane %v2782, %v2785
        %v2787 = vrot.slane %v2017, 4
        %v2788 = vsel %vm1846, %v2787, %v2015
        %v2790 = vunpack.c.l.s4 1983009808
        %v2791 = vunpack.c.0.s8 %v2790
        %v2792 = vperm.slane %v2788, %v2791
        %v2793 = vrot.slane %v2792, 4
        %v2794 = vsel %vm1846, %v2793, %v2786
        %v2796 = vunpack.c.l.s4 1934713408
        %v2797 = vunpack.c.0.s8 %v2796
        %v2798 = vperm.slane %v2794, %v2797
        %v2799 = vrot.slane %v2798, 4
        %v2800 = vsel %vm1846, 0, %v2799
        %v2801 = vsel %vm1846, %v2042, %v2035
        %v2803 = vunpack.c.l.s4 1983009808
        %v2804 = vunpack.c.0.s8 %v2803
        %v2805 = vperm.slane %v2801, %v2804
        %v2806 = vrot.slane %v2043, 4
        %v2807 = vsel %vm1846, %v2806, %v2041
        %v2809 = vunpack.c.l.s4 1983009808
        %v2810 = vunpack.c.0.s8 %v2809
        %v2811 = vperm.slane %v2807, %v2810
        %v2812 = vrot.slane %v2811, 4
        %v2813 = vsel %vm1846, %v2812, %v2805
        %v2815 = vunpack.c.l.s4 1934713408
        %v2816 = vunpack.c.0.s8 %v2815
        %v2817 = vperm.slane %v2813, %v2816
        %v2818 = vrot.slane %v2817, 4
        %v2819 = vsel %vm1846, 0, %v2818
        %v2820 = vsel %vm1846, %v2068, %v2061
        %v2822 = vunpack.c.l.s4 1983009808
        %v2823 = vunpack.c.0.s8 %v2822
        %v2824 = vperm.slane %v2820, %v2823
        %v2825 = vrot.slane %v2069, 4
        %v2826 = vsel %vm1846, %v2825, %v2067
        %v2828 = vunpack.c.l.s4 1983009808
        %v2829 = vunpack.c.0.s8 %v2828
        %v2830 = vperm.slane %v2826, %v2829
        %v2831 = vrot.slane %v2830, 4
        %v2832 = vsel %vm1846, %v2831, %v2824
        %v2834 = vunpack.c.l.s4 1934713408
        %v2835 = vunpack.c.0.s8 %v2834
        %v2836 = vperm.slane %v2832, %v2835
        %v2837 = vrot.slane %v2836, 4
        %v2838 = vsel %vm1846, 0, %v2837
        %v2839 = vsel %vm1846, %v2094, %v2087
        %v2841 = vunpack.c.l.s4 1983009808
        %v2842 = vunpack.c.0.s8 %v2841
        %v2843 = vperm.slane %v2839, %v2842
        %v2844 = vrot.slane %v2095, 4
        %v2845 = vsel %vm1846, %v2844, %v2093
        %v2847 = vunpack.c.l.s4 1983009808
        %v2848 = vunpack.c.0.s8 %v2847
        %v2849 = vperm.slane %v2845, %v2848
        %v2850 = vrot.slane %v2849, 4
        %v2851 = vsel %vm1846, %v2850, %v2843
        %v2853 = vunpack.c.l.s4 1934713408
        %v2854 = vunpack.c.0.s8 %v2853
        %v2855 = vperm.slane %v2851, %v2854
        %v2856 = vrot.slane %v2855, 4
        %v2857 = vsel %vm1846, 0, %v2856
        %v2858 = vsel %vm1846, %v2120, %v2113
        %v2860 = vunpack.c.l.s4 1983009808
        %v2861 = vunpack.c.0.s8 %v2860
        %v2862 = vperm.slane %v2858, %v2861
        %v2863 = vrot.slane %v2121, 4
        %v2864 = vsel %vm1846, %v2863, %v2119
        %v2866 = vunpack.c.l.s4 1983009808
        %v2867 = vunpack.c.0.s8 %v2866
        %v2868 = vperm.slane %v2864, %v2867
        %v2869 = vrot.slane %v2868, 4
        %v2870 = vsel %vm1846, %v2869, %v2862
        %v2872 = vunpack.c.l.s4 1934713408
        %v2873 = vunpack.c.0.s8 %v2872
        %v2874 = vperm.slane %v2870, %v2873
        %v2875 = vrot.slane %v2874, 4
        %v2876 = vsel %vm1846, 0, %v2875
        %v2877 = vsel %vm1846, %v2146, %v2139
        %v2879 = vunpack.c.l.s4 1983009808
        %v2880 = vunpack.c.0.s8 %v2879
        %v2881 = vperm.slane %v2877, %v2880
        %v2882 = vrot.slane %v2147, 4
        %v2883 = vsel %vm1846, %v2882, %v2145
        %v2885 = vunpack.c.l.s4 1983009808
        %v2886 = vunpack.c.0.s8 %v2885
        %v2887 = vperm.slane %v2883, %v2886
        %v2888 = vrot.slane %v2887, 4
        %v2889 = vsel %vm1846, %v2888, %v2881
        %v2891 = vunpack.c.l.s4 1934713408
        %v2892 = vunpack.c.0.s8 %v2891
        %v2893 = vperm.slane %v2889, %v2892
        %v2894 = vrot.slane %v2893, 4
        %v2895 = vsel %vm1846, 0, %v2894
        %v2896 = vsel %vm1846, %v2172, %v2165
        %v2898 = vunpack.c.l.s4 1983009808
        %v2899 = vunpack.c.0.s8 %v2898
        %v2900 = vperm.slane %v2896, %v2899
        %v2901 = vrot.slane %v2173, 4
        %v2902 = vsel %vm1846, %v2901, %v2171
        %v2904 = vunpack.c.l.s4 1983009808
        %v2905 = vunpack.c.0.s8 %v2904
        %v2906 = vperm.slane %v2902, %v2905
        %v2907 = vrot.slane %v2906, 4
        %v2908 = vsel %vm1846, %v2907, %v2900
        %v2910 = vunpack.c.l.s4 1934713408
        %v2911 = vunpack.c.0.s8 %v2910
        %v2912 = vperm.slane %v2908, %v2911
        %v2913 = vrot.slane %v2912, 4
        %v2914 = vsel %vm1846, 0, %v2913
        %v2915 = vsel %vm1846, %v2198, %v2191
        %v2917 = vunpack.c.l.s4 1983009808
        %v2918 = vunpack.c.0.s8 %v2917
        %v2919 = vperm.slane %v2915, %v2918
        %v2920 = vrot.slane %v2199, 4
        %v2921 = vsel %vm1846, %v2920, %v2197
        %v2923 = vunpack.c.l.s4 1983009808
        %v2924 = vunpack.c.0.s8 %v2923
        %v2925 = vperm.slane %v2921, %v2924
        %v2926 = vrot.slane %v2925, 4
        %v2927 = vsel %vm1846, %v2926, %v2919
        %v2929 = vunpack.c.l.s4 1934713408
        %v2930 = vunpack.c.0.s8 %v2929
        %v2931 = vperm.slane %v2927, %v2930
        %v2932 = vrot.slane %v2931, 4
        %v2933 = vsel %vm1846, 0, %v2932
        %v2934 = vsel %vm1846, %v2224, %v2217
        %v2936 = vunpack.c.l.s4 1983009808
        %v2937 = vunpack.c.0.s8 %v2936
        %v2938 = vperm.slane %v2934, %v2937
        %v2939 = vrot.slane %v2225, 4
        %v2940 = vsel %vm1846, %v2939, %v2223
        %v2942 = vunpack.c.l.s4 1983009808
        %v2943 = vunpack.c.0.s8 %v2942
        %v2944 = vperm.slane %v2940, %v2943
        %v2945 = vrot.slane %v2944, 4
        %v2946 = vsel %vm1846, %v2945, %v2938
        %v2948 = vunpack.c.l.s4 1934713408
        %v2949 = vunpack.c.0.s8 %v2948
        %v2950 = vperm.slane %v2946, %v2949
        %v2951 = vrot.slane %v2950, 4
        %v2952 = vsel %vm1846, 0, %v2951
        %v2953 = vsel %vm1846, %v2250, %v2243
        %v2955 = vunpack.c.l.s4 1983009808
        %v2956 = vunpack.c.0.s8 %v2955
        %v2957 = vperm.slane %v2953, %v2956
        %v2958 = vrot.slane %v2251, 4
        %v2959 = vsel %vm1846, %v2958, %v2249
        %v2961 = vunpack.c.l.s4 1983009808
        %v2962 = vunpack.c.0.s8 %v2961
        %v2963 = vperm.slane %v2959, %v2962
        %v2964 = vrot.slane %v2963, 4
        %v2965 = vsel %vm1846, %v2964, %v2957
        %v2967 = vunpack.c.l.s4 1934713408
        %v2968 = vunpack.c.0.s8 %v2967
        %v2969 = vperm.slane %v2965, %v2968
        %v2970 = vrot.slane %v2969, 4
        %v2971 = vsel %vm1846, 0, %v2970
        %v2972 = vsel %vm1846, %v2276, %v2269
        %v2974 = vunpack.c.l.s4 1983009808
        %v2975 = vunpack.c.0.s8 %v2974
        %v2976 = vperm.slane %v2972, %v2975
        %v2977 = vrot.slane %v2277, 4
        %v2978 = vsel %vm1846, %v2977, %v2275
        %v2980 = vunpack.c.l.s4 1983009808
        %v2981 = vunpack.c.0.s8 %v2980
        %v2982 = vperm.slane %v2978, %v2981
        %v2983 = vrot.slane %v2982, 4
        %v2984 = vsel %vm1846, %v2983, %v2976
        %v2986 = vunpack.c.l.s4 1934713408
        %v2987 = vunpack.c.0.s8 %v2986
        %v2988 = vperm.slane %v2984, %v2987
        %v2989 = vrot.slane %v2988, 4
        %v2990 = vsel %vm1846, 0, %v2989
        %v2991 = vsel %vm1846, %v2302, %v2295
        %v2993 = vunpack.c.l.s4 1983009808
        %v2994 = vunpack.c.0.s8 %v2993
        %v2995 = vperm.slane %v2991, %v2994
        %v2996 = vrot.slane %v2303, 4
        %v2997 = vsel %vm1846, %v2996, %v2301
        %v2999 = vunpack.c.l.s4 1983009808
        %v3000 = vunpack.c.0.s8 %v2999
        %v3001 = vperm.slane %v2997, %v3000
        %v3002 = vrot.slane %v3001, 4
        %v3003 = vsel %vm1846, %v3002, %v2995
        %v3005 = vunpack.c.l.s4 1934713408
        %v3006 = vunpack.c.0.s8 %v3005
        %v3007 = vperm.slane %v3003, %v3006
        %v3008 = vrot.slane %v3007, 4
        %v3009 = vsel %vm1846, 0, %v3008
        %v3010 = vsel %vm1846, %v2328, %v2321
        %v3012 = vunpack.c.l.s4 1983009808
        %v3013 = vunpack.c.0.s8 %v3012
        %v3014 = vperm.slane %v3010, %v3013
        %v3015 = vrot.slane %v2329, 4
        %v3016 = vsel %vm1846, %v3015, %v2327
        %v3018 = vunpack.c.l.s4 1983009808
        %v3019 = vunpack.c.0.s8 %v3018
        %v3020 = vperm.slane %v3016, %v3019
        %v3021 = vrot.slane %v3020, 4
        %v3022 = vsel %vm1846, %v3021, %v3014
        %v3024 = vunpack.c.l.s4 1934713408
        %v3025 = vunpack.c.0.s8 %v3024
        %v3026 = vperm.slane %v3022, %v3025
        %v3027 = vrot.slane %v3026, 4
        %v3028 = vsel %vm1846, 0, %v3027
        %v3029 = vsel %vm1846, %v2354, %v2347
        %v3031 = vunpack.c.l.s4 1983009808
        %v3032 = vunpack.c.0.s8 %v3031
        %v3033 = vperm.slane %v3029, %v3032
        %v3034 = vrot.slane %v2355, 4
        %v3035 = vsel %vm1846, %v3034, %v2353
        %v3037 = vunpack.c.l.s4 1983009808
        %v3038 = vunpack.c.0.s8 %v3037
        %v3039 = vperm.slane %v3035, %v3038
        %v3040 = vrot.slane %v3039, 4
        %v3041 = vsel %vm1846, %v3040, %v3033
        %v3043 = vunpack.c.l.s4 1934713408
        %v3044 = vunpack.c.0.s8 %v3043
        %v3045 = vperm.slane %v3041, %v3044
        %v3046 = vrot.slane %v3045, 4
        %v3047 = vsel %vm1846, 0, %v3046
        %v3048 = vsel %vm1846, %v2380, %v2373
        %v3050 = vunpack.c.l.s4 1983009808
        %v3051 = vunpack.c.0.s8 %v3050
        %v3052 = vperm.slane %v3048, %v3051
        %v3053 = vrot.slane %v2381, 4
        %v3054 = vsel %vm1846, %v3053, %v2379
        %v3056 = vunpack.c.l.s4 1983009808
        %v3057 = vunpack.c.0.s8 %v3056
        %v3058 = vperm.slane %v3054, %v3057
        %v3059 = vrot.slane %v3058, 4
        %v3060 = vsel %vm1846, %v3059, %v3052
        %v3062 = vunpack.c.l.s4 1934713408
        %v3063 = vunpack.c.0.s8 %v3062
        %v3064 = vperm.slane %v3060, %v3063
        %v3065 = vrot.slane %v3064, 4
        %v3066 = vsel %vm1846, 0, %v3065
        %v3067 = vsel %vm1846, %v2406, %v2399
        %v3069 = vunpack.c.l.s4 1983009808
        %v3070 = vunpack.c.0.s8 %v3069
        %v3071 = vperm.slane %v3067, %v3070
        %v3072 = vrot.slane %v2407, 4
        %v3073 = vsel %vm1846, %v3072, %v2405
        %v3075 = vunpack.c.l.s4 1983009808
        %v3076 = vunpack.c.0.s8 %v3075
        %v3077 = vperm.slane %v3073, %v3076
        %v3078 = vrot.slane %v3077, 4
        %v3079 = vsel %vm1846, %v3078, %v3071
        %v3081 = vunpack.c.l.s4 1934713408
        %v3082 = vunpack.c.0.s8 %v3081
        %v3083 = vperm.slane %v3079, %v3082
        %v3084 = vrot.slane %v3083, 4
        %v3085 = vsel %vm1846, 0, %v3084
        %v3086 = vsel %vm1846, %v2432, %v2425
        %v3088 = vunpack.c.l.s4 1983009808
        %v3089 = vunpack.c.0.s8 %v3088
        %v3090 = vperm.slane %v3086, %v3089
        %v3091 = vrot.slane %v2433, 4
        %v3092 = vsel %vm1846, %v3091, %v2431
        %v3094 = vunpack.c.l.s4 1983009808
        %v3095 = vunpack.c.0.s8 %v3094
        %v3096 = vperm.slane %v3092, %v3095
        %v3097 = vrot.slane %v3096, 4
        %v3098 = vsel %vm1846, %v3097, %v3090
        %v3100 = vunpack.c.l.s4 1934713408
        %v3101 = vunpack.c.0.s8 %v3100
        %v3102 = vperm.slane %v3098, %v3101
        %v3103 = vrot.slane %v3102, 4
        %v3104 = vsel %vm1846, 0, %v3103
        %v3105 = vsel %vm1846, %v2458, %v2451
        %v3107 = vunpack.c.l.s4 1983009808
        %v3108 = vunpack.c.0.s8 %v3107
        %v3109 = vperm.slane %v3105, %v3108
        %v3110 = vrot.slane %v2459, 4
        %v3111 = vsel %vm1846, %v3110, %v2457
        %v3113 = vunpack.c.l.s4 1983009808
        %v3114 = vunpack.c.0.s8 %v3113
        %v3115 = vperm.slane %v3111, %v3114
        %v3116 = vrot.slane %v3115, 4
        %v3117 = vsel %vm1846, %v3116, %v3109
        %v3119 = vunpack.c.l.s4 1934713408
        %v3120 = vunpack.c.0.s8 %v3119
        %v3121 = vperm.slane %v3117, %v3120
        %v3122 = vrot.slane %v3121, 4
        %v3123 = vsel %vm1846, 0, %v3122
        %v3124 = vsel %vm1846, %v2484, %v2477
        %v3126 = vunpack.c.l.s4 1983009808
        %v3127 = vunpack.c.0.s8 %v3126
        %v3128 = vperm.slane %v3124, %v3127
        %v3129 = vrot.slane %v2485, 4
        %v3130 = vsel %vm1846, %v3129, %v2483
        %v3132 = vunpack.c.l.s4 1983009808
        %v3133 = vunpack.c.0.s8 %v3132
        %v3134 = vperm.slane %v3130, %v3133
        %v3135 = vrot.slane %v3134, 4
        %v3136 = vsel %vm1846, %v3135, %v3128
        %v3138 = vunpack.c.l.s4 1934713408
        %v3139 = vunpack.c.0.s8 %v3138
        %v3140 = vperm.slane %v3136, %v3139
        %v3141 = vrot.slane %v3140, 4
        %v3142 = vsel %vm1846, 0, %v3141
        %v3143 = vsel %vm1846, %v2510, %v2503
        %v3145 = vunpack.c.l.s4 1983009808
        %v3146 = vunpack.c.0.s8 %v3145
        %v3147 = vperm.slane %v3143, %v3146
        %v3148 = vrot.slane %v2511, 4
        %v3149 = vsel %vm1846, %v3148, %v2509
        %v3151 = vunpack.c.l.s4 1983009808
        %v3152 = vunpack.c.0.s8 %v3151
        %v3153 = vperm.slane %v3149, %v3152
        %v3154 = vrot.slane %v3153, 4
        %v3155 = vsel %vm1846, %v3154, %v3147
        %v3157 = vunpack.c.l.s4 1934713408
        %v3158 = vunpack.c.0.s8 %v3157
        %v3159 = vperm.slane %v3155, %v3158
        %v3160 = vrot.slane %v3159, 4
        %v3161 = vsel %vm1846, 0, %v3160
        %v3162 = vsel %vm1846, %v2536, %v2529
        %v3164 = vunpack.c.l.s4 1983009808
        %v3165 = vunpack.c.0.s8 %v3164
        %v3166 = vperm.slane %v3162, %v3165
        %v3167 = vrot.slane %v2537, 4
        %v3168 = vsel %vm1846, %v3167, %v2535
        %v3170 = vunpack.c.l.s4 1983009808
        %v3171 = vunpack.c.0.s8 %v3170
        %v3172 = vperm.slane %v3168, %v3171
        %v3173 = vrot.slane %v3172, 4
        %v3174 = vsel %vm1846, %v3173, %v3166
        %v3176 = vunpack.c.l.s4 1934713408
        %v3177 = vunpack.c.0.s8 %v3176
        %v3178 = vperm.slane %v3174, %v3177
        %v3179 = vrot.slane %v3178, 4
        %v3180 = vsel %vm1846, 0, %v3179
        %v3181 = vsel %vm1846, %v2562, %v2555
        %v3183 = vunpack.c.l.s4 1983009808
        %v3184 = vunpack.c.0.s8 %v3183
        %v3185 = vperm.slane %v3181, %v3184
        %v3186 = vrot.slane %v2563, 4
        %v3187 = vsel %vm1846, %v3186, %v2561
        %v3189 = vunpack.c.l.s4 1983009808
        %v3190 = vunpack.c.0.s8 %v3189
        %v3191 = vperm.slane %v3187, %v3190
        %v3192 = vrot.slane %v3191, 4
        %v3193 = vsel %vm1846, %v3192, %v3185
        %v3195 = vunpack.c.l.s4 1934713408
        %v3196 = vunpack.c.0.s8 %v3195
        %v3197 = vperm.slane %v3193, %v3196
        %v3198 = vrot.slane %v3197, 4
        %v3199 = vsel %vm1846, 0, %v3198
        %v3200 = vsel %vm1846, %v2588, %v2581
        %v3202 = vunpack.c.l.s4 1983009808
        %v3203 = vunpack.c.0.s8 %v3202
        %v3204 = vperm.slane %v3200, %v3203
        %v3205 = vrot.slane %v2589, 4
        %v3206 = vsel %vm1846, %v3205, %v2587
        %v3208 = vunpack.c.l.s4 1983009808
        %v3209 = vunpack.c.0.s8 %v3208
        %v3210 = vperm.slane %v3206, %v3209
        %v3211 = vrot.slane %v3210, 4
        %v3212 = vsel %vm1846, %v3211, %v3204
        %v3214 = vunpack.c.l.s4 1934713408
        %v3215 = vunpack.c.0.s8 %v3214
        %v3216 = vperm.slane %v3212, %v3215
        %v3217 = vrot.slane %v3216, 4
        %v3218 = vsel %vm1846, 0, %v3217
        %v3219 = vsel %vm1846, %v2614, %v2607
        %v3221 = vunpack.c.l.s4 1983009808
        %v3222 = vunpack.c.0.s8 %v3221
        %v3223 = vperm.slane %v3219, %v3222
        %v3224 = vrot.slane %v2615, 4
        %v3225 = vsel %vm1846, %v3224, %v2613
        %v3227 = vunpack.c.l.s4 1983009808
        %v3228 = vunpack.c.0.s8 %v3227
        %v3229 = vperm.slane %v3225, %v3228
        %v3230 = vrot.slane %v3229, 4
        %v3231 = vsel %vm1846, %v3230, %v3223
        %v3233 = vunpack.c.l.s4 1934713408
        %v3234 = vunpack.c.0.s8 %v3233
        %v3235 = vperm.slane %v3231, %v3234
        %v3236 = vrot.slane %v3235, 4
        %v3237 = vsel %vm1846, 0, %v3236
        %v3238 = vsel %vm1846, %v2640, %v2633
        %v3240 = vunpack.c.l.s4 1983009808
        %v3241 = vunpack.c.0.s8 %v3240
        %v3242 = vperm.slane %v3238, %v3241
        %v3243 = vrot.slane %v2641, 4
        %v3244 = vsel %vm1846, %v3243, %v2639
        %v3246 = vunpack.c.l.s4 1983009808
        %v3247 = vunpack.c.0.s8 %v3246
        %v3248 = vperm.slane %v3244, %v3247
        %v3249 = vrot.slane %v3248, 4
        %v3250 = vsel %vm1846, %v3249, %v3242
        %v3252 = vunpack.c.l.s4 1934713408
        %v3253 = vunpack.c.0.s8 %v3252
        %v3254 = vperm.slane %v3250, %v3253
        %v3255 = vrot.slane %v3254, 4
        %v3256 = vsel %vm1846, 0, %v3255
        %v3257 = vsel %vm1846, %v2666, %v2659
        %v3259 = vunpack.c.l.s4 1983009808
        %v3260 = vunpack.c.0.s8 %v3259
        %v3261 = vperm.slane %v3257, %v3260
        %v3262 = vrot.slane %v2667, 4
        %v3263 = vsel %vm1846, %v3262, %v2665
        %v3265 = vunpack.c.l.s4 1983009808
        %v3266 = vunpack.c.0.s8 %v3265
        %v3267 = vperm.slane %v3263, %v3266
        %v3268 = vrot.slane %v3267, 4
        %v3269 = vsel %vm1846, %v3268, %v3261
        %v3271 = vunpack.c.l.s4 1934713408
        %v3272 = vunpack.c.0.s8 %v3271
        %v3273 = vperm.slane %v3269, %v3272
        %v3274 = vrot.slane %v3273, 4
        %v3275 = vsel %vm1846, 0, %v3274
        %v3278 = vpack.i.b16 %v2703, %v2684
        %v3279 = vshrl.u32 %v2684, 16
        %v3280 = vshrl.u32 %v2703, 16
        %v3281 = vpack.i.b16 %v3280, %v3279
        %v3284 = vpack.i.b16 %v2705, %v2686
        %v3285 = vshrl.u32 %v2686, 16
        %v3286 = vshrl.u32 %v2705, 16
        %v3287 = vpack.i.b16 %v3286, %v3285
        %v3290 = vpack.i.b16 %v2741, %v2722
        %v3291 = vshrl.u32 %v2722, 16
        %v3292 = vshrl.u32 %v2741, 16
        %v3293 = vpack.i.b16 %v3292, %v3291
        %v3296 = vpack.i.b16 %v2743, %v2724
        %v3297 = vshrl.u32 %v2724, 16
        %v3298 = vshrl.u32 %v2743, 16
        %v3299 = vpack.i.b16 %v3298, %v3297
        %v3302 = vpack.i.b16 %v2779, %v2760
        %v3303 = vshrl.u32 %v2760, 16
        %v3304 = vshrl.u32 %v2779, 16
        %v3305 = vpack.i.b16 %v3304, %v3303
        %v3308 = vpack.i.b16 %v2781, %v2762
        %v3309 = vshrl.u32 %v2762, 16
        %v3310 = vshrl.u32 %v2781, 16
        %v3311 = vpack.i.b16 %v3310, %v3309
        %v3314 = vpack.i.b16 %v2817, %v2798
        %v3315 = vshrl.u32 %v2798, 16
        %v3316 = vshrl.u32 %v2817, 16
        %v3317 = vpack.i.b16 %v3316, %v3315
        %v3320 = vpack.i.b16 %v2819, %v2800
        %v3321 = vshrl.u32 %v2800, 16
        %v3322 = vshrl.u32 %v2819, 16
        %v3323 = vpack.i.b16 %v3322, %v3321
        %v3326 = vpack.i.b16 %v2855, %v2836
        %v3327 = vshrl.u32 %v2836, 16
        %v3328 = vshrl.u32 %v2855, 16
        %v3329 = vpack.i.b16 %v3328, %v3327
        %v3332 = vpack.i.b16 %v2857, %v2838
        %v3333 = vshrl.u32 %v2838, 16
        %v3334 = vshrl.u32 %v2857, 16
        %v3335 = vpack.i.b16 %v3334, %v3333
        %v3338 = vpack.i.b16 %v2893, %v2874
        %v3339 = vshrl.u32 %v2874, 16
        %v3340 = vshrl.u32 %v2893, 16
        %v3341 = vpack.i.b16 %v3340, %v3339
        %v3344 = vpack.i.b16 %v2895, %v2876
        %v3345 = vshrl.u32 %v2876, 16
        %v3346 = vshrl.u32 %v2895, 16
        %v3347 = vpack.i.b16 %v3346, %v3345
        %v3350 = vpack.i.b16 %v2931, %v2912
        %v3351 = vshrl.u32 %v2912, 16
        %v3352 = vshrl.u32 %v2931, 16
        %v3353 = vpack.i.b16 %v3352, %v3351
        %v3356 = vpack.i.b16 %v2933, %v2914
        %v3357 = vshrl.u32 %v2914, 16
        %v3358 = vshrl.u32 %v2933, 16
        %v3359 = vpack.i.b16 %v3358, %v3357
        %v3362 = vpack.i.b16 %v2969, %v2950
        %v3363 = vshrl.u32 %v2950, 16
        %v3364 = vshrl.u32 %v2969, 16
        %v3365 = vpack.i.b16 %v3364, %v3363
        %v3368 = vpack.i.b16 %v2971, %v2952
        %v3369 = vshrl.u32 %v2952, 16
        %v3370 = vshrl.u32 %v2971, 16
        %v3371 = vpack.i.b16 %v3370, %v3369
        %v3374 = vpack.i.b16 %v3007, %v2988
        %v3375 = vshrl.u32 %v2988, 16
        %v3376 = vshrl.u32 %v3007, 16
        %v3377 = vpack.i.b16 %v3376, %v3375
        %v3380 = vpack.i.b16 %v3009, %v2990
        %v3381 = vshrl.u32 %v2990, 16
        %v3382 = vshrl.u32 %v3009, 16
        %v3383 = vpack.i.b16 %v3382, %v3381
        %v3386 = vpack.i.b16 %v3045, %v3026
        %v3387 = vshrl.u32 %v3026, 16
        %v3388 = vshrl.u32 %v3045, 16
        %v3389 = vpack.i.b16 %v3388, %v3387
        %v3392 = vpack.i.b16 %v3047, %v3028
        %v3393 = vshrl.u32 %v3028, 16
        %v3394 = vshrl.u32 %v3047, 16
        %v3395 = vpack.i.b16 %v3394, %v3393
        %v3398 = vpack.i.b16 %v3083, %v3064
        %v3399 = vshrl.u32 %v3064, 16
        %v3400 = vshrl.u32 %v3083, 16
        %v3401 = vpack.i.b16 %v3400, %v3399
        %v3404 = vpack.i.b16 %v3085, %v3066
        %v3405 = vshrl.u32 %v3066, 16
        %v3406 = vshrl.u32 %v3085, 16
        %v3407 = vpack.i.b16 %v3406, %v3405
        %v3410 = vpack.i.b16 %v3121, %v3102
        %v3411 = vshrl.u32 %v3102, 16
        %v3412 = vshrl.u32 %v3121, 16
        %v3413 = vpack.i.b16 %v3412, %v3411
        %v3416 = vpack.i.b16 %v3123, %v3104
        %v3417 = vshrl.u32 %v3104, 16
        %v3418 = vshrl.u32 %v3123, 16
        %v3419 = vpack.i.b16 %v3418, %v3417
        %v3422 = vpack.i.b16 %v3159, %v3140
        %v3423 = vshrl.u32 %v3140, 16
        %v3424 = vshrl.u32 %v3159, 16
        %v3425 = vpack.i.b16 %v3424, %v3423
        %v3428 = vpack.i.b16 %v3161, %v3142
        %v3429 = vshrl.u32 %v3142, 16
        %v3430 = vshrl.u32 %v3161, 16
        %v3431 = vpack.i.b16 %v3430, %v3429
        %v3434 = vpack.i.b16 %v3197, %v3178
        %v3435 = vshrl.u32 %v3178, 16
        %v3436 = vshrl.u32 %v3197, 16
        %v3437 = vpack.i.b16 %v3436, %v3435
        %v3440 = vpack.i.b16 %v3199, %v3180
        %v3441 = vshrl.u32 %v3180, 16
        %v3442 = vshrl.u32 %v3199, 16
        %v3443 = vpack.i.b16 %v3442, %v3441
        %v3446 = vpack.i.b16 %v3235, %v3216
        %v3447 = vshrl.u32 %v3216, 16
        %v3448 = vshrl.u32 %v3235, 16
        %v3449 = vpack.i.b16 %v3448, %v3447
        %v3452 = vpack.i.b16 %v3237, %v3218
        %v3453 = vshrl.u32 %v3218, 16
        %v3454 = vshrl.u32 %v3237, 16
        %v3455 = vpack.i.b16 %v3454, %v3453
        %v3458 = vpack.i.b16 %v3273, %v3254
        %v3459 = vshrl.u32 %v3254, 16
        %v3460 = vshrl.u32 %v3273, 16
        %v3461 = vpack.i.b16 %v3460, %v3459
        %v3464 = vpack.i.b16 %v3275, %v3256
        %v3465 = vshrl.u32 %v3256, 16
        %v3466 = vshrl.u32 %v3275, 16
        %v3467 = vpack.i.b16 %v3466, %v3465
        %v3484 = vrot.slane %v1516, 4
        %v3485 = vrot.slane %v1519, 4
        %v3486 = vrot.slane %v1522, 4
        %v3487 = vrot.slane %v1525, 4
        %v3488 = vrot.slane %v1528, 4
        %v3489 = vrot.slane %v1531, 4
        %v3490 = vrot.slane %v1534, 4
        %v3491 = vrot.slane %v1537, 4
        %v3492 = vrot.slane %v1540, 4
        %v3493 = vrot.slane %v1543, 4
        %v3494 = vrot.slane %v1546, 4
        %v3495 = vrot.slane %v1549, 4
        %v3496 = vrot.slane %v1552, 4
        %v3497 = vrot.slane %v1555, 4
        %v3498 = vrot.slane %v1558, 4
        %v3499 = vrot.slane %v1561, 4
        %3500 = vrot.lane.b32.xlu0 %v1516, 64
        %v3501 = vpop.permute.xlu0 %3500
        %3502 = vrot.lane.b32.xlu0 %v1519, 64
        %v3503 = vpop.permute.xlu0 %3502
        %3504 = vrot.lane.b32.xlu0 %v1522, 64
        %v3505 = vpop.permute.xlu0 %3504
        %3506 = vrot.lane.b32.xlu0 %v1525, 64
        %v3507 = vpop.permute.xlu0 %3506
        %3508 = vrot.lane.b32.xlu0 %v1528, 64
        %v3509 = vpop.permute.xlu0 %3508
        %3510 = vrot.lane.b32.xlu0 %v1531, 64
        %v3511 = vpop.permute.xlu0 %3510
        %3512 = vrot.lane.b32.xlu0 %v1534, 64
        %v3513 = vpop.permute.xlu0 %3512
        %3514 = vrot.lane.b32.xlu0 %v1537, 64
        %v3515 = vpop.permute.xlu0 %3514
        %3516 = vrot.lane.b32.xlu0 %v1540, 64
        %v3517 = vpop.permute.xlu0 %3516
        %3518 = vrot.lane.b32.xlu0 %v1543, 64
        %v3519 = vpop.permute.xlu0 %3518
        %3520 = vrot.lane.b32.xlu0 %v1546, 64
        %v3521 = vpop.permute.xlu0 %3520
        %3522 = vrot.lane.b32.xlu0 %v1549, 64
        %v3523 = vpop.permute.xlu0 %3522
        %3524 = vrot.lane.b32.xlu0 %v1552, 64
        %v3525 = vpop.permute.xlu0 %3524
        %3526 = vrot.lane.b32.xlu0 %v1555, 64
        %v3527 = vpop.permute.xlu0 %3526
        %3528 = vrot.lane.b32.xlu0 %v1558, 64
        %v3529 = vpop.permute.xlu0 %3528
        %3530 = vrot.lane.b32.xlu0 %v1561, 64
        %v3531 = vpop.permute.xlu0 %3530
        %v3532 = vrot.slane %v3501, 4
        %v3533 = vrot.slane %v3503, 4
        %v3534 = vrot.slane %v3505, 4
        %v3535 = vrot.slane %v3507, 4
        %v3536 = vrot.slane %v3509, 4
        %v3537 = vrot.slane %v3511, 4
        %v3538 = vrot.slane %v3513, 4
        %v3539 = vrot.slane %v3515, 4
        %v3540 = vrot.slane %v3517, 4
        %v3541 = vrot.slane %v3519, 4
        %v3542 = vrot.slane %v3521, 4
        %v3543 = vrot.slane %v3523, 4
        %v3544 = vrot.slane %v3525, 4
        %v3545 = vrot.slane %v3527, 4
        %v3546 = vrot.slane %v3529, 4
        %v3547 = vrot.slane %v3531, 4
        %v3550 = vpack.i.b16 %v3501, %v1516
        %v3551 = vshrl.u32 %v1516, 16
        %v3552 = vshrl.u32 %v3501, 16
        %v3553 = vpack.i.b16 %v3552, %v3551
        %v3556 = vpack.i.b16 %v3532, %v3484
        %v3557 = vshrl.u32 %v3484, 16
        %v3558 = vshrl.u32 %v3532, 16
        %v3559 = vpack.i.b16 %v3558, %v3557
        %v3562 = vpack.i.b16 %v3503, %v1519
        %v3563 = vshrl.u32 %v1519, 16
        %v3564 = vshrl.u32 %v3503, 16
        %v3565 = vpack.i.b16 %v3564, %v3563
        %v3568 = vpack.i.b16 %v3533, %v3485
        %v3569 = vshrl.u32 %v3485, 16
        %v3570 = vshrl.u32 %v3533, 16
        %v3571 = vpack.i.b16 %v3570, %v3569
        %v3574 = vpack.i.b16 %v3505, %v1522
        %v3575 = vshrl.u32 %v1522, 16
        %v3576 = vshrl.u32 %v3505, 16
        %v3577 = vpack.i.b16 %v3576, %v3575
        %v3580 = vpack.i.b16 %v3534, %v3486
        %v3581 = vshrl.u32 %v3486, 16
        %v3582 = vshrl.u32 %v3534, 16
        %v3583 = vpack.i.b16 %v3582, %v3581
        %v3586 = vpack.i.b16 %v3507, %v1525
        %v3587 = vshrl.u32 %v1525, 16
        %v3588 = vshrl.u32 %v3507, 16
        %v3589 = vpack.i.b16 %v3588, %v3587
        %v3592 = vpack.i.b16 %v3535, %v3487
        %v3593 = vshrl.u32 %v3487, 16
        %v3594 = vshrl.u32 %v3535, 16
        %v3595 = vpack.i.b16 %v3594, %v3593
        %v3598 = vpack.i.b16 %v3509, %v1528
        %v3599 = vshrl.u32 %v1528, 16
        %v3600 = vshrl.u32 %v3509, 16
        %v3601 = vpack.i.b16 %v3600, %v3599
        %v3604 = vpack.i.b16 %v3536, %v3488
        %v3605 = vshrl.u32 %v3488, 16
        %v3606 = vshrl.u32 %v3536, 16
        %v3607 = vpack.i.b16 %v3606, %v3605
        %v3610 = vpack.i.b16 %v3511, %v1531
        %v3611 = vshrl.u32 %v1531, 16
        %v3612 = vshrl.u32 %v3511, 16
        %v3613 = vpack.i.b16 %v3612, %v3611
        %v3616 = vpack.i.b16 %v3537, %v3489
        %v3617 = vshrl.u32 %v3489, 16
        %v3618 = vshrl.u32 %v3537, 16
        %v3619 = vpack.i.b16 %v3618, %v3617
        %v3622 = vpack.i.b16 %v3513, %v1534
        %v3623 = vshrl.u32 %v1534, 16
        %v3624 = vshrl.u32 %v3513, 16
        %v3625 = vpack.i.b16 %v3624, %v3623
        %v3628 = vpack.i.b16 %v3538, %v3490
        %v3629 = vshrl.u32 %v3490, 16
        %v3630 = vshrl.u32 %v3538, 16
        %v3631 = vpack.i.b16 %v3630, %v3629
        %v3634 = vpack.i.b16 %v3515, %v1537
        %v3635 = vshrl.u32 %v1537, 16
        %v3636 = vshrl.u32 %v3515, 16
        %v3637 = vpack.i.b16 %v3636, %v3635
        %v3640 = vpack.i.b16 %v3539, %v3491
        %v3641 = vshrl.u32 %v3491, 16
        %v3642 = vshrl.u32 %v3539, 16
        %v3643 = vpack.i.b16 %v3642, %v3641
        %v3646 = vpack.i.b16 %v3517, %v1540
        %v3647 = vshrl.u32 %v1540, 16
        %v3648 = vshrl.u32 %v3517, 16
        %v3649 = vpack.i.b16 %v3648, %v3647
        %v3652 = vpack.i.b16 %v3540, %v3492
        %v3653 = vshrl.u32 %v3492, 16
        %v3654 = vshrl.u32 %v3540, 16
        %v3655 = vpack.i.b16 %v3654, %v3653
        %v3658 = vpack.i.b16 %v3519, %v1543
        %v3659 = vshrl.u32 %v1543, 16
        %v3660 = vshrl.u32 %v3519, 16
        %v3661 = vpack.i.b16 %v3660, %v3659
        %v3664 = vpack.i.b16 %v3541, %v3493
        %v3665 = vshrl.u32 %v3493, 16
        %v3666 = vshrl.u32 %v3541, 16
        %v3667 = vpack.i.b16 %v3666, %v3665
        %v3670 = vpack.i.b16 %v3521, %v1546
        %v3671 = vshrl.u32 %v1546, 16
        %v3672 = vshrl.u32 %v3521, 16
        %v3673 = vpack.i.b16 %v3672, %v3671
        %v3676 = vpack.i.b16 %v3542, %v3494
        %v3677 = vshrl.u32 %v3494, 16
        %v3678 = vshrl.u32 %v3542, 16
        %v3679 = vpack.i.b16 %v3678, %v3677
        %v3682 = vpack.i.b16 %v3523, %v1549
        %v3683 = vshrl.u32 %v1549, 16
        %v3684 = vshrl.u32 %v3523, 16
        %v3685 = vpack.i.b16 %v3684, %v3683
        %v3688 = vpack.i.b16 %v3543, %v3495
        %v3689 = vshrl.u32 %v3495, 16
        %v3690 = vshrl.u32 %v3543, 16
        %v3691 = vpack.i.b16 %v3690, %v3689
        %v3694 = vpack.i.b16 %v3525, %v1552
        %v3695 = vshrl.u32 %v1552, 16
        %v3696 = vshrl.u32 %v3525, 16
        %v3697 = vpack.i.b16 %v3696, %v3695
        %v3700 = vpack.i.b16 %v3544, %v3496
        %v3701 = vshrl.u32 %v3496, 16
        %v3702 = vshrl.u32 %v3544, 16
        %v3703 = vpack.i.b16 %v3702, %v3701
        %v3706 = vpack.i.b16 %v3527, %v1555
        %v3707 = vshrl.u32 %v1555, 16
        %v3708 = vshrl.u32 %v3527, 16
        %v3709 = vpack.i.b16 %v3708, %v3707
        %v3712 = vpack.i.b16 %v3545, %v3497
        %v3713 = vshrl.u32 %v3497, 16
        %v3714 = vshrl.u32 %v3545, 16
        %v3715 = vpack.i.b16 %v3714, %v3713
        %v3718 = vpack.i.b16 %v3529, %v1558
        %v3719 = vshrl.u32 %v1558, 16
        %v3720 = vshrl.u32 %v3529, 16
        %v3721 = vpack.i.b16 %v3720, %v3719
        %v3724 = vpack.i.b16 %v3546, %v3498
        %v3725 = vshrl.u32 %v3498, 16
        %v3726 = vshrl.u32 %v3546, 16
        %v3727 = vpack.i.b16 %v3726, %v3725
        %v3730 = vpack.i.b16 %v3531, %v1561
        %v3731 = vshrl.u32 %v1561, 16
        %v3732 = vshrl.u32 %v3531, 16
        %v3733 = vpack.i.b16 %v3732, %v3731
        %v3736 = vpack.i.b16 %v3547, %v3499
        %v3737 = vshrl.u32 %v3499, 16
        %v3738 = vshrl.u32 %v3547, 16
        %v3739 = vpack.i.b16 %v3738, %v3737
        %v3742 = vunpack.c.l.s4 1983009808
        %v3743 = vunpack.c.0.s8 %v3742
        %v3744 = vperm.slane %v3550, %v3743
        %v3747 = vunpack.c.l.s4 1983009808
        %v3748 = vunpack.c.0.s8 %v3747
        %v3749 = vperm.slane %v3556, %v3748
        %v3750 = vrot.slane %v3749, 4
        %v3751 = vsel %vm1846, %v3750, %v3744
        %v3752 = vrot.slane %v3744, 4
        %v3753 = vsel %vm1846, %v3749, %v3752
        %v3755 = vunpack.c.l.s4 1934713408
        %v3756 = vunpack.c.0.s8 %v3755
        %v3757 = vperm.slane %v3751, %v3756
        %v3759 = vunpack.c.l.s4 1934713408
        %v3760 = vunpack.c.0.s8 %v3759
        %v3761 = vperm.slane %v3753, %v3760
        %v3762 = vrot.slane %v3757, 4
        %v3763 = vsel %vm1846, 0, %v3762
        %v3764 = vrot.slane %v3761, 4
        %v3765 = vsel %vm1846, 0, %v3764
        %v3768 = vunpack.c.l.s4 1983009808
        %v3769 = vunpack.c.0.s8 %v3768
        %v3770 = vperm.slane %v3553, %v3769
        %v3773 = vunpack.c.l.s4 1983009808
        %v3774 = vunpack.c.0.s8 %v3773
        %v3775 = vperm.slane %v3559, %v3774
        %v3776 = vrot.slane %v3775, 4
        %v3777 = vsel %vm1846, %v3776, %v3770
        %v3778 = vrot.slane %v3770, 4
        %v3779 = vsel %vm1846, %v3775, %v3778
        %v3781 = vunpack.c.l.s4 1934713408
        %v3782 = vunpack.c.0.s8 %v3781
        %v3783 = vperm.slane %v3777, %v3782
        %v3785 = vunpack.c.l.s4 1934713408
        %v3786 = vunpack.c.0.s8 %v3785
        %v3787 = vperm.slane %v3779, %v3786
        %v3788 = vrot.slane %v3783, 4
        %v3789 = vsel %vm1846, 0, %v3788
        %v3790 = vrot.slane %v3787, 4
        %v3791 = vsel %vm1846, 0, %v3790
        %v3794 = vunpack.c.l.s4 1983009808
        %v3795 = vunpack.c.0.s8 %v3794
        %v3796 = vperm.slane %v3562, %v3795
        %v3799 = vunpack.c.l.s4 1983009808
        %v3800 = vunpack.c.0.s8 %v3799
        %v3801 = vperm.slane %v3568, %v3800
        %v3802 = vrot.slane %v3801, 4
        %v3803 = vsel %vm1846, %v3802, %v3796
        %v3804 = vrot.slane %v3796, 4
        %v3805 = vsel %vm1846, %v3801, %v3804
        %v3807 = vunpack.c.l.s4 1934713408
        %v3808 = vunpack.c.0.s8 %v3807
        %v3809 = vperm.slane %v3803, %v3808
        %v3811 = vunpack.c.l.s4 1934713408
        %v3812 = vunpack.c.0.s8 %v3811
        %v3813 = vperm.slane %v3805, %v3812
        %v3814 = vrot.slane %v3809, 4
        %v3815 = vsel %vm1846, 0, %v3814
        %v3816 = vrot.slane %v3813, 4
        %v3817 = vsel %vm1846, 0, %v3816
        %v3820 = vunpack.c.l.s4 1983009808
        %v3821 = vunpack.c.0.s8 %v3820
        %v3822 = vperm.slane %v3565, %v3821
        %v3825 = vunpack.c.l.s4 1983009808
        %v3826 = vunpack.c.0.s8 %v3825
        %v3827 = vperm.slane %v3571, %v3826
        %v3828 = vrot.slane %v3827, 4
        %v3829 = vsel %vm1846, %v3828, %v3822
        %v3830 = vrot.slane %v3822, 4
        %v3831 = vsel %vm1846, %v3827, %v3830
        %v3833 = vunpack.c.l.s4 1934713408
        %v3834 = vunpack.c.0.s8 %v3833
        %v3835 = vperm.slane %v3829, %v3834
        %v3837 = vunpack.c.l.s4 1934713408
        %v3838 = vunpack.c.0.s8 %v3837
        %v3839 = vperm.slane %v3831, %v3838
        %v3840 = vrot.slane %v3835, 4
        %v3841 = vsel %vm1846, 0, %v3840
        %v3842 = vrot.slane %v3839, 4
        %v3843 = vsel %vm1846, 0, %v3842
        %v3846 = vunpack.c.l.s4 1983009808
        %v3847 = vunpack.c.0.s8 %v3846
        %v3848 = vperm.slane %v3574, %v3847
        %v3851 = vunpack.c.l.s4 1983009808
        %v3852 = vunpack.c.0.s8 %v3851
        %v3853 = vperm.slane %v3580, %v3852
        %v3854 = vrot.slane %v3853, 4
        %v3855 = vsel %vm1846, %v3854, %v3848
        %v3856 = vrot.slane %v3848, 4
        %v3857 = vsel %vm1846, %v3853, %v3856
        %v3859 = vunpack.c.l.s4 1934713408
        %v3860 = vunpack.c.0.s8 %v3859
        %v3861 = vperm.slane %v3855, %v3860
        %v3863 = vunpack.c.l.s4 1934713408
        %v3864 = vunpack.c.0.s8 %v3863
        %v3865 = vperm.slane %v3857, %v3864
        %v3866 = vrot.slane %v3861, 4
        %v3867 = vsel %vm1846, 0, %v3866
        %v3868 = vrot.slane %v3865, 4
        %v3869 = vsel %vm1846, 0, %v3868
        %v3872 = vunpack.c.l.s4 1983009808
        %v3873 = vunpack.c.0.s8 %v3872
        %v3874 = vperm.slane %v3577, %v3873
        %v3877 = vunpack.c.l.s4 1983009808
        %v3878 = vunpack.c.0.s8 %v3877
        %v3879 = vperm.slane %v3583, %v3878
        %v3880 = vrot.slane %v3879, 4
        %v3881 = vsel %vm1846, %v3880, %v3874
        %v3882 = vrot.slane %v3874, 4
        %v3883 = vsel %vm1846, %v3879, %v3882
        %v3885 = vunpack.c.l.s4 1934713408
        %v3886 = vunpack.c.0.s8 %v3885
        %v3887 = vperm.slane %v3881, %v3886
        %v3889 = vunpack.c.l.s4 1934713408
        %v3890 = vunpack.c.0.s8 %v3889
        %v3891 = vperm.slane %v3883, %v3890
        %v3892 = vrot.slane %v3887, 4
        %v3893 = vsel %vm1846, 0, %v3892
        %v3894 = vrot.slane %v3891, 4
        %v3895 = vsel %vm1846, 0, %v3894
        %v3898 = vunpack.c.l.s4 1983009808
        %v3899 = vunpack.c.0.s8 %v3898
        %v3900 = vperm.slane %v3586, %v3899
        %v3903 = vunpack.c.l.s4 1983009808
        %v3904 = vunpack.c.0.s8 %v3903
        %v3905 = vperm.slane %v3592, %v3904
        %v3906 = vrot.slane %v3905, 4
        %v3907 = vsel %vm1846, %v3906, %v3900
        %v3908 = vrot.slane %v3900, 4
        %v3909 = vsel %vm1846, %v3905, %v3908
        %v3911 = vunpack.c.l.s4 1934713408
        %v3912 = vunpack.c.0.s8 %v3911
        %v3913 = vperm.slane %v3907, %v3912
        %v3915 = vunpack.c.l.s4 1934713408
        %v3916 = vunpack.c.0.s8 %v3915
        %v3917 = vperm.slane %v3909, %v3916
        %v3918 = vrot.slane %v3913, 4
        %v3919 = vsel %vm1846, 0, %v3918
        %v3920 = vrot.slane %v3917, 4
        %v3921 = vsel %vm1846, 0, %v3920
        %v3924 = vunpack.c.l.s4 1983009808
        %v3925 = vunpack.c.0.s8 %v3924
        %v3926 = vperm.slane %v3589, %v3925
        %v3929 = vunpack.c.l.s4 1983009808
        %v3930 = vunpack.c.0.s8 %v3929
        %v3931 = vperm.slane %v3595, %v3930
        %v3932 = vrot.slane %v3931, 4
        %v3933 = vsel %vm1846, %v3932, %v3926
        %v3934 = vrot.slane %v3926, 4
        %v3935 = vsel %vm1846, %v3931, %v3934
        %v3937 = vunpack.c.l.s4 1934713408
        %v3938 = vunpack.c.0.s8 %v3937
        %v3939 = vperm.slane %v3933, %v3938
        %v3941 = vunpack.c.l.s4 1934713408
        %v3942 = vunpack.c.0.s8 %v3941
        %v3943 = vperm.slane %v3935, %v3942
        %v3944 = vrot.slane %v3939, 4
        %v3945 = vsel %vm1846, 0, %v3944
        %v3946 = vrot.slane %v3943, 4
        %v3947 = vsel %vm1846, 0, %v3946
        %v3950 = vunpack.c.l.s4 1983009808
        %v3951 = vunpack.c.0.s8 %v3950
        %v3952 = vperm.slane %v3598, %v3951
        %v3955 = vunpack.c.l.s4 1983009808
        %v3956 = vunpack.c.0.s8 %v3955
        %v3957 = vperm.slane %v3604, %v3956
        %v3958 = vrot.slane %v3957, 4
        %v3959 = vsel %vm1846, %v3958, %v3952
        %v3960 = vrot.slane %v3952, 4
        %v3961 = vsel %vm1846, %v3957, %v3960
        %v3963 = vunpack.c.l.s4 1934713408
        %v3964 = vunpack.c.0.s8 %v3963
        %v3965 = vperm.slane %v3959, %v3964
        %v3967 = vunpack.c.l.s4 1934713408
        %v3968 = vunpack.c.0.s8 %v3967
        %v3969 = vperm.slane %v3961, %v3968
        %v3970 = vrot.slane %v3965, 4
        %v3971 = vsel %vm1846, 0, %v3970
        %v3972 = vrot.slane %v3969, 4
        %v3973 = vsel %vm1846, 0, %v3972
        %v3976 = vunpack.c.l.s4 1983009808
        %v3977 = vunpack.c.0.s8 %v3976
        %v3978 = vperm.slane %v3601, %v3977
        %v3981 = vunpack.c.l.s4 1983009808
        %v3982 = vunpack.c.0.s8 %v3981
        %v3983 = vperm.slane %v3607, %v3982
        %v3984 = vrot.slane %v3983, 4
        %v3985 = vsel %vm1846, %v3984, %v3978
        %v3986 = vrot.slane %v3978, 4
        %v3987 = vsel %vm1846, %v3983, %v3986
        %v3989 = vunpack.c.l.s4 1934713408
        %v3990 = vunpack.c.0.s8 %v3989
        %v3991 = vperm.slane %v3985, %v3990
        %v3993 = vunpack.c.l.s4 1934713408
        %v3994 = vunpack.c.0.s8 %v3993
        %v3995 = vperm.slane %v3987, %v3994
        %v3996 = vrot.slane %v3991, 4
        %v3997 = vsel %vm1846, 0, %v3996
        %v3998 = vrot.slane %v3995, 4
        %v3999 = vsel %vm1846, 0, %v3998
        %v4002 = vunpack.c.l.s4 1983009808
        %v4003 = vunpack.c.0.s8 %v4002
        %v4004 = vperm.slane %v3610, %v4003
        %v4007 = vunpack.c.l.s4 1983009808
        %v4008 = vunpack.c.0.s8 %v4007
        %v4009 = vperm.slane %v3616, %v4008
        %v4010 = vrot.slane %v4009, 4
        %v4011 = vsel %vm1846, %v4010, %v4004
        %v4012 = vrot.slane %v4004, 4
        %v4013 = vsel %vm1846, %v4009, %v4012
        %v4015 = vunpack.c.l.s4 1934713408
        %v4016 = vunpack.c.0.s8 %v4015
        %v4017 = vperm.slane %v4011, %v4016
        %v4019 = vunpack.c.l.s4 1934713408
        %v4020 = vunpack.c.0.s8 %v4019
        %v4021 = vperm.slane %v4013, %v4020
        %v4022 = vrot.slane %v4017, 4
        %v4023 = vsel %vm1846, 0, %v4022
        %v4024 = vrot.slane %v4021, 4
        %v4025 = vsel %vm1846, 0, %v4024
        %v4028 = vunpack.c.l.s4 1983009808
        %v4029 = vunpack.c.0.s8 %v4028
        %v4030 = vperm.slane %v3613, %v4029
        %v4033 = vunpack.c.l.s4 1983009808
        %v4034 = vunpack.c.0.s8 %v4033
        %v4035 = vperm.slane %v3619, %v4034
        %v4036 = vrot.slane %v4035, 4
        %v4037 = vsel %vm1846, %v4036, %v4030
        %v4038 = vrot.slane %v4030, 4
        %v4039 = vsel %vm1846, %v4035, %v4038
        %v4041 = vunpack.c.l.s4 1934713408
        %v4042 = vunpack.c.0.s8 %v4041
        %v4043 = vperm.slane %v4037, %v4042
        %v4045 = vunpack.c.l.s4 1934713408
        %v4046 = vunpack.c.0.s8 %v4045
        %v4047 = vperm.slane %v4039, %v4046
        %v4048 = vrot.slane %v4043, 4
        %v4049 = vsel %vm1846, 0, %v4048
        %v4050 = vrot.slane %v4047, 4
        %v4051 = vsel %vm1846, 0, %v4050
        %v4054 = vunpack.c.l.s4 1983009808
        %v4055 = vunpack.c.0.s8 %v4054
        %v4056 = vperm.slane %v3622, %v4055
        %v4059 = vunpack.c.l.s4 1983009808
        %v4060 = vunpack.c.0.s8 %v4059
        %v4061 = vperm.slane %v3628, %v4060
        %v4062 = vrot.slane %v4061, 4
        %v4063 = vsel %vm1846, %v4062, %v4056
        %v4064 = vrot.slane %v4056, 4
        %v4065 = vsel %vm1846, %v4061, %v4064
        %v4067 = vunpack.c.l.s4 1934713408
        %v4068 = vunpack.c.0.s8 %v4067
        %v4069 = vperm.slane %v4063, %v4068
        %v4071 = vunpack.c.l.s4 1934713408
        %v4072 = vunpack.c.0.s8 %v4071
        %v4073 = vperm.slane %v4065, %v4072
        %v4074 = vrot.slane %v4069, 4
        %v4075 = vsel %vm1846, 0, %v4074
        %v4076 = vrot.slane %v4073, 4
        %v4077 = vsel %vm1846, 0, %v4076
        %v4080 = vunpack.c.l.s4 1983009808
        %v4081 = vunpack.c.0.s8 %v4080
        %v4082 = vperm.slane %v3625, %v4081
        %v4085 = vunpack.c.l.s4 1983009808
        %v4086 = vunpack.c.0.s8 %v4085
        %v4087 = vperm.slane %v3631, %v4086
        %v4088 = vrot.slane %v4087, 4
        %v4089 = vsel %vm1846, %v4088, %v4082
        %v4090 = vrot.slane %v4082, 4
        %v4091 = vsel %vm1846, %v4087, %v4090
        %v4093 = vunpack.c.l.s4 1934713408
        %v4094 = vunpack.c.0.s8 %v4093
        %v4095 = vperm.slane %v4089, %v4094
        %v4097 = vunpack.c.l.s4 1934713408
        %v4098 = vunpack.c.0.s8 %v4097
        %v4099 = vperm.slane %v4091, %v4098
        %v4100 = vrot.slane %v4095, 4
        %v4101 = vsel %vm1846, 0, %v4100
        %v4102 = vrot.slane %v4099, 4
        %v4103 = vsel %vm1846, 0, %v4102
        %v4106 = vunpack.c.l.s4 1983009808
        %v4107 = vunpack.c.0.s8 %v4106
        %v4108 = vperm.slane %v3634, %v4107
        %v4111 = vunpack.c.l.s4 1983009808
        %v4112 = vunpack.c.0.s8 %v4111
        %v4113 = vperm.slane %v3640, %v4112
        %v4114 = vrot.slane %v4113, 4
        %v4115 = vsel %vm1846, %v4114, %v4108
        %v4116 = vrot.slane %v4108, 4
        %v4117 = vsel %vm1846, %v4113, %v4116
        %v4119 = vunpack.c.l.s4 1934713408
        %v4120 = vunpack.c.0.s8 %v4119
        %v4121 = vperm.slane %v4115, %v4120
        %v4123 = vunpack.c.l.s4 1934713408
        %v4124 = vunpack.c.0.s8 %v4123
        %v4125 = vperm.slane %v4117, %v4124
        %v4126 = vrot.slane %v4121, 4
        %v4127 = vsel %vm1846, 0, %v4126
        %v4128 = vrot.slane %v4125, 4
        %v4129 = vsel %vm1846, 0, %v4128
        %v4132 = vunpack.c.l.s4 1983009808
        %v4133 = vunpack.c.0.s8 %v4132
        %v4134 = vperm.slane %v3637, %v4133
        %v4137 = vunpack.c.l.s4 1983009808
        %v4138 = vunpack.c.0.s8 %v4137
        %v4139 = vperm.slane %v3643, %v4138
        %v4140 = vrot.slane %v4139, 4
        %v4141 = vsel %vm1846, %v4140, %v4134
        %v4142 = vrot.slane %v4134, 4
        %v4143 = vsel %vm1846, %v4139, %v4142
        %v4145 = vunpack.c.l.s4 1934713408
        %v4146 = vunpack.c.0.s8 %v4145
        %v4147 = vperm.slane %v4141, %v4146
        %v4149 = vunpack.c.l.s4 1934713408
        %v4150 = vunpack.c.0.s8 %v4149
        %v4151 = vperm.slane %v4143, %v4150
        %v4152 = vrot.slane %v4147, 4
        %v4153 = vsel %vm1846, 0, %v4152
        %v4154 = vrot.slane %v4151, 4
        %v4155 = vsel %vm1846, 0, %v4154
        %v4158 = vunpack.c.l.s4 1983009808
        %v4159 = vunpack.c.0.s8 %v4158
        %v4160 = vperm.slane %v3646, %v4159
        %v4163 = vunpack.c.l.s4 1983009808
        %v4164 = vunpack.c.0.s8 %v4163
        %v4165 = vperm.slane %v3652, %v4164
        %v4166 = vrot.slane %v4165, 4
        %v4167 = vsel %vm1846, %v4166, %v4160
        %v4168 = vrot.slane %v4160, 4
        %v4169 = vsel %vm1846, %v4165, %v4168
        %v4171 = vunpack.c.l.s4 1934713408
        %v4172 = vunpack.c.0.s8 %v4171
        %v4173 = vperm.slane %v4167, %v4172
        %v4175 = vunpack.c.l.s4 1934713408
        %v4176 = vunpack.c.0.s8 %v4175
        %v4177 = vperm.slane %v4169, %v4176
        %v4178 = vrot.slane %v4173, 4
        %v4179 = vsel %vm1846, 0, %v4178
        %v4180 = vrot.slane %v4177, 4
        %v4181 = vsel %vm1846, 0, %v4180
        %v4184 = vunpack.c.l.s4 1983009808
        %v4185 = vunpack.c.0.s8 %v4184
        %v4186 = vperm.slane %v3649, %v4185
        %v4189 = vunpack.c.l.s4 1983009808
        %v4190 = vunpack.c.0.s8 %v4189
        %v4191 = vperm.slane %v3655, %v4190
        %v4192 = vrot.slane %v4191, 4
        %v4193 = vsel %vm1846, %v4192, %v4186
        %v4194 = vrot.slane %v4186, 4
        %v4195 = vsel %vm1846, %v4191, %v4194
        %v4197 = vunpack.c.l.s4 1934713408
        %v4198 = vunpack.c.0.s8 %v4197
        %v4199 = vperm.slane %v4193, %v4198
        %v4201 = vunpack.c.l.s4 1934713408
        %v4202 = vunpack.c.0.s8 %v4201
        %v4203 = vperm.slane %v4195, %v4202
        %v4204 = vrot.slane %v4199, 4
        %v4205 = vsel %vm1846, 0, %v4204
        %v4206 = vrot.slane %v4203, 4
        %v4207 = vsel %vm1846, 0, %v4206
        %v4210 = vunpack.c.l.s4 1983009808
        %v4211 = vunpack.c.0.s8 %v4210
        %v4212 = vperm.slane %v3658, %v4211
        %v4215 = vunpack.c.l.s4 1983009808
        %v4216 = vunpack.c.0.s8 %v4215
        %v4217 = vperm.slane %v3664, %v4216
        %v4218 = vrot.slane %v4217, 4
        %v4219 = vsel %vm1846, %v4218, %v4212
        %v4220 = vrot.slane %v4212, 4
        %v4221 = vsel %vm1846, %v4217, %v4220
        %v4223 = vunpack.c.l.s4 1934713408
        %v4224 = vunpack.c.0.s8 %v4223
        %v4225 = vperm.slane %v4219, %v4224
        %v4227 = vunpack.c.l.s4 1934713408
        %v4228 = vunpack.c.0.s8 %v4227
        %v4229 = vperm.slane %v4221, %v4228
        %v4230 = vrot.slane %v4225, 4
        %v4231 = vsel %vm1846, 0, %v4230
        %v4232 = vrot.slane %v4229, 4
        %v4233 = vsel %vm1846, 0, %v4232
        %v4236 = vunpack.c.l.s4 1983009808
        %v4237 = vunpack.c.0.s8 %v4236
        %v4238 = vperm.slane %v3661, %v4237
        %v4241 = vunpack.c.l.s4 1983009808
        %v4242 = vunpack.c.0.s8 %v4241
        %v4243 = vperm.slane %v3667, %v4242
        %v4244 = vrot.slane %v4243, 4
        %v4245 = vsel %vm1846, %v4244, %v4238
        %v4246 = vrot.slane %v4238, 4
        %v4247 = vsel %vm1846, %v4243, %v4246
        %v4249 = vunpack.c.l.s4 1934713408
        %v4250 = vunpack.c.0.s8 %v4249
        %v4251 = vperm.slane %v4245, %v4250
        %v4253 = vunpack.c.l.s4 1934713408
        %v4254 = vunpack.c.0.s8 %v4253
        %v4255 = vperm.slane %v4247, %v4254
        %v4256 = vrot.slane %v4251, 4
        %v4257 = vsel %vm1846, 0, %v4256
        %v4258 = vrot.slane %v4255, 4
        %v4259 = vsel %vm1846, 0, %v4258
        %v4262 = vunpack.c.l.s4 1983009808
        %v4263 = vunpack.c.0.s8 %v4262
        %v4264 = vperm.slane %v3670, %v4263
        %v4267 = vunpack.c.l.s4 1983009808
        %v4268 = vunpack.c.0.s8 %v4267
        %v4269 = vperm.slane %v3676, %v4268
        %v4270 = vrot.slane %v4269, 4
        %v4271 = vsel %vm1846, %v4270, %v4264
        %v4272 = vrot.slane %v4264, 4
        %v4273 = vsel %vm1846, %v4269, %v4272
        %v4275 = vunpack.c.l.s4 1934713408
        %v4276 = vunpack.c.0.s8 %v4275
        %v4277 = vperm.slane %v4271, %v4276
        %v4279 = vunpack.c.l.s4 1934713408
        %v4280 = vunpack.c.0.s8 %v4279
        %v4281 = vperm.slane %v4273, %v4280
        %v4282 = vrot.slane %v4277, 4
        %v4283 = vsel %vm1846, 0, %v4282
        %v4284 = vrot.slane %v4281, 4
        %v4285 = vsel %vm1846, 0, %v4284
        %v4288 = vunpack.c.l.s4 1983009808
        %v4289 = vunpack.c.0.s8 %v4288
        %v4290 = vperm.slane %v3673, %v4289
        %v4293 = vunpack.c.l.s4 1983009808
        %v4294 = vunpack.c.0.s8 %v4293
        %v4295 = vperm.slane %v3679, %v4294
        %v4296 = vrot.slane %v4295, 4
        %v4297 = vsel %vm1846, %v4296, %v4290
        %v4298 = vrot.slane %v4290, 4
        %v4299 = vsel %vm1846, %v4295, %v4298
        %v4301 = vunpack.c.l.s4 1934713408
        %v4302 = vunpack.c.0.s8 %v4301
        %v4303 = vperm.slane %v4297, %v4302
        %v4305 = vunpack.c.l.s4 1934713408
        %v4306 = vunpack.c.0.s8 %v4305
        %v4307 = vperm.slane %v4299, %v4306
        %v4308 = vrot.slane %v4303, 4
        %v4309 = vsel %vm1846, 0, %v4308
        %v4310 = vrot.slane %v4307, 4
        %v4311 = vsel %vm1846, 0, %v4310
        %v4314 = vunpack.c.l.s4 1983009808
        %v4315 = vunpack.c.0.s8 %v4314
        %v4316 = vperm.slane %v3682, %v4315
        %v4319 = vunpack.c.l.s4 1983009808
        %v4320 = vunpack.c.0.s8 %v4319
        %v4321 = vperm.slane %v3688, %v4320
        %v4322 = vrot.slane %v4321, 4
        %v4323 = vsel %vm1846, %v4322, %v4316
        %v4324 = vrot.slane %v4316, 4
        %v4325 = vsel %vm1846, %v4321, %v4324
        %v4327 = vunpack.c.l.s4 1934713408
        %v4328 = vunpack.c.0.s8 %v4327
        %v4329 = vperm.slane %v4323, %v4328
        %v4331 = vunpack.c.l.s4 1934713408
        %v4332 = vunpack.c.0.s8 %v4331
        %v4333 = vperm.slane %v4325, %v4332
        %v4334 = vrot.slane %v4329, 4
        %v4335 = vsel %vm1846, 0, %v4334
        %v4336 = vrot.slane %v4333, 4
        %v4337 = vsel %vm1846, 0, %v4336
        %v4340 = vunpack.c.l.s4 1983009808
        %v4341 = vunpack.c.0.s8 %v4340
        %v4342 = vperm.slane %v3685, %v4341
        %v4345 = vunpack.c.l.s4 1983009808
        %v4346 = vunpack.c.0.s8 %v4345
        %v4347 = vperm.slane %v3691, %v4346
        %v4348 = vrot.slane %v4347, 4
        %v4349 = vsel %vm1846, %v4348, %v4342
        %v4350 = vrot.slane %v4342, 4
        %v4351 = vsel %vm1846, %v4347, %v4350
        %v4353 = vunpack.c.l.s4 1934713408
        %v4354 = vunpack.c.0.s8 %v4353
        %v4355 = vperm.slane %v4349, %v4354
        %v4357 = vunpack.c.l.s4 1934713408
        %v4358 = vunpack.c.0.s8 %v4357
        %v4359 = vperm.slane %v4351, %v4358
        %v4360 = vrot.slane %v4355, 4
        %v4361 = vsel %vm1846, 0, %v4360
        %v4362 = vrot.slane %v4359, 4
        %v4363 = vsel %vm1846, 0, %v4362
        %v4366 = vunpack.c.l.s4 1983009808
        %v4367 = vunpack.c.0.s8 %v4366
        %v4368 = vperm.slane %v3694, %v4367
        %v4371 = vunpack.c.l.s4 1983009808
        %v4372 = vunpack.c.0.s8 %v4371
        %v4373 = vperm.slane %v3700, %v4372
        %v4374 = vrot.slane %v4373, 4
        %v4375 = vsel %vm1846, %v4374, %v4368
        %v4376 = vrot.slane %v4368, 4
        %v4377 = vsel %vm1846, %v4373, %v4376
        %v4379 = vunpack.c.l.s4 1934713408
        %v4380 = vunpack.c.0.s8 %v4379
        %v4381 = vperm.slane %v4375, %v4380
        %v4383 = vunpack.c.l.s4 1934713408
        %v4384 = vunpack.c.0.s8 %v4383
        %v4385 = vperm.slane %v4377, %v4384
        %v4386 = vrot.slane %v4381, 4
        %v4387 = vsel %vm1846, 0, %v4386
        %v4388 = vrot.slane %v4385, 4
        %v4389 = vsel %vm1846, 0, %v4388
        %v4392 = vunpack.c.l.s4 1983009808
        %v4393 = vunpack.c.0.s8 %v4392
        %v4394 = vperm.slane %v3697, %v4393
        %v4397 = vunpack.c.l.s4 1983009808
        %v4398 = vunpack.c.0.s8 %v4397
        %v4399 = vperm.slane %v3703, %v4398
        %v4400 = vrot.slane %v4399, 4
        %v4401 = vsel %vm1846, %v4400, %v4394
        %v4402 = vrot.slane %v4394, 4
        %v4403 = vsel %vm1846, %v4399, %v4402
        %v4405 = vunpack.c.l.s4 1934713408
        %v4406 = vunpack.c.0.s8 %v4405
        %v4407 = vperm.slane %v4401, %v4406
        %v4409 = vunpack.c.l.s4 1934713408
        %v4410 = vunpack.c.0.s8 %v4409
        %v4411 = vperm.slane %v4403, %v4410
        %v4412 = vrot.slane %v4407, 4
        %v4413 = vsel %vm1846, 0, %v4412
        %v4414 = vrot.slane %v4411, 4
        %v4415 = vsel %vm1846, 0, %v4414
        %v4418 = vunpack.c.l.s4 1983009808
        %v4419 = vunpack.c.0.s8 %v4418
        %v4420 = vperm.slane %v3706, %v4419
        %v4423 = vunpack.c.l.s4 1983009808
        %v4424 = vunpack.c.0.s8 %v4423
        %v4425 = vperm.slane %v3712, %v4424
        %v4426 = vrot.slane %v4425, 4
        %v4427 = vsel %vm1846, %v4426, %v4420
        %v4428 = vrot.slane %v4420, 4
        %v4429 = vsel %vm1846, %v4425, %v4428
        %v4431 = vunpack.c.l.s4 1934713408
        %v4432 = vunpack.c.0.s8 %v4431
        %v4433 = vperm.slane %v4427, %v4432
        %v4435 = vunpack.c.l.s4 1934713408
        %v4436 = vunpack.c.0.s8 %v4435
        %v4437 = vperm.slane %v4429, %v4436
        %v4438 = vrot.slane %v4433, 4
        %v4439 = vsel %vm1846, 0, %v4438
        %v4440 = vrot.slane %v4437, 4
        %v4441 = vsel %vm1846, 0, %v4440
        %v4444 = vunpack.c.l.s4 1983009808
        %v4445 = vunpack.c.0.s8 %v4444
        %v4446 = vperm.slane %v3709, %v4445
        %v4449 = vunpack.c.l.s4 1983009808
        %v4450 = vunpack.c.0.s8 %v4449
        %v4451 = vperm.slane %v3715, %v4450
        %v4452 = vrot.slane %v4451, 4
        %v4453 = vsel %vm1846, %v4452, %v4446
        %v4454 = vrot.slane %v4446, 4
        %v4455 = vsel %vm1846, %v4451, %v4454
        %v4457 = vunpack.c.l.s4 1934713408
        %v4458 = vunpack.c.0.s8 %v4457
        %v4459 = vperm.slane %v4453, %v4458
        %v4461 = vunpack.c.l.s4 1934713408
        %v4462 = vunpack.c.0.s8 %v4461
        %v4463 = vperm.slane %v4455, %v4462
        %v4464 = vrot.slane %v4459, 4
        %v4465 = vsel %vm1846, 0, %v4464
        %v4466 = vrot.slane %v4463, 4
        %v4467 = vsel %vm1846, 0, %v4466
        %v4470 = vunpack.c.l.s4 1983009808
        %v4471 = vunpack.c.0.s8 %v4470
        %v4472 = vperm.slane %v3718, %v4471
        %v4475 = vunpack.c.l.s4 1983009808
        %v4476 = vunpack.c.0.s8 %v4475
        %v4477 = vperm.slane %v3724, %v4476
        %v4478 = vrot.slane %v4477, 4
        %v4479 = vsel %vm1846, %v4478, %v4472
        %v4480 = vrot.slane %v4472, 4
        %v4481 = vsel %vm1846, %v4477, %v4480
        %v4483 = vunpack.c.l.s4 1934713408
        %v4484 = vunpack.c.0.s8 %v4483
        %v4485 = vperm.slane %v4479, %v4484
        %v4487 = vunpack.c.l.s4 1934713408
        %v4488 = vunpack.c.0.s8 %v4487
        %v4489 = vperm.slane %v4481, %v4488
        %v4490 = vrot.slane %v4485, 4
        %v4491 = vsel %vm1846, 0, %v4490
        %v4492 = vrot.slane %v4489, 4
        %v4493 = vsel %vm1846, 0, %v4492
        %v4496 = vunpack.c.l.s4 1983009808
        %v4497 = vunpack.c.0.s8 %v4496
        %v4498 = vperm.slane %v3721, %v4497
        %v4501 = vunpack.c.l.s4 1983009808
        %v4502 = vunpack.c.0.s8 %v4501
        %v4503 = vperm.slane %v3727, %v4502
        %v4504 = vrot.slane %v4503, 4
        %v4505 = vsel %vm1846, %v4504, %v4498
        %v4506 = vrot.slane %v4498, 4
        %v4507 = vsel %vm1846, %v4503, %v4506
        %v4509 = vunpack.c.l.s4 1934713408
        %v4510 = vunpack.c.0.s8 %v4509
        %v4511 = vperm.slane %v4505, %v4510
        %v4513 = vunpack.c.l.s4 1934713408
        %v4514 = vunpack.c.0.s8 %v4513
        %v4515 = vperm.slane %v4507, %v4514
        %v4516 = vrot.slane %v4511, 4
        %v4517 = vsel %vm1846, 0, %v4516
        %v4518 = vrot.slane %v4515, 4
        %v4519 = vsel %vm1846, 0, %v4518
        %v4522 = vunpack.c.l.s4 1983009808
        %v4523 = vunpack.c.0.s8 %v4522
        %v4524 = vperm.slane %v3730, %v4523
        %v4527 = vunpack.c.l.s4 1983009808
        %v4528 = vunpack.c.0.s8 %v4527
        %v4529 = vperm.slane %v3736, %v4528
        %v4530 = vrot.slane %v4529, 4
        %v4531 = vsel %vm1846, %v4530, %v4524
        %v4532 = vrot.slane %v4524, 4
        %v4533 = vsel %vm1846, %v4529, %v4532
        %v4535 = vunpack.c.l.s4 1934713408
        %v4536 = vunpack.c.0.s8 %v4535
        %v4537 = vperm.slane %v4531, %v4536
        %v4539 = vunpack.c.l.s4 1934713408
        %v4540 = vunpack.c.0.s8 %v4539
        %v4541 = vperm.slane %v4533, %v4540
        %v4542 = vrot.slane %v4537, 4
        %v4543 = vsel %vm1846, 0, %v4542
        %v4544 = vrot.slane %v4541, 4
        %v4545 = vsel %vm1846, 0, %v4544
        %v4548 = vunpack.c.l.s4 1983009808
        %v4549 = vunpack.c.0.s8 %v4548
        %v4550 = vperm.slane %v3733, %v4549
        %v4553 = vunpack.c.l.s4 1983009808
        %v4554 = vunpack.c.0.s8 %v4553
        %v4555 = vperm.slane %v3739, %v4554
        %v4556 = vrot.slane %v4555, 4
        %v4557 = vsel %vm1846, %v4556, %v4550
        %v4558 = vrot.slane %v4550, 4
        %v4559 = vsel %vm1846, %v4555, %v4558
        %v4561 = vunpack.c.l.s4 1934713408
        %v4562 = vunpack.c.0.s8 %v4561
        %v4563 = vperm.slane %v4557, %v4562
        %v4565 = vunpack.c.l.s4 1934713408
        %v4566 = vunpack.c.0.s8 %v4565
        %v4567 = vperm.slane %v4559, %v4566
        %v4568 = vrot.slane %v4563, 4
        %v4569 = vsel %vm1846, 0, %v4568
        %v4570 = vrot.slane %v4567, 4
        %v4571 = vsel %vm1846, 0, %v4570
        %v4572 = vsel %vm1846, %v3764, %v3757
        %v4574 = vunpack.c.l.s4 1983009808
        %v4575 = vunpack.c.0.s8 %v4574
        %v4576 = vperm.slane %v4572, %v4575
        %v4577 = vrot.slane %v3765, 4
        %v4578 = vsel %vm1846, %v4577, %v3763
        %v4580 = vunpack.c.l.s4 1983009808
        %v4581 = vunpack.c.0.s8 %v4580
        %v4582 = vperm.slane %v4578, %v4581
        %v4583 = vrot.slane %v4582, 4
        %v4584 = vsel %vm1846, %v4583, %v4576
        %v4586 = vunpack.c.l.s4 1934713408
        %v4587 = vunpack.c.0.s8 %v4586
        %v4588 = vperm.slane %v4584, %v4587
        %v4589 = vrot.slane %v4588, 4
        %v4590 = vsel %vm1846, 0, %v4589
        %v4591 = vsel %vm1846, %v3790, %v3783
        %v4593 = vunpack.c.l.s4 1983009808
        %v4594 = vunpack.c.0.s8 %v4593
        %v4595 = vperm.slane %v4591, %v4594
        %v4596 = vrot.slane %v3791, 4
        %v4597 = vsel %vm1846, %v4596, %v3789
        %v4599 = vunpack.c.l.s4 1983009808
        %v4600 = vunpack.c.0.s8 %v4599
        %v4601 = vperm.slane %v4597, %v4600
        %v4602 = vrot.slane %v4601, 4
        %v4603 = vsel %vm1846, %v4602, %v4595
        %v4605 = vunpack.c.l.s4 1934713408
        %v4606 = vunpack.c.0.s8 %v4605
        %v4607 = vperm.slane %v4603, %v4606
        %v4608 = vrot.slane %v4607, 4
        %v4609 = vsel %vm1846, 0, %v4608
        %v4610 = vsel %vm1846, %v3816, %v3809
        %v4612 = vunpack.c.l.s4 1983009808
        %v4613 = vunpack.c.0.s8 %v4612
        %v4614 = vperm.slane %v4610, %v4613
        %v4615 = vrot.slane %v3817, 4
        %v4616 = vsel %vm1846, %v4615, %v3815
        %v4618 = vunpack.c.l.s4 1983009808
        %v4619 = vunpack.c.0.s8 %v4618
        %v4620 = vperm.slane %v4616, %v4619
        %v4621 = vrot.slane %v4620, 4
        %v4622 = vsel %vm1846, %v4621, %v4614
        %v4624 = vunpack.c.l.s4 1934713408
        %v4625 = vunpack.c.0.s8 %v4624
        %v4626 = vperm.slane %v4622, %v4625
        %v4627 = vrot.slane %v4626, 4
        %v4628 = vsel %vm1846, 0, %v4627
        %v4629 = vsel %vm1846, %v3842, %v3835
        %v4631 = vunpack.c.l.s4 1983009808
        %v4632 = vunpack.c.0.s8 %v4631
        %v4633 = vperm.slane %v4629, %v4632
        %v4634 = vrot.slane %v3843, 4
        %v4635 = vsel %vm1846, %v4634, %v3841
        %v4637 = vunpack.c.l.s4 1983009808
        %v4638 = vunpack.c.0.s8 %v4637
        %v4639 = vperm.slane %v4635, %v4638
        %v4640 = vrot.slane %v4639, 4
        %v4641 = vsel %vm1846, %v4640, %v4633
        %v4643 = vunpack.c.l.s4 1934713408
        %v4644 = vunpack.c.0.s8 %v4643
        %v4645 = vperm.slane %v4641, %v4644
        %v4646 = vrot.slane %v4645, 4
        %v4647 = vsel %vm1846, 0, %v4646
        %v4648 = vsel %vm1846, %v3868, %v3861
        %v4650 = vunpack.c.l.s4 1983009808
        %v4651 = vunpack.c.0.s8 %v4650
        %v4652 = vperm.slane %v4648, %v4651
        %v4653 = vrot.slane %v3869, 4
        %v4654 = vsel %vm1846, %v4653, %v3867
        %v4656 = vunpack.c.l.s4 1983009808
        %v4657 = vunpack.c.0.s8 %v4656
        %v4658 = vperm.slane %v4654, %v4657
        %v4659 = vrot.slane %v4658, 4
        %v4660 = vsel %vm1846, %v4659, %v4652
        %v4662 = vunpack.c.l.s4 1934713408
        %v4663 = vunpack.c.0.s8 %v4662
        %v4664 = vperm.slane %v4660, %v4663
        %v4665 = vrot.slane %v4664, 4
        %v4666 = vsel %vm1846, 0, %v4665
        %v4667 = vsel %vm1846, %v3894, %v3887
        %v4669 = vunpack.c.l.s4 1983009808
        %v4670 = vunpack.c.0.s8 %v4669
        %v4671 = vperm.slane %v4667, %v4670
        %v4672 = vrot.slane %v3895, 4
        %v4673 = vsel %vm1846, %v4672, %v3893
        %v4675 = vunpack.c.l.s4 1983009808
        %v4676 = vunpack.c.0.s8 %v4675
        %v4677 = vperm.slane %v4673, %v4676
        %v4678 = vrot.slane %v4677, 4
        %v4679 = vsel %vm1846, %v4678, %v4671
        %v4681 = vunpack.c.l.s4 1934713408
        %v4682 = vunpack.c.0.s8 %v4681
        %v4683 = vperm.slane %v4679, %v4682
        %v4684 = vrot.slane %v4683, 4
        %v4685 = vsel %vm1846, 0, %v4684
        %v4686 = vsel %vm1846, %v3920, %v3913
        %v4688 = vunpack.c.l.s4 1983009808
        %v4689 = vunpack.c.0.s8 %v4688
        %v4690 = vperm.slane %v4686, %v4689
        %v4691 = vrot.slane %v3921, 4
        %v4692 = vsel %vm1846, %v4691, %v3919
        %v4694 = vunpack.c.l.s4 1983009808
        %v4695 = vunpack.c.0.s8 %v4694
        %v4696 = vperm.slane %v4692, %v4695
        %v4697 = vrot.slane %v4696, 4
        %v4698 = vsel %vm1846, %v4697, %v4690
        %v4700 = vunpack.c.l.s4 1934713408
        %v4701 = vunpack.c.0.s8 %v4700
        %v4702 = vperm.slane %v4698, %v4701
        %v4703 = vrot.slane %v4702, 4
        %v4704 = vsel %vm1846, 0, %v4703
        %v4705 = vsel %vm1846, %v3946, %v3939
        %v4707 = vunpack.c.l.s4 1983009808
        %v4708 = vunpack.c.0.s8 %v4707
        %v4709 = vperm.slane %v4705, %v4708
        %v4710 = vrot.slane %v3947, 4
        %v4711 = vsel %vm1846, %v4710, %v3945
        %v4713 = vunpack.c.l.s4 1983009808
        %v4714 = vunpack.c.0.s8 %v4713
        %v4715 = vperm.slane %v4711, %v4714
        %v4716 = vrot.slane %v4715, 4
        %v4717 = vsel %vm1846, %v4716, %v4709
        %v4719 = vunpack.c.l.s4 1934713408
        %v4720 = vunpack.c.0.s8 %v4719
        %v4721 = vperm.slane %v4717, %v4720
        %v4722 = vrot.slane %v4721, 4
        %v4723 = vsel %vm1846, 0, %v4722
        %v4724 = vsel %vm1846, %v3972, %v3965
        %v4726 = vunpack.c.l.s4 1983009808
        %v4727 = vunpack.c.0.s8 %v4726
        %v4728 = vperm.slane %v4724, %v4727
        %v4729 = vrot.slane %v3973, 4
        %v4730 = vsel %vm1846, %v4729, %v3971
        %v4732 = vunpack.c.l.s4 1983009808
        %v4733 = vunpack.c.0.s8 %v4732
        %v4734 = vperm.slane %v4730, %v4733
        %v4735 = vrot.slane %v4734, 4
        %v4736 = vsel %vm1846, %v4735, %v4728
        %v4738 = vunpack.c.l.s4 1934713408
        %v4739 = vunpack.c.0.s8 %v4738
        %v4740 = vperm.slane %v4736, %v4739
        %v4741 = vrot.slane %v4740, 4
        %v4742 = vsel %vm1846, 0, %v4741
        %v4743 = vsel %vm1846, %v3998, %v3991
        %v4745 = vunpack.c.l.s4 1983009808
        %v4746 = vunpack.c.0.s8 %v4745
        %v4747 = vperm.slane %v4743, %v4746
        %v4748 = vrot.slane %v3999, 4
        %v4749 = vsel %vm1846, %v4748, %v3997
        %v4751 = vunpack.c.l.s4 1983009808
        %v4752 = vunpack.c.0.s8 %v4751
        %v4753 = vperm.slane %v4749, %v4752
        %v4754 = vrot.slane %v4753, 4
        %v4755 = vsel %vm1846, %v4754, %v4747
        %v4757 = vunpack.c.l.s4 1934713408
        %v4758 = vunpack.c.0.s8 %v4757
        %v4759 = vperm.slane %v4755, %v4758
        %v4760 = vrot.slane %v4759, 4
        %v4761 = vsel %vm1846, 0, %v4760
        %v4762 = vsel %vm1846, %v4024, %v4017
        %v4764 = vunpack.c.l.s4 1983009808
        %v4765 = vunpack.c.0.s8 %v4764
        %v4766 = vperm.slane %v4762, %v4765
        %v4767 = vrot.slane %v4025, 4
        %v4768 = vsel %vm1846, %v4767, %v4023
        %v4770 = vunpack.c.l.s4 1983009808
        %v4771 = vunpack.c.0.s8 %v4770
        %v4772 = vperm.slane %v4768, %v4771
        %v4773 = vrot.slane %v4772, 4
        %v4774 = vsel %vm1846, %v4773, %v4766
        %v4776 = vunpack.c.l.s4 1934713408
        %v4777 = vunpack.c.0.s8 %v4776
        %v4778 = vperm.slane %v4774, %v4777
        %v4779 = vrot.slane %v4778, 4
        %v4780 = vsel %vm1846, 0, %v4779
        %v4781 = vsel %vm1846, %v4050, %v4043
        %v4783 = vunpack.c.l.s4 1983009808
        %v4784 = vunpack.c.0.s8 %v4783
        %v4785 = vperm.slane %v4781, %v4784
        %v4786 = vrot.slane %v4051, 4
        %v4787 = vsel %vm1846, %v4786, %v4049
        %v4789 = vunpack.c.l.s4 1983009808
        %v4790 = vunpack.c.0.s8 %v4789
        %v4791 = vperm.slane %v4787, %v4790
        %v4792 = vrot.slane %v4791, 4
        %v4793 = vsel %vm1846, %v4792, %v4785
        %v4795 = vunpack.c.l.s4 1934713408
        %v4796 = vunpack.c.0.s8 %v4795
        %v4797 = vperm.slane %v4793, %v4796
        %v4798 = vrot.slane %v4797, 4
        %v4799 = vsel %vm1846, 0, %v4798
        %v4800 = vsel %vm1846, %v4076, %v4069
        %v4802 = vunpack.c.l.s4 1983009808
        %v4803 = vunpack.c.0.s8 %v4802
        %v4804 = vperm.slane %v4800, %v4803
        %v4805 = vrot.slane %v4077, 4
        %v4806 = vsel %vm1846, %v4805, %v4075
        %v4808 = vunpack.c.l.s4 1983009808
        %v4809 = vunpack.c.0.s8 %v4808
        %v4810 = vperm.slane %v4806, %v4809
        %v4811 = vrot.slane %v4810, 4
        %v4812 = vsel %vm1846, %v4811, %v4804
        %v4814 = vunpack.c.l.s4 1934713408
        %v4815 = vunpack.c.0.s8 %v4814
        %v4816 = vperm.slane %v4812, %v4815
        %v4817 = vrot.slane %v4816, 4
        %v4818 = vsel %vm1846, 0, %v4817
        %v4819 = vsel %vm1846, %v4102, %v4095
        %v4821 = vunpack.c.l.s4 1983009808
        %v4822 = vunpack.c.0.s8 %v4821
        %v4823 = vperm.slane %v4819, %v4822
        %v4824 = vrot.slane %v4103, 4
        %v4825 = vsel %vm1846, %v4824, %v4101
        %v4827 = vunpack.c.l.s4 1983009808
        %v4828 = vunpack.c.0.s8 %v4827
        %v4829 = vperm.slane %v4825, %v4828
        %v4830 = vrot.slane %v4829, 4
        %v4831 = vsel %vm1846, %v4830, %v4823
        %v4833 = vunpack.c.l.s4 1934713408
        %v4834 = vunpack.c.0.s8 %v4833
        %v4835 = vperm.slane %v4831, %v4834
        %v4836 = vrot.slane %v4835, 4
        %v4837 = vsel %vm1846, 0, %v4836
        %v4838 = vsel %vm1846, %v4128, %v4121
        %v4840 = vunpack.c.l.s4 1983009808
        %v4841 = vunpack.c.0.s8 %v4840
        %v4842 = vperm.slane %v4838, %v4841
        %v4843 = vrot.slane %v4129, 4
        %v4844 = vsel %vm1846, %v4843, %v4127
        %v4846 = vunpack.c.l.s4 1983009808
        %v4847 = vunpack.c.0.s8 %v4846
        %v4848 = vperm.slane %v4844, %v4847
        %v4849 = vrot.slane %v4848, 4
        %v4850 = vsel %vm1846, %v4849, %v4842
        %v4852 = vunpack.c.l.s4 1934713408
        %v4853 = vunpack.c.0.s8 %v4852
        %v4854 = vperm.slane %v4850, %v4853
        %v4855 = vrot.slane %v4854, 4
        %v4856 = vsel %vm1846, 0, %v4855
        %v4857 = vsel %vm1846, %v4154, %v4147
        %v4859 = vunpack.c.l.s4 1983009808
        %v4860 = vunpack.c.0.s8 %v4859
        %v4861 = vperm.slane %v4857, %v4860
        %v4862 = vrot.slane %v4155, 4
        %v4863 = vsel %vm1846, %v4862, %v4153
        %v4865 = vunpack.c.l.s4 1983009808
        %v4866 = vunpack.c.0.s8 %v4865
        %v4867 = vperm.slane %v4863, %v4866
        %v4868 = vrot.slane %v4867, 4
        %v4869 = vsel %vm1846, %v4868, %v4861
        %v4871 = vunpack.c.l.s4 1934713408
        %v4872 = vunpack.c.0.s8 %v4871
        %v4873 = vperm.slane %v4869, %v4872
        %v4874 = vrot.slane %v4873, 4
        %v4875 = vsel %vm1846, 0, %v4874
        %v4876 = vsel %vm1846, %v4180, %v4173
        %v4878 = vunpack.c.l.s4 1983009808
        %v4879 = vunpack.c.0.s8 %v4878
        %v4880 = vperm.slane %v4876, %v4879
        %v4881 = vrot.slane %v4181, 4
        %v4882 = vsel %vm1846, %v4881, %v4179
        %v4884 = vunpack.c.l.s4 1983009808
        %v4885 = vunpack.c.0.s8 %v4884
        %v4886 = vperm.slane %v4882, %v4885
        %v4887 = vrot.slane %v4886, 4
        %v4888 = vsel %vm1846, %v4887, %v4880
        %v4890 = vunpack.c.l.s4 1934713408
        %v4891 = vunpack.c.0.s8 %v4890
        %v4892 = vperm.slane %v4888, %v4891
        %v4893 = vrot.slane %v4892, 4
        %v4894 = vsel %vm1846, 0, %v4893
        %v4895 = vsel %vm1846, %v4206, %v4199
        %v4897 = vunpack.c.l.s4 1983009808
        %v4898 = vunpack.c.0.s8 %v4897
        %v4899 = vperm.slane %v4895, %v4898
        %v4900 = vrot.slane %v4207, 4
        %v4901 = vsel %vm1846, %v4900, %v4205
        %v4903 = vunpack.c.l.s4 1983009808
        %v4904 = vunpack.c.0.s8 %v4903
        %v4905 = vperm.slane %v4901, %v4904
        %v4906 = vrot.slane %v4905, 4
        %v4907 = vsel %vm1846, %v4906, %v4899
        %v4909 = vunpack.c.l.s4 1934713408
        %v4910 = vunpack.c.0.s8 %v4909
        %v4911 = vperm.slane %v4907, %v4910
        %v4912 = vrot.slane %v4911, 4
        %v4913 = vsel %vm1846, 0, %v4912
        %v4914 = vsel %vm1846, %v4232, %v4225
        %v4916 = vunpack.c.l.s4 1983009808
        %v4917 = vunpack.c.0.s8 %v4916
        %v4918 = vperm.slane %v4914, %v4917
        %v4919 = vrot.slane %v4233, 4
        %v4920 = vsel %vm1846, %v4919, %v4231
        %v4922 = vunpack.c.l.s4 1983009808
        %v4923 = vunpack.c.0.s8 %v4922
        %v4924 = vperm.slane %v4920, %v4923
        %v4925 = vrot.slane %v4924, 4
        %v4926 = vsel %vm1846, %v4925, %v4918
        %v4928 = vunpack.c.l.s4 1934713408
        %v4929 = vunpack.c.0.s8 %v4928
        %v4930 = vperm.slane %v4926, %v4929
        %v4931 = vrot.slane %v4930, 4
        %v4932 = vsel %vm1846, 0, %v4931
        %v4933 = vsel %vm1846, %v4258, %v4251
        %v4935 = vunpack.c.l.s4 1983009808
        %v4936 = vunpack.c.0.s8 %v4935
        %v4937 = vperm.slane %v4933, %v4936
        %v4938 = vrot.slane %v4259, 4
        %v4939 = vsel %vm1846, %v4938, %v4257
        %v4941 = vunpack.c.l.s4 1983009808
        %v4942 = vunpack.c.0.s8 %v4941
        %v4943 = vperm.slane %v4939, %v4942
        %v4944 = vrot.slane %v4943, 4
        %v4945 = vsel %vm1846, %v4944, %v4937
        %v4947 = vunpack.c.l.s4 1934713408
        %v4948 = vunpack.c.0.s8 %v4947
        %v4949 = vperm.slane %v4945, %v4948
        %v4950 = vrot.slane %v4949, 4
        %v4951 = vsel %vm1846, 0, %v4950
        %v4952 = vsel %vm1846, %v4284, %v4277
        %v4954 = vunpack.c.l.s4 1983009808
        %v4955 = vunpack.c.0.s8 %v4954
        %v4956 = vperm.slane %v4952, %v4955
        %v4957 = vrot.slane %v4285, 4
        %v4958 = vsel %vm1846, %v4957, %v4283
        %v4960 = vunpack.c.l.s4 1983009808
        %v4961 = vunpack.c.0.s8 %v4960
        %v4962 = vperm.slane %v4958, %v4961
        %v4963 = vrot.slane %v4962, 4
        %v4964 = vsel %vm1846, %v4963, %v4956
        %v4966 = vunpack.c.l.s4 1934713408
        %v4967 = vunpack.c.0.s8 %v4966
        %v4968 = vperm.slane %v4964, %v4967
        %v4969 = vrot.slane %v4968, 4
        %v4970 = vsel %vm1846, 0, %v4969
        %v4971 = vsel %vm1846, %v4310, %v4303
        %v4973 = vunpack.c.l.s4 1983009808
        %v4974 = vunpack.c.0.s8 %v4973
        %v4975 = vperm.slane %v4971, %v4974
        %v4976 = vrot.slane %v4311, 4
        %v4977 = vsel %vm1846, %v4976, %v4309
        %v4979 = vunpack.c.l.s4 1983009808
        %v4980 = vunpack.c.0.s8 %v4979
        %v4981 = vperm.slane %v4977, %v4980
        %v4982 = vrot.slane %v4981, 4
        %v4983 = vsel %vm1846, %v4982, %v4975
        %v4985 = vunpack.c.l.s4 1934713408
        %v4986 = vunpack.c.0.s8 %v4985
        %v4987 = vperm.slane %v4983, %v4986
        %v4988 = vrot.slane %v4987, 4
        %v4989 = vsel %vm1846, 0, %v4988
        %v4990 = vsel %vm1846, %v4336, %v4329
        %v4992 = vunpack.c.l.s4 1983009808
        %v4993 = vunpack.c.0.s8 %v4992
        %v4994 = vperm.slane %v4990, %v4993
        %v4995 = vrot.slane %v4337, 4
        %v4996 = vsel %vm1846, %v4995, %v4335
        %v4998 = vunpack.c.l.s4 1983009808
        %v4999 = vunpack.c.0.s8 %v4998
        %v5000 = vperm.slane %v4996, %v4999
        %v5001 = vrot.slane %v5000, 4
        %v5002 = vsel %vm1846, %v5001, %v4994
        %v5004 = vunpack.c.l.s4 1934713408
        %v5005 = vunpack.c.0.s8 %v5004
        %v5006 = vperm.slane %v5002, %v5005
        %v5007 = vrot.slane %v5006, 4
        %v5008 = vsel %vm1846, 0, %v5007
        %v5009 = vsel %vm1846, %v4362, %v4355
        %v5011 = vunpack.c.l.s4 1983009808
        %v5012 = vunpack.c.0.s8 %v5011
        %v5013 = vperm.slane %v5009, %v5012
        %v5014 = vrot.slane %v4363, 4
        %v5015 = vsel %vm1846, %v5014, %v4361
        %v5017 = vunpack.c.l.s4 1983009808
        %v5018 = vunpack.c.0.s8 %v5017
        %v5019 = vperm.slane %v5015, %v5018
        %v5020 = vrot.slane %v5019, 4
        %v5021 = vsel %vm1846, %v5020, %v5013
        %v5023 = vunpack.c.l.s4 1934713408
        %v5024 = vunpack.c.0.s8 %v5023
        %v5025 = vperm.slane %v5021, %v5024
        %v5026 = vrot.slane %v5025, 4
        %v5027 = vsel %vm1846, 0, %v5026
        %v5028 = vsel %vm1846, %v4388, %v4381
        %v5030 = vunpack.c.l.s4 1983009808
        %v5031 = vunpack.c.0.s8 %v5030
        %v5032 = vperm.slane %v5028, %v5031
        %v5033 = vrot.slane %v4389, 4
        %v5034 = vsel %vm1846, %v5033, %v4387
        %v5036 = vunpack.c.l.s4 1983009808
        %v5037 = vunpack.c.0.s8 %v5036
        %v5038 = vperm.slane %v5034, %v5037
        %v5039 = vrot.slane %v5038, 4
        %v5040 = vsel %vm1846, %v5039, %v5032
        %v5042 = vunpack.c.l.s4 1934713408
        %v5043 = vunpack.c.0.s8 %v5042
        %v5044 = vperm.slane %v5040, %v5043
        %v5045 = vrot.slane %v5044, 4
        %v5046 = vsel %vm1846, 0, %v5045
        %v5047 = vsel %vm1846, %v4414, %v4407
        %v5049 = vunpack.c.l.s4 1983009808
        %v5050 = vunpack.c.0.s8 %v5049
        %v5051 = vperm.slane %v5047, %v5050
        %v5052 = vrot.slane %v4415, 4
        %v5053 = vsel %vm1846, %v5052, %v4413
        %v5055 = vunpack.c.l.s4 1983009808
        %v5056 = vunpack.c.0.s8 %v5055
        %v5057 = vperm.slane %v5053, %v5056
        %v5058 = vrot.slane %v5057, 4
        %v5059 = vsel %vm1846, %v5058, %v5051
        %v5061 = vunpack.c.l.s4 1934713408
        %v5062 = vunpack.c.0.s8 %v5061
        %v5063 = vperm.slane %v5059, %v5062
        %v5064 = vrot.slane %v5063, 4
        %v5065 = vsel %vm1846, 0, %v5064
        %v5066 = vsel %vm1846, %v4440, %v4433
        %v5068 = vunpack.c.l.s4 1983009808
        %v5069 = vunpack.c.0.s8 %v5068
        %v5070 = vperm.slane %v5066, %v5069
        %v5071 = vrot.slane %v4441, 4
        %v5072 = vsel %vm1846, %v5071, %v4439
        %v5074 = vunpack.c.l.s4 1983009808
        %v5075 = vunpack.c.0.s8 %v5074
        %v5076 = vperm.slane %v5072, %v5075
        %v5077 = vrot.slane %v5076, 4
        %v5078 = vsel %vm1846, %v5077, %v5070
        %v5080 = vunpack.c.l.s4 1934713408
        %v5081 = vunpack.c.0.s8 %v5080
        %v5082 = vperm.slane %v5078, %v5081
        %v5083 = vrot.slane %v5082, 4
        %v5084 = vsel %vm1846, 0, %v5083
        %v5085 = vsel %vm1846, %v4466, %v4459
        %v5087 = vunpack.c.l.s4 1983009808
        %v5088 = vunpack.c.0.s8 %v5087
        %v5089 = vperm.slane %v5085, %v5088
        %v5090 = vrot.slane %v4467, 4
        %v5091 = vsel %vm1846, %v5090, %v4465
        %v5093 = vunpack.c.l.s4 1983009808
        %v5094 = vunpack.c.0.s8 %v5093
        %v5095 = vperm.slane %v5091, %v5094
        %v5096 = vrot.slane %v5095, 4
        %v5097 = vsel %vm1846, %v5096, %v5089
        %v5099 = vunpack.c.l.s4 1934713408
        %v5100 = vunpack.c.0.s8 %v5099
        %v5101 = vperm.slane %v5097, %v5100
        %v5102 = vrot.slane %v5101, 4
        %v5103 = vsel %vm1846, 0, %v5102
        %v5104 = vsel %vm1846, %v4492, %v4485
        %v5106 = vunpack.c.l.s4 1983009808
        %v5107 = vunpack.c.0.s8 %v5106
        %v5108 = vperm.slane %v5104, %v5107
        %v5109 = vrot.slane %v4493, 4
        %v5110 = vsel %vm1846, %v5109, %v4491
        %v5112 = vunpack.c.l.s4 1983009808
        %v5113 = vunpack.c.0.s8 %v5112
        %v5114 = vperm.slane %v5110, %v5113
        %v5115 = vrot.slane %v5114, 4
        %v5116 = vsel %vm1846, %v5115, %v5108
        %v5118 = vunpack.c.l.s4 1934713408
        %v5119 = vunpack.c.0.s8 %v5118
        %v5120 = vperm.slane %v5116, %v5119
        %v5121 = vrot.slane %v5120, 4
        %v5122 = vsel %vm1846, 0, %v5121
        %v5123 = vsel %vm1846, %v4518, %v4511
        %v5125 = vunpack.c.l.s4 1983009808
        %v5126 = vunpack.c.0.s8 %v5125
        %v5127 = vperm.slane %v5123, %v5126
        %v5128 = vrot.slane %v4519, 4
        %v5129 = vsel %vm1846, %v5128, %v4517
        %v5131 = vunpack.c.l.s4 1983009808
        %v5132 = vunpack.c.0.s8 %v5131
        %v5133 = vperm.slane %v5129, %v5132
        %v5134 = vrot.slane %v5133, 4
        %v5135 = vsel %vm1846, %v5134, %v5127
        %v5137 = vunpack.c.l.s4 1934713408
        %v5138 = vunpack.c.0.s8 %v5137
        %v5139 = vperm.slane %v5135, %v5138
        %v5140 = vrot.slane %v5139, 4
        %v5141 = vsel %vm1846, 0, %v5140
        %v5142 = vsel %vm1846, %v4544, %v4537
        %v5144 = vunpack.c.l.s4 1983009808
        %v5145 = vunpack.c.0.s8 %v5144
        %v5146 = vperm.slane %v5142, %v5145
        %v5147 = vrot.slane %v4545, 4
        %v5148 = vsel %vm1846, %v5147, %v4543
        %v5150 = vunpack.c.l.s4 1983009808
        %v5151 = vunpack.c.0.s8 %v5150
        %v5152 = vperm.slane %v5148, %v5151
        %v5153 = vrot.slane %v5152, 4
        %v5154 = vsel %vm1846, %v5153, %v5146
        %v5156 = vunpack.c.l.s4 1934713408
        %v5157 = vunpack.c.0.s8 %v5156
        %v5158 = vperm.slane %v5154, %v5157
        %v5159 = vrot.slane %v5158, 4
        %v5160 = vsel %vm1846, 0, %v5159
        %v5161 = vsel %vm1846, %v4570, %v4563
        %v5163 = vunpack.c.l.s4 1983009808
        %v5164 = vunpack.c.0.s8 %v5163
        %v5165 = vperm.slane %v5161, %v5164
        %v5166 = vrot.slane %v4571, 4
        %v5167 = vsel %vm1846, %v5166, %v4569
        %v5169 = vunpack.c.l.s4 1983009808
        %v5170 = vunpack.c.0.s8 %v5169
        %v5171 = vperm.slane %v5167, %v5170
        %v5172 = vrot.slane %v5171, 4
        %v5173 = vsel %vm1846, %v5172, %v5165
        %v5175 = vunpack.c.l.s4 1934713408
        %v5176 = vunpack.c.0.s8 %v5175
        %v5177 = vperm.slane %v5173, %v5176
        %v5178 = vrot.slane %v5177, 4
        %v5179 = vsel %vm1846, 0, %v5178
        %v5182 = vpack.i.b16 %v4607, %v4588
        %v5183 = vshrl.u32 %v4588, 16
        %v5184 = vshrl.u32 %v4607, 16
        %v5185 = vpack.i.b16 %v5184, %v5183
        %v5188 = vpack.i.b16 %v4609, %v4590
        %v5189 = vshrl.u32 %v4590, 16
        %v5190 = vshrl.u32 %v4609, 16
        %v5191 = vpack.i.b16 %v5190, %v5189
        %v5194 = vpack.i.b16 %v4645, %v4626
        %v5195 = vshrl.u32 %v4626, 16
        %v5196 = vshrl.u32 %v4645, 16
        %v5197 = vpack.i.b16 %v5196, %v5195
        %v5200 = vpack.i.b16 %v4647, %v4628
        %v5201 = vshrl.u32 %v4628, 16
        %v5202 = vshrl.u32 %v4647, 16
        %v5203 = vpack.i.b16 %v5202, %v5201
        %v5206 = vpack.i.b16 %v4683, %v4664
        %v5207 = vshrl.u32 %v4664, 16
        %v5208 = vshrl.u32 %v4683, 16
        %v5209 = vpack.i.b16 %v5208, %v5207
        %v5212 = vpack.i.b16 %v4685, %v4666
        %v5213 = vshrl.u32 %v4666, 16
        %v5214 = vshrl.u32 %v4685, 16
        %v5215 = vpack.i.b16 %v5214, %v5213
        %v5218 = vpack.i.b16 %v4721, %v4702
        %v5219 = vshrl.u32 %v4702, 16
        %v5220 = vshrl.u32 %v4721, 16
        %v5221 = vpack.i.b16 %v5220, %v5219
        %v5224 = vpack.i.b16 %v4723, %v4704
        %v5225 = vshrl.u32 %v4704, 16
        %v5226 = vshrl.u32 %v4723, 16
        %v5227 = vpack.i.b16 %v5226, %v5225
        %v5230 = vpack.i.b16 %v4759, %v4740
        %v5231 = vshrl.u32 %v4740, 16
        %v5232 = vshrl.u32 %v4759, 16
        %v5233 = vpack.i.b16 %v5232, %v5231
        %v5236 = vpack.i.b16 %v4761, %v4742
        %v5237 = vshrl.u32 %v4742, 16
        %v5238 = vshrl.u32 %v4761, 16
        %v5239 = vpack.i.b16 %v5238, %v5237
        %v5242 = vpack.i.b16 %v4797, %v4778
        %v5243 = vshrl.u32 %v4778, 16
        %v5244 = vshrl.u32 %v4797, 16
        %v5245 = vpack.i.b16 %v5244, %v5243
        %v5248 = vpack.i.b16 %v4799, %v4780
        %v5249 = vshrl.u32 %v4780, 16
        %v5250 = vshrl.u32 %v4799, 16
        %v5251 = vpack.i.b16 %v5250, %v5249
        %v5254 = vpack.i.b16 %v4835, %v4816
        %v5255 = vshrl.u32 %v4816, 16
        %v5256 = vshrl.u32 %v4835, 16
        %v5257 = vpack.i.b16 %v5256, %v5255
        %v5260 = vpack.i.b16 %v4837, %v4818
        %v5261 = vshrl.u32 %v4818, 16
        %v5262 = vshrl.u32 %v4837, 16
        %v5263 = vpack.i.b16 %v5262, %v5261
        %v5266 = vpack.i.b16 %v4873, %v4854
        %v5267 = vshrl.u32 %v4854, 16
        %v5268 = vshrl.u32 %v4873, 16
        %v5269 = vpack.i.b16 %v5268, %v5267
        %v5272 = vpack.i.b16 %v4875, %v4856
        %v5273 = vshrl.u32 %v4856, 16
        %v5274 = vshrl.u32 %v4875, 16
        %v5275 = vpack.i.b16 %v5274, %v5273
        %v5278 = vpack.i.b16 %v4911, %v4892
        %v5279 = vshrl.u32 %v4892, 16
        %v5280 = vshrl.u32 %v4911, 16
        %v5281 = vpack.i.b16 %v5280, %v5279
        %v5284 = vpack.i.b16 %v4913, %v4894
        %v5285 = vshrl.u32 %v4894, 16
        %v5286 = vshrl.u32 %v4913, 16
        %v5287 = vpack.i.b16 %v5286, %v5285
        %v5290 = vpack.i.b16 %v4949, %v4930
        %v5291 = vshrl.u32 %v4930, 16
        %v5292 = vshrl.u32 %v4949, 16
        %v5293 = vpack.i.b16 %v5292, %v5291
        %v5296 = vpack.i.b16 %v4951, %v4932
        %v5297 = vshrl.u32 %v4932, 16
        %v5298 = vshrl.u32 %v4951, 16
        %v5299 = vpack.i.b16 %v5298, %v5297
        %v5302 = vpack.i.b16 %v4987, %v4968
        %v5303 = vshrl.u32 %v4968, 16
        %v5304 = vshrl.u32 %v4987, 16
        %v5305 = vpack.i.b16 %v5304, %v5303
        %v5308 = vpack.i.b16 %v4989, %v4970
        %v5309 = vshrl.u32 %v4970, 16
        %v5310 = vshrl.u32 %v4989, 16
        %v5311 = vpack.i.b16 %v5310, %v5309
        %v5314 = vpack.i.b16 %v5025, %v5006
        %v5315 = vshrl.u32 %v5006, 16
        %v5316 = vshrl.u32 %v5025, 16
        %v5317 = vpack.i.b16 %v5316, %v5315
        %v5320 = vpack.i.b16 %v5027, %v5008
        %v5321 = vshrl.u32 %v5008, 16
        %v5322 = vshrl.u32 %v5027, 16
        %v5323 = vpack.i.b16 %v5322, %v5321
        %v5326 = vpack.i.b16 %v5063, %v5044
        %v5327 = vshrl.u32 %v5044, 16
        %v5328 = vshrl.u32 %v5063, 16
        %v5329 = vpack.i.b16 %v5328, %v5327
        %v5332 = vpack.i.b16 %v5065, %v5046
        %v5333 = vshrl.u32 %v5046, 16
        %v5334 = vshrl.u32 %v5065, 16
        %v5335 = vpack.i.b16 %v5334, %v5333
        %v5338 = vpack.i.b16 %v5101, %v5082
        %v5339 = vshrl.u32 %v5082, 16
        %v5340 = vshrl.u32 %v5101, 16
        %v5341 = vpack.i.b16 %v5340, %v5339
        %v5344 = vpack.i.b16 %v5103, %v5084
        %v5345 = vshrl.u32 %v5084, 16
        %v5346 = vshrl.u32 %v5103, 16
        %v5347 = vpack.i.b16 %v5346, %v5345
        %v5350 = vpack.i.b16 %v5139, %v5120
        %v5351 = vshrl.u32 %v5120, 16
        %v5352 = vshrl.u32 %v5139, 16
        %v5353 = vpack.i.b16 %v5352, %v5351
        %v5356 = vpack.i.b16 %v5141, %v5122
        %v5357 = vshrl.u32 %v5122, 16
        %v5358 = vshrl.u32 %v5141, 16
        %v5359 = vpack.i.b16 %v5358, %v5357
        %v5362 = vpack.i.b16 %v5177, %v5158
        %v5363 = vshrl.u32 %v5158, 16
        %v5364 = vshrl.u32 %v5177, 16
        %v5365 = vpack.i.b16 %v5364, %v5363
        %v5368 = vpack.i.b16 %v5179, %v5160
        %v5369 = vshrl.u32 %v5160, 16
        %v5370 = vshrl.u32 %v5179, 16
        %v5371 = vpack.i.b16 %v5370, %v5369
        %v5388 = vrot.slane %v1517, 4
        %v5389 = vrot.slane %v1520, 4
        %v5390 = vrot.slane %v1523, 4
        %v5391 = vrot.slane %v1526, 4
        %v5392 = vrot.slane %v1529, 4
        %v5393 = vrot.slane %v1532, 4
        %v5394 = vrot.slane %v1535, 4
        %v5395 = vrot.slane %v1538, 4
        %v5396 = vrot.slane %v1541, 4
        %v5397 = vrot.slane %v1544, 4
        %v5398 = vrot.slane %v1547, 4
        %v5399 = vrot.slane %v1550, 4
        %v5400 = vrot.slane %v1553, 4
        %v5401 = vrot.slane %v1556, 4
        %v5402 = vrot.slane %v1559, 4
        %v5403 = vrot.slane %v1562, 4
        %5404 = vrot.lane.b32.xlu0 %v1517, 64
        %v5405 = vpop.permute.xlu0 %5404
        %5406 = vrot.lane.b32.xlu0 %v1520, 64
        %v5407 = vpop.permute.xlu0 %5406
        %5408 = vrot.lane.b32.xlu0 %v1523, 64
        %v5409 = vpop.permute.xlu0 %5408
        %5410 = vrot.lane.b32.xlu0 %v1526, 64
        %v5411 = vpop.permute.xlu0 %5410
        %5412 = vrot.lane.b32.xlu0 %v1529, 64
        %v5413 = vpop.permute.xlu0 %5412
        %5414 = vrot.lane.b32.xlu0 %v1532, 64
        %v5415 = vpop.permute.xlu0 %5414
        %5416 = vrot.lane.b32.xlu0 %v1535, 64
        %v5417 = vpop.permute.xlu0 %5416
        %5418 = vrot.lane.b32.xlu0 %v1538, 64
        %v5419 = vpop.permute.xlu0 %5418
        %5420 = vrot.lane.b32.xlu0 %v1541, 64
        %v5421 = vpop.permute.xlu0 %5420
        %5422 = vrot.lane.b32.xlu0 %v1544, 64
        %v5423 = vpop.permute.xlu0 %5422
        %5424 = vrot.lane.b32.xlu0 %v1547, 64
        %v5425 = vpop.permute.xlu0 %5424
        %5426 = vrot.lane.b32.xlu0 %v1550, 64
        %v5427 = vpop.permute.xlu0 %5426
        %5428 = vrot.lane.b32.xlu0 %v1553, 64
        %v5429 = vpop.permute.xlu0 %5428
        %5430 = vrot.lane.b32.xlu0 %v1556, 64
        %v5431 = vpop.permute.xlu0 %5430
        %5432 = vrot.lane.b32.xlu0 %v1559, 64
        %v5433 = vpop.permute.xlu0 %5432
        %5434 = vrot.lane.b32.xlu0 %v1562, 64
        %v5435 = vpop.permute.xlu0 %5434
        %v5436 = vrot.slane %v5405, 4
        %v5437 = vrot.slane %v5407, 4
        %v5438 = vrot.slane %v5409, 4
        %v5439 = vrot.slane %v5411, 4
        %v5440 = vrot.slane %v5413, 4
        %v5441 = vrot.slane %v5415, 4
        %v5442 = vrot.slane %v5417, 4
        %v5443 = vrot.slane %v5419, 4
        %v5444 = vrot.slane %v5421, 4
        %v5445 = vrot.slane %v5423, 4
        %v5446 = vrot.slane %v5425, 4
        %v5447 = vrot.slane %v5427, 4
        %v5448 = vrot.slane %v5429, 4
        %v5449 = vrot.slane %v5431, 4
        %v5450 = vrot.slane %v5433, 4
        %v5451 = vrot.slane %v5435, 4
        %v5454 = vpack.i.b16 %v5405, %v1517
        %v5455 = vshrl.u32 %v1517, 16
        %v5456 = vshrl.u32 %v5405, 16
        %v5457 = vpack.i.b16 %v5456, %v5455
        %v5460 = vpack.i.b16 %v5436, %v5388
        %v5461 = vshrl.u32 %v5388, 16
        %v5462 = vshrl.u32 %v5436, 16
        %v5463 = vpack.i.b16 %v5462, %v5461
        %v5466 = vpack.i.b16 %v5407, %v1520
        %v5467 = vshrl.u32 %v1520, 16
        %v5468 = vshrl.u32 %v5407, 16
        %v5469 = vpack.i.b16 %v5468, %v5467
        %v5472 = vpack.i.b16 %v5437, %v5389
        %v5473 = vshrl.u32 %v5389, 16
        %v5474 = vshrl.u32 %v5437, 16
        %v5475 = vpack.i.b16 %v5474, %v5473
        %v5478 = vpack.i.b16 %v5409, %v1523
        %v5479 = vshrl.u32 %v1523, 16
        %v5480 = vshrl.u32 %v5409, 16
        %v5481 = vpack.i.b16 %v5480, %v5479
        %v5484 = vpack.i.b16 %v5438, %v5390
        %v5485 = vshrl.u32 %v5390, 16
        %v5486 = vshrl.u32 %v5438, 16
        %v5487 = vpack.i.b16 %v5486, %v5485
        %v5490 = vpack.i.b16 %v5411, %v1526
        %v5491 = vshrl.u32 %v1526, 16
        %v5492 = vshrl.u32 %v5411, 16
        %v5493 = vpack.i.b16 %v5492, %v5491
        %v5496 = vpack.i.b16 %v5439, %v5391
        %v5497 = vshrl.u32 %v5391, 16
        %v5498 = vshrl.u32 %v5439, 16
        %v5499 = vpack.i.b16 %v5498, %v5497
        %v5502 = vpack.i.b16 %v5413, %v1529
        %v5503 = vshrl.u32 %v1529, 16
        %v5504 = vshrl.u32 %v5413, 16
        %v5505 = vpack.i.b16 %v5504, %v5503
        %v5508 = vpack.i.b16 %v5440, %v5392
        %v5509 = vshrl.u32 %v5392, 16
        %v5510 = vshrl.u32 %v5440, 16
        %v5511 = vpack.i.b16 %v5510, %v5509
        %v5514 = vpack.i.b16 %v5415, %v1532
        %v5515 = vshrl.u32 %v1532, 16
        %v5516 = vshrl.u32 %v5415, 16
        %v5517 = vpack.i.b16 %v5516, %v5515
        %v5520 = vpack.i.b16 %v5441, %v5393
        %v5521 = vshrl.u32 %v5393, 16
        %v5522 = vshrl.u32 %v5441, 16
        %v5523 = vpack.i.b16 %v5522, %v5521
        %v5526 = vpack.i.b16 %v5417, %v1535
        %v5527 = vshrl.u32 %v1535, 16
        %v5528 = vshrl.u32 %v5417, 16
        %v5529 = vpack.i.b16 %v5528, %v5527
        %v5532 = vpack.i.b16 %v5442, %v5394
        %v5533 = vshrl.u32 %v5394, 16
        %v5534 = vshrl.u32 %v5442, 16
        %v5535 = vpack.i.b16 %v5534, %v5533
        %v5538 = vpack.i.b16 %v5419, %v1538
        %v5539 = vshrl.u32 %v1538, 16
        %v5540 = vshrl.u32 %v5419, 16
        %v5541 = vpack.i.b16 %v5540, %v5539
        %v5544 = vpack.i.b16 %v5443, %v5395
        %v5545 = vshrl.u32 %v5395, 16
        %v5546 = vshrl.u32 %v5443, 16
        %v5547 = vpack.i.b16 %v5546, %v5545
        %v5550 = vpack.i.b16 %v5421, %v1541
        %v5551 = vshrl.u32 %v1541, 16
        %v5552 = vshrl.u32 %v5421, 16
        %v5553 = vpack.i.b16 %v5552, %v5551
        %v5556 = vpack.i.b16 %v5444, %v5396
        %v5557 = vshrl.u32 %v5396, 16
        %v5558 = vshrl.u32 %v5444, 16
        %v5559 = vpack.i.b16 %v5558, %v5557
        %v5562 = vpack.i.b16 %v5423, %v1544
        %v5563 = vshrl.u32 %v1544, 16
        %v5564 = vshrl.u32 %v5423, 16
        %v5565 = vpack.i.b16 %v5564, %v5563
        %v5568 = vpack.i.b16 %v5445, %v5397
        %v5569 = vshrl.u32 %v5397, 16
        %v5570 = vshrl.u32 %v5445, 16
        %v5571 = vpack.i.b16 %v5570, %v5569
        %v5574 = vpack.i.b16 %v5425, %v1547
        %v5575 = vshrl.u32 %v1547, 16
        %v5576 = vshrl.u32 %v5425, 16
        %v5577 = vpack.i.b16 %v5576, %v5575
        %v5580 = vpack.i.b16 %v5446, %v5398
        %v5581 = vshrl.u32 %v5398, 16
        %v5582 = vshrl.u32 %v5446, 16
        %v5583 = vpack.i.b16 %v5582, %v5581
        %v5586 = vpack.i.b16 %v5427, %v1550
        %v5587 = vshrl.u32 %v1550, 16
        %v5588 = vshrl.u32 %v5427, 16
        %v5589 = vpack.i.b16 %v5588, %v5587
        %v5592 = vpack.i.b16 %v5447, %v5399
        %v5593 = vshrl.u32 %v5399, 16
        %v5594 = vshrl.u32 %v5447, 16
        %v5595 = vpack.i.b16 %v5594, %v5593
        %v5598 = vpack.i.b16 %v5429, %v1553
        %v5599 = vshrl.u32 %v1553, 16
        %v5600 = vshrl.u32 %v5429, 16
        %v5601 = vpack.i.b16 %v5600, %v5599
        %v5604 = vpack.i.b16 %v5448, %v5400
        %v5605 = vshrl.u32 %v5400, 16
        %v5606 = vshrl.u32 %v5448, 16
        %v5607 = vpack.i.b16 %v5606, %v5605
        %v5610 = vpack.i.b16 %v5431, %v1556
        %v5611 = vshrl.u32 %v1556, 16
        %v5612 = vshrl.u32 %v5431, 16
        %v5613 = vpack.i.b16 %v5612, %v5611
        %v5616 = vpack.i.b16 %v5449, %v5401
        %v5617 = vshrl.u32 %v5401, 16
        %v5618 = vshrl.u32 %v5449, 16
        %v5619 = vpack.i.b16 %v5618, %v5617
        %v5622 = vpack.i.b16 %v5433, %v1559
        %v5623 = vshrl.u32 %v1559, 16
        %v5624 = vshrl.u32 %v5433, 16
        %v5625 = vpack.i.b16 %v5624, %v5623
        %v5628 = vpack.i.b16 %v5450, %v5402
        %v5629 = vshrl.u32 %v5402, 16
        %v5630 = vshrl.u32 %v5450, 16
        %v5631 = vpack.i.b16 %v5630, %v5629
        %v5634 = vpack.i.b16 %v5435, %v1562
        %v5635 = vshrl.u32 %v1562, 16
        %v5636 = vshrl.u32 %v5435, 16
        %v5637 = vpack.i.b16 %v5636, %v5635
        %v5640 = vpack.i.b16 %v5451, %v5403
        %v5641 = vshrl.u32 %v5403, 16
        %v5642 = vshrl.u32 %v5451, 16
        %v5643 = vpack.i.b16 %v5642, %v5641
        %v5646 = vunpack.c.l.s4 1983009808
        %v5647 = vunpack.c.0.s8 %v5646
        %v5648 = vperm.slane %v5454, %v5647
        %v5651 = vunpack.c.l.s4 1983009808
        %v5652 = vunpack.c.0.s8 %v5651
        %v5653 = vperm.slane %v5460, %v5652
        %v5654 = vrot.slane %v5653, 4
        %v5655 = vsel %vm1846, %v5654, %v5648
        %v5656 = vrot.slane %v5648, 4
        %v5657 = vsel %vm1846, %v5653, %v5656
        %v5659 = vunpack.c.l.s4 1934713408
        %v5660 = vunpack.c.0.s8 %v5659
        %v5661 = vperm.slane %v5655, %v5660
        %v5663 = vunpack.c.l.s4 1934713408
        %v5664 = vunpack.c.0.s8 %v5663
        %v5665 = vperm.slane %v5657, %v5664
        %v5666 = vrot.slane %v5661, 4
        %v5667 = vsel %vm1846, 0, %v5666
        %v5668 = vrot.slane %v5665, 4
        %v5669 = vsel %vm1846, 0, %v5668
        %v5672 = vunpack.c.l.s4 1983009808
        %v5673 = vunpack.c.0.s8 %v5672
        %v5674 = vperm.slane %v5457, %v5673
        %v5677 = vunpack.c.l.s4 1983009808
        %v5678 = vunpack.c.0.s8 %v5677
        %v5679 = vperm.slane %v5463, %v5678
        %v5680 = vrot.slane %v5679, 4
        %v5681 = vsel %vm1846, %v5680, %v5674
        %v5682 = vrot.slane %v5674, 4
        %v5683 = vsel %vm1846, %v5679, %v5682
        %v5685 = vunpack.c.l.s4 1934713408
        %v5686 = vunpack.c.0.s8 %v5685
        %v5687 = vperm.slane %v5681, %v5686
        %v5689 = vunpack.c.l.s4 1934713408
        %v5690 = vunpack.c.0.s8 %v5689
        %v5691 = vperm.slane %v5683, %v5690
        %v5692 = vrot.slane %v5687, 4
        %v5693 = vsel %vm1846, 0, %v5692
        %v5694 = vrot.slane %v5691, 4
        %v5695 = vsel %vm1846, 0, %v5694
        %v5698 = vunpack.c.l.s4 1983009808
        %v5699 = vunpack.c.0.s8 %v5698
        %v5700 = vperm.slane %v5466, %v5699
        %v5703 = vunpack.c.l.s4 1983009808
        %v5704 = vunpack.c.0.s8 %v5703
        %v5705 = vperm.slane %v5472, %v5704
        %v5706 = vrot.slane %v5705, 4
        %v5707 = vsel %vm1846, %v5706, %v5700
        %v5708 = vrot.slane %v5700, 4
        %v5709 = vsel %vm1846, %v5705, %v5708
        %v5711 = vunpack.c.l.s4 1934713408
        %v5712 = vunpack.c.0.s8 %v5711
        %v5713 = vperm.slane %v5707, %v5712
        %v5715 = vunpack.c.l.s4 1934713408
        %v5716 = vunpack.c.0.s8 %v5715
        %v5717 = vperm.slane %v5709, %v5716
        %v5718 = vrot.slane %v5713, 4
        %v5719 = vsel %vm1846, 0, %v5718
        %v5720 = vrot.slane %v5717, 4
        %v5721 = vsel %vm1846, 0, %v5720
        %v5724 = vunpack.c.l.s4 1983009808
        %v5725 = vunpack.c.0.s8 %v5724
        %v5726 = vperm.slane %v5469, %v5725
        %v5729 = vunpack.c.l.s4 1983009808
        %v5730 = vunpack.c.0.s8 %v5729
        %v5731 = vperm.slane %v5475, %v5730
        %v5732 = vrot.slane %v5731, 4
        %v5733 = vsel %vm1846, %v5732, %v5726
        %v5734 = vrot.slane %v5726, 4
        %v5735 = vsel %vm1846, %v5731, %v5734
        %v5737 = vunpack.c.l.s4 1934713408
        %v5738 = vunpack.c.0.s8 %v5737
        %v5739 = vperm.slane %v5733, %v5738
        %v5741 = vunpack.c.l.s4 1934713408
        %v5742 = vunpack.c.0.s8 %v5741
        %v5743 = vperm.slane %v5735, %v5742
        %v5744 = vrot.slane %v5739, 4
        %v5745 = vsel %vm1846, 0, %v5744
        %v5746 = vrot.slane %v5743, 4
        %v5747 = vsel %vm1846, 0, %v5746
        %v5750 = vunpack.c.l.s4 1983009808
        %v5751 = vunpack.c.0.s8 %v5750
        %v5752 = vperm.slane %v5478, %v5751
        %v5755 = vunpack.c.l.s4 1983009808
        %v5756 = vunpack.c.0.s8 %v5755
        %v5757 = vperm.slane %v5484, %v5756
        %v5758 = vrot.slane %v5757, 4
        %v5759 = vsel %vm1846, %v5758, %v5752
        %v5760 = vrot.slane %v5752, 4
        %v5761 = vsel %vm1846, %v5757, %v5760
        %v5763 = vunpack.c.l.s4 1934713408
        %v5764 = vunpack.c.0.s8 %v5763
        %v5765 = vperm.slane %v5759, %v5764
        %v5767 = vunpack.c.l.s4 1934713408
        %v5768 = vunpack.c.0.s8 %v5767
        %v5769 = vperm.slane %v5761, %v5768
        %v5770 = vrot.slane %v5765, 4
        %v5771 = vsel %vm1846, 0, %v5770
        %v5772 = vrot.slane %v5769, 4
        %v5773 = vsel %vm1846, 0, %v5772
        %v5776 = vunpack.c.l.s4 1983009808
        %v5777 = vunpack.c.0.s8 %v5776
        %v5778 = vperm.slane %v5481, %v5777
        %v5781 = vunpack.c.l.s4 1983009808
        %v5782 = vunpack.c.0.s8 %v5781
        %v5783 = vperm.slane %v5487, %v5782
        %v5784 = vrot.slane %v5783, 4
        %v5785 = vsel %vm1846, %v5784, %v5778
        %v5786 = vrot.slane %v5778, 4
        %v5787 = vsel %vm1846, %v5783, %v5786
        %v5789 = vunpack.c.l.s4 1934713408
        %v5790 = vunpack.c.0.s8 %v5789
        %v5791 = vperm.slane %v5785, %v5790
        %v5793 = vunpack.c.l.s4 1934713408
        %v5794 = vunpack.c.0.s8 %v5793
        %v5795 = vperm.slane %v5787, %v5794
        %v5796 = vrot.slane %v5791, 4
        %v5797 = vsel %vm1846, 0, %v5796
        %v5798 = vrot.slane %v5795, 4
        %v5799 = vsel %vm1846, 0, %v5798
        %v5802 = vunpack.c.l.s4 1983009808
        %v5803 = vunpack.c.0.s8 %v5802
        %v5804 = vperm.slane %v5490, %v5803
        %v5807 = vunpack.c.l.s4 1983009808
        %v5808 = vunpack.c.0.s8 %v5807
        %v5809 = vperm.slane %v5496, %v5808
        %v5810 = vrot.slane %v5809, 4
        %v5811 = vsel %vm1846, %v5810, %v5804
        %v5812 = vrot.slane %v5804, 4
        %v5813 = vsel %vm1846, %v5809, %v5812
        %v5815 = vunpack.c.l.s4 1934713408
        %v5816 = vunpack.c.0.s8 %v5815
        %v5817 = vperm.slane %v5811, %v5816
        %v5819 = vunpack.c.l.s4 1934713408
        %v5820 = vunpack.c.0.s8 %v5819
        %v5821 = vperm.slane %v5813, %v5820
        %v5822 = vrot.slane %v5817, 4
        %v5823 = vsel %vm1846, 0, %v5822
        %v5824 = vrot.slane %v5821, 4
        %v5825 = vsel %vm1846, 0, %v5824
        %v5828 = vunpack.c.l.s4 1983009808
        %v5829 = vunpack.c.0.s8 %v5828
        %v5830 = vperm.slane %v5493, %v5829
        %v5833 = vunpack.c.l.s4 1983009808
        %v5834 = vunpack.c.0.s8 %v5833
        %v5835 = vperm.slane %v5499, %v5834
        %v5836 = vrot.slane %v5835, 4
        %v5837 = vsel %vm1846, %v5836, %v5830
        %v5838 = vrot.slane %v5830, 4
        %v5839 = vsel %vm1846, %v5835, %v5838
        %v5841 = vunpack.c.l.s4 1934713408
        %v5842 = vunpack.c.0.s8 %v5841
        %v5843 = vperm.slane %v5837, %v5842
        %v5845 = vunpack.c.l.s4 1934713408
        %v5846 = vunpack.c.0.s8 %v5845
        %v5847 = vperm.slane %v5839, %v5846
        %v5848 = vrot.slane %v5843, 4
        %v5849 = vsel %vm1846, 0, %v5848
        %v5850 = vrot.slane %v5847, 4
        %v5851 = vsel %vm1846, 0, %v5850
        %v5854 = vunpack.c.l.s4 1983009808
        %v5855 = vunpack.c.0.s8 %v5854
        %v5856 = vperm.slane %v5502, %v5855
        %v5859 = vunpack.c.l.s4 1983009808
        %v5860 = vunpack.c.0.s8 %v5859
        %v5861 = vperm.slane %v5508, %v5860
        %v5862 = vrot.slane %v5861, 4
        %v5863 = vsel %vm1846, %v5862, %v5856
        %v5864 = vrot.slane %v5856, 4
        %v5865 = vsel %vm1846, %v5861, %v5864
        %v5867 = vunpack.c.l.s4 1934713408
        %v5868 = vunpack.c.0.s8 %v5867
        %v5869 = vperm.slane %v5863, %v5868
        %v5871 = vunpack.c.l.s4 1934713408
        %v5872 = vunpack.c.0.s8 %v5871
        %v5873 = vperm.slane %v5865, %v5872
        %v5874 = vrot.slane %v5869, 4
        %v5875 = vsel %vm1846, 0, %v5874
        %v5876 = vrot.slane %v5873, 4
        %v5877 = vsel %vm1846, 0, %v5876
        %v5880 = vunpack.c.l.s4 1983009808
        %v5881 = vunpack.c.0.s8 %v5880
        %v5882 = vperm.slane %v5505, %v5881
        %v5885 = vunpack.c.l.s4 1983009808
        %v5886 = vunpack.c.0.s8 %v5885
        %v5887 = vperm.slane %v5511, %v5886
        %v5888 = vrot.slane %v5887, 4
        %v5889 = vsel %vm1846, %v5888, %v5882
        %v5890 = vrot.slane %v5882, 4
        %v5891 = vsel %vm1846, %v5887, %v5890
        %v5893 = vunpack.c.l.s4 1934713408
        %v5894 = vunpack.c.0.s8 %v5893
        %v5895 = vperm.slane %v5889, %v5894
        %v5897 = vunpack.c.l.s4 1934713408
        %v5898 = vunpack.c.0.s8 %v5897
        %v5899 = vperm.slane %v5891, %v5898
        %v5900 = vrot.slane %v5895, 4
        %v5901 = vsel %vm1846, 0, %v5900
        %v5902 = vrot.slane %v5899, 4
        %v5903 = vsel %vm1846, 0, %v5902
        %v5906 = vunpack.c.l.s4 1983009808
        %v5907 = vunpack.c.0.s8 %v5906
        %v5908 = vperm.slane %v5514, %v5907
        %v5911 = vunpack.c.l.s4 1983009808
        %v5912 = vunpack.c.0.s8 %v5911
        %v5913 = vperm.slane %v5520, %v5912
        %v5914 = vrot.slane %v5913, 4
        %v5915 = vsel %vm1846, %v5914, %v5908
        %v5916 = vrot.slane %v5908, 4
        %v5917 = vsel %vm1846, %v5913, %v5916
        %v5919 = vunpack.c.l.s4 1934713408
        %v5920 = vunpack.c.0.s8 %v5919
        %v5921 = vperm.slane %v5915, %v5920
        %v5923 = vunpack.c.l.s4 1934713408
        %v5924 = vunpack.c.0.s8 %v5923
        %v5925 = vperm.slane %v5917, %v5924
        %v5926 = vrot.slane %v5921, 4
        %v5927 = vsel %vm1846, 0, %v5926
        %v5928 = vrot.slane %v5925, 4
        %v5929 = vsel %vm1846, 0, %v5928
        %v5932 = vunpack.c.l.s4 1983009808
        %v5933 = vunpack.c.0.s8 %v5932
        %v5934 = vperm.slane %v5517, %v5933
        %v5937 = vunpack.c.l.s4 1983009808
        %v5938 = vunpack.c.0.s8 %v5937
        %v5939 = vperm.slane %v5523, %v5938
        %v5940 = vrot.slane %v5939, 4
        %v5941 = vsel %vm1846, %v5940, %v5934
        %v5942 = vrot.slane %v5934, 4
        %v5943 = vsel %vm1846, %v5939, %v5942
        %v5945 = vunpack.c.l.s4 1934713408
        %v5946 = vunpack.c.0.s8 %v5945
        %v5947 = vperm.slane %v5941, %v5946
        %v5949 = vunpack.c.l.s4 1934713408
        %v5950 = vunpack.c.0.s8 %v5949
        %v5951 = vperm.slane %v5943, %v5950
        %v5952 = vrot.slane %v5947, 4
        %v5953 = vsel %vm1846, 0, %v5952
        %v5954 = vrot.slane %v5951, 4
        %v5955 = vsel %vm1846, 0, %v5954
        %v5958 = vunpack.c.l.s4 1983009808
        %v5959 = vunpack.c.0.s8 %v5958
        %v5960 = vperm.slane %v5526, %v5959
        %v5963 = vunpack.c.l.s4 1983009808
        %v5964 = vunpack.c.0.s8 %v5963
        %v5965 = vperm.slane %v5532, %v5964
        %v5966 = vrot.slane %v5965, 4
        %v5967 = vsel %vm1846, %v5966, %v5960
        %v5968 = vrot.slane %v5960, 4
        %v5969 = vsel %vm1846, %v5965, %v5968
        %v5971 = vunpack.c.l.s4 1934713408
        %v5972 = vunpack.c.0.s8 %v5971
        %v5973 = vperm.slane %v5967, %v5972
        %v5975 = vunpack.c.l.s4 1934713408
        %v5976 = vunpack.c.0.s8 %v5975
        %v5977 = vperm.slane %v5969, %v5976
        %v5978 = vrot.slane %v5973, 4
        %v5979 = vsel %vm1846, 0, %v5978
        %v5980 = vrot.slane %v5977, 4
        %v5981 = vsel %vm1846, 0, %v5980
        %v5984 = vunpack.c.l.s4 1983009808
        %v5985 = vunpack.c.0.s8 %v5984
        %v5986 = vperm.slane %v5529, %v5985
        %v5989 = vunpack.c.l.s4 1983009808
        %v5990 = vunpack.c.0.s8 %v5989
        %v5991 = vperm.slane %v5535, %v5990
        %v5992 = vrot.slane %v5991, 4
        %v5993 = vsel %vm1846, %v5992, %v5986
        %v5994 = vrot.slane %v5986, 4
        %v5995 = vsel %vm1846, %v5991, %v5994
        %v5997 = vunpack.c.l.s4 1934713408
        %v5998 = vunpack.c.0.s8 %v5997
        %v5999 = vperm.slane %v5993, %v5998
        %v6001 = vunpack.c.l.s4 1934713408
        %v6002 = vunpack.c.0.s8 %v6001
        %v6003 = vperm.slane %v5995, %v6002
        %v6004 = vrot.slane %v5999, 4
        %v6005 = vsel %vm1846, 0, %v6004
        %v6006 = vrot.slane %v6003, 4
        %v6007 = vsel %vm1846, 0, %v6006
        %v6010 = vunpack.c.l.s4 1983009808
        %v6011 = vunpack.c.0.s8 %v6010
        %v6012 = vperm.slane %v5538, %v6011
        %v6015 = vunpack.c.l.s4 1983009808
        %v6016 = vunpack.c.0.s8 %v6015
        %v6017 = vperm.slane %v5544, %v6016
        %v6018 = vrot.slane %v6017, 4
        %v6019 = vsel %vm1846, %v6018, %v6012
        %v6020 = vrot.slane %v6012, 4
        %v6021 = vsel %vm1846, %v6017, %v6020
        %v6023 = vunpack.c.l.s4 1934713408
        %v6024 = vunpack.c.0.s8 %v6023
        %v6025 = vperm.slane %v6019, %v6024
        %v6027 = vunpack.c.l.s4 1934713408
        %v6028 = vunpack.c.0.s8 %v6027
        %v6029 = vperm.slane %v6021, %v6028
        %v6030 = vrot.slane %v6025, 4
        %v6031 = vsel %vm1846, 0, %v6030
        %v6032 = vrot.slane %v6029, 4
        %v6033 = vsel %vm1846, 0, %v6032
        %v6036 = vunpack.c.l.s4 1983009808
        %v6037 = vunpack.c.0.s8 %v6036
        %v6038 = vperm.slane %v5541, %v6037
        %v6041 = vunpack.c.l.s4 1983009808
        %v6042 = vunpack.c.0.s8 %v6041
        %v6043 = vperm.slane %v5547, %v6042
        %v6044 = vrot.slane %v6043, 4
        %v6045 = vsel %vm1846, %v6044, %v6038
        %v6046 = vrot.slane %v6038, 4
        %v6047 = vsel %vm1846, %v6043, %v6046
        %v6049 = vunpack.c.l.s4 1934713408
        %v6050 = vunpack.c.0.s8 %v6049
        %v6051 = vperm.slane %v6045, %v6050
        %v6053 = vunpack.c.l.s4 1934713408
        %v6054 = vunpack.c.0.s8 %v6053
        %v6055 = vperm.slane %v6047, %v6054
        %v6056 = vrot.slane %v6051, 4
        %v6057 = vsel %vm1846, 0, %v6056
        %v6058 = vrot.slane %v6055, 4
        %v6059 = vsel %vm1846, 0, %v6058
        %v6062 = vunpack.c.l.s4 1983009808
        %v6063 = vunpack.c.0.s8 %v6062
        %v6064 = vperm.slane %v5550, %v6063
        %v6067 = vunpack.c.l.s4 1983009808
        %v6068 = vunpack.c.0.s8 %v6067
        %v6069 = vperm.slane %v5556, %v6068
        %v6070 = vrot.slane %v6069, 4
        %v6071 = vsel %vm1846, %v6070, %v6064
        %v6072 = vrot.slane %v6064, 4
        %v6073 = vsel %vm1846, %v6069, %v6072
        %v6075 = vunpack.c.l.s4 1934713408
        %v6076 = vunpack.c.0.s8 %v6075
        %v6077 = vperm.slane %v6071, %v6076
        %v6079 = vunpack.c.l.s4 1934713408
        %v6080 = vunpack.c.0.s8 %v6079
        %v6081 = vperm.slane %v6073, %v6080
        %v6082 = vrot.slane %v6077, 4
        %v6083 = vsel %vm1846, 0, %v6082
        %v6084 = vrot.slane %v6081, 4
        %v6085 = vsel %vm1846, 0, %v6084
        %v6088 = vunpack.c.l.s4 1983009808
        %v6089 = vunpack.c.0.s8 %v6088
        %v6090 = vperm.slane %v5553, %v6089
        %v6093 = vunpack.c.l.s4 1983009808
        %v6094 = vunpack.c.0.s8 %v6093
        %v6095 = vperm.slane %v5559, %v6094
        %v6096 = vrot.slane %v6095, 4
        %v6097 = vsel %vm1846, %v6096, %v6090
        %v6098 = vrot.slane %v6090, 4
        %v6099 = vsel %vm1846, %v6095, %v6098
        %v6101 = vunpack.c.l.s4 1934713408
        %v6102 = vunpack.c.0.s8 %v6101
        %v6103 = vperm.slane %v6097, %v6102
        %v6105 = vunpack.c.l.s4 1934713408
        %v6106 = vunpack.c.0.s8 %v6105
        %v6107 = vperm.slane %v6099, %v6106
        %v6108 = vrot.slane %v6103, 4
        %v6109 = vsel %vm1846, 0, %v6108
        %v6110 = vrot.slane %v6107, 4
        %v6111 = vsel %vm1846, 0, %v6110
        %v6114 = vunpack.c.l.s4 1983009808
        %v6115 = vunpack.c.0.s8 %v6114
        %v6116 = vperm.slane %v5562, %v6115
        %v6119 = vunpack.c.l.s4 1983009808
        %v6120 = vunpack.c.0.s8 %v6119
        %v6121 = vperm.slane %v5568, %v6120
        %v6122 = vrot.slane %v6121, 4
        %v6123 = vsel %vm1846, %v6122, %v6116
        %v6124 = vrot.slane %v6116, 4
        %v6125 = vsel %vm1846, %v6121, %v6124
        %v6127 = vunpack.c.l.s4 1934713408
        %v6128 = vunpack.c.0.s8 %v6127
        %v6129 = vperm.slane %v6123, %v6128
        %v6131 = vunpack.c.l.s4 1934713408
        %v6132 = vunpack.c.0.s8 %v6131
        %v6133 = vperm.slane %v6125, %v6132
        %v6134 = vrot.slane %v6129, 4
        %v6135 = vsel %vm1846, 0, %v6134
        %v6136 = vrot.slane %v6133, 4
        %v6137 = vsel %vm1846, 0, %v6136
        %v6140 = vunpack.c.l.s4 1983009808
        %v6141 = vunpack.c.0.s8 %v6140
        %v6142 = vperm.slane %v5565, %v6141
        %v6145 = vunpack.c.l.s4 1983009808
        %v6146 = vunpack.c.0.s8 %v6145
        %v6147 = vperm.slane %v5571, %v6146
        %v6148 = vrot.slane %v6147, 4
        %v6149 = vsel %vm1846, %v6148, %v6142
        %v6150 = vrot.slane %v6142, 4
        %v6151 = vsel %vm1846, %v6147, %v6150
        %v6153 = vunpack.c.l.s4 1934713408
        %v6154 = vunpack.c.0.s8 %v6153
        %v6155 = vperm.slane %v6149, %v6154
        %v6157 = vunpack.c.l.s4 1934713408
        %v6158 = vunpack.c.0.s8 %v6157
        %v6159 = vperm.slane %v6151, %v6158
        %v6160 = vrot.slane %v6155, 4
        %v6161 = vsel %vm1846, 0, %v6160
        %v6162 = vrot.slane %v6159, 4
        %v6163 = vsel %vm1846, 0, %v6162
        %v6166 = vunpack.c.l.s4 1983009808
        %v6167 = vunpack.c.0.s8 %v6166
        %v6168 = vperm.slane %v5574, %v6167
        %v6171 = vunpack.c.l.s4 1983009808
        %v6172 = vunpack.c.0.s8 %v6171
        %v6173 = vperm.slane %v5580, %v6172
        %v6174 = vrot.slane %v6173, 4
        %v6175 = vsel %vm1846, %v6174, %v6168
        %v6176 = vrot.slane %v6168, 4
        %v6177 = vsel %vm1846, %v6173, %v6176
        %v6179 = vunpack.c.l.s4 1934713408
        %v6180 = vunpack.c.0.s8 %v6179
        %v6181 = vperm.slane %v6175, %v6180
        %v6183 = vunpack.c.l.s4 1934713408
        %v6184 = vunpack.c.0.s8 %v6183
        %v6185 = vperm.slane %v6177, %v6184
        %v6186 = vrot.slane %v6181, 4
        %v6187 = vsel %vm1846, 0, %v6186
        %v6188 = vrot.slane %v6185, 4
        %v6189 = vsel %vm1846, 0, %v6188
        %v6192 = vunpack.c.l.s4 1983009808
        %v6193 = vunpack.c.0.s8 %v6192
        %v6194 = vperm.slane %v5577, %v6193
        %v6197 = vunpack.c.l.s4 1983009808
        %v6198 = vunpack.c.0.s8 %v6197
        %v6199 = vperm.slane %v5583, %v6198
        %v6200 = vrot.slane %v6199, 4
        %v6201 = vsel %vm1846, %v6200, %v6194
        %v6202 = vrot.slane %v6194, 4
        %v6203 = vsel %vm1846, %v6199, %v6202
        %v6205 = vunpack.c.l.s4 1934713408
        %v6206 = vunpack.c.0.s8 %v6205
        %v6207 = vperm.slane %v6201, %v6206
        %v6209 = vunpack.c.l.s4 1934713408
        %v6210 = vunpack.c.0.s8 %v6209
        %v6211 = vperm.slane %v6203, %v6210
        %v6212 = vrot.slane %v6207, 4
        %v6213 = vsel %vm1846, 0, %v6212
        %v6214 = vrot.slane %v6211, 4
        %v6215 = vsel %vm1846, 0, %v6214
        %v6218 = vunpack.c.l.s4 1983009808
        %v6219 = vunpack.c.0.s8 %v6218
        %v6220 = vperm.slane %v5586, %v6219
        %v6223 = vunpack.c.l.s4 1983009808
        %v6224 = vunpack.c.0.s8 %v6223
        %v6225 = vperm.slane %v5592, %v6224
        %v6226 = vrot.slane %v6225, 4
        %v6227 = vsel %vm1846, %v6226, %v6220
        %v6228 = vrot.slane %v6220, 4
        %v6229 = vsel %vm1846, %v6225, %v6228
        %v6231 = vunpack.c.l.s4 1934713408
        %v6232 = vunpack.c.0.s8 %v6231
        %v6233 = vperm.slane %v6227, %v6232
        %v6235 = vunpack.c.l.s4 1934713408
        %v6236 = vunpack.c.0.s8 %v6235
        %v6237 = vperm.slane %v6229, %v6236
        %v6238 = vrot.slane %v6233, 4
        %v6239 = vsel %vm1846, 0, %v6238
        %v6240 = vrot.slane %v6237, 4
        %v6241 = vsel %vm1846, 0, %v6240
        %v6244 = vunpack.c.l.s4 1983009808
        %v6245 = vunpack.c.0.s8 %v6244
        %v6246 = vperm.slane %v5589, %v6245
        %v6249 = vunpack.c.l.s4 1983009808
        %v6250 = vunpack.c.0.s8 %v6249
        %v6251 = vperm.slane %v5595, %v6250
        %v6252 = vrot.slane %v6251, 4
        %v6253 = vsel %vm1846, %v6252, %v6246
        %v6254 = vrot.slane %v6246, 4
        %v6255 = vsel %vm1846, %v6251, %v6254
        %v6257 = vunpack.c.l.s4 1934713408
        %v6258 = vunpack.c.0.s8 %v6257
        %v6259 = vperm.slane %v6253, %v6258
        %v6261 = vunpack.c.l.s4 1934713408
        %v6262 = vunpack.c.0.s8 %v6261
        %v6263 = vperm.slane %v6255, %v6262
        %v6264 = vrot.slane %v6259, 4
        %v6265 = vsel %vm1846, 0, %v6264
        %v6266 = vrot.slane %v6263, 4
        %v6267 = vsel %vm1846, 0, %v6266
        %v6270 = vunpack.c.l.s4 1983009808
        %v6271 = vunpack.c.0.s8 %v6270
        %v6272 = vperm.slane %v5598, %v6271
        %v6275 = vunpack.c.l.s4 1983009808
        %v6276 = vunpack.c.0.s8 %v6275
        %v6277 = vperm.slane %v5604, %v6276
        %v6278 = vrot.slane %v6277, 4
        %v6279 = vsel %vm1846, %v6278, %v6272
        %v6280 = vrot.slane %v6272, 4
        %v6281 = vsel %vm1846, %v6277, %v6280
        %v6283 = vunpack.c.l.s4 1934713408
        %v6284 = vunpack.c.0.s8 %v6283
        %v6285 = vperm.slane %v6279, %v6284
        %v6287 = vunpack.c.l.s4 1934713408
        %v6288 = vunpack.c.0.s8 %v6287
        %v6289 = vperm.slane %v6281, %v6288
        %v6290 = vrot.slane %v6285, 4
        %v6291 = vsel %vm1846, 0, %v6290
        %v6292 = vrot.slane %v6289, 4
        %v6293 = vsel %vm1846, 0, %v6292
        %v6296 = vunpack.c.l.s4 1983009808
        %v6297 = vunpack.c.0.s8 %v6296
        %v6298 = vperm.slane %v5601, %v6297
        %v6301 = vunpack.c.l.s4 1983009808
        %v6302 = vunpack.c.0.s8 %v6301
        %v6303 = vperm.slane %v5607, %v6302
        %v6304 = vrot.slane %v6303, 4
        %v6305 = vsel %vm1846, %v6304, %v6298
        %v6306 = vrot.slane %v6298, 4
        %v6307 = vsel %vm1846, %v6303, %v6306
        %v6309 = vunpack.c.l.s4 1934713408
        %v6310 = vunpack.c.0.s8 %v6309
        %v6311 = vperm.slane %v6305, %v6310
        %v6313 = vunpack.c.l.s4 1934713408
        %v6314 = vunpack.c.0.s8 %v6313
        %v6315 = vperm.slane %v6307, %v6314
        %v6316 = vrot.slane %v6311, 4
        %v6317 = vsel %vm1846, 0, %v6316
        %v6318 = vrot.slane %v6315, 4
        %v6319 = vsel %vm1846, 0, %v6318
        %v6322 = vunpack.c.l.s4 1983009808
        %v6323 = vunpack.c.0.s8 %v6322
        %v6324 = vperm.slane %v5610, %v6323
        %v6327 = vunpack.c.l.s4 1983009808
        %v6328 = vunpack.c.0.s8 %v6327
        %v6329 = vperm.slane %v5616, %v6328
        %v6330 = vrot.slane %v6329, 4
        %v6331 = vsel %vm1846, %v6330, %v6324
        %v6332 = vrot.slane %v6324, 4
        %v6333 = vsel %vm1846, %v6329, %v6332
        %v6335 = vunpack.c.l.s4 1934713408
        %v6336 = vunpack.c.0.s8 %v6335
        %v6337 = vperm.slane %v6331, %v6336
        %v6339 = vunpack.c.l.s4 1934713408
        %v6340 = vunpack.c.0.s8 %v6339
        %v6341 = vperm.slane %v6333, %v6340
        %v6342 = vrot.slane %v6337, 4
        %v6343 = vsel %vm1846, 0, %v6342
        %v6344 = vrot.slane %v6341, 4
        %v6345 = vsel %vm1846, 0, %v6344
        %v6348 = vunpack.c.l.s4 1983009808
        %v6349 = vunpack.c.0.s8 %v6348
        %v6350 = vperm.slane %v5613, %v6349
        %v6353 = vunpack.c.l.s4 1983009808
        %v6354 = vunpack.c.0.s8 %v6353
        %v6355 = vperm.slane %v5619, %v6354
        %v6356 = vrot.slane %v6355, 4
        %v6357 = vsel %vm1846, %v6356, %v6350
        %v6358 = vrot.slane %v6350, 4
        %v6359 = vsel %vm1846, %v6355, %v6358
        %v6361 = vunpack.c.l.s4 1934713408
        %v6362 = vunpack.c.0.s8 %v6361
        %v6363 = vperm.slane %v6357, %v6362
        %v6365 = vunpack.c.l.s4 1934713408
        %v6366 = vunpack.c.0.s8 %v6365
        %v6367 = vperm.slane %v6359, %v6366
        %v6368 = vrot.slane %v6363, 4
        %v6369 = vsel %vm1846, 0, %v6368
        %v6370 = vrot.slane %v6367, 4
        %v6371 = vsel %vm1846, 0, %v6370
        %v6374 = vunpack.c.l.s4 1983009808
        %v6375 = vunpack.c.0.s8 %v6374
        %v6376 = vperm.slane %v5622, %v6375
        %v6379 = vunpack.c.l.s4 1983009808
        %v6380 = vunpack.c.0.s8 %v6379
        %v6381 = vperm.slane %v5628, %v6380
        %v6382 = vrot.slane %v6381, 4
        %v6383 = vsel %vm1846, %v6382, %v6376
        %v6384 = vrot.slane %v6376, 4
        %v6385 = vsel %vm1846, %v6381, %v6384
        %v6387 = vunpack.c.l.s4 1934713408
        %v6388 = vunpack.c.0.s8 %v6387
        %v6389 = vperm.slane %v6383, %v6388
        %v6391 = vunpack.c.l.s4 1934713408
        %v6392 = vunpack.c.0.s8 %v6391
        %v6393 = vperm.slane %v6385, %v6392
        %v6394 = vrot.slane %v6389, 4
        %v6395 = vsel %vm1846, 0, %v6394
        %v6396 = vrot.slane %v6393, 4
        %v6397 = vsel %vm1846, 0, %v6396
        %v6400 = vunpack.c.l.s4 1983009808
        %v6401 = vunpack.c.0.s8 %v6400
        %v6402 = vperm.slane %v5625, %v6401
        %v6405 = vunpack.c.l.s4 1983009808
        %v6406 = vunpack.c.0.s8 %v6405
        %v6407 = vperm.slane %v5631, %v6406
        %v6408 = vrot.slane %v6407, 4
        %v6409 = vsel %vm1846, %v6408, %v6402
        %v6410 = vrot.slane %v6402, 4
        %v6411 = vsel %vm1846, %v6407, %v6410
        %v6413 = vunpack.c.l.s4 1934713408
        %v6414 = vunpack.c.0.s8 %v6413
        %v6415 = vperm.slane %v6409, %v6414
        %v6417 = vunpack.c.l.s4 1934713408
        %v6418 = vunpack.c.0.s8 %v6417
        %v6419 = vperm.slane %v6411, %v6418
        %v6420 = vrot.slane %v6415, 4
        %v6421 = vsel %vm1846, 0, %v6420
        %v6422 = vrot.slane %v6419, 4
        %v6423 = vsel %vm1846, 0, %v6422
        %v6426 = vunpack.c.l.s4 1983009808
        %v6427 = vunpack.c.0.s8 %v6426
        %v6428 = vperm.slane %v5634, %v6427
        %v6431 = vunpack.c.l.s4 1983009808
        %v6432 = vunpack.c.0.s8 %v6431
        %v6433 = vperm.slane %v5640, %v6432
        %v6434 = vrot.slane %v6433, 4
        %v6435 = vsel %vm1846, %v6434, %v6428
        %v6436 = vrot.slane %v6428, 4
        %v6437 = vsel %vm1846, %v6433, %v6436
        %v6439 = vunpack.c.l.s4 1934713408
        %v6440 = vunpack.c.0.s8 %v6439
        %v6441 = vperm.slane %v6435, %v6440
        %v6443 = vunpack.c.l.s4 1934713408
        %v6444 = vunpack.c.0.s8 %v6443
        %v6445 = vperm.slane %v6437, %v6444
        %v6446 = vrot.slane %v6441, 4
        %v6447 = vsel %vm1846, 0, %v6446
        %v6448 = vrot.slane %v6445, 4
        %v6449 = vsel %vm1846, 0, %v6448
        %v6452 = vunpack.c.l.s4 1983009808
        %v6453 = vunpack.c.0.s8 %v6452
        %v6454 = vperm.slane %v5637, %v6453
        %v6457 = vunpack.c.l.s4 1983009808
        %v6458 = vunpack.c.0.s8 %v6457
        %v6459 = vperm.slane %v5643, %v6458
        %v6460 = vrot.slane %v6459, 4
        %v6461 = vsel %vm1846, %v6460, %v6454
        %v6462 = vrot.slane %v6454, 4
        %v6463 = vsel %vm1846, %v6459, %v6462
        %v6465 = vunpack.c.l.s4 1934713408
        %v6466 = vunpack.c.0.s8 %v6465
        %v6467 = vperm.slane %v6461, %v6466
        %v6469 = vunpack.c.l.s4 1934713408
        %v6470 = vunpack.c.0.s8 %v6469
        %v6471 = vperm.slane %v6463, %v6470
        %v6472 = vrot.slane %v6467, 4
        %v6473 = vsel %vm1846, 0, %v6472
        %v6474 = vrot.slane %v6471, 4
        %v6475 = vsel %vm1846, 0, %v6474
        %v6476 = vsel %vm1846, %v5668, %v5661
        %v6478 = vunpack.c.l.s4 1983009808
        %v6479 = vunpack.c.0.s8 %v6478
        %v6480 = vperm.slane %v6476, %v6479
        %v6481 = vrot.slane %v5669, 4
        %v6482 = vsel %vm1846, %v6481, %v5667
        %v6484 = vunpack.c.l.s4 1983009808
        %v6485 = vunpack.c.0.s8 %v6484
        %v6486 = vperm.slane %v6482, %v6485
        %v6487 = vrot.slane %v6486, 4
        %v6488 = vsel %vm1846, %v6487, %v6480
        %v6490 = vunpack.c.l.s4 1934713408
        %v6491 = vunpack.c.0.s8 %v6490
        %v6492 = vperm.slane %v6488, %v6491
        %v6493 = vrot.slane %v6492, 4
        %v6494 = vsel %vm1846, 0, %v6493
        %v6495 = vsel %vm1846, %v5694, %v5687
        %v6497 = vunpack.c.l.s4 1983009808
        %v6498 = vunpack.c.0.s8 %v6497
        %v6499 = vperm.slane %v6495, %v6498
        %v6500 = vrot.slane %v5695, 4
        %v6501 = vsel %vm1846, %v6500, %v5693
        %v6503 = vunpack.c.l.s4 1983009808
        %v6504 = vunpack.c.0.s8 %v6503
        %v6505 = vperm.slane %v6501, %v6504
        %v6506 = vrot.slane %v6505, 4
        %v6507 = vsel %vm1846, %v6506, %v6499
        %v6509 = vunpack.c.l.s4 1934713408
        %v6510 = vunpack.c.0.s8 %v6509
        %v6511 = vperm.slane %v6507, %v6510
        %v6512 = vrot.slane %v6511, 4
        %v6513 = vsel %vm1846, 0, %v6512
        %v6514 = vsel %vm1846, %v5720, %v5713
        %v6516 = vunpack.c.l.s4 1983009808
        %v6517 = vunpack.c.0.s8 %v6516
        %v6518 = vperm.slane %v6514, %v6517
        %v6519 = vrot.slane %v5721, 4
        %v6520 = vsel %vm1846, %v6519, %v5719
        %v6522 = vunpack.c.l.s4 1983009808
        %v6523 = vunpack.c.0.s8 %v6522
        %v6524 = vperm.slane %v6520, %v6523
        %v6525 = vrot.slane %v6524, 4
        %v6526 = vsel %vm1846, %v6525, %v6518
        %v6528 = vunpack.c.l.s4 1934713408
        %v6529 = vunpack.c.0.s8 %v6528
        %v6530 = vperm.slane %v6526, %v6529
        %v6531 = vrot.slane %v6530, 4
        %v6532 = vsel %vm1846, 0, %v6531
        %v6533 = vsel %vm1846, %v5746, %v5739
        %v6535 = vunpack.c.l.s4 1983009808
        %v6536 = vunpack.c.0.s8 %v6535
        %v6537 = vperm.slane %v6533, %v6536
        %v6538 = vrot.slane %v5747, 4
        %v6539 = vsel %vm1846, %v6538, %v5745
        %v6541 = vunpack.c.l.s4 1983009808
        %v6542 = vunpack.c.0.s8 %v6541
        %v6543 = vperm.slane %v6539, %v6542
        %v6544 = vrot.slane %v6543, 4
        %v6545 = vsel %vm1846, %v6544, %v6537
        %v6547 = vunpack.c.l.s4 1934713408
        %v6548 = vunpack.c.0.s8 %v6547
        %v6549 = vperm.slane %v6545, %v6548
        %v6550 = vrot.slane %v6549, 4
        %v6551 = vsel %vm1846, 0, %v6550
        %v6552 = vsel %vm1846, %v5772, %v5765
        %v6554 = vunpack.c.l.s4 1983009808
        %v6555 = vunpack.c.0.s8 %v6554
        %v6556 = vperm.slane %v6552, %v6555
        %v6557 = vrot.slane %v5773, 4
        %v6558 = vsel %vm1846, %v6557, %v5771
        %v6560 = vunpack.c.l.s4 1983009808
        %v6561 = vunpack.c.0.s8 %v6560
        %v6562 = vperm.slane %v6558, %v6561
        %v6563 = vrot.slane %v6562, 4
        %v6564 = vsel %vm1846, %v6563, %v6556
        %v6566 = vunpack.c.l.s4 1934713408
        %v6567 = vunpack.c.0.s8 %v6566
        %v6568 = vperm.slane %v6564, %v6567
        %v6569 = vrot.slane %v6568, 4
        %v6570 = vsel %vm1846, 0, %v6569
        %v6571 = vsel %vm1846, %v5798, %v5791
        %v6573 = vunpack.c.l.s4 1983009808
        %v6574 = vunpack.c.0.s8 %v6573
        %v6575 = vperm.slane %v6571, %v6574
        %v6576 = vrot.slane %v5799, 4
        %v6577 = vsel %vm1846, %v6576, %v5797
        %v6579 = vunpack.c.l.s4 1983009808
        %v6580 = vunpack.c.0.s8 %v6579
        %v6581 = vperm.slane %v6577, %v6580
        %v6582 = vrot.slane %v6581, 4
        %v6583 = vsel %vm1846, %v6582, %v6575
        %v6585 = vunpack.c.l.s4 1934713408
        %v6586 = vunpack.c.0.s8 %v6585
        %v6587 = vperm.slane %v6583, %v6586
        %v6588 = vrot.slane %v6587, 4
        %v6589 = vsel %vm1846, 0, %v6588
        %v6590 = vsel %vm1846, %v5824, %v5817
        %v6592 = vunpack.c.l.s4 1983009808
        %v6593 = vunpack.c.0.s8 %v6592
        %v6594 = vperm.slane %v6590, %v6593
        %v6595 = vrot.slane %v5825, 4
        %v6596 = vsel %vm1846, %v6595, %v5823
        %v6598 = vunpack.c.l.s4 1983009808
        %v6599 = vunpack.c.0.s8 %v6598
        %v6600 = vperm.slane %v6596, %v6599
        %v6601 = vrot.slane %v6600, 4
        %v6602 = vsel %vm1846, %v6601, %v6594
        %v6604 = vunpack.c.l.s4 1934713408
        %v6605 = vunpack.c.0.s8 %v6604
        %v6606 = vperm.slane %v6602, %v6605
        %v6607 = vrot.slane %v6606, 4
        %v6608 = vsel %vm1846, 0, %v6607
        %v6609 = vsel %vm1846, %v5850, %v5843
        %v6611 = vunpack.c.l.s4 1983009808
        %v6612 = vunpack.c.0.s8 %v6611
        %v6613 = vperm.slane %v6609, %v6612
        %v6614 = vrot.slane %v5851, 4
        %v6615 = vsel %vm1846, %v6614, %v5849
        %v6617 = vunpack.c.l.s4 1983009808
        %v6618 = vunpack.c.0.s8 %v6617
        %v6619 = vperm.slane %v6615, %v6618
        %v6620 = vrot.slane %v6619, 4
        %v6621 = vsel %vm1846, %v6620, %v6613
        %v6623 = vunpack.c.l.s4 1934713408
        %v6624 = vunpack.c.0.s8 %v6623
        %v6625 = vperm.slane %v6621, %v6624
        %v6626 = vrot.slane %v6625, 4
        %v6627 = vsel %vm1846, 0, %v6626
        %v6628 = vsel %vm1846, %v5876, %v5869
        %v6630 = vunpack.c.l.s4 1983009808
        %v6631 = vunpack.c.0.s8 %v6630
        %v6632 = vperm.slane %v6628, %v6631
        %v6633 = vrot.slane %v5877, 4
        %v6634 = vsel %vm1846, %v6633, %v5875
        %v6636 = vunpack.c.l.s4 1983009808
        %v6637 = vunpack.c.0.s8 %v6636
        %v6638 = vperm.slane %v6634, %v6637
        %v6639 = vrot.slane %v6638, 4
        %v6640 = vsel %vm1846, %v6639, %v6632
        %v6642 = vunpack.c.l.s4 1934713408
        %v6643 = vunpack.c.0.s8 %v6642
        %v6644 = vperm.slane %v6640, %v6643
        %v6645 = vrot.slane %v6644, 4
        %v6646 = vsel %vm1846, 0, %v6645
        %v6647 = vsel %vm1846, %v5902, %v5895
        %v6649 = vunpack.c.l.s4 1983009808
        %v6650 = vunpack.c.0.s8 %v6649
        %v6651 = vperm.slane %v6647, %v6650
        %v6652 = vrot.slane %v5903, 4
        %v6653 = vsel %vm1846, %v6652, %v5901
        %v6655 = vunpack.c.l.s4 1983009808
        %v6656 = vunpack.c.0.s8 %v6655
        %v6657 = vperm.slane %v6653, %v6656
        %v6658 = vrot.slane %v6657, 4
        %v6659 = vsel %vm1846, %v6658, %v6651
        %v6661 = vunpack.c.l.s4 1934713408
        %v6662 = vunpack.c.0.s8 %v6661
        %v6663 = vperm.slane %v6659, %v6662
        %v6664 = vrot.slane %v6663, 4
        %v6665 = vsel %vm1846, 0, %v6664
        %v6666 = vsel %vm1846, %v5928, %v5921
        %v6668 = vunpack.c.l.s4 1983009808
        %v6669 = vunpack.c.0.s8 %v6668
        %v6670 = vperm.slane %v6666, %v6669
        %v6671 = vrot.slane %v5929, 4
        %v6672 = vsel %vm1846, %v6671, %v5927
        %v6674 = vunpack.c.l.s4 1983009808
        %v6675 = vunpack.c.0.s8 %v6674
        %v6676 = vperm.slane %v6672, %v6675
        %v6677 = vrot.slane %v6676, 4
        %v6678 = vsel %vm1846, %v6677, %v6670
        %v6680 = vunpack.c.l.s4 1934713408
        %v6681 = vunpack.c.0.s8 %v6680
        %v6682 = vperm.slane %v6678, %v6681
        %v6683 = vrot.slane %v6682, 4
        %v6684 = vsel %vm1846, 0, %v6683
        %v6685 = vsel %vm1846, %v5954, %v5947
        %v6687 = vunpack.c.l.s4 1983009808
        %v6688 = vunpack.c.0.s8 %v6687
        %v6689 = vperm.slane %v6685, %v6688
        %v6690 = vrot.slane %v5955, 4
        %v6691 = vsel %vm1846, %v6690, %v5953
        %v6693 = vunpack.c.l.s4 1983009808
        %v6694 = vunpack.c.0.s8 %v6693
        %v6695 = vperm.slane %v6691, %v6694
        %v6696 = vrot.slane %v6695, 4
        %v6697 = vsel %vm1846, %v6696, %v6689
        %v6699 = vunpack.c.l.s4 1934713408
        %v6700 = vunpack.c.0.s8 %v6699
        %v6701 = vperm.slane %v6697, %v6700
        %v6702 = vrot.slane %v6701, 4
        %v6703 = vsel %vm1846, 0, %v6702
        %v6704 = vsel %vm1846, %v5980, %v5973
        %v6706 = vunpack.c.l.s4 1983009808
        %v6707 = vunpack.c.0.s8 %v6706
        %v6708 = vperm.slane %v6704, %v6707
        %v6709 = vrot.slane %v5981, 4
        %v6710 = vsel %vm1846, %v6709, %v5979
        %v6712 = vunpack.c.l.s4 1983009808
        %v6713 = vunpack.c.0.s8 %v6712
        %v6714 = vperm.slane %v6710, %v6713
        %v6715 = vrot.slane %v6714, 4
        %v6716 = vsel %vm1846, %v6715, %v6708
        %v6718 = vunpack.c.l.s4 1934713408
        %v6719 = vunpack.c.0.s8 %v6718
        %v6720 = vperm.slane %v6716, %v6719
        %v6721 = vrot.slane %v6720, 4
        %v6722 = vsel %vm1846, 0, %v6721
        %v6723 = vsel %vm1846, %v6006, %v5999
        %v6725 = vunpack.c.l.s4 1983009808
        %v6726 = vunpack.c.0.s8 %v6725
        %v6727 = vperm.slane %v6723, %v6726
        %v6728 = vrot.slane %v6007, 4
        %v6729 = vsel %vm1846, %v6728, %v6005
        %v6731 = vunpack.c.l.s4 1983009808
        %v6732 = vunpack.c.0.s8 %v6731
        %v6733 = vperm.slane %v6729, %v6732
        %v6734 = vrot.slane %v6733, 4
        %v6735 = vsel %vm1846, %v6734, %v6727
        %v6737 = vunpack.c.l.s4 1934713408
        %v6738 = vunpack.c.0.s8 %v6737
        %v6739 = vperm.slane %v6735, %v6738
        %v6740 = vrot.slane %v6739, 4
        %v6741 = vsel %vm1846, 0, %v6740
        %v6742 = vsel %vm1846, %v6032, %v6025
        %v6744 = vunpack.c.l.s4 1983009808
        %v6745 = vunpack.c.0.s8 %v6744
        %v6746 = vperm.slane %v6742, %v6745
        %v6747 = vrot.slane %v6033, 4
        %v6748 = vsel %vm1846, %v6747, %v6031
        %v6750 = vunpack.c.l.s4 1983009808
        %v6751 = vunpack.c.0.s8 %v6750
        %v6752 = vperm.slane %v6748, %v6751
        %v6753 = vrot.slane %v6752, 4
        %v6754 = vsel %vm1846, %v6753, %v6746
        %v6756 = vunpack.c.l.s4 1934713408
        %v6757 = vunpack.c.0.s8 %v6756
        %v6758 = vperm.slane %v6754, %v6757
        %v6759 = vrot.slane %v6758, 4
        %v6760 = vsel %vm1846, 0, %v6759
        %v6761 = vsel %vm1846, %v6058, %v6051
        %v6763 = vunpack.c.l.s4 1983009808
        %v6764 = vunpack.c.0.s8 %v6763
        %v6765 = vperm.slane %v6761, %v6764
        %v6766 = vrot.slane %v6059, 4
        %v6767 = vsel %vm1846, %v6766, %v6057
        %v6769 = vunpack.c.l.s4 1983009808
        %v6770 = vunpack.c.0.s8 %v6769
        %v6771 = vperm.slane %v6767, %v6770
        %v6772 = vrot.slane %v6771, 4
        %v6773 = vsel %vm1846, %v6772, %v6765
        %v6775 = vunpack.c.l.s4 1934713408
        %v6776 = vunpack.c.0.s8 %v6775
        %v6777 = vperm.slane %v6773, %v6776
        %v6778 = vrot.slane %v6777, 4
        %v6779 = vsel %vm1846, 0, %v6778
        %v6780 = vsel %vm1846, %v6084, %v6077
        %v6782 = vunpack.c.l.s4 1983009808
        %v6783 = vunpack.c.0.s8 %v6782
        %v6784 = vperm.slane %v6780, %v6783
        %v6785 = vrot.slane %v6085, 4
        %v6786 = vsel %vm1846, %v6785, %v6083
        %v6788 = vunpack.c.l.s4 1983009808
        %v6789 = vunpack.c.0.s8 %v6788
        %v6790 = vperm.slane %v6786, %v6789
        %v6791 = vrot.slane %v6790, 4
        %v6792 = vsel %vm1846, %v6791, %v6784
        %v6794 = vunpack.c.l.s4 1934713408
        %v6795 = vunpack.c.0.s8 %v6794
        %v6796 = vperm.slane %v6792, %v6795
        %v6797 = vrot.slane %v6796, 4
        %v6798 = vsel %vm1846, 0, %v6797
        %v6799 = vsel %vm1846, %v6110, %v6103
        %v6801 = vunpack.c.l.s4 1983009808
        %v6802 = vunpack.c.0.s8 %v6801
        %v6803 = vperm.slane %v6799, %v6802
        %v6804 = vrot.slane %v6111, 4
        %v6805 = vsel %vm1846, %v6804, %v6109
        %v6807 = vunpack.c.l.s4 1983009808
        %v6808 = vunpack.c.0.s8 %v6807
        %v6809 = vperm.slane %v6805, %v6808
        %v6810 = vrot.slane %v6809, 4
        %v6811 = vsel %vm1846, %v6810, %v6803
        %v6813 = vunpack.c.l.s4 1934713408
        %v6814 = vunpack.c.0.s8 %v6813
        %v6815 = vperm.slane %v6811, %v6814
        %v6816 = vrot.slane %v6815, 4
        %v6817 = vsel %vm1846, 0, %v6816
        %v6818 = vsel %vm1846, %v6136, %v6129
        %v6820 = vunpack.c.l.s4 1983009808
        %v6821 = vunpack.c.0.s8 %v6820
        %v6822 = vperm.slane %v6818, %v6821
        %v6823 = vrot.slane %v6137, 4
        %v6824 = vsel %vm1846, %v6823, %v6135
        %v6826 = vunpack.c.l.s4 1983009808
        %v6827 = vunpack.c.0.s8 %v6826
        %v6828 = vperm.slane %v6824, %v6827
        %v6829 = vrot.slane %v6828, 4
        %v6830 = vsel %vm1846, %v6829, %v6822
        %v6832 = vunpack.c.l.s4 1934713408
        %v6833 = vunpack.c.0.s8 %v6832
        %v6834 = vperm.slane %v6830, %v6833
        %v6835 = vrot.slane %v6834, 4
        %v6836 = vsel %vm1846, 0, %v6835
        %v6837 = vsel %vm1846, %v6162, %v6155
        %v6839 = vunpack.c.l.s4 1983009808
        %v6840 = vunpack.c.0.s8 %v6839
        %v6841 = vperm.slane %v6837, %v6840
        %v6842 = vrot.slane %v6163, 4
        %v6843 = vsel %vm1846, %v6842, %v6161
        %v6845 = vunpack.c.l.s4 1983009808
        %v6846 = vunpack.c.0.s8 %v6845
        %v6847 = vperm.slane %v6843, %v6846
        %v6848 = vrot.slane %v6847, 4
        %v6849 = vsel %vm1846, %v6848, %v6841
        %v6851 = vunpack.c.l.s4 1934713408
        %v6852 = vunpack.c.0.s8 %v6851
        %v6853 = vperm.slane %v6849, %v6852
        %v6854 = vrot.slane %v6853, 4
        %v6855 = vsel %vm1846, 0, %v6854
        %v6856 = vsel %vm1846, %v6188, %v6181
        %v6858 = vunpack.c.l.s4 1983009808
        %v6859 = vunpack.c.0.s8 %v6858
        %v6860 = vperm.slane %v6856, %v6859
        %v6861 = vrot.slane %v6189, 4
        %v6862 = vsel %vm1846, %v6861, %v6187
        %v6864 = vunpack.c.l.s4 1983009808
        %v6865 = vunpack.c.0.s8 %v6864
        %v6866 = vperm.slane %v6862, %v6865
        %v6867 = vrot.slane %v6866, 4
        %v6868 = vsel %vm1846, %v6867, %v6860
        %v6870 = vunpack.c.l.s4 1934713408
        %v6871 = vunpack.c.0.s8 %v6870
        %v6872 = vperm.slane %v6868, %v6871
        %v6873 = vrot.slane %v6872, 4
        %v6874 = vsel %vm1846, 0, %v6873
        %v6875 = vsel %vm1846, %v6214, %v6207
        %v6877 = vunpack.c.l.s4 1983009808
        %v6878 = vunpack.c.0.s8 %v6877
        %v6879 = vperm.slane %v6875, %v6878
        %v6880 = vrot.slane %v6215, 4
        %v6881 = vsel %vm1846, %v6880, %v6213
        %v6883 = vunpack.c.l.s4 1983009808
        %v6884 = vunpack.c.0.s8 %v6883
        %v6885 = vperm.slane %v6881, %v6884
        %v6886 = vrot.slane %v6885, 4
        %v6887 = vsel %vm1846, %v6886, %v6879
        %v6889 = vunpack.c.l.s4 1934713408
        %v6890 = vunpack.c.0.s8 %v6889
        %v6891 = vperm.slane %v6887, %v6890
        %v6892 = vrot.slane %v6891, 4
        %v6893 = vsel %vm1846, 0, %v6892
        %v6894 = vsel %vm1846, %v6240, %v6233
        %v6896 = vunpack.c.l.s4 1983009808
        %v6897 = vunpack.c.0.s8 %v6896
        %v6898 = vperm.slane %v6894, %v6897
        %v6899 = vrot.slane %v6241, 4
        %v6900 = vsel %vm1846, %v6899, %v6239
        %v6902 = vunpack.c.l.s4 1983009808
        %v6903 = vunpack.c.0.s8 %v6902
        %v6904 = vperm.slane %v6900, %v6903
        %v6905 = vrot.slane %v6904, 4
        %v6906 = vsel %vm1846, %v6905, %v6898
        %v6908 = vunpack.c.l.s4 1934713408
        %v6909 = vunpack.c.0.s8 %v6908
        %v6910 = vperm.slane %v6906, %v6909
        %v6911 = vrot.slane %v6910, 4
        %v6912 = vsel %vm1846, 0, %v6911
        %v6913 = vsel %vm1846, %v6266, %v6259
        %v6915 = vunpack.c.l.s4 1983009808
        %v6916 = vunpack.c.0.s8 %v6915
        %v6917 = vperm.slane %v6913, %v6916
        %v6918 = vrot.slane %v6267, 4
        %v6919 = vsel %vm1846, %v6918, %v6265
        %v6921 = vunpack.c.l.s4 1983009808
        %v6922 = vunpack.c.0.s8 %v6921
        %v6923 = vperm.slane %v6919, %v6922
        %v6924 = vrot.slane %v6923, 4
        %v6925 = vsel %vm1846, %v6924, %v6917
        %v6927 = vunpack.c.l.s4 1934713408
        %v6928 = vunpack.c.0.s8 %v6927
        %v6929 = vperm.slane %v6925, %v6928
        %v6930 = vrot.slane %v6929, 4
        %v6931 = vsel %vm1846, 0, %v6930
        %v6932 = vsel %vm1846, %v6292, %v6285
        %v6934 = vunpack.c.l.s4 1983009808
        %v6935 = vunpack.c.0.s8 %v6934
        %v6936 = vperm.slane %v6932, %v6935
        %v6937 = vrot.slane %v6293, 4
        %v6938 = vsel %vm1846, %v6937, %v6291
        %v6940 = vunpack.c.l.s4 1983009808
        %v6941 = vunpack.c.0.s8 %v6940
        %v6942 = vperm.slane %v6938, %v6941
        %v6943 = vrot.slane %v6942, 4
        %v6944 = vsel %vm1846, %v6943, %v6936
        %v6946 = vunpack.c.l.s4 1934713408
        %v6947 = vunpack.c.0.s8 %v6946
        %v6948 = vperm.slane %v6944, %v6947
        %v6949 = vrot.slane %v6948, 4
        %v6950 = vsel %vm1846, 0, %v6949
        %v6951 = vsel %vm1846, %v6318, %v6311
        %v6953 = vunpack.c.l.s4 1983009808
        %v6954 = vunpack.c.0.s8 %v6953
        %v6955 = vperm.slane %v6951, %v6954
        %v6956 = vrot.slane %v6319, 4
        %v6957 = vsel %vm1846, %v6956, %v6317
        %v6959 = vunpack.c.l.s4 1983009808
        %v6960 = vunpack.c.0.s8 %v6959
        %v6961 = vperm.slane %v6957, %v6960
        %v6962 = vrot.slane %v6961, 4
        %v6963 = vsel %vm1846, %v6962, %v6955
        %v6965 = vunpack.c.l.s4 1934713408
        %v6966 = vunpack.c.0.s8 %v6965
        %v6967 = vperm.slane %v6963, %v6966
        %v6968 = vrot.slane %v6967, 4
        %v6969 = vsel %vm1846, 0, %v6968
        %v6970 = vsel %vm1846, %v6344, %v6337
        %v6972 = vunpack.c.l.s4 1983009808
        %v6973 = vunpack.c.0.s8 %v6972
        %v6974 = vperm.slane %v6970, %v6973
        %v6975 = vrot.slane %v6345, 4
        %v6976 = vsel %vm1846, %v6975, %v6343
        %v6978 = vunpack.c.l.s4 1983009808
        %v6979 = vunpack.c.0.s8 %v6978
        %v6980 = vperm.slane %v6976, %v6979
        %v6981 = vrot.slane %v6980, 4
        %v6982 = vsel %vm1846, %v6981, %v6974
        %v6984 = vunpack.c.l.s4 1934713408
        %v6985 = vunpack.c.0.s8 %v6984
        %v6986 = vperm.slane %v6982, %v6985
        %v6987 = vrot.slane %v6986, 4
        %v6988 = vsel %vm1846, 0, %v6987
        %v6989 = vsel %vm1846, %v6370, %v6363
        %v6991 = vunpack.c.l.s4 1983009808
        %v6992 = vunpack.c.0.s8 %v6991
        %v6993 = vperm.slane %v6989, %v6992
        %v6994 = vrot.slane %v6371, 4
        %v6995 = vsel %vm1846, %v6994, %v6369
        %v6997 = vunpack.c.l.s4 1983009808
        %v6998 = vunpack.c.0.s8 %v6997
        %v6999 = vperm.slane %v6995, %v6998
        %v7000 = vrot.slane %v6999, 4
        %v7001 = vsel %vm1846, %v7000, %v6993
        %v7003 = vunpack.c.l.s4 1934713408
        %v7004 = vunpack.c.0.s8 %v7003
        %v7005 = vperm.slane %v7001, %v7004
        %v7006 = vrot.slane %v7005, 4
        %v7007 = vsel %vm1846, 0, %v7006
        %v7008 = vsel %vm1846, %v6396, %v6389
        %v7010 = vunpack.c.l.s4 1983009808
        %v7011 = vunpack.c.0.s8 %v7010
        %v7012 = vperm.slane %v7008, %v7011
        %v7013 = vrot.slane %v6397, 4
        %v7014 = vsel %vm1846, %v7013, %v6395
        %v7016 = vunpack.c.l.s4 1983009808
        %v7017 = vunpack.c.0.s8 %v7016
        %v7018 = vperm.slane %v7014, %v7017
        %v7019 = vrot.slane %v7018, 4
        %v7020 = vsel %vm1846, %v7019, %v7012
        %v7022 = vunpack.c.l.s4 1934713408
        %v7023 = vunpack.c.0.s8 %v7022
        %v7024 = vperm.slane %v7020, %v7023
        %v7025 = vrot.slane %v7024, 4
        %v7026 = vsel %vm1846, 0, %v7025
        %v7027 = vsel %vm1846, %v6422, %v6415
        %v7029 = vunpack.c.l.s4 1983009808
        %v7030 = vunpack.c.0.s8 %v7029
        %v7031 = vperm.slane %v7027, %v7030
        %v7032 = vrot.slane %v6423, 4
        %v7033 = vsel %vm1846, %v7032, %v6421
        %v7035 = vunpack.c.l.s4 1983009808
        %v7036 = vunpack.c.0.s8 %v7035
        %v7037 = vperm.slane %v7033, %v7036
        %v7038 = vrot.slane %v7037, 4
        %v7039 = vsel %vm1846, %v7038, %v7031
        %v7041 = vunpack.c.l.s4 1934713408
        %v7042 = vunpack.c.0.s8 %v7041
        %v7043 = vperm.slane %v7039, %v7042
        %v7044 = vrot.slane %v7043, 4
        %v7045 = vsel %vm1846, 0, %v7044
        %v7046 = vsel %vm1846, %v6448, %v6441
        %v7048 = vunpack.c.l.s4 1983009808
        %v7049 = vunpack.c.0.s8 %v7048
        %v7050 = vperm.slane %v7046, %v7049
        %v7051 = vrot.slane %v6449, 4
        %v7052 = vsel %vm1846, %v7051, %v6447
        %v7054 = vunpack.c.l.s4 1983009808
        %v7055 = vunpack.c.0.s8 %v7054
        %v7056 = vperm.slane %v7052, %v7055
        %v7057 = vrot.slane %v7056, 4
        %v7058 = vsel %vm1846, %v7057, %v7050
        %v7060 = vunpack.c.l.s4 1934713408
        %v7061 = vunpack.c.0.s8 %v7060
        %v7062 = vperm.slane %v7058, %v7061
        %v7063 = vrot.slane %v7062, 4
        %v7064 = vsel %vm1846, 0, %v7063
        %v7065 = vsel %vm1846, %v6474, %v6467
        %v7067 = vunpack.c.l.s4 1983009808
        %v7068 = vunpack.c.0.s8 %v7067
        %v7069 = vperm.slane %v7065, %v7068
        %v7070 = vrot.slane %v6475, 4
        %v7071 = vsel %vm1846, %v7070, %v6473
        %v7073 = vunpack.c.l.s4 1983009808
        %v7074 = vunpack.c.0.s8 %v7073
        %v7075 = vperm.slane %v7071, %v7074
        %v7076 = vrot.slane %v7075, 4
        %v7077 = vsel %vm1846, %v7076, %v7069
        %v7079 = vunpack.c.l.s4 1934713408
        %v7080 = vunpack.c.0.s8 %v7079
        %v7081 = vperm.slane %v7077, %v7080
        %v7082 = vrot.slane %v7081, 4
        %v7083 = vsel %vm1846, 0, %v7082
        %v7086 = vpack.i.b16 %v6511, %v6492
        %v7087 = vshrl.u32 %v6492, 16
        %v7088 = vshrl.u32 %v6511, 16
        %v7089 = vpack.i.b16 %v7088, %v7087
        %v7092 = vpack.i.b16 %v6513, %v6494
        %v7093 = vshrl.u32 %v6494, 16
        %v7094 = vshrl.u32 %v6513, 16
        %v7095 = vpack.i.b16 %v7094, %v7093
        %v7098 = vpack.i.b16 %v6549, %v6530
        %v7099 = vshrl.u32 %v6530, 16
        %v7100 = vshrl.u32 %v6549, 16
        %v7101 = vpack.i.b16 %v7100, %v7099
        %v7104 = vpack.i.b16 %v6551, %v6532
        %v7105 = vshrl.u32 %v6532, 16
        %v7106 = vshrl.u32 %v6551, 16
        %v7107 = vpack.i.b16 %v7106, %v7105
        %v7110 = vpack.i.b16 %v6587, %v6568
        %v7111 = vshrl.u32 %v6568, 16
        %v7112 = vshrl.u32 %v6587, 16
        %v7113 = vpack.i.b16 %v7112, %v7111
        %v7116 = vpack.i.b16 %v6589, %v6570
        %v7117 = vshrl.u32 %v6570, 16
        %v7118 = vshrl.u32 %v6589, 16
        %v7119 = vpack.i.b16 %v7118, %v7117
        %v7122 = vpack.i.b16 %v6625, %v6606
        %v7123 = vshrl.u32 %v6606, 16
        %v7124 = vshrl.u32 %v6625, 16
        %v7125 = vpack.i.b16 %v7124, %v7123
        %v7128 = vpack.i.b16 %v6627, %v6608
        %v7129 = vshrl.u32 %v6608, 16
        %v7130 = vshrl.u32 %v6627, 16
        %v7131 = vpack.i.b16 %v7130, %v7129
        %v7134 = vpack.i.b16 %v6663, %v6644
        %v7135 = vshrl.u32 %v6644, 16
        %v7136 = vshrl.u32 %v6663, 16
        %v7137 = vpack.i.b16 %v7136, %v7135
        %v7140 = vpack.i.b16 %v6665, %v6646
        %v7141 = vshrl.u32 %v6646, 16
        %v7142 = vshrl.u32 %v6665, 16
        %v7143 = vpack.i.b16 %v7142, %v7141
        %v7146 = vpack.i.b16 %v6701, %v6682
        %v7147 = vshrl.u32 %v6682, 16
        %v7148 = vshrl.u32 %v6701, 16
        %v7149 = vpack.i.b16 %v7148, %v7147
        %v7152 = vpack.i.b16 %v6703, %v6684
        %v7153 = vshrl.u32 %v6684, 16
        %v7154 = vshrl.u32 %v6703, 16
        %v7155 = vpack.i.b16 %v7154, %v7153
        %v7158 = vpack.i.b16 %v6739, %v6720
        %v7159 = vshrl.u32 %v6720, 16
        %v7160 = vshrl.u32 %v6739, 16
        %v7161 = vpack.i.b16 %v7160, %v7159
        %v7164 = vpack.i.b16 %v6741, %v6722
        %v7165 = vshrl.u32 %v6722, 16
        %v7166 = vshrl.u32 %v6741, 16
        %v7167 = vpack.i.b16 %v7166, %v7165
        %v7170 = vpack.i.b16 %v6777, %v6758
        %v7171 = vshrl.u32 %v6758, 16
        %v7172 = vshrl.u32 %v6777, 16
        %v7173 = vpack.i.b16 %v7172, %v7171
        %v7176 = vpack.i.b16 %v6779, %v6760
        %v7177 = vshrl.u32 %v6760, 16
        %v7178 = vshrl.u32 %v6779, 16
        %v7179 = vpack.i.b16 %v7178, %v7177
        %v7182 = vpack.i.b16 %v6815, %v6796
        %v7183 = vshrl.u32 %v6796, 16
        %v7184 = vshrl.u32 %v6815, 16
        %v7185 = vpack.i.b16 %v7184, %v7183
        %v7188 = vpack.i.b16 %v6817, %v6798
        %v7189 = vshrl.u32 %v6798, 16
        %v7190 = vshrl.u32 %v6817, 16
        %v7191 = vpack.i.b16 %v7190, %v7189
        %v7194 = vpack.i.b16 %v6853, %v6834
        %v7195 = vshrl.u32 %v6834, 16
        %v7196 = vshrl.u32 %v6853, 16
        %v7197 = vpack.i.b16 %v7196, %v7195
        %v7200 = vpack.i.b16 %v6855, %v6836
        %v7201 = vshrl.u32 %v6836, 16
        %v7202 = vshrl.u32 %v6855, 16
        %v7203 = vpack.i.b16 %v7202, %v7201
        %v7206 = vpack.i.b16 %v6891, %v6872
        %v7207 = vshrl.u32 %v6872, 16
        %v7208 = vshrl.u32 %v6891, 16
        %v7209 = vpack.i.b16 %v7208, %v7207
        %v7212 = vpack.i.b16 %v6893, %v6874
        %v7213 = vshrl.u32 %v6874, 16
        %v7214 = vshrl.u32 %v6893, 16
        %v7215 = vpack.i.b16 %v7214, %v7213
        %v7218 = vpack.i.b16 %v6929, %v6910
        %v7219 = vshrl.u32 %v6910, 16
        %v7220 = vshrl.u32 %v6929, 16
        %v7221 = vpack.i.b16 %v7220, %v7219
        %v7224 = vpack.i.b16 %v6931, %v6912
        %v7225 = vshrl.u32 %v6912, 16
        %v7226 = vshrl.u32 %v6931, 16
        %v7227 = vpack.i.b16 %v7226, %v7225
        %v7230 = vpack.i.b16 %v6967, %v6948
        %v7231 = vshrl.u32 %v6948, 16
        %v7232 = vshrl.u32 %v6967, 16
        %v7233 = vpack.i.b16 %v7232, %v7231
        %v7236 = vpack.i.b16 %v6969, %v6950
        %v7237 = vshrl.u32 %v6950, 16
        %v7238 = vshrl.u32 %v6969, 16
        %v7239 = vpack.i.b16 %v7238, %v7237
        %v7242 = vpack.i.b16 %v7005, %v6986
        %v7243 = vshrl.u32 %v6986, 16
        %v7244 = vshrl.u32 %v7005, 16
        %v7245 = vpack.i.b16 %v7244, %v7243
        %v7248 = vpack.i.b16 %v7007, %v6988
        %v7249 = vshrl.u32 %v6988, 16
        %v7250 = vshrl.u32 %v7007, 16
        %v7251 = vpack.i.b16 %v7250, %v7249
        %v7254 = vpack.i.b16 %v7043, %v7024
        %v7255 = vshrl.u32 %v7024, 16
        %v7256 = vshrl.u32 %v7043, 16
        %v7257 = vpack.i.b16 %v7256, %v7255
        %v7260 = vpack.i.b16 %v7045, %v7026
        %v7261 = vshrl.u32 %v7026, 16
        %v7262 = vshrl.u32 %v7045, 16
        %v7263 = vpack.i.b16 %v7262, %v7261
        %v7266 = vpack.i.b16 %v7081, %v7062
        %v7267 = vshrl.u32 %v7062, 16
        %v7268 = vshrl.u32 %v7081, 16
        %v7269 = vpack.i.b16 %v7268, %v7267
        %v7272 = vpack.i.b16 %v7083, %v7064
        %v7273 = vshrl.u32 %v7064, 16
        %v7274 = vshrl.u32 %v7083, 16
        %v7275 = vpack.i.b16 %v7274, %v7273
        %v7276 = vunpack.c.l.b16 %v3278
        %v7277 = vunpack.c.l.b16 %v3290
        %v7278 = vunpack.c.l.b16 %v3302
        %v7279 = vunpack.c.l.b16 %v3314
        %v7280 = vunpack.c.l.b16 %v3326
        %v7281 = vunpack.c.l.b16 %v3338
        %v7282 = vunpack.c.l.b16 %v3350
        %v7283 = vunpack.c.l.b16 %v3362
        %v7284 = vpack.c.b16 %v7277, %v7276
        %v7285 = vpack.c.b16 %v7279, %v7278
        %v7286 = vpack.c.b16 %v7281, %v7280
        %v7287 = vpack.c.b16 %v7283, %v7282
        %v7288 = vunpack.c.l.b16 %v5182
        %v7289 = vunpack.c.l.b16 %v5194
        %v7290 = vunpack.c.l.b16 %v5206
        %v7291 = vunpack.c.l.b16 %v5218
        %v7292 = vunpack.c.l.b16 %v5230
        %v7293 = vunpack.c.l.b16 %v5242
        %v7294 = vunpack.c.l.b16 %v5254
        %v7295 = vunpack.c.l.b16 %v5266
        %v7296 = vpack.c.b16 %v7289, %v7288
        %v7297 = vpack.c.b16 %v7291, %v7290
        %v7298 = vpack.c.b16 %v7293, %v7292
        %v7299 = vpack.c.b16 %v7295, %v7294
        %vm7300 = vcmask 523264
        %v7302 = vsel %vm7300, %v7284, 0
        %v7305 = vsel %vm7300, %v7285, 0
        %v7308 = vsel %vm7300, %v7286, 0
        %v7311 = vsel %vm7300, %v7287, 0
        %v7314 = vsel %vm7300, %v7296, 0
        %v7317 = vsel %vm7300, %v7297, 0
        %v7320 = vsel %vm7300, %v7298, 0
        %v7323 = vsel %vm7300, %v7299, 0
        %7325 = vmatpush.bf16.xpose.msra.mxu0 0
        %7326 = vmatpush.bf16.xpose.msra.mxu0 0
        %7327 = vmatpush.bf16.xpose.msra.mxu0 0
        %7328 = vmatpush.bf16.xpose.msra.mxu0 0
        %7329 = vmatpush.bf16.xpose.msra.mxu0 %v7323
        %7330 = vmatpush.bf16.xpose.msra.mxu0 %v7320
        %7331 = vmatpush.bf16.xpose.msra.mxu0 %v7317
        %7332 = vmatpush.bf16.xpose.msra.mxu0 %v7314
        %7333 = vmatmul.bf16.gmra.mxu0 %v7302
        %v7334 = vpop.f32.mrf.mxu0
        %v7335 = vadd.f32 0.0, %v7334
        %v7336 = vpop.f32.mrf.mxu0
        %v7337 = vadd.f32 0.0, %v7336
        %7338 = vmatmul.bf16.gmra.mxu0 %v7305
        %v7339 = vpop.f32.mrf.mxu0
        %v7340 = vadd.f32 0.0, %v7339
        %v7341 = vpop.f32.mrf.mxu0
        %v7342 = vadd.f32 0.0, %v7341
        %7343 = vmatmul.bf16.gmra.mxu0 %v7308
        %v7344 = vpop.f32.mrf.mxu0
        %v7345 = vadd.f32 0.0, %v7344
        %v7346 = vpop.f32.mrf.mxu0
        %v7347 = vadd.f32 0.0, %v7346
        %7348 = vmatmul.bf16.gmra.mxu0 %v7311
        %v7349 = vpop.f32.mrf.mxu0
        %v7350 = vadd.f32 0.0, %v7349
        %v7351 = vpop.f32.mrf.mxu0
        %v7352 = vadd.f32 0.0, %v7351
        %7353 = vdwg.mxu0
        %v7354 = vunpack.c.l.b16 %v3374
        %v7355 = vunpack.c.l.b16 %v3386
        %v7356 = vunpack.c.l.b16 %v3398
        %v7357 = vunpack.c.l.b16 %v3410
        %v7358 = vunpack.c.l.b16 %v3422
        %v7359 = vunpack.c.l.b16 %v3434
        %v7360 = vunpack.c.l.b16 %v3446
        %v7361 = vunpack.c.l.b16 %v3458
        %v7362 = vpack.c.b16 %v7355, %v7354
        %v7363 = vpack.c.b16 %v7357, %v7356
        %v7364 = vpack.c.b16 %v7359, %v7358
        %v7365 = vpack.c.b16 %v7361, %v7360
        %v7366 = vunpack.c.l.b16 %v5278
        %v7367 = vunpack.c.l.b16 %v5290
        %v7368 = vunpack.c.l.b16 %v5302
        %v7369 = vunpack.c.l.b16 %v5314
        %v7370 = vunpack.c.l.b16 %v5326
        %v7371 = vunpack.c.l.b16 %v5338
        %v7372 = vunpack.c.l.b16 %v5350
        %v7373 = vunpack.c.l.b16 %v5362
        %v7374 = vpack.c.b16 %v7367, %v7366
        %v7375 = vpack.c.b16 %v7369, %v7368
        %v7376 = vpack.c.b16 %v7371, %v7370
        %v7377 = vpack.c.b16 %v7373, %v7372
        %v7379 = vsel %vm7300, %v7362, 0
        %v7382 = vsel %vm7300, %v7363, 0
        %v7385 = vsel %vm7300, %v7364, 0
        %v7388 = vsel %vm7300, %v7365, 0
        %v7391 = vsel %vm7300, %v7374, 0
        %v7394 = vsel %vm7300, %v7375, 0
        %v7397 = vsel %vm7300, %v7376, 0
        %v7400 = vsel %vm7300, %v7377, 0
        %7402 = vmatpush.bf16.xpose.msra.mxu0 0
        %7403 = vmatpush.bf16.xpose.msra.mxu0 0
        %7404 = vmatpush.bf16.xpose.msra.mxu0 0
        %7405 = vmatpush.bf16.xpose.msra.mxu0 0
        %7406 = vmatpush.bf16.xpose.msra.mxu0 %v7400
        %7407 = vmatpush.bf16.xpose.msra.mxu0 %v7397
        %7408 = vmatpush.bf16.xpose.msra.mxu0 %v7394
        %7409 = vmatpush.bf16.xpose.msra.mxu0 %v7391
        %7410 = vmatmul.bf16.gmra.mxu0 %v7379
        %v7411 = vpop.f32.mrf.mxu0
        %v7412 = vadd.f32 0.0, %v7411
        %v7413 = vpop.f32.mrf.mxu0
        %v7414 = vadd.f32 0.0, %v7413
        %7415 = vmatmul.bf16.gmra.mxu0 %v7382
        %v7416 = vpop.f32.mrf.mxu0
        %v7417 = vadd.f32 0.0, %v7416
        %v7418 = vpop.f32.mrf.mxu0
        %v7419 = vadd.f32 0.0, %v7418
        %7420 = vmatmul.bf16.gmra.mxu0 %v7385
        %v7421 = vpop.f32.mrf.mxu0
        %v7422 = vadd.f32 0.0, %v7421
        %v7423 = vpop.f32.mrf.mxu0
        %v7424 = vadd.f32 0.0, %v7423
        %7425 = vmatmul.bf16.gmra.mxu0 %v7388
        %v7426 = vpop.f32.mrf.mxu0
        %v7427 = vadd.f32 0.0, %v7426
        %v7428 = vpop.f32.mrf.mxu0
        %v7429 = vadd.f32 0.0, %v7428
        %7430 = vdwg.mxu0
        %v7431 = vunpack.c.l.b16 %v3281
        %v7432 = vunpack.c.l.b16 %v3293
        %v7433 = vunpack.c.l.b16 %v3305
        %v7434 = vunpack.c.l.b16 %v3317
        %v7435 = vunpack.c.l.b16 %v3329
        %v7436 = vunpack.c.l.b16 %v3341
        %v7437 = vunpack.c.l.b16 %v3353
        %v7438 = vunpack.c.l.b16 %v3365
        %v7439 = vpack.c.b16 %v7432, %v7431
        %v7440 = vpack.c.b16 %v7434, %v7433
        %v7441 = vpack.c.b16 %v7436, %v7435
        %v7442 = vpack.c.b16 %v7438, %v7437
        %v7443 = vunpack.c.l.b16 %v5185
        %v7444 = vunpack.c.l.b16 %v5197
        %v7445 = vunpack.c.l.b16 %v5209
        %v7446 = vunpack.c.l.b16 %v5221
        %v7447 = vunpack.c.l.b16 %v5233
        %v7448 = vunpack.c.l.b16 %v5245
        %v7449 = vunpack.c.l.b16 %v5257
        %v7450 = vunpack.c.l.b16 %v5269
        %v7451 = vpack.c.b16 %v7444, %v7443
        %v7452 = vpack.c.b16 %v7446, %v7445
        %v7453 = vpack.c.b16 %v7448, %v7447
        %v7454 = vpack.c.b16 %v7450, %v7449
        %v7456 = vsel %vm7300, %v7439, 0
        %v7459 = vsel %vm7300, %v7440, 0
        %v7462 = vsel %vm7300, %v7441, 0
        %v7465 = vsel %vm7300, %v7442, 0
        %v7468 = vsel %vm7300, %v7451, 0
        %v7471 = vsel %vm7300, %v7452, 0
        %v7474 = vsel %vm7300, %v7453, 0
        %v7477 = vsel %vm7300, %v7454, 0
        %7479 = vmatpush.bf16.xpose.msra.mxu0 0
        %7480 = vmatpush.bf16.xpose.msra.mxu0 0
        %7481 = vmatpush.bf16.xpose.msra.mxu0 0
        %7482 = vmatpush.bf16.xpose.msra.mxu0 0
        %7483 = vmatpush.bf16.xpose.msra.mxu0 %v7477
        %7484 = vmatpush.bf16.xpose.msra.mxu0 %v7474
        %7485 = vmatpush.bf16.xpose.msra.mxu0 %v7471
        %7486 = vmatpush.bf16.xpose.msra.mxu0 %v7468
        %7487 = vmatmul.bf16.gmra.mxu0 %v7456
        %v7488 = vpop.f32.mrf.mxu0
        %v7489 = vadd.f32 0.0, %v7488
        %v7490 = vpop.f32.mrf.mxu0
        %v7491 = vadd.f32 0.0, %v7490
        %7492 = vmatmul.bf16.gmra.mxu0 %v7459
        %v7493 = vpop.f32.mrf.mxu0
        %v7494 = vadd.f32 0.0, %v7493
        %v7495 = vpop.f32.mrf.mxu0
        %v7496 = vadd.f32 0.0, %v7495
        %7497 = vmatmul.bf16.gmra.mxu0 %v7462
        %v7498 = vpop.f32.mrf.mxu0
        %v7499 = vadd.f32 0.0, %v7498
        %v7500 = vpop.f32.mrf.mxu0
        %v7501 = vadd.f32 0.0, %v7500
        %7502 = vmatmul.bf16.gmra.mxu0 %v7465
        %v7503 = vpop.f32.mrf.mxu0
        %v7504 = vadd.f32 0.0, %v7503
        %v7505 = vpop.f32.mrf.mxu0
        %v7506 = vadd.f32 0.0, %v7505
        %7507 = vdwg.mxu0
        %v7508 = vunpack.c.l.b16 %v3377
        %v7509 = vunpack.c.l.b16 %v3389
        %v7510 = vunpack.c.l.b16 %v3401
        %v7511 = vunpack.c.l.b16 %v3413
        %v7512 = vunpack.c.l.b16 %v3425
        %v7513 = vunpack.c.l.b16 %v3437
        %v7514 = vunpack.c.l.b16 %v3449
        %v7515 = vunpack.c.l.b16 %v3461
        %v7516 = vpack.c.b16 %v7509, %v7508
        %v7517 = vpack.c.b16 %v7511, %v7510
        %v7518 = vpack.c.b16 %v7513, %v7512
        %v7519 = vpack.c.b16 %v7515, %v7514
        %v7520 = vunpack.c.l.b16 %v5281
        %v7521 = vunpack.c.l.b16 %v5293
        %v7522 = vunpack.c.l.b16 %v5305
        %v7523 = vunpack.c.l.b16 %v5317
        %v7524 = vunpack.c.l.b16 %v5329
        %v7525 = vunpack.c.l.b16 %v5341
        %v7526 = vunpack.c.l.b16 %v5353
        %v7527 = vunpack.c.l.b16 %v5365
        %v7528 = vpack.c.b16 %v7521, %v7520
        %v7529 = vpack.c.b16 %v7523, %v7522
        %v7530 = vpack.c.b16 %v7525, %v7524
        %v7531 = vpack.c.b16 %v7527, %v7526
        %v7533 = vsel %vm7300, %v7516, 0
        %v7536 = vsel %vm7300, %v7517, 0
        %v7539 = vsel %vm7300, %v7518, 0
        %v7542 = vsel %vm7300, %v7519, 0
        %v7545 = vsel %vm7300, %v7528, 0
        %v7548 = vsel %vm7300, %v7529, 0
        %v7551 = vsel %vm7300, %v7530, 0
        %v7554 = vsel %vm7300, %v7531, 0
        %7556 = vmatpush.bf16.xpose.msra.mxu0 0
        %7557 = vmatpush.bf16.xpose.msra.mxu0 0
        %7558 = vmatpush.bf16.xpose.msra.mxu0 0
        %7559 = vmatpush.bf16.xpose.msra.mxu0 0
        %7560 = vmatpush.bf16.xpose.msra.mxu0 %v7554
        %7561 = vmatpush.bf16.xpose.msra.mxu0 %v7551
        %7562 = vmatpush.bf16.xpose.msra.mxu0 %v7548
        %7563 = vmatpush.bf16.xpose.msra.mxu0 %v7545
        %7564 = vmatmul.bf16.gmra.mxu0 %v7533
        %v7565 = vpop.f32.mrf.mxu0
        %v7566 = vadd.f32 0.0, %v7565
        %v7567 = vpop.f32.mrf.mxu0
        %v7568 = vadd.f32 0.0, %v7567
        %7569 = vmatmul.bf16.gmra.mxu0 %v7536
        %v7570 = vpop.f32.mrf.mxu0
        %v7571 = vadd.f32 0.0, %v7570
        %v7572 = vpop.f32.mrf.mxu0
        %v7573 = vadd.f32 0.0, %v7572
        %7574 = vmatmul.bf16.gmra.mxu0 %v7539
        %v7575 = vpop.f32.mrf.mxu0
        %v7576 = vadd.f32 0.0, %v7575
        %v7577 = vpop.f32.mrf.mxu0
        %v7578 = vadd.f32 0.0, %v7577
        %7579 = vmatmul.bf16.gmra.mxu0 %v7542
        %v7580 = vpop.f32.mrf.mxu0
        %v7581 = vadd.f32 0.0, %v7580
        %v7582 = vpop.f32.mrf.mxu0
        %v7583 = vadd.f32 0.0, %v7582
        %7584 = vdwg.mxu0
        %v7585 = vunpack.c.l.b16 %v3284
        %v7586 = vunpack.c.l.b16 %v3296
        %v7587 = vunpack.c.l.b16 %v3308
        %v7588 = vunpack.c.l.b16 %v3320
        %v7589 = vunpack.c.l.b16 %v3332
        %v7590 = vunpack.c.l.b16 %v3344
        %v7591 = vunpack.c.l.b16 %v3356
        %v7592 = vunpack.c.l.b16 %v3368
        %v7593 = vpack.c.b16 %v7586, %v7585
        %v7594 = vpack.c.b16 %v7588, %v7587
        %v7595 = vpack.c.b16 %v7590, %v7589
        %v7596 = vpack.c.b16 %v7592, %v7591
        %v7597 = vunpack.c.l.b16 %v5188
        %v7598 = vunpack.c.l.b16 %v5200
        %v7599 = vunpack.c.l.b16 %v5212
        %v7600 = vunpack.c.l.b16 %v5224
        %v7601 = vunpack.c.l.b16 %v5236
        %v7602 = vunpack.c.l.b16 %v5248
        %v7603 = vunpack.c.l.b16 %v5260
        %v7604 = vunpack.c.l.b16 %v5272
        %v7605 = vpack.c.b16 %v7598, %v7597
        %v7606 = vpack.c.b16 %v7600, %v7599
        %v7607 = vpack.c.b16 %v7602, %v7601
        %v7608 = vpack.c.b16 %v7604, %v7603
        %v7610 = vsel %vm7300, %v7593, 0
        %v7613 = vsel %vm7300, %v7594, 0
        %v7616 = vsel %vm7300, %v7595, 0
        %v7619 = vsel %vm7300, %v7596, 0
        %v7622 = vsel %vm7300, %v7605, 0
        %v7625 = vsel %vm7300, %v7606, 0
        %v7628 = vsel %vm7300, %v7607, 0
        %v7631 = vsel %vm7300, %v7608, 0
        %7633 = vmatpush.bf16.xpose.msra.mxu0 0
        %7634 = vmatpush.bf16.xpose.msra.mxu0 0
        %7635 = vmatpush.bf16.xpose.msra.mxu0 0
        %7636 = vmatpush.bf16.xpose.msra.mxu0 0
        %7637 = vmatpush.bf16.xpose.msra.mxu0 %v7631
        %7638 = vmatpush.bf16.xpose.msra.mxu0 %v7628
        %7639 = vmatpush.bf16.xpose.msra.mxu0 %v7625
        %7640 = vmatpush.bf16.xpose.msra.mxu0 %v7622
        %7641 = vmatmul.bf16.gmra.mxu0 %v7610
        %v7642 = vpop.f32.mrf.mxu0
        %v7643 = vadd.f32 0.0, %v7642
        %v7644 = vpop.f32.mrf.mxu0
        %v7645 = vadd.f32 0.0, %v7644
        %7646 = vmatmul.bf16.gmra.mxu0 %v7613
        %v7647 = vpop.f32.mrf.mxu0
        %v7648 = vadd.f32 0.0, %v7647
        %v7649 = vpop.f32.mrf.mxu0
        %v7650 = vadd.f32 0.0, %v7649
        %7651 = vmatmul.bf16.gmra.mxu0 %v7616
        %v7652 = vpop.f32.mrf.mxu0
        %v7653 = vadd.f32 0.0, %v7652
        %v7654 = vpop.f32.mrf.mxu0
        %v7655 = vadd.f32 0.0, %v7654
        %7656 = vmatmul.bf16.gmra.mxu0 %v7619
        %v7657 = vpop.f32.mrf.mxu0
        %v7658 = vadd.f32 0.0, %v7657
        %v7659 = vpop.f32.mrf.mxu0
        %v7660 = vadd.f32 0.0, %v7659
        %7661 = vdwg.mxu0
        %v7662 = vunpack.c.l.b16 %v3380
        %v7663 = vunpack.c.l.b16 %v3392
        %v7664 = vunpack.c.l.b16 %v3404
        %v7665 = vunpack.c.l.b16 %v3416
        %v7666 = vunpack.c.l.b16 %v3428
        %v7667 = vunpack.c.l.b16 %v3440
        %v7668 = vunpack.c.l.b16 %v3452
        %v7669 = vunpack.c.l.b16 %v3464
        %v7670 = vpack.c.b16 %v7663, %v7662
        %v7671 = vpack.c.b16 %v7665, %v7664
        %v7672 = vpack.c.b16 %v7667, %v7666
        %v7673 = vpack.c.b16 %v7669, %v7668
        %v7674 = vunpack.c.l.b16 %v5284
        %v7675 = vunpack.c.l.b16 %v5296
        %v7676 = vunpack.c.l.b16 %v5308
        %v7677 = vunpack.c.l.b16 %v5320
        %v7678 = vunpack.c.l.b16 %v5332
        %v7679 = vunpack.c.l.b16 %v5344
        %v7680 = vunpack.c.l.b16 %v5356
        %v7681 = vunpack.c.l.b16 %v5368
        %v7682 = vpack.c.b16 %v7675, %v7674
        %v7683 = vpack.c.b16 %v7677, %v7676
        %v7684 = vpack.c.b16 %v7679, %v7678
        %v7685 = vpack.c.b16 %v7681, %v7680
        %v7687 = vsel %vm7300, %v7670, 0
        %v7690 = vsel %vm7300, %v7671, 0
        %v7693 = vsel %vm7300, %v7672, 0
        %v7696 = vsel %vm7300, %v7673, 0
        %v7699 = vsel %vm7300, %v7682, 0
        %v7702 = vsel %vm7300, %v7683, 0
        %v7705 = vsel %vm7300, %v7684, 0
        %v7708 = vsel %vm7300, %v7685, 0
        %7710 = vmatpush.bf16.xpose.msra.mxu0 0
        %7711 = vmatpush.bf16.xpose.msra.mxu0 0
        %7712 = vmatpush.bf16.xpose.msra.mxu0 0
        %7713 = vmatpush.bf16.xpose.msra.mxu0 0
        %7714 = vmatpush.bf16.xpose.msra.mxu0 %v7708
        %7715 = vmatpush.bf16.xpose.msra.mxu0 %v7705
        %7716 = vmatpush.bf16.xpose.msra.mxu0 %v7702
        %7717 = vmatpush.bf16.xpose.msra.mxu0 %v7699
        %7718 = vmatmul.bf16.gmra.mxu0 %v7687
        %v7719 = vpop.f32.mrf.mxu0
        %v7720 = vadd.f32 0.0, %v7719
        %v7721 = vpop.f32.mrf.mxu0
        %v7722 = vadd.f32 0.0, %v7721
        %7723 = vmatmul.bf16.gmra.mxu0 %v7690
        %v7724 = vpop.f32.mrf.mxu0
        %v7725 = vadd.f32 0.0, %v7724
        %v7726 = vpop.f32.mrf.mxu0
        %v7727 = vadd.f32 0.0, %v7726
        %7728 = vmatmul.bf16.gmra.mxu0 %v7693
        %v7729 = vpop.f32.mrf.mxu0
        %v7730 = vadd.f32 0.0, %v7729
        %v7731 = vpop.f32.mrf.mxu0
        %v7732 = vadd.f32 0.0, %v7731
        %7733 = vmatmul.bf16.gmra.mxu0 %v7696
        %v7734 = vpop.f32.mrf.mxu0
        %v7735 = vadd.f32 0.0, %v7734
        %v7736 = vpop.f32.mrf.mxu0
        %v7737 = vadd.f32 0.0, %v7736
        %7738 = vdwg.mxu0
        %v7739 = vunpack.c.l.b16 %v3287
        %v7740 = vunpack.c.l.b16 %v3299
        %v7741 = vunpack.c.l.b16 %v3311
        %v7742 = vunpack.c.l.b16 %v3323
        %v7743 = vunpack.c.l.b16 %v3335
        %v7744 = vunpack.c.l.b16 %v3347
        %v7745 = vunpack.c.l.b16 %v3359
        %v7746 = vunpack.c.l.b16 %v3371
        %v7747 = vpack.c.b16 %v7740, %v7739
        %v7748 = vpack.c.b16 %v7742, %v7741
        %v7749 = vpack.c.b16 %v7744, %v7743
        %v7750 = vpack.c.b16 %v7746, %v7745
        %v7751 = vunpack.c.l.b16 %v5191
        %v7752 = vunpack.c.l.b16 %v5203
        %v7753 = vunpack.c.l.b16 %v5215
        %v7754 = vunpack.c.l.b16 %v5227
        %v7755 = vunpack.c.l.b16 %v5239
        %v7756 = vunpack.c.l.b16 %v5251
        %v7757 = vunpack.c.l.b16 %v5263
        %v7758 = vunpack.c.l.b16 %v5275
        %v7759 = vpack.c.b16 %v7752, %v7751
        %v7760 = vpack.c.b16 %v7754, %v7753
        %v7761 = vpack.c.b16 %v7756, %v7755
        %v7762 = vpack.c.b16 %v7758, %v7757
        %v7764 = vsel %vm7300, %v7747, 0
        %v7767 = vsel %vm7300, %v7748, 0
        %v7770 = vsel %vm7300, %v7749, 0
        %v7773 = vsel %vm7300, %v7750, 0
        %v7776 = vsel %vm7300, %v7759, 0
        %v7779 = vsel %vm7300, %v7760, 0
        %v7782 = vsel %vm7300, %v7761, 0
        %v7785 = vsel %vm7300, %v7762, 0
        %7787 = vmatpush.bf16.xpose.msra.mxu0 0
        %7788 = vmatpush.bf16.xpose.msra.mxu0 0
        %7789 = vmatpush.bf16.xpose.msra.mxu0 0
        %7790 = vmatpush.bf16.xpose.msra.mxu0 0
        %7791 = vmatpush.bf16.xpose.msra.mxu0 %v7785
        %7792 = vmatpush.bf16.xpose.msra.mxu0 %v7782
        %7793 = vmatpush.bf16.xpose.msra.mxu0 %v7779
        %7794 = vmatpush.bf16.xpose.msra.mxu0 %v7776
        %7795 = vmatmul.bf16.gmra.mxu0 %v7764
        %v7796 = vpop.f32.mrf.mxu0
        %v7797 = vadd.f32 0.0, %v7796
        %v7798 = vpop.f32.mrf.mxu0
        %v7799 = vadd.f32 0.0, %v7798
        %7800 = vmatmul.bf16.gmra.mxu0 %v7767
        %v7801 = vpop.f32.mrf.mxu0
        %v7802 = vadd.f32 0.0, %v7801
        %v7803 = vpop.f32.mrf.mxu0
        %v7804 = vadd.f32 0.0, %v7803
        %7805 = vmatmul.bf16.gmra.mxu0 %v7770
        %v7806 = vpop.f32.mrf.mxu0
        %v7807 = vadd.f32 0.0, %v7806
        %v7808 = vpop.f32.mrf.mxu0
        %v7809 = vadd.f32 0.0, %v7808
        %7810 = vmatmul.bf16.gmra.mxu0 %v7773
        %v7811 = vpop.f32.mrf.mxu0
        %v7812 = vadd.f32 0.0, %v7811
        %v7813 = vpop.f32.mrf.mxu0
        %v7814 = vadd.f32 0.0, %v7813
        %7815 = vdwg.mxu0
        %v7816 = vunpack.c.l.b16 %v3383
        %v7817 = vunpack.c.l.b16 %v3395
        %v7818 = vunpack.c.l.b16 %v3407
        %v7819 = vunpack.c.l.b16 %v3419
        %v7820 = vunpack.c.l.b16 %v3431
        %v7821 = vunpack.c.l.b16 %v3443
        %v7822 = vunpack.c.l.b16 %v3455
        %v7823 = vunpack.c.l.b16 %v3467
        %v7824 = vpack.c.b16 %v7817, %v7816
        %v7825 = vpack.c.b16 %v7819, %v7818
        %v7826 = vpack.c.b16 %v7821, %v7820
        %v7827 = vpack.c.b16 %v7823, %v7822
        %v7828 = vunpack.c.l.b16 %v5287
        %v7829 = vunpack.c.l.b16 %v5299
        %v7830 = vunpack.c.l.b16 %v5311
        %v7831 = vunpack.c.l.b16 %v5323
        %v7832 = vunpack.c.l.b16 %v5335
        %v7833 = vunpack.c.l.b16 %v5347
        %v7834 = vunpack.c.l.b16 %v5359
        %v7835 = vunpack.c.l.b16 %v5371
        %v7836 = vpack.c.b16 %v7829, %v7828
        %v7837 = vpack.c.b16 %v7831, %v7830
        %v7838 = vpack.c.b16 %v7833, %v7832
        %v7839 = vpack.c.b16 %v7835, %v7834
        %v7841 = vsel %vm7300, %v7824, 0
        %v7844 = vsel %vm7300, %v7825, 0
        %v7847 = vsel %vm7300, %v7826, 0
        %v7850 = vsel %vm7300, %v7827, 0
        %v7853 = vsel %vm7300, %v7836, 0
        %v7856 = vsel %vm7300, %v7837, 0
        %v7859 = vsel %vm7300, %v7838, 0
        %v7862 = vsel %vm7300, %v7839, 0
        %7864 = vmatpush.bf16.xpose.msra.mxu0 0
        %7865 = vmatpush.bf16.xpose.msra.mxu0 0
        %7866 = vmatpush.bf16.xpose.msra.mxu0 0
        %7867 = vmatpush.bf16.xpose.msra.mxu0 0
        %7868 = vmatpush.bf16.xpose.msra.mxu0 %v7862
        %7869 = vmatpush.bf16.xpose.msra.mxu0 %v7859
        %7870 = vmatpush.bf16.xpose.msra.mxu0 %v7856
        %7871 = vmatpush.bf16.xpose.msra.mxu0 %v7853
        %7872 = vmatmul.bf16.gmra.mxu0 %v7841
        %v7873 = vpop.f32.mrf.mxu0
        %v7874 = vadd.f32 0.0, %v7873
        %v7875 = vpop.f32.mrf.mxu0
        %v7876 = vadd.f32 0.0, %v7875
        %7877 = vmatmul.bf16.gmra.mxu0 %v7844
        %v7878 = vpop.f32.mrf.mxu0
        %v7879 = vadd.f32 0.0, %v7878
        %v7880 = vpop.f32.mrf.mxu0
        %v7881 = vadd.f32 0.0, %v7880
        %7882 = vmatmul.bf16.gmra.mxu0 %v7847
        %v7883 = vpop.f32.mrf.mxu0
        %v7884 = vadd.f32 0.0, %v7883
        %v7885 = vpop.f32.mrf.mxu0
        %v7886 = vadd.f32 0.0, %v7885
        %7887 = vmatmul.bf16.gmra.mxu0 %v7850
        %v7888 = vpop.f32.mrf.mxu0
        %v7889 = vadd.f32 0.0, %v7888
        %v7890 = vpop.f32.mrf.mxu0
        %v7891 = vadd.f32 0.0, %v7890
        %7892 = vdwg.mxu0
        %v7893 = vsel %vm7300, %v7335, -inf
        %7894 = vmax.xlane.f32.xlu0 %v7893
        %v7895 = vpop.xlane.xlu0 %7894
        %v7896 = vsel %vm7300, %v7337, -inf
        %7897 = vmax.xlane.f32.xlu0 %v7896
        %v7898 = vpop.xlane.xlu0 %7897
        %v7899 = vsel %vm7300, %v7340, -inf
        %7900 = vmax.xlane.f32.xlu0 %v7899
        %v7901 = vpop.xlane.xlu0 %7900
        %v7902 = vsel %vm7300, %v7342, -inf
        %7903 = vmax.xlane.f32.xlu0 %v7902
        %v7904 = vpop.xlane.xlu0 %7903
        %v7905 = vsel %vm7300, %v7345, -inf
        %7906 = vmax.xlane.f32.xlu0 %v7905
        %v7907 = vpop.xlane.xlu0 %7906
        %v7908 = vsel %vm7300, %v7347, -inf
        %7909 = vmax.xlane.f32.xlu0 %v7908
        %v7910 = vpop.xlane.xlu0 %7909
        %v7911 = vsel %vm7300, %v7350, -inf
        %7912 = vmax.xlane.f32.xlu0 %v7911
        %v7913 = vpop.xlane.xlu0 %7912
        %v7914 = vsel %vm7300, %v7352, -inf
        %7915 = vmax.xlane.f32.xlu0 %v7914
        %v7916 = vpop.xlane.xlu0 %7915
        %v7917 = vsel %vm7300, %v7412, -inf
        %7918 = vmax.xlane.f32.xlu0 %v7917
        %v7919 = vpop.xlane.xlu0 %7918
        %v7920 = vsel %vm7300, %v7414, -inf
        %7921 = vmax.xlane.f32.xlu0 %v7920
        %v7922 = vpop.xlane.xlu0 %7921
        %v7923 = vsel %vm7300, %v7417, -inf
        %7924 = vmax.xlane.f32.xlu0 %v7923
        %v7925 = vpop.xlane.xlu0 %7924
        %v7926 = vsel %vm7300, %v7419, -inf
        %7927 = vmax.xlane.f32.xlu0 %v7926
        %v7928 = vpop.xlane.xlu0 %7927
        %v7929 = vsel %vm7300, %v7422, -inf
        %7930 = vmax.xlane.f32.xlu0 %v7929
        %v7931 = vpop.xlane.xlu0 %7930
        %v7932 = vsel %vm7300, %v7424, -inf
        %7933 = vmax.xlane.f32.xlu0 %v7932
        %v7934 = vpop.xlane.xlu0 %7933
        %v7935 = vsel %vm7300, %v7427, -inf
        %7936 = vmax.xlane.f32.xlu0 %v7935
        %v7937 = vpop.xlane.xlu0 %7936
        %v7938 = vsel %vm7300, %v7429, -inf
        %7939 = vmax.xlane.f32.xlu0 %v7938
        %v7940 = vpop.xlane.xlu0 %7939
        %v7941 = vsel %vm7300, %v7489, -inf
        %7942 = vmax.xlane.f32.xlu0 %v7941
        %v7943 = vpop.xlane.xlu0 %7942
        %v7944 = vsel %vm7300, %v7491, -inf
        %7945 = vmax.xlane.f32.xlu0 %v7944
        %v7946 = vpop.xlane.xlu0 %7945
        %v7947 = vsel %vm7300, %v7494, -inf
        %7948 = vmax.xlane.f32.xlu0 %v7947
        %v7949 = vpop.xlane.xlu0 %7948
        %v7950 = vsel %vm7300, %v7496, -inf
        %7951 = vmax.xlane.f32.xlu0 %v7950
        %v7952 = vpop.xlane.xlu0 %7951
        %v7953 = vsel %vm7300, %v7499, -inf
        %7954 = vmax.xlane.f32.xlu0 %v7953
        %v7955 = vpop.xlane.xlu0 %7954
        %v7956 = vsel %vm7300, %v7501, -inf
        %7957 = vmax.xlane.f32.xlu0 %v7956
        %v7958 = vpop.xlane.xlu0 %7957
        %v7959 = vsel %vm7300, %v7504, -inf
        %7960 = vmax.xlane.f32.xlu0 %v7959
        %v7961 = vpop.xlane.xlu0 %7960
        %v7962 = vsel %vm7300, %v7506, -inf
        %7963 = vmax.xlane.f32.xlu0 %v7962
        %v7964 = vpop.xlane.xlu0 %7963
        %v7965 = vsel %vm7300, %v7566, -inf
        %7966 = vmax.xlane.f32.xlu0 %v7965
        %v7967 = vpop.xlane.xlu0 %7966
        %v7968 = vsel %vm7300, %v7568, -inf
        %7969 = vmax.xlane.f32.xlu0 %v7968
        %v7970 = vpop.xlane.xlu0 %7969
        %v7971 = vsel %vm7300, %v7571, -inf
        %7972 = vmax.xlane.f32.xlu0 %v7971
        %v7973 = vpop.xlane.xlu0 %7972
        %v7974 = vsel %vm7300, %v7573, -inf
        %7975 = vmax.xlane.f32.xlu0 %v7974
        %v7976 = vpop.xlane.xlu0 %7975
        %v7977 = vsel %vm7300, %v7576, -inf
        %7978 = vmax.xlane.f32.xlu0 %v7977
        %v7979 = vpop.xlane.xlu0 %7978
        %v7980 = vsel %vm7300, %v7578, -inf
        %7981 = vmax.xlane.f32.xlu0 %v7980
        %v7982 = vpop.xlane.xlu0 %7981
        %v7983 = vsel %vm7300, %v7581, -inf
        %7984 = vmax.xlane.f32.xlu0 %v7983
        %v7985 = vpop.xlane.xlu0 %7984
        %v7986 = vsel %vm7300, %v7583, -inf
        %7987 = vmax.xlane.f32.xlu0 %v7986
        %v7988 = vpop.xlane.xlu0 %7987
        %v7989 = vsel %vm7300, %v7643, -inf
        %7990 = vmax.xlane.f32.xlu0 %v7989
        %v7991 = vpop.xlane.xlu0 %7990
        %v7992 = vsel %vm7300, %v7645, -inf
        %7993 = vmax.xlane.f32.xlu0 %v7992
        %v7994 = vpop.xlane.xlu0 %7993
        %v7995 = vsel %vm7300, %v7648, -inf
        %7996 = vmax.xlane.f32.xlu0 %v7995
        %v7997 = vpop.xlane.xlu0 %7996
        %v7998 = vsel %vm7300, %v7650, -inf
        %7999 = vmax.xlane.f32.xlu0 %v7998
        %v8000 = vpop.xlane.xlu0 %7999
        %v8001 = vsel %vm7300, %v7653, -inf
        %8002 = vmax.xlane.f32.xlu0 %v8001
        %v8003 = vpop.xlane.xlu0 %8002
        %v8004 = vsel %vm7300, %v7655, -inf
        %8005 = vmax.xlane.f32.xlu0 %v8004
        %v8006 = vpop.xlane.xlu0 %8005
        %v8007 = vsel %vm7300, %v7658, -inf
        %8008 = vmax.xlane.f32.xlu0 %v8007
        %v8009 = vpop.xlane.xlu0 %8008
        %v8010 = vsel %vm7300, %v7660, -inf
        %8011 = vmax.xlane.f32.xlu0 %v8010
        %v8012 = vpop.xlane.xlu0 %8011
        %v8013 = vsel %vm7300, %v7720, -inf
        %8014 = vmax.xlane.f32.xlu0 %v8013
        %v8015 = vpop.xlane.xlu0 %8014
        %v8016 = vsel %vm7300, %v7722, -inf
        %8017 = vmax.xlane.f32.xlu0 %v8016
        %v8018 = vpop.xlane.xlu0 %8017
        %v8019 = vsel %vm7300, %v7725, -inf
        %8020 = vmax.xlane.f32.xlu0 %v8019
        %v8021 = vpop.xlane.xlu0 %8020
        %v8022 = vsel %vm7300, %v7727, -inf
        %8023 = vmax.xlane.f32.xlu0 %v8022
        %v8024 = vpop.xlane.xlu0 %8023
        %v8025 = vsel %vm7300, %v7730, -inf
        %8026 = vmax.xlane.f32.xlu0 %v8025
        %v8027 = vpop.xlane.xlu0 %8026
        %v8028 = vsel %vm7300, %v7732, -inf
        %8029 = vmax.xlane.f32.xlu0 %v8028
        %v8030 = vpop.xlane.xlu0 %8029
        %v8031 = vsel %vm7300, %v7735, -inf
        %8032 = vmax.xlane.f32.xlu0 %v8031
        %v8033 = vpop.xlane.xlu0 %8032
        %v8034 = vsel %vm7300, %v7737, -inf
        %8035 = vmax.xlane.f32.xlu0 %v8034
        %v8036 = vpop.xlane.xlu0 %8035
        %v8037 = vsel %vm7300, %v7797, -inf
        %8038 = vmax.xlane.f32.xlu0 %v8037
        %v8039 = vpop.xlane.xlu0 %8038
        %v8040 = vsel %vm7300, %v7799, -inf
        %8041 = vmax.xlane.f32.xlu0 %v8040
        %v8042 = vpop.xlane.xlu0 %8041
        %v8043 = vsel %vm7300, %v7802, -inf
        %8044 = vmax.xlane.f32.xlu0 %v8043
        %v8045 = vpop.xlane.xlu0 %8044
        %v8046 = vsel %vm7300, %v7804, -inf
        %8047 = vmax.xlane.f32.xlu0 %v8046
        %v8048 = vpop.xlane.xlu0 %8047
        %v8049 = vsel %vm7300, %v7807, -inf
        %8050 = vmax.xlane.f32.xlu0 %v8049
        %v8051 = vpop.xlane.xlu0 %8050
        %v8052 = vsel %vm7300, %v7809, -inf
        %8053 = vmax.xlane.f32.xlu0 %v8052
        %v8054 = vpop.xlane.xlu0 %8053
        %v8055 = vsel %vm7300, %v7812, -inf
        %8056 = vmax.xlane.f32.xlu0 %v8055
        %v8057 = vpop.xlane.xlu0 %8056
        %v8058 = vsel %vm7300, %v7814, -inf
        %8059 = vmax.xlane.f32.xlu0 %v8058
        %v8060 = vpop.xlane.xlu0 %8059
        %v8061 = vsel %vm7300, %v7874, -inf
        %8062 = vmax.xlane.f32.xlu0 %v8061
        %v8063 = vpop.xlane.xlu0 %8062
        %v8064 = vsel %vm7300, %v7876, -inf
        %8065 = vmax.xlane.f32.xlu0 %v8064
        %v8066 = vpop.xlane.xlu0 %8065
        %v8067 = vsel %vm7300, %v7879, -inf
        %8068 = vmax.xlane.f32.xlu0 %v8067
        %v8069 = vpop.xlane.xlu0 %8068
        %v8070 = vsel %vm7300, %v7881, -inf
        %8071 = vmax.xlane.f32.xlu0 %v8070
        %v8072 = vpop.xlane.xlu0 %8071
        %v8073 = vsel %vm7300, %v7884, -inf
        %8074 = vmax.xlane.f32.xlu0 %v8073
        %v8075 = vpop.xlane.xlu0 %8074
        %v8076 = vsel %vm7300, %v7886, -inf
        %8077 = vmax.xlane.f32.xlu0 %v8076
        %v8078 = vpop.xlane.xlu0 %8077
        %v8079 = vsel %vm7300, %v7889, -inf
        %8080 = vmax.xlane.f32.xlu0 %v8079
        %v8081 = vpop.xlane.xlu0 %8080
        %v8082 = vsel %vm7300, %v7891, -inf
        %8083 = vmax.xlane.f32.xlu0 %v8082
        %v8084 = vpop.xlane.xlu0 %8083
        %v8085 = vsub.f32 %v7335, %v7895
        %v8086 = vsub.f32 %v7337, %v7898
        %v8087 = vsub.f32 %v7340, %v7901
        %v8088 = vsub.f32 %v7342, %v7904
        %v8089 = vsub.f32 %v7345, %v7907
        %v8090 = vsub.f32 %v7347, %v7910
        %v8091 = vsub.f32 %v7350, %v7913
        %v8092 = vsub.f32 %v7352, %v7916
        %v8093 = vsub.f32 %v7412, %v7919
        %v8094 = vsub.f32 %v7414, %v7922
        %v8095 = vsub.f32 %v7417, %v7925
        %v8096 = vsub.f32 %v7419, %v7928
        %v8097 = vsub.f32 %v7422, %v7931
        %v8098 = vsub.f32 %v7424, %v7934
        %v8099 = vsub.f32 %v7427, %v7937
        %v8100 = vsub.f32 %v7429, %v7940
        %v8101 = vsub.f32 %v7489, %v7943
        %v8102 = vsub.f32 %v7491, %v7946
        %v8103 = vsub.f32 %v7494, %v7949
        %v8104 = vsub.f32 %v7496, %v7952
        %v8105 = vsub.f32 %v7499, %v7955
        %v8106 = vsub.f32 %v7501, %v7958
        %v8107 = vsub.f32 %v7504, %v7961
        %v8108 = vsub.f32 %v7506, %v7964
        %v8109 = vsub.f32 %v7566, %v7967
        %v8110 = vsub.f32 %v7568, %v7970
        %v8111 = vsub.f32 %v7571, %v7973
        %v8112 = vsub.f32 %v7573, %v7976
        %v8113 = vsub.f32 %v7576, %v7979
        %v8114 = vsub.f32 %v7578, %v7982
        %v8115 = vsub.f32 %v7581, %v7985
        %v8116 = vsub.f32 %v7583, %v7988
        %v8117 = vsub.f32 %v7643, %v7991
        %v8118 = vsub.f32 %v7645, %v7994
        %v8119 = vsub.f32 %v7648, %v7997
        %v8120 = vsub.f32 %v7650, %v8000
        %v8121 = vsub.f32 %v7653, %v8003
        %v8122 = vsub.f32 %v7655, %v8006
        %v8123 = vsub.f32 %v7658, %v8009
        %v8124 = vsub.f32 %v7660, %v8012
        %v8125 = vsub.f32 %v7720, %v8015
        %v8126 = vsub.f32 %v7722, %v8018
        %v8127 = vsub.f32 %v7725, %v8021
        %v8128 = vsub.f32 %v7727, %v8024
        %v8129 = vsub.f32 %v7730, %v8027
        %v8130 = vsub.f32 %v7732, %v8030
        %v8131 = vsub.f32 %v7735, %v8033
        %v8132 = vsub.f32 %v7737, %v8036
        %v8133 = vsub.f32 %v7797, %v8039
        %v8134 = vsub.f32 %v7799, %v8042
        %v8135 = vsub.f32 %v7802, %v8045
        %v8136 = vsub.f32 %v7804, %v8048
        %v8137 = vsub.f32 %v7807, %v8051
        %v8138 = vsub.f32 %v7809, %v8054
        %v8139 = vsub.f32 %v7812, %v8057
        %v8140 = vsub.f32 %v7814, %v8060
        %v8141 = vsub.f32 %v7874, %v8063
        %v8142 = vsub.f32 %v7876, %v8066
        %v8143 = vsub.f32 %v7879, %v8069
        %v8144 = vsub.f32 %v7881, %v8072
        %v8145 = vsub.f32 %v7884, %v8075
        %v8146 = vsub.f32 %v7886, %v8078
        %v8147 = vsub.f32 %v7889, %v8081
        %v8148 = vsub.f32 %v7891, %v8084
        %v8149 = vpack.c.bf16 %v8085, %v8085
        %v8150 = vpack.c.bf16 %v8086, %v8086
        %v8151 = vpack.c.bf16 %v8087, %v8087
        %v8152 = vpack.c.bf16 %v8088, %v8088
        %v8153 = vpack.c.bf16 %v8089, %v8089
        %v8154 = vpack.c.bf16 %v8090, %v8090
        %v8155 = vpack.c.bf16 %v8091, %v8091
        %v8156 = vpack.c.bf16 %v8092, %v8092
        %v8157 = vpack.c.bf16 %v8093, %v8093
        %v8158 = vpack.c.bf16 %v8094, %v8094
        %v8159 = vpack.c.bf16 %v8095, %v8095
        %v8160 = vpack.c.bf16 %v8096, %v8096
        %v8161 = vpack.c.bf16 %v8097, %v8097
        %v8162 = vpack.c.bf16 %v8098, %v8098
        %v8163 = vpack.c.bf16 %v8099, %v8099
        %v8164 = vpack.c.bf16 %v8100, %v8100
        %v8165 = vpack.c.bf16 %v8101, %v8101
        %v8166 = vpack.c.bf16 %v8102, %v8102
        %v8167 = vpack.c.bf16 %v8103, %v8103
        %v8168 = vpack.c.bf16 %v8104, %v8104
        %v8169 = vpack.c.bf16 %v8105, %v8105
        %v8170 = vpack.c.bf16 %v8106, %v8106
        %v8171 = vpack.c.bf16 %v8107, %v8107
        %v8172 = vpack.c.bf16 %v8108, %v8108
        %v8173 = vpack.c.bf16 %v8109, %v8109
        %v8174 = vpack.c.bf16 %v8110, %v8110
        %v8175 = vpack.c.bf16 %v8111, %v8111
        %v8176 = vpack.c.bf16 %v8112, %v8112
        %v8177 = vpack.c.bf16 %v8113, %v8113
        %v8178 = vpack.c.bf16 %v8114, %v8114
        %v8179 = vpack.c.bf16 %v8115, %v8115
        %v8180 = vpack.c.bf16 %v8116, %v8116
        %v8181 = vpack.c.bf16 %v8117, %v8117
        %v8182 = vpack.c.bf16 %v8118, %v8118
        %v8183 = vpack.c.bf16 %v8119, %v8119
        %v8184 = vpack.c.bf16 %v8120, %v8120
        %v8185 = vpack.c.bf16 %v8121, %v8121
        %v8186 = vpack.c.bf16 %v8122, %v8122
        %v8187 = vpack.c.bf16 %v8123, %v8123
        %v8188 = vpack.c.bf16 %v8124, %v8124
        %v8189 = vpack.c.bf16 %v8125, %v8125
        %v8190 = vpack.c.bf16 %v8126, %v8126
        %v8191 = vpack.c.bf16 %v8127, %v8127
        %v8192 = vpack.c.bf16 %v8128, %v8128
        %v8193 = vpack.c.bf16 %v8129, %v8129
        %v8194 = vpack.c.bf16 %v8130, %v8130
        %v8195 = vpack.c.bf16 %v8131, %v8131
        %v8196 = vpack.c.bf16 %v8132, %v8132
        %v8197 = vpack.c.bf16 %v8133, %v8133
        %v8198 = vpack.c.bf16 %v8134, %v8134
        %v8199 = vpack.c.bf16 %v8135, %v8135
        %v8200 = vpack.c.bf16 %v8136, %v8136
        %v8201 = vpack.c.bf16 %v8137, %v8137
        %v8202 = vpack.c.bf16 %v8138, %v8138
        %v8203 = vpack.c.bf16 %v8139, %v8139
        %v8204 = vpack.c.bf16 %v8140, %v8140
        %v8205 = vpack.c.bf16 %v8141, %v8141
        %v8206 = vpack.c.bf16 %v8142, %v8142
        %v8207 = vpack.c.bf16 %v8143, %v8143
        %v8208 = vpack.c.bf16 %v8144, %v8144
        %v8209 = vpack.c.bf16 %v8145, %v8145
        %v8210 = vpack.c.bf16 %v8146, %v8146
        %v8211 = vpack.c.bf16 %v8147, %v8147
        %v8212 = vpack.c.bf16 %v8148, %v8148
        %v8213 = vunpack.c.l.bf16 %v8149
        %v8214 = vunpack.c.l.bf16 %v8150
        %v8215 = vunpack.c.l.bf16 %v8151
        %v8216 = vunpack.c.l.bf16 %v8152
        %v8217 = vunpack.c.l.bf16 %v8153
        %v8218 = vunpack.c.l.bf16 %v8154
        %v8219 = vunpack.c.l.bf16 %v8155
        %v8220 = vunpack.c.l.bf16 %v8156
        %v8221 = vunpack.c.l.bf16 %v8157
        %v8222 = vunpack.c.l.bf16 %v8158
        %v8223 = vunpack.c.l.bf16 %v8159
        %v8224 = vunpack.c.l.bf16 %v8160
        %v8225 = vunpack.c.l.bf16 %v8161
        %v8226 = vunpack.c.l.bf16 %v8162
        %v8227 = vunpack.c.l.bf16 %v8163
        %v8228 = vunpack.c.l.bf16 %v8164
        %v8229 = vunpack.c.l.bf16 %v8165
        %v8230 = vunpack.c.l.bf16 %v8166
        %v8231 = vunpack.c.l.bf16 %v8167
        %v8232 = vunpack.c.l.bf16 %v8168
        %v8233 = vunpack.c.l.bf16 %v8169
        %v8234 = vunpack.c.l.bf16 %v8170
        %v8235 = vunpack.c.l.bf16 %v8171
        %v8236 = vunpack.c.l.bf16 %v8172
        %v8237 = vunpack.c.l.bf16 %v8173
        %v8238 = vunpack.c.l.bf16 %v8174
        %v8239 = vunpack.c.l.bf16 %v8175
        %v8240 = vunpack.c.l.bf16 %v8176
        %v8241 = vunpack.c.l.bf16 %v8177
        %v8242 = vunpack.c.l.bf16 %v8178
        %v8243 = vunpack.c.l.bf16 %v8179
        %v8244 = vunpack.c.l.bf16 %v8180
        %v8245 = vunpack.c.l.bf16 %v8181
        %v8246 = vunpack.c.l.bf16 %v8182
        %v8247 = vunpack.c.l.bf16 %v8183
        %v8248 = vunpack.c.l.bf16 %v8184
        %v8249 = vunpack.c.l.bf16 %v8185
        %v8250 = vunpack.c.l.bf16 %v8186
        %v8251 = vunpack.c.l.bf16 %v8187
        %v8252 = vunpack.c.l.bf16 %v8188
        %v8253 = vunpack.c.l.bf16 %v8189
        %v8254 = vunpack.c.l.bf16 %v8190
        %v8255 = vunpack.c.l.bf16 %v8191
        %v8256 = vunpack.c.l.bf16 %v8192
        %v8257 = vunpack.c.l.bf16 %v8193
        %v8258 = vunpack.c.l.bf16 %v8194
        %v8259 = vunpack.c.l.bf16 %v8195
        %v8260 = vunpack.c.l.bf16 %v8196
        %v8261 = vunpack.c.l.bf16 %v8197
        %v8262 = vunpack.c.l.bf16 %v8198
        %v8263 = vunpack.c.l.bf16 %v8199
        %v8264 = vunpack.c.l.bf16 %v8200
        %v8265 = vunpack.c.l.bf16 %v8201
        %v8266 = vunpack.c.l.bf16 %v8202
        %v8267 = vunpack.c.l.bf16 %v8203
        %v8268 = vunpack.c.l.bf16 %v8204
        %v8269 = vunpack.c.l.bf16 %v8205
        %v8270 = vunpack.c.l.bf16 %v8206
        %v8271 = vunpack.c.l.bf16 %v8207
        %v8272 = vunpack.c.l.bf16 %v8208
        %v8273 = vunpack.c.l.bf16 %v8209
        %v8274 = vunpack.c.l.bf16 %v8210
        %v8275 = vunpack.c.l.bf16 %v8211
        %v8276 = vunpack.c.l.bf16 %v8212
        %v8277 = vmul.f32 %v8213, 1.442695
        %v8278 = vpow.pop %v8277
        %v8279 = vmul.f32 %v8214, 1.442695
        %v8280 = vpow.pop %v8279
        %v8281 = vmul.f32 %v8215, 1.442695
        %v8282 = vpow.pop %v8281
        %v8283 = vmul.f32 %v8216, 1.442695
        %v8284 = vpow.pop %v8283
        %v8285 = vmul.f32 %v8217, 1.442695
        %v8286 = vpow.pop %v8285
        %v8287 = vmul.f32 %v8218, 1.442695
        %v8288 = vpow.pop %v8287
        %v8289 = vmul.f32 %v8219, 1.442695
        %v8290 = vpow.pop %v8289
        %v8291 = vmul.f32 %v8220, 1.442695
        %v8292 = vpow.pop %v8291
        %v8293 = vmul.f32 %v8221, 1.442695
        %v8294 = vpow.pop %v8293
        %v8295 = vmul.f32 %v8222, 1.442695
        %v8296 = vpow.pop %v8295
        %v8297 = vmul.f32 %v8223, 1.442695
        %v8298 = vpow.pop %v8297
        %v8299 = vmul.f32 %v8224, 1.442695
        %v8300 = vpow.pop %v8299
        %v8301 = vmul.f32 %v8225, 1.442695
        %v8302 = vpow.pop %v8301
        %v8303 = vmul.f32 %v8226, 1.442695
        %v8304 = vpow.pop %v8303
        %v8305 = vmul.f32 %v8227, 1.442695
        %v8306 = vpow.pop %v8305
        %v8307 = vmul.f32 %v8228, 1.442695
        %v8308 = vpow.pop %v8307
        %v8309 = vmul.f32 %v8229, 1.442695
        %v8310 = vpow.pop %v8309
        %v8311 = vmul.f32 %v8230, 1.442695
        %v8312 = vpow.pop %v8311
        %v8313 = vmul.f32 %v8231, 1.442695
        %v8314 = vpow.pop %v8313
        %v8315 = vmul.f32 %v8232, 1.442695
        %v8316 = vpow.pop %v8315
        %v8317 = vmul.f32 %v8233, 1.442695
        %v8318 = vpow.pop %v8317
        %v8319 = vmul.f32 %v8234, 1.442695
        %v8320 = vpow.pop %v8319
        %v8321 = vmul.f32 %v8235, 1.442695
        %v8322 = vpow.pop %v8321
        %v8323 = vmul.f32 %v8236, 1.442695
        %v8324 = vpow.pop %v8323
        %v8325 = vmul.f32 %v8237, 1.442695
        %v8326 = vpow.pop %v8325
        %v8327 = vmul.f32 %v8238, 1.442695
        %v8328 = vpow.pop %v8327
        %v8329 = vmul.f32 %v8239, 1.442695
        %v8330 = vpow.pop %v8329
        %v8331 = vmul.f32 %v8240, 1.442695
        %v8332 = vpow.pop %v8331
        %v8333 = vmul.f32 %v8241, 1.442695
        %v8334 = vpow.pop %v8333
        %v8335 = vmul.f32 %v8242, 1.442695
        %v8336 = vpow.pop %v8335
        %v8337 = vmul.f32 %v8243, 1.442695
        %v8338 = vpow.pop %v8337
        %v8339 = vmul.f32 %v8244, 1.442695
        %v8340 = vpow.pop %v8339
        %v8341 = vmul.f32 %v8245, 1.442695
        %v8342 = vpow.pop %v8341
        %v8343 = vmul.f32 %v8246, 1.442695
        %v8344 = vpow.pop %v8343
        %v8345 = vmul.f32 %v8247, 1.442695
        %v8346 = vpow.pop %v8345
        %v8347 = vmul.f32 %v8248, 1.442695
        %v8348 = vpow.pop %v8347
        %v8349 = vmul.f32 %v8249, 1.442695
        %v8350 = vpow.pop %v8349
        %v8351 = vmul.f32 %v8250, 1.442695
        %v8352 = vpow.pop %v8351
        %v8353 = vmul.f32 %v8251, 1.442695
        %v8354 = vpow.pop %v8353
        %v8355 = vmul.f32 %v8252, 1.442695
        %v8356 = vpow.pop %v8355
        %v8357 = vmul.f32 %v8253, 1.442695
        %v8358 = vpow.pop %v8357
        %v8359 = vmul.f32 %v8254, 1.442695
        %v8360 = vpow.pop %v8359
        %v8361 = vmul.f32 %v8255, 1.442695
        %v8362 = vpow.pop %v8361
        %v8363 = vmul.f32 %v8256, 1.442695
        %v8364 = vpow.pop %v8363
        %v8365 = vmul.f32 %v8257, 1.442695
        %v8366 = vpow.pop %v8365
        %v8367 = vmul.f32 %v8258, 1.442695
        %v8368 = vpow.pop %v8367
        %v8369 = vmul.f32 %v8259, 1.442695
        %v8370 = vpow.pop %v8369
        %v8371 = vmul.f32 %v8260, 1.442695
        %v8372 = vpow.pop %v8371
        %v8373 = vmul.f32 %v8261, 1.442695
        %v8374 = vpow.pop %v8373
        %v8375 = vmul.f32 %v8262, 1.442695
        %v8376 = vpow.pop %v8375
        %v8377 = vmul.f32 %v8263, 1.442695
        %v8378 = vpow.pop %v8377
        %v8379 = vmul.f32 %v8264, 1.442695
        %v8380 = vpow.pop %v8379
        %v8381 = vmul.f32 %v8265, 1.442695
        %v8382 = vpow.pop %v8381
        %v8383 = vmul.f32 %v8266, 1.442695
        %v8384 = vpow.pop %v8383
        %v8385 = vmul.f32 %v8267, 1.442695
        %v8386 = vpow.pop %v8385
        %v8387 = vmul.f32 %v8268, 1.442695
        %v8388 = vpow.pop %v8387
        %v8389 = vmul.f32 %v8269, 1.442695
        %v8390 = vpow.pop %v8389
        %v8391 = vmul.f32 %v8270, 1.442695
        %v8392 = vpow.pop %v8391
        %v8393 = vmul.f32 %v8271, 1.442695
        %v8394 = vpow.pop %v8393
        %v8395 = vmul.f32 %v8272, 1.442695
        %v8396 = vpow.pop %v8395
        %v8397 = vmul.f32 %v8273, 1.442695
        %v8398 = vpow.pop %v8397
        %v8399 = vmul.f32 %v8274, 1.442695
        %v8400 = vpow.pop %v8399
        %v8401 = vmul.f32 %v8275, 1.442695
        %v8402 = vpow.pop %v8401
        %v8403 = vmul.f32 %v8276, 1.442695
        %v8404 = vpow.pop %v8403
        %v8405 = vpack.c.bf16 %v8278, %v8278
        %v8406 = vpack.c.bf16 %v8280, %v8280
        %v8407 = vpack.c.bf16 %v8282, %v8282
        %v8408 = vpack.c.bf16 %v8284, %v8284
        %v8409 = vpack.c.bf16 %v8286, %v8286
        %v8410 = vpack.c.bf16 %v8288, %v8288
        %v8411 = vpack.c.bf16 %v8290, %v8290
        %v8412 = vpack.c.bf16 %v8292, %v8292
        %v8413 = vpack.c.bf16 %v8294, %v8294
        %v8414 = vpack.c.bf16 %v8296, %v8296
        %v8415 = vpack.c.bf16 %v8298, %v8298
        %v8416 = vpack.c.bf16 %v8300, %v8300
        %v8417 = vpack.c.bf16 %v8302, %v8302
        %v8418 = vpack.c.bf16 %v8304, %v8304
        %v8419 = vpack.c.bf16 %v8306, %v8306
        %v8420 = vpack.c.bf16 %v8308, %v8308
        %v8421 = vpack.c.bf16 %v8310, %v8310
        %v8422 = vpack.c.bf16 %v8312, %v8312
        %v8423 = vpack.c.bf16 %v8314, %v8314
        %v8424 = vpack.c.bf16 %v8316, %v8316
        %v8425 = vpack.c.bf16 %v8318, %v8318
        %v8426 = vpack.c.bf16 %v8320, %v8320
        %v8427 = vpack.c.bf16 %v8322, %v8322
        %v8428 = vpack.c.bf16 %v8324, %v8324
        %v8429 = vpack.c.bf16 %v8326, %v8326
        %v8430 = vpack.c.bf16 %v8328, %v8328
        %v8431 = vpack.c.bf16 %v8330, %v8330
        %v8432 = vpack.c.bf16 %v8332, %v8332
        %v8433 = vpack.c.bf16 %v8334, %v8334
        %v8434 = vpack.c.bf16 %v8336, %v8336
        %v8435 = vpack.c.bf16 %v8338, %v8338
        %v8436 = vpack.c.bf16 %v8340, %v8340
        %v8437 = vpack.c.bf16 %v8342, %v8342
        %v8438 = vpack.c.bf16 %v8344, %v8344
        %v8439 = vpack.c.bf16 %v8346, %v8346
        %v8440 = vpack.c.bf16 %v8348, %v8348
        %v8441 = vpack.c.bf16 %v8350, %v8350
        %v8442 = vpack.c.bf16 %v8352, %v8352
        %v8443 = vpack.c.bf16 %v8354, %v8354
        %v8444 = vpack.c.bf16 %v8356, %v8356
        %v8445 = vpack.c.bf16 %v8358, %v8358
        %v8446 = vpack.c.bf16 %v8360, %v8360
        %v8447 = vpack.c.bf16 %v8362, %v8362
        %v8448 = vpack.c.bf16 %v8364, %v8364
        %v8449 = vpack.c.bf16 %v8366, %v8366
        %v8450 = vpack.c.bf16 %v8368, %v8368
        %v8451 = vpack.c.bf16 %v8370, %v8370
        %v8452 = vpack.c.bf16 %v8372, %v8372
        %v8453 = vpack.c.bf16 %v8374, %v8374
        %v8454 = vpack.c.bf16 %v8376, %v8376
        %v8455 = vpack.c.bf16 %v8378, %v8378
        %v8456 = vpack.c.bf16 %v8380, %v8380
        %v8457 = vpack.c.bf16 %v8382, %v8382
        %v8458 = vpack.c.bf16 %v8384, %v8384
        %v8459 = vpack.c.bf16 %v8386, %v8386
        %v8460 = vpack.c.bf16 %v8388, %v8388
        %v8461 = vpack.c.bf16 %v8390, %v8390
        %v8462 = vpack.c.bf16 %v8392, %v8392
        %v8463 = vpack.c.bf16 %v8394, %v8394
        %v8464 = vpack.c.bf16 %v8396, %v8396
        %v8465 = vpack.c.bf16 %v8398, %v8398
        %v8466 = vpack.c.bf16 %v8400, %v8400
        %v8467 = vpack.c.bf16 %v8402, %v8402
        %v8468 = vpack.c.bf16 %v8404, %v8404
        %v8469 = vunpack.c.l.bf16 %v8405
        %v8470 = vunpack.c.l.bf16 %v8406
        %v8471 = vunpack.c.l.bf16 %v8407
        %v8472 = vunpack.c.l.bf16 %v8408
        %v8473 = vunpack.c.l.bf16 %v8409
        %v8474 = vunpack.c.l.bf16 %v8410
        %v8475 = vunpack.c.l.bf16 %v8411
        %v8476 = vunpack.c.l.bf16 %v8412
        %v8477 = vunpack.c.l.bf16 %v8413
        %v8478 = vunpack.c.l.bf16 %v8414
        %v8479 = vunpack.c.l.bf16 %v8415
        %v8480 = vunpack.c.l.bf16 %v8416
        %v8481 = vunpack.c.l.bf16 %v8417
        %v8482 = vunpack.c.l.bf16 %v8418
        %v8483 = vunpack.c.l.bf16 %v8419
        %v8484 = vunpack.c.l.bf16 %v8420
        %v8485 = vunpack.c.l.bf16 %v8421
        %v8486 = vunpack.c.l.bf16 %v8422
        %v8487 = vunpack.c.l.bf16 %v8423
        %v8488 = vunpack.c.l.bf16 %v8424
        %v8489 = vunpack.c.l.bf16 %v8425
        %v8490 = vunpack.c.l.bf16 %v8426
        %v8491 = vunpack.c.l.bf16 %v8427
        %v8492 = vunpack.c.l.bf16 %v8428
        %v8493 = vunpack.c.l.bf16 %v8429
        %v8494 = vunpack.c.l.bf16 %v8430
        %v8495 = vunpack.c.l.bf16 %v8431
        %v8496 = vunpack.c.l.bf16 %v8432
        %v8497 = vunpack.c.l.bf16 %v8433
        %v8498 = vunpack.c.l.bf16 %v8434
        %v8499 = vunpack.c.l.bf16 %v8435
        %v8500 = vunpack.c.l.bf16 %v8436
        %v8501 = vunpack.c.l.bf16 %v8437
        %v8502 = vunpack.c.l.bf16 %v8438
        %v8503 = vunpack.c.l.bf16 %v8439
        %v8504 = vunpack.c.l.bf16 %v8440
        %v8505 = vunpack.c.l.bf16 %v8441
        %v8506 = vunpack.c.l.bf16 %v8442
        %v8507 = vunpack.c.l.bf16 %v8443
        %v8508 = vunpack.c.l.bf16 %v8444
        %v8509 = vunpack.c.l.bf16 %v8445
        %v8510 = vunpack.c.l.bf16 %v8446
        %v8511 = vunpack.c.l.bf16 %v8447
        %v8512 = vunpack.c.l.bf16 %v8448
        %v8513 = vunpack.c.l.bf16 %v8449
        %v8514 = vunpack.c.l.bf16 %v8450
        %v8515 = vunpack.c.l.bf16 %v8451
        %v8516 = vunpack.c.l.bf16 %v8452
        %v8517 = vunpack.c.l.bf16 %v8453
        %v8518 = vunpack.c.l.bf16 %v8454
        %v8519 = vunpack.c.l.bf16 %v8455
        %v8520 = vunpack.c.l.bf16 %v8456
        %v8521 = vunpack.c.l.bf16 %v8457
        %v8522 = vunpack.c.l.bf16 %v8458
        %v8523 = vunpack.c.l.bf16 %v8459
        %v8524 = vunpack.c.l.bf16 %v8460
        %v8525 = vunpack.c.l.bf16 %v8461
        %v8526 = vunpack.c.l.bf16 %v8462
        %v8527 = vunpack.c.l.bf16 %v8463
        %v8528 = vunpack.c.l.bf16 %v8464
        %v8529 = vunpack.c.l.bf16 %v8465
        %v8530 = vunpack.c.l.bf16 %v8466
        %v8531 = vunpack.c.l.bf16 %v8467
        %v8532 = vunpack.c.l.bf16 %v8468
        %v8533 = vsel %vm7300, %v8469, 0.0
        %8534 = vadd.xlane.f32.xlu0 %v8533
        %v8535 = vpop.xlane.xlu0 %8534
        %v8536 = vsel %vm7300, %v8470, 0.0
        %8537 = vadd.xlane.f32.xlu0 %v8536
        %v8538 = vpop.xlane.xlu0 %8537
        %v8539 = vsel %vm7300, %v8471, 0.0
        %8540 = vadd.xlane.f32.xlu0 %v8539
        %v8541 = vpop.xlane.xlu0 %8540
        %v8542 = vsel %vm7300, %v8472, 0.0
        %8543 = vadd.xlane.f32.xlu0 %v8542
        %v8544 = vpop.xlane.xlu0 %8543
        %v8545 = vsel %vm7300, %v8473, 0.0
        %8546 = vadd.xlane.f32.xlu0 %v8545
        %v8547 = vpop.xlane.xlu0 %8546
        %v8548 = vsel %vm7300, %v8474, 0.0
        %8549 = vadd.xlane.f32.xlu0 %v8548
        %v8550 = vpop.xlane.xlu0 %8549
        %v8551 = vsel %vm7300, %v8475, 0.0
        %8552 = vadd.xlane.f32.xlu0 %v8551
        %v8553 = vpop.xlane.xlu0 %8552
        %v8554 = vsel %vm7300, %v8476, 0.0
        %8555 = vadd.xlane.f32.xlu0 %v8554
        %v8556 = vpop.xlane.xlu0 %8555
        %v8557 = vsel %vm7300, %v8477, 0.0
        %8558 = vadd.xlane.f32.xlu0 %v8557
        %v8559 = vpop.xlane.xlu0 %8558
        %v8560 = vsel %vm7300, %v8478, 0.0
        %8561 = vadd.xlane.f32.xlu0 %v8560
        %v8562 = vpop.xlane.xlu0 %8561
        %v8563 = vsel %vm7300, %v8479, 0.0
        %8564 = vadd.xlane.f32.xlu0 %v8563
        %v8565 = vpop.xlane.xlu0 %8564
        %v8566 = vsel %vm7300, %v8480, 0.0
        %8567 = vadd.xlane.f32.xlu0 %v8566
        %v8568 = vpop.xlane.xlu0 %8567
        %v8569 = vsel %vm7300, %v8481, 0.0
        %8570 = vadd.xlane.f32.xlu0 %v8569
        %v8571 = vpop.xlane.xlu0 %8570
        %v8572 = vsel %vm7300, %v8482, 0.0
        %8573 = vadd.xlane.f32.xlu0 %v8572
        %v8574 = vpop.xlane.xlu0 %8573
        %v8575 = vsel %vm7300, %v8483, 0.0
        %8576 = vadd.xlane.f32.xlu0 %v8575
        %v8577 = vpop.xlane.xlu0 %8576
        %v8578 = vsel %vm7300, %v8484, 0.0
        %8579 = vadd.xlane.f32.xlu0 %v8578
        %v8580 = vpop.xlane.xlu0 %8579
        %v8581 = vsel %vm7300, %v8485, 0.0
        %8582 = vadd.xlane.f32.xlu0 %v8581
        %v8583 = vpop.xlane.xlu0 %8582
        %v8584 = vsel %vm7300, %v8486, 0.0
        %8585 = vadd.xlane.f32.xlu0 %v8584
        %v8586 = vpop.xlane.xlu0 %8585
        %v8587 = vsel %vm7300, %v8487, 0.0
        %8588 = vadd.xlane.f32.xlu0 %v8587
        %v8589 = vpop.xlane.xlu0 %8588
        %v8590 = vsel %vm7300, %v8488, 0.0
        %8591 = vadd.xlane.f32.xlu0 %v8590
        %v8592 = vpop.xlane.xlu0 %8591
        %v8593 = vsel %vm7300, %v8489, 0.0
        %8594 = vadd.xlane.f32.xlu0 %v8593
        %v8595 = vpop.xlane.xlu0 %8594
        %v8596 = vsel %vm7300, %v8490, 0.0
        %8597 = vadd.xlane.f32.xlu0 %v8596
        %v8598 = vpop.xlane.xlu0 %8597
        %v8599 = vsel %vm7300, %v8491, 0.0
        %8600 = vadd.xlane.f32.xlu0 %v8599
        %v8601 = vpop.xlane.xlu0 %8600
        %v8602 = vsel %vm7300, %v8492, 0.0
        %8603 = vadd.xlane.f32.xlu0 %v8602
        %v8604 = vpop.xlane.xlu0 %8603
        %v8605 = vsel %vm7300, %v8493, 0.0
        %8606 = vadd.xlane.f32.xlu0 %v8605
        %v8607 = vpop.xlane.xlu0 %8606
        %v8608 = vsel %vm7300, %v8494, 0.0
        %8609 = vadd.xlane.f32.xlu0 %v8608
        %v8610 = vpop.xlane.xlu0 %8609
        %v8611 = vsel %vm7300, %v8495, 0.0
        %8612 = vadd.xlane.f32.xlu0 %v8611
        %v8613 = vpop.xlane.xlu0 %8612
        %v8614 = vsel %vm7300, %v8496, 0.0
        %8615 = vadd.xlane.f32.xlu0 %v8614
        %v8616 = vpop.xlane.xlu0 %8615
        %v8617 = vsel %vm7300, %v8497, 0.0
        %8618 = vadd.xlane.f32.xlu0 %v8617
        %v8619 = vpop.xlane.xlu0 %8618
        %v8620 = vsel %vm7300, %v8498, 0.0
        %8621 = vadd.xlane.f32.xlu0 %v8620
        %v8622 = vpop.xlane.xlu0 %8621
        %v8623 = vsel %vm7300, %v8499, 0.0
        %8624 = vadd.xlane.f32.xlu0 %v8623
        %v8625 = vpop.xlane.xlu0 %8624
        %v8626 = vsel %vm7300, %v8500, 0.0
        %8627 = vadd.xlane.f32.xlu0 %v8626
        %v8628 = vpop.xlane.xlu0 %8627
        %v8629 = vsel %vm7300, %v8501, 0.0
        %8630 = vadd.xlane.f32.xlu0 %v8629
        %v8631 = vpop.xlane.xlu0 %8630
        %v8632 = vsel %vm7300, %v8502, 0.0
        %8633 = vadd.xlane.f32.xlu0 %v8632
        %v8634 = vpop.xlane.xlu0 %8633
        %v8635 = vsel %vm7300, %v8503, 0.0
        %8636 = vadd.xlane.f32.xlu0 %v8635
        %v8637 = vpop.xlane.xlu0 %8636
        %v8638 = vsel %vm7300, %v8504, 0.0
        %8639 = vadd.xlane.f32.xlu0 %v8638
        %v8640 = vpop.xlane.xlu0 %8639
        %v8641 = vsel %vm7300, %v8505, 0.0
        %8642 = vadd.xlane.f32.xlu0 %v8641
        %v8643 = vpop.xlane.xlu0 %8642
        %v8644 = vsel %vm7300, %v8506, 0.0
        %8645 = vadd.xlane.f32.xlu0 %v8644
        %v8646 = vpop.xlane.xlu0 %8645
        %v8647 = vsel %vm7300, %v8507, 0.0
        %8648 = vadd.xlane.f32.xlu0 %v8647
        %v8649 = vpop.xlane.xlu0 %8648
        %v8650 = vsel %vm7300, %v8508, 0.0
        %8651 = vadd.xlane.f32.xlu0 %v8650
        %v8652 = vpop.xlane.xlu0 %8651
        %v8653 = vsel %vm7300, %v8509, 0.0
        %8654 = vadd.xlane.f32.xlu0 %v8653
        %v8655 = vpop.xlane.xlu0 %8654
        %v8656 = vsel %vm7300, %v8510, 0.0
        %8657 = vadd.xlane.f32.xlu0 %v8656
        %v8658 = vpop.xlane.xlu0 %8657
        %v8659 = vsel %vm7300, %v8511, 0.0
        %8660 = vadd.xlane.f32.xlu0 %v8659
        %v8661 = vpop.xlane.xlu0 %8660
        %v8662 = vsel %vm7300, %v8512, 0.0
        %8663 = vadd.xlane.f32.xlu0 %v8662
        %v8664 = vpop.xlane.xlu0 %8663
        %v8665 = vsel %vm7300, %v8513, 0.0
        %8666 = vadd.xlane.f32.xlu0 %v8665
        %v8667 = vpop.xlane.xlu0 %8666
        %v8668 = vsel %vm7300, %v8514, 0.0
        %8669 = vadd.xlane.f32.xlu0 %v8668
        %v8670 = vpop.xlane.xlu0 %8669
        %v8671 = vsel %vm7300, %v8515, 0.0
        %8672 = vadd.xlane.f32.xlu0 %v8671
        %v8673 = vpop.xlane.xlu0 %8672
        %v8674 = vsel %vm7300, %v8516, 0.0
        %8675 = vadd.xlane.f32.xlu0 %v8674
        %v8676 = vpop.xlane.xlu0 %8675
        %v8677 = vsel %vm7300, %v8517, 0.0
        %8678 = vadd.xlane.f32.xlu0 %v8677
        %v8679 = vpop.xlane.xlu0 %8678
        %v8680 = vsel %vm7300, %v8518, 0.0
        %8681 = vadd.xlane.f32.xlu0 %v8680
        %v8682 = vpop.xlane.xlu0 %8681
        %v8683 = vsel %vm7300, %v8519, 0.0
        %8684 = vadd.xlane.f32.xlu0 %v8683
        %v8685 = vpop.xlane.xlu0 %8684
        %v8686 = vsel %vm7300, %v8520, 0.0
        %8687 = vadd.xlane.f32.xlu0 %v8686
        %v8688 = vpop.xlane.xlu0 %8687
        %v8689 = vsel %vm7300, %v8521, 0.0
        %8690 = vadd.xlane.f32.xlu0 %v8689
        %v8691 = vpop.xlane.xlu0 %8690
        %v8692 = vsel %vm7300, %v8522, 0.0
        %8693 = vadd.xlane.f32.xlu0 %v8692
        %v8694 = vpop.xlane.xlu0 %8693
        %v8695 = vsel %vm7300, %v8523, 0.0
        %8696 = vadd.xlane.f32.xlu0 %v8695
        %v8697 = vpop.xlane.xlu0 %8696
        %v8698 = vsel %vm7300, %v8524, 0.0
        %8699 = vadd.xlane.f32.xlu0 %v8698
        %v8700 = vpop.xlane.xlu0 %8699
        %v8701 = vsel %vm7300, %v8525, 0.0
        %8702 = vadd.xlane.f32.xlu0 %v8701
        %v8703 = vpop.xlane.xlu0 %8702
        %v8704 = vsel %vm7300, %v8526, 0.0
        %8705 = vadd.xlane.f32.xlu0 %v8704
        %v8706 = vpop.xlane.xlu0 %8705
        %v8707 = vsel %vm7300, %v8527, 0.0
        %8708 = vadd.xlane.f32.xlu0 %v8707
        %v8709 = vpop.xlane.xlu0 %8708
        %v8710 = vsel %vm7300, %v8528, 0.0
        %8711 = vadd.xlane.f32.xlu0 %v8710
        %v8712 = vpop.xlane.xlu0 %8711
        %v8713 = vsel %vm7300, %v8529, 0.0
        %8714 = vadd.xlane.f32.xlu0 %v8713
        %v8715 = vpop.xlane.xlu0 %8714
        %v8716 = vsel %vm7300, %v8530, 0.0
        %8717 = vadd.xlane.f32.xlu0 %v8716
        %v8718 = vpop.xlane.xlu0 %8717
        %v8719 = vsel %vm7300, %v8531, 0.0
        %8720 = vadd.xlane.f32.xlu0 %v8719
        %v8721 = vpop.xlane.xlu0 %8720
        %v8722 = vsel %vm7300, %v8532, 0.0
        %8723 = vadd.xlane.f32.xlu0 %v8722
        %v8724 = vpop.xlane.xlu0 %8723
        %v8733 = vunpack.c.l.b16 %v8405
        %v8734 = vunpack.c.l.b16 %v8406
        %v8735 = vunpack.c.l.b16 %v8407
        %v8736 = vunpack.c.l.b16 %v8408
        %v8737 = vunpack.c.l.b16 %v8409
        %v8738 = vunpack.c.l.b16 %v8410
        %v8739 = vunpack.c.l.b16 %v8411
        %v8740 = vunpack.c.l.b16 %v8412
        %v8741 = vpack.c.b16 %v8734, %v8733
        %v8742 = vpack.c.b16 %v8736, %v8735
        %v8743 = vpack.c.b16 %v8738, %v8737
        %v8744 = vpack.c.b16 %v8740, %v8739
        %v8745 = vunpack.c.l.b16 %v7086
        %v8746 = vunpack.c.l.b16 %v7098
        %v8747 = vunpack.c.l.b16 %v7110
        %v8748 = vunpack.c.l.b16 %v7122
        %v8749 = vunpack.c.l.b16 %v7134
        %v8750 = vunpack.c.l.b16 %v7146
        %v8751 = vunpack.c.l.b16 %v7158
        %v8752 = vunpack.c.l.b16 %v7170
        %v8753 = vpack.c.b16 %v8746, %v8745
        %v8754 = vpack.c.b16 %v8748, %v8747
        %v8755 = vpack.c.b16 %v8750, %v8749
        %v8756 = vpack.c.b16 %v8752, %v8751
        %v8762 = vsel %vm7300, %v8741, 0
        %v8765 = vsel %vm7300, %v8742, 0
        %v8768 = vsel %vm7300, %v8743, 0
        %v8771 = vsel %vm7300, %v8744, 0
        %8773 = vmatpush.bf16.msra.mxu0 0
        %8774 = vmatpush.bf16.msra.mxu0 0
        %8775 = vmatpush.bf16.msra.mxu0 0
        %8776 = vmatpush.bf16.msra.mxu0 0
        %8777 = vmatpush.bf16.msra.mxu0 %v8756
        %8778 = vmatpush.bf16.msra.mxu0 %v8755
        %8779 = vmatpush.bf16.msra.mxu0 %v8754
        %8780 = vmatpush.bf16.msra.mxu0 %v8753
        %8781 = vmatmul.bf16.gmra.mxu0 %v8762
        %v8782 = vpop.f32.mrf.mxu0
        %v8783 = vadd.f32 0.0, %v8782
        %v8784 = vpop.f32.mrf.mxu0
        %v8785 = vadd.f32 0.0, %v8784
        %8786 = vmatmul.bf16.gmra.mxu0 %v8765
        %v8787 = vpop.f32.mrf.mxu0
        %v8788 = vadd.f32 0.0, %v8787
        %v8789 = vpop.f32.mrf.mxu0
        %v8790 = vadd.f32 0.0, %v8789
        %8791 = vmatmul.bf16.gmra.mxu0 %v8768
        %v8792 = vpop.f32.mrf.mxu0
        %v8793 = vadd.f32 0.0, %v8792
        %v8794 = vpop.f32.mrf.mxu0
        %v8795 = vadd.f32 0.0, %v8794
        %8796 = vmatmul.bf16.gmra.mxu0 %v8771
        %v8797 = vpop.f32.mrf.mxu0
        %v8798 = vadd.f32 0.0, %v8797
        %v8799 = vpop.f32.mrf.mxu0
        %v8800 = vadd.f32 0.0, %v8799
        %8801 = vdwg.mxu0
        %v8810 = vunpack.c.l.b16 %v8413
        %v8811 = vunpack.c.l.b16 %v8414
        %v8812 = vunpack.c.l.b16 %v8415
        %v8813 = vunpack.c.l.b16 %v8416
        %v8814 = vunpack.c.l.b16 %v8417
        %v8815 = vunpack.c.l.b16 %v8418
        %v8816 = vunpack.c.l.b16 %v8419
        %v8817 = vunpack.c.l.b16 %v8420
        %v8818 = vpack.c.b16 %v8811, %v8810
        %v8819 = vpack.c.b16 %v8813, %v8812
        %v8820 = vpack.c.b16 %v8815, %v8814
        %v8821 = vpack.c.b16 %v8817, %v8816
        %v8822 = vunpack.c.l.b16 %v7182
        %v8823 = vunpack.c.l.b16 %v7194
        %v8824 = vunpack.c.l.b16 %v7206
        %v8825 = vunpack.c.l.b16 %v7218
        %v8826 = vunpack.c.l.b16 %v7230
        %v8827 = vunpack.c.l.b16 %v7242
        %v8828 = vunpack.c.l.b16 %v7254
        %v8829 = vunpack.c.l.b16 %v7266
        %v8830 = vpack.c.b16 %v8823, %v8822
        %v8831 = vpack.c.b16 %v8825, %v8824
        %v8832 = vpack.c.b16 %v8827, %v8826
        %v8833 = vpack.c.b16 %v8829, %v8828
        %v8839 = vsel %vm7300, %v8818, 0
        %v8842 = vsel %vm7300, %v8819, 0
        %v8845 = vsel %vm7300, %v8820, 0
        %v8848 = vsel %vm7300, %v8821, 0
        %8850 = vmatpush.bf16.msra.mxu0 0
        %8851 = vmatpush.bf16.msra.mxu0 0
        %8852 = vmatpush.bf16.msra.mxu0 0
        %8853 = vmatpush.bf16.msra.mxu0 0
        %8854 = vmatpush.bf16.msra.mxu0 %v8833
        %8855 = vmatpush.bf16.msra.mxu0 %v8832
        %8856 = vmatpush.bf16.msra.mxu0 %v8831
        %8857 = vmatpush.bf16.msra.mxu0 %v8830
        %8858 = vmatmul.bf16.gmra.mxu0 %v8839
        %v8859 = vpop.f32.mrf.mxu0
        %v8860 = vadd.f32 0.0, %v8859
        %v8861 = vpop.f32.mrf.mxu0
        %v8862 = vadd.f32 0.0, %v8861
        %8863 = vmatmul.bf16.gmra.mxu0 %v8842
        %v8864 = vpop.f32.mrf.mxu0
        %v8865 = vadd.f32 0.0, %v8864
        %v8866 = vpop.f32.mrf.mxu0
        %v8867 = vadd.f32 0.0, %v8866
        %8868 = vmatmul.bf16.gmra.mxu0 %v8845
        %v8869 = vpop.f32.mrf.mxu0
        %v8870 = vadd.f32 0.0, %v8869
        %v8871 = vpop.f32.mrf.mxu0
        %v8872 = vadd.f32 0.0, %v8871
        %8873 = vmatmul.bf16.gmra.mxu0 %v8848
        %v8874 = vpop.f32.mrf.mxu0
        %v8875 = vadd.f32 0.0, %v8874
        %v8876 = vpop.f32.mrf.mxu0
        %v8877 = vadd.f32 0.0, %v8876
        %8878 = vdwg.mxu0
        %v8887 = vunpack.c.l.b16 %v8421
        %v8888 = vunpack.c.l.b16 %v8422
        %v8889 = vunpack.c.l.b16 %v8423
        %v8890 = vunpack.c.l.b16 %v8424
        %v8891 = vunpack.c.l.b16 %v8425
        %v8892 = vunpack.c.l.b16 %v8426
        %v8893 = vunpack.c.l.b16 %v8427
        %v8894 = vunpack.c.l.b16 %v8428
        %v8895 = vpack.c.b16 %v8888, %v8887
        %v8896 = vpack.c.b16 %v8890, %v8889
        %v8897 = vpack.c.b16 %v8892, %v8891
        %v8898 = vpack.c.b16 %v8894, %v8893
        %v8899 = vunpack.c.l.b16 %v7089
        %v8900 = vunpack.c.l.b16 %v7101
        %v8901 = vunpack.c.l.b16 %v7113
        %v8902 = vunpack.c.l.b16 %v7125
        %v8903 = vunpack.c.l.b16 %v7137
        %v8904 = vunpack.c.l.b16 %v7149
        %v8905 = vunpack.c.l.b16 %v7161
        %v8906 = vunpack.c.l.b16 %v7173
        %v8907 = vpack.c.b16 %v8900, %v8899
        %v8908 = vpack.c.b16 %v8902, %v8901
        %v8909 = vpack.c.b16 %v8904, %v8903
        %v8910 = vpack.c.b16 %v8906, %v8905
        %v8916 = vsel %vm7300, %v8895, 0
        %v8919 = vsel %vm7300, %v8896, 0
        %v8922 = vsel %vm7300, %v8897, 0
        %v8925 = vsel %vm7300, %v8898, 0
        %8927 = vmatpush.bf16.msra.mxu0 0
        %8928 = vmatpush.bf16.msra.mxu0 0
        %8929 = vmatpush.bf16.msra.mxu0 0
        %8930 = vmatpush.bf16.msra.mxu0 0
        %8931 = vmatpush.bf16.msra.mxu0 %v8910
        %8932 = vmatpush.bf16.msra.mxu0 %v8909
        %8933 = vmatpush.bf16.msra.mxu0 %v8908
        %8934 = vmatpush.bf16.msra.mxu0 %v8907
        %8935 = vmatmul.bf16.gmra.mxu0 %v8916
        %v8936 = vpop.f32.mrf.mxu0
        %v8937 = vadd.f32 0.0, %v8936
        %v8938 = vpop.f32.mrf.mxu0
        %v8939 = vadd.f32 0.0, %v8938
        %8940 = vmatmul.bf16.gmra.mxu0 %v8919
        %v8941 = vpop.f32.mrf.mxu0
        %v8942 = vadd.f32 0.0, %v8941
        %v8943 = vpop.f32.mrf.mxu0
        %v8944 = vadd.f32 0.0, %v8943
        %8945 = vmatmul.bf16.gmra.mxu0 %v8922
        %v8946 = vpop.f32.mrf.mxu0
        %v8947 = vadd.f32 0.0, %v8946
        %v8948 = vpop.f32.mrf.mxu0
        %v8949 = vadd.f32 0.0, %v8948
        %8950 = vmatmul.bf16.gmra.mxu0 %v8925
        %v8951 = vpop.f32.mrf.mxu0
        %v8952 = vadd.f32 0.0, %v8951
        %v8953 = vpop.f32.mrf.mxu0
        %v8954 = vadd.f32 0.0, %v8953
        %8955 = vdwg.mxu0
        %v8964 = vunpack.c.l.b16 %v8429
        %v8965 = vunpack.c.l.b16 %v8430
        %v8966 = vunpack.c.l.b16 %v8431
        %v8967 = vunpack.c.l.b16 %v8432
        %v8968 = vunpack.c.l.b16 %v8433
        %v8969 = vunpack.c.l.b16 %v8434
        %v8970 = vunpack.c.l.b16 %v8435
        %v8971 = vunpack.c.l.b16 %v8436
        %v8972 = vpack.c.b16 %v8965, %v8964
        %v8973 = vpack.c.b16 %v8967, %v8966
        %v8974 = vpack.c.b16 %v8969, %v8968
        %v8975 = vpack.c.b16 %v8971, %v8970
        %v8976 = vunpack.c.l.b16 %v7185
        %v8977 = vunpack.c.l.b16 %v7197
        %v8978 = vunpack.c.l.b16 %v7209
        %v8979 = vunpack.c.l.b16 %v7221
        %v8980 = vunpack.c.l.b16 %v7233
        %v8981 = vunpack.c.l.b16 %v7245
        %v8982 = vunpack.c.l.b16 %v7257
        %v8983 = vunpack.c.l.b16 %v7269
        %v8984 = vpack.c.b16 %v8977, %v8976
        %v8985 = vpack.c.b16 %v8979, %v8978
        %v8986 = vpack.c.b16 %v8981, %v8980
        %v8987 = vpack.c.b16 %v8983, %v8982
        %v8993 = vsel %vm7300, %v8972, 0
        %v8996 = vsel %vm7300, %v8973, 0
        %v8999 = vsel %vm7300, %v8974, 0
        %v9002 = vsel %vm7300, %v8975, 0
        %9004 = vmatpush.bf16.msra.mxu0 0
        %9005 = vmatpush.bf16.msra.mxu0 0
        %9006 = vmatpush.bf16.msra.mxu0 0
        %9007 = vmatpush.bf16.msra.mxu0 0
        %9008 = vmatpush.bf16.msra.mxu0 %v8987
        %9009 = vmatpush.bf16.msra.mxu0 %v8986
        %9010 = vmatpush.bf16.msra.mxu0 %v8985
        %9011 = vmatpush.bf16.msra.mxu0 %v8984
        %9012 = vmatmul.bf16.gmra.mxu0 %v8993
        %v9013 = vpop.f32.mrf.mxu0
        %v9014 = vadd.f32 0.0, %v9013
        %v9015 = vpop.f32.mrf.mxu0
        %v9016 = vadd.f32 0.0, %v9015
        %9017 = vmatmul.bf16.gmra.mxu0 %v8996
        %v9018 = vpop.f32.mrf.mxu0
        %v9019 = vadd.f32 0.0, %v9018
        %v9020 = vpop.f32.mrf.mxu0
        %v9021 = vadd.f32 0.0, %v9020
        %9022 = vmatmul.bf16.gmra.mxu0 %v8999
        %v9023 = vpop.f32.mrf.mxu0
        %v9024 = vadd.f32 0.0, %v9023
        %v9025 = vpop.f32.mrf.mxu0
        %v9026 = vadd.f32 0.0, %v9025
        %9027 = vmatmul.bf16.gmra.mxu0 %v9002
        %v9028 = vpop.f32.mrf.mxu0
        %v9029 = vadd.f32 0.0, %v9028
        %v9030 = vpop.f32.mrf.mxu0
        %v9031 = vadd.f32 0.0, %v9030
        %9032 = vdwg.mxu0
        %v9041 = vunpack.c.l.b16 %v8437
        %v9042 = vunpack.c.l.b16 %v8438
        %v9043 = vunpack.c.l.b16 %v8439
        %v9044 = vunpack.c.l.b16 %v8440
        %v9045 = vunpack.c.l.b16 %v8441
        %v9046 = vunpack.c.l.b16 %v8442
        %v9047 = vunpack.c.l.b16 %v8443
        %v9048 = vunpack.c.l.b16 %v8444
        %v9049 = vpack.c.b16 %v9042, %v9041
        %v9050 = vpack.c.b16 %v9044, %v9043
        %v9051 = vpack.c.b16 %v9046, %v9045
        %v9052 = vpack.c.b16 %v9048, %v9047
        %v9053 = vunpack.c.l.b16 %v7092
        %v9054 = vunpack.c.l.b16 %v7104
        %v9055 = vunpack.c.l.b16 %v7116
        %v9056 = vunpack.c.l.b16 %v7128
        %v9057 = vunpack.c.l.b16 %v7140
        %v9058 = vunpack.c.l.b16 %v7152
        %v9059 = vunpack.c.l.b16 %v7164
        %v9060 = vunpack.c.l.b16 %v7176
        %v9061 = vpack.c.b16 %v9054, %v9053
        %v9062 = vpack.c.b16 %v9056, %v9055
        %v9063 = vpack.c.b16 %v9058, %v9057
        %v9064 = vpack.c.b16 %v9060, %v9059
        %v9070 = vsel %vm7300, %v9049, 0
        %v9073 = vsel %vm7300, %v9050, 0
        %v9076 = vsel %vm7300, %v9051, 0
        %v9079 = vsel %vm7300, %v9052, 0
        %9081 = vmatpush.bf16.msra.mxu0 0
        %9082 = vmatpush.bf16.msra.mxu0 0
        %9083 = vmatpush.bf16.msra.mxu0 0
        %9084 = vmatpush.bf16.msra.mxu0 0
        %9085 = vmatpush.bf16.msra.mxu0 %v9064
        %9086 = vmatpush.bf16.msra.mxu0 %v9063
        %9087 = vmatpush.bf16.msra.mxu0 %v9062
        %9088 = vmatpush.bf16.msra.mxu0 %v9061
        %9089 = vmatmul.bf16.gmra.mxu0 %v9070
        %v9090 = vpop.f32.mrf.mxu0
        %v9091 = vadd.f32 0.0, %v9090
        %v9092 = vpop.f32.mrf.mxu0
        %v9093 = vadd.f32 0.0, %v9092
        %9094 = vmatmul.bf16.gmra.mxu0 %v9073
        %v9095 = vpop.f32.mrf.mxu0
        %v9096 = vadd.f32 0.0, %v9095
        %v9097 = vpop.f32.mrf.mxu0
        %v9098 = vadd.f32 0.0, %v9097
        %9099 = vmatmul.bf16.gmra.mxu0 %v9076
        %v9100 = vpop.f32.mrf.mxu0
        %v9101 = vadd.f32 0.0, %v9100
        %v9102 = vpop.f32.mrf.mxu0
        %v9103 = vadd.f32 0.0, %v9102
        %9104 = vmatmul.bf16.gmra.mxu0 %v9079
        %v9105 = vpop.f32.mrf.mxu0
        %v9106 = vadd.f32 0.0, %v9105
        %v9107 = vpop.f32.mrf.mxu0
        %v9108 = vadd.f32 0.0, %v9107
        %9109 = vdwg.mxu0
        %v9118 = vunpack.c.l.b16 %v8445
        %v9119 = vunpack.c.l.b16 %v8446
        %v9120 = vunpack.c.l.b16 %v8447
        %v9121 = vunpack.c.l.b16 %v8448
        %v9122 = vunpack.c.l.b16 %v8449
        %v9123 = vunpack.c.l.b16 %v8450
        %v9124 = vunpack.c.l.b16 %v8451
        %v9125 = vunpack.c.l.b16 %v8452
        %v9126 = vpack.c.b16 %v9119, %v9118
        %v9127 = vpack.c.b16 %v9121, %v9120
        %v9128 = vpack.c.b16 %v9123, %v9122
        %v9129 = vpack.c.b16 %v9125, %v9124
        %v9130 = vunpack.c.l.b16 %v7188
        %v9131 = vunpack.c.l.b16 %v7200
        %v9132 = vunpack.c.l.b16 %v7212
        %v9133 = vunpack.c.l.b16 %v7224
        %v9134 = vunpack.c.l.b16 %v7236
        %v9135 = vunpack.c.l.b16 %v7248
        %v9136 = vunpack.c.l.b16 %v7260
        %v9137 = vunpack.c.l.b16 %v7272
        %v9138 = vpack.c.b16 %v9131, %v9130
        %v9139 = vpack.c.b16 %v9133, %v9132
        %v9140 = vpack.c.b16 %v9135, %v9134
        %v9141 = vpack.c.b16 %v9137, %v9136
        %v9147 = vsel %vm7300, %v9126, 0
        %v9150 = vsel %vm7300, %v9127, 0
        %v9153 = vsel %vm7300, %v9128, 0
        %v9156 = vsel %vm7300, %v9129, 0
        %9158 = vmatpush.bf16.msra.mxu0 0
        %9159 = vmatpush.bf16.msra.mxu0 0
        %9160 = vmatpush.bf16.msra.mxu0 0
        %9161 = vmatpush.bf16.msra.mxu0 0
        %9162 = vmatpush.bf16.msra.mxu0 %v9141
        %9163 = vmatpush.bf16.msra.mxu0 %v9140
        %9164 = vmatpush.bf16.msra.mxu0 %v9139
        %9165 = vmatpush.bf16.msra.mxu0 %v9138
        %9166 = vmatmul.bf16.gmra.mxu0 %v9147
        %v9167 = vpop.f32.mrf.mxu0
        %v9168 = vadd.f32 0.0, %v9167
        %v9169 = vpop.f32.mrf.mxu0
        %v9170 = vadd.f32 0.0, %v9169
        %9171 = vmatmul.bf16.gmra.mxu0 %v9150
        %v9172 = vpop.f32.mrf.mxu0
        %v9173 = vadd.f32 0.0, %v9172
        %v9174 = vpop.f32.mrf.mxu0
        %v9175 = vadd.f32 0.0, %v9174
        %9176 = vmatmul.bf16.gmra.mxu0 %v9153
        %v9177 = vpop.f32.mrf.mxu0
        %v9178 = vadd.f32 0.0, %v9177
        %v9179 = vpop.f32.mrf.mxu0
        %v9180 = vadd.f32 0.0, %v9179
        %9181 = vmatmul.bf16.gmra.mxu0 %v9156
        %v9182 = vpop.f32.mrf.mxu0
        %v9183 = vadd.f32 0.0, %v9182
        %v9184 = vpop.f32.mrf.mxu0
        %v9185 = vadd.f32 0.0, %v9184
        %9186 = vdwg.mxu0
        %v9195 = vunpack.c.l.b16 %v8453
        %v9196 = vunpack.c.l.b16 %v8454
        %v9197 = vunpack.c.l.b16 %v8455
        %v9198 = vunpack.c.l.b16 %v8456
        %v9199 = vunpack.c.l.b16 %v8457
        %v9200 = vunpack.c.l.b16 %v8458
        %v9201 = vunpack.c.l.b16 %v8459
        %v9202 = vunpack.c.l.b16 %v8460
        %v9203 = vpack.c.b16 %v9196, %v9195
        %v9204 = vpack.c.b16 %v9198, %v9197
        %v9205 = vpack.c.b16 %v9200, %v9199
        %v9206 = vpack.c.b16 %v9202, %v9201
        %v9207 = vunpack.c.l.b16 %v7095
        %v9208 = vunpack.c.l.b16 %v7107
        %v9209 = vunpack.c.l.b16 %v7119
        %v9210 = vunpack.c.l.b16 %v7131
        %v9211 = vunpack.c.l.b16 %v7143
        %v9212 = vunpack.c.l.b16 %v7155
        %v9213 = vunpack.c.l.b16 %v7167
        %v9214 = vunpack.c.l.b16 %v7179
        %v9215 = vpack.c.b16 %v9208, %v9207
        %v9216 = vpack.c.b16 %v9210, %v9209
        %v9217 = vpack.c.b16 %v9212, %v9211
        %v9218 = vpack.c.b16 %v9214, %v9213
        %v9224 = vsel %vm7300, %v9203, 0
        %v9227 = vsel %vm7300, %v9204, 0
        %v9230 = vsel %vm7300, %v9205, 0
        %v9233 = vsel %vm7300, %v9206, 0
        %9235 = vmatpush.bf16.msra.mxu0 0
        %9236 = vmatpush.bf16.msra.mxu0 0
        %9237 = vmatpush.bf16.msra.mxu0 0
        %9238 = vmatpush.bf16.msra.mxu0 0
        %9239 = vmatpush.bf16.msra.mxu0 %v9218
        %9240 = vmatpush.bf16.msra.mxu0 %v9217
        %9241 = vmatpush.bf16.msra.mxu0 %v9216
        %9242 = vmatpush.bf16.msra.mxu0 %v9215
        %9243 = vmatmul.bf16.gmra.mxu0 %v9224
        %v9244 = vpop.f32.mrf.mxu0
        %v9245 = vadd.f32 0.0, %v9244
        %v9246 = vpop.f32.mrf.mxu0
        %v9247 = vadd.f32 0.0, %v9246
        %9248 = vmatmul.bf16.gmra.mxu0 %v9227
        %v9249 = vpop.f32.mrf.mxu0
        %v9250 = vadd.f32 0.0, %v9249
        %v9251 = vpop.f32.mrf.mxu0
        %v9252 = vadd.f32 0.0, %v9251
        %9253 = vmatmul.bf16.gmra.mxu0 %v9230
        %v9254 = vpop.f32.mrf.mxu0
        %v9255 = vadd.f32 0.0, %v9254
        %v9256 = vpop.f32.mrf.mxu0
        %v9257 = vadd.f32 0.0, %v9256
        %9258 = vmatmul.bf16.gmra.mxu0 %v9233
        %v9259 = vpop.f32.mrf.mxu0
        %v9260 = vadd.f32 0.0, %v9259
        %v9261 = vpop.f32.mrf.mxu0
        %v9262 = vadd.f32 0.0, %v9261
        %9263 = vdwg.mxu0
        %v9272 = vunpack.c.l.b16 %v8461
        %v9273 = vunpack.c.l.b16 %v8462
        %v9274 = vunpack.c.l.b16 %v8463
        %v9275 = vunpack.c.l.b16 %v8464
        %v9276 = vunpack.c.l.b16 %v8465
        %v9277 = vunpack.c.l.b16 %v8466
        %v9278 = vunpack.c.l.b16 %v8467
        %v9279 = vunpack.c.l.b16 %v8468
        %v9280 = vpack.c.b16 %v9273, %v9272
        %v9281 = vpack.c.b16 %v9275, %v9274
        %v9282 = vpack.c.b16 %v9277, %v9276
        %v9283 = vpack.c.b16 %v9279, %v9278
        %v9284 = vunpack.c.l.b16 %v7191
        %v9285 = vunpack.c.l.b16 %v7203
        %v9286 = vunpack.c.l.b16 %v7215
        %v9287 = vunpack.c.l.b16 %v7227
        %v9288 = vunpack.c.l.b16 %v7239
        %v9289 = vunpack.c.l.b16 %v7251
        %v9290 = vunpack.c.l.b16 %v7263
        %v9291 = vunpack.c.l.b16 %v7275
        %v9292 = vpack.c.b16 %v9285, %v9284
        %v9293 = vpack.c.b16 %v9287, %v9286
        %v9294 = vpack.c.b16 %v9289, %v9288
        %v9295 = vpack.c.b16 %v9291, %v9290
        %v9301 = vsel %vm7300, %v9280, 0
        %v9304 = vsel %vm7300, %v9281, 0
        %v9307 = vsel %vm7300, %v9282, 0
        %v9310 = vsel %vm7300, %v9283, 0
        %9312 = vmatpush.bf16.msra.mxu0 0
        %9313 = vmatpush.bf16.msra.mxu0 0
        %9314 = vmatpush.bf16.msra.mxu0 0
        %9315 = vmatpush.bf16.msra.mxu0 0
        %9316 = vmatpush.bf16.msra.mxu0 %v9295
        %9317 = vmatpush.bf16.msra.mxu0 %v9294
        %9318 = vmatpush.bf16.msra.mxu0 %v9293
        %9319 = vmatpush.bf16.msra.mxu0 %v9292
        %9320 = vmatmul.bf16.gmra.mxu0 %v9301
        %v9321 = vpop.f32.mrf.mxu0
        %v9322 = vadd.f32 0.0, %v9321
        %v9323 = vpop.f32.mrf.mxu0
        %v9324 = vadd.f32 0.0, %v9323
        %9325 = vmatmul.bf16.gmra.mxu0 %v9304
        %v9326 = vpop.f32.mrf.mxu0
        %v9327 = vadd.f32 0.0, %v9326
        %v9328 = vpop.f32.mrf.mxu0
        %v9329 = vadd.f32 0.0, %v9328
        %9330 = vmatmul.bf16.gmra.mxu0 %v9307
        %v9331 = vpop.f32.mrf.mxu0
        %v9332 = vadd.f32 0.0, %v9331
        %v9333 = vpop.f32.mrf.mxu0
        %v9334 = vadd.f32 0.0, %v9333
        %9335 = vmatmul.bf16.gmra.mxu0 %v9310
        %v9336 = vpop.f32.mrf.mxu0
        %v9337 = vadd.f32 0.0, %v9336
        %v9338 = vpop.f32.mrf.mxu0
        %v9339 = vadd.f32 0.0, %v9338
        %9340 = vdwg.mxu0
        %v9341 = vrcp.pop %v8535
        %v9342 = vrcp.pop %v8538
        %v9343 = vrcp.pop %v8541
        %v9344 = vrcp.pop %v8544
        %v9345 = vrcp.pop %v8547
        %v9346 = vrcp.pop %v8550
        %v9347 = vrcp.pop %v8553
        %v9348 = vrcp.pop %v8556
        %v9349 = vrcp.pop %v8559
        %v9350 = vrcp.pop %v8562
        %v9351 = vrcp.pop %v8565
        %v9352 = vrcp.pop %v8568
        %v9353 = vrcp.pop %v8571
        %v9354 = vrcp.pop %v8574
        %v9355 = vrcp.pop %v8577
        %v9356 = vrcp.pop %v8580
        %v9357 = vrcp.pop %v8583
        %v9358 = vrcp.pop %v8586
        %v9359 = vrcp.pop %v8589
        %v9360 = vrcp.pop %v8592
        %v9361 = vrcp.pop %v8595
        %v9362 = vrcp.pop %v8598
        %v9363 = vrcp.pop %v8601
        %v9364 = vrcp.pop %v8604
        %v9365 = vrcp.pop %v8607
        %v9366 = vrcp.pop %v8610
        %v9367 = vrcp.pop %v8613
        %v9368 = vrcp.pop %v8616
        %v9369 = vrcp.pop %v8619
        %v9370 = vrcp.pop %v8622
        %v9371 = vrcp.pop %v8625
        %v9372 = vrcp.pop %v8628
        %v9373 = vrcp.pop %v8631
        %v9374 = vrcp.pop %v8634
        %v9375 = vrcp.pop %v8637
        %v9376 = vrcp.pop %v8640
        %v9377 = vrcp.pop %v8643
        %v9378 = vrcp.pop %v8646
        %v9379 = vrcp.pop %v8649
        %v9380 = vrcp.pop %v8652
        %v9381 = vrcp.pop %v8655
        %v9382 = vrcp.pop %v8658
        %v9383 = vrcp.pop %v8661
        %v9384 = vrcp.pop %v8664
        %v9385 = vrcp.pop %v8667
        %v9386 = vrcp.pop %v8670
        %v9387 = vrcp.pop %v8673
        %v9388 = vrcp.pop %v8676
        %v9389 = vrcp.pop %v8679
        %v9390 = vrcp.pop %v8682
        %v9391 = vrcp.pop %v8685
        %v9392 = vrcp.pop %v8688
        %v9393 = vrcp.pop %v8691
        %v9394 = vrcp.pop %v8694
        %v9395 = vrcp.pop %v8697
        %v9396 = vrcp.pop %v8700
        %v9397 = vrcp.pop %v8703
        %v9398 = vrcp.pop %v8706
        %v9399 = vrcp.pop %v8709
        %v9400 = vrcp.pop %v8712
        %v9401 = vrcp.pop %v8715
        %v9402 = vrcp.pop %v8718
        %v9403 = vrcp.pop %v8721
        %v9404 = vrcp.pop %v8724
        %v9405 = vmul.f32 %v8783, %v9341
        %v9406 = vmul.f32 %v8785, %v9342
        %v9407 = vmul.f32 %v8788, %v9343
        %v9408 = vmul.f32 %v8790, %v9344
        %v9409 = vmul.f32 %v8793, %v9345
        %v9410 = vmul.f32 %v8795, %v9346
        %v9411 = vmul.f32 %v8798, %v9347
        %v9412 = vmul.f32 %v8800, %v9348
        %v9413 = vmul.f32 %v8860, %v9349
        %v9414 = vmul.f32 %v8862, %v9350
        %v9415 = vmul.f32 %v8865, %v9351
        %v9416 = vmul.f32 %v8867, %v9352
        %v9417 = vmul.f32 %v8870, %v9353
        %v9418 = vmul.f32 %v8872, %v9354
        %v9419 = vmul.f32 %v8875, %v9355
        %v9420 = vmul.f32 %v8877, %v9356
        %v9421 = vmul.f32 %v8937, %v9357
        %v9422 = vmul.f32 %v8939, %v9358
        %v9423 = vmul.f32 %v8942, %v9359
        %v9424 = vmul.f32 %v8944, %v9360
        %v9425 = vmul.f32 %v8947, %v9361
        %v9426 = vmul.f32 %v8949, %v9362
        %v9427 = vmul.f32 %v8952, %v9363
        %v9428 = vmul.f32 %v8954, %v9364
        %v9429 = vmul.f32 %v9014, %v9365
        %v9430 = vmul.f32 %v9016, %v9366
        %v9431 = vmul.f32 %v9019, %v9367
        %v9432 = vmul.f32 %v9021, %v9368
        %v9433 = vmul.f32 %v9024, %v9369
        %v9434 = vmul.f32 %v9026, %v9370
        %v9435 = vmul.f32 %v9029, %v9371
        %v9436 = vmul.f32 %v9031, %v9372
        %v9437 = vmul.f32 %v9091, %v9373
        %v9438 = vmul.f32 %v9093, %v9374
        %v9439 = vmul.f32 %v9096, %v9375
        %v9440 = vmul.f32 %v9098, %v9376
        %v9441 = vmul.f32 %v9101, %v9377
        %v9442 = vmul.f32 %v9103, %v9378
        %v9443 = vmul.f32 %v9106, %v9379
        %v9444 = vmul.f32 %v9108, %v9380
        %v9445 = vmul.f32 %v9168, %v9381
        %v9446 = vmul.f32 %v9170, %v9382
        %v9447 = vmul.f32 %v9173, %v9383
        %v9448 = vmul.f32 %v9175, %v9384
        %v9449 = vmul.f32 %v9178, %v9385
        %v9450 = vmul.f32 %v9180, %v9386
        %v9451 = vmul.f32 %v9183, %v9387
        %v9452 = vmul.f32 %v9185, %v9388
        %v9453 = vmul.f32 %v9245, %v9389
        %v9454 = vmul.f32 %v9247, %v9390
        %v9455 = vmul.f32 %v9250, %v9391
        %v9456 = vmul.f32 %v9252, %v9392
        %v9457 = vmul.f32 %v9255, %v9393
        %v9458 = vmul.f32 %v9257, %v9394
        %v9459 = vmul.f32 %v9260, %v9395
        %v9460 = vmul.f32 %v9262, %v9396
        %v9461 = vmul.f32 %v9322, %v9397
        %v9462 = vmul.f32 %v9324, %v9398
        %v9463 = vmul.f32 %v9327, %v9399
        %v9464 = vmul.f32 %v9329, %v9400
        %v9465 = vmul.f32 %v9332, %v9401
        %v9466 = vmul.f32 %v9334, %v9402
        %v9467 = vmul.f32 %v9337, %v9403
        %v9468 = vmul.f32 %v9339, %v9404
        %v9469 = vpack.c.bf16 %v9405, %v9405
        %v9470 = vpack.c.bf16 %v9406, %v9406
        %v9471 = vpack.c.bf16 %v9407, %v9407
        %v9472 = vpack.c.bf16 %v9408, %v9408
        %v9473 = vpack.c.bf16 %v9409, %v9409
        %v9474 = vpack.c.bf16 %v9410, %v9410
        %v9475 = vpack.c.bf16 %v9411, %v9411
        %v9476 = vpack.c.bf16 %v9412, %v9412
        %v9477 = vpack.c.bf16 %v9413, %v9413
        %v9478 = vpack.c.bf16 %v9414, %v9414
        %v9479 = vpack.c.bf16 %v9415, %v9415
        %v9480 = vpack.c.bf16 %v9416, %v9416
        %v9481 = vpack.c.bf16 %v9417, %v9417
        %v9482 = vpack.c.bf16 %v9418, %v9418
        %v9483 = vpack.c.bf16 %v9419, %v9419
        %v9484 = vpack.c.bf16 %v9420, %v9420
        %v9485 = vpack.c.bf16 %v9421, %v9421
        %v9486 = vpack.c.bf16 %v9422, %v9422
        %v9487 = vpack.c.bf16 %v9423, %v9423
        %v9488 = vpack.c.bf16 %v9424, %v9424
        %v9489 = vpack.c.bf16 %v9425, %v9425
        %v9490 = vpack.c.bf16 %v9426, %v9426
        %v9491 = vpack.c.bf16 %v9427, %v9427
        %v9492 = vpack.c.bf16 %v9428, %v9428
        %v9493 = vpack.c.bf16 %v9429, %v9429
        %v9494 = vpack.c.bf16 %v9430, %v9430
        %v9495 = vpack.c.bf16 %v9431, %v9431
        %v9496 = vpack.c.bf16 %v9432, %v9432
        %v9497 = vpack.c.bf16 %v9433, %v9433
        %v9498 = vpack.c.bf16 %v9434, %v9434
        %v9499 = vpack.c.bf16 %v9435, %v9435
        %v9500 = vpack.c.bf16 %v9436, %v9436
        %v9501 = vpack.c.bf16 %v9437, %v9437
        %v9502 = vpack.c.bf16 %v9438, %v9438
        %v9503 = vpack.c.bf16 %v9439, %v9439
        %v9504 = vpack.c.bf16 %v9440, %v9440
        %v9505 = vpack.c.bf16 %v9441, %v9441
        %v9506 = vpack.c.bf16 %v9442, %v9442
        %v9507 = vpack.c.bf16 %v9443, %v9443
        %v9508 = vpack.c.bf16 %v9444, %v9444
        %v9509 = vpack.c.bf16 %v9445, %v9445
        %v9510 = vpack.c.bf16 %v9446, %v9446
        %v9511 = vpack.c.bf16 %v9447, %v9447
        %v9512 = vpack.c.bf16 %v9448, %v9448
        %v9513 = vpack.c.bf16 %v9449, %v9449
        %v9514 = vpack.c.bf16 %v9450, %v9450
        %v9515 = vpack.c.bf16 %v9451, %v9451
        %v9516 = vpack.c.bf16 %v9452, %v9452
        %v9517 = vpack.c.bf16 %v9453, %v9453
        %v9518 = vpack.c.bf16 %v9454, %v9454
        %v9519 = vpack.c.bf16 %v9455, %v9455
        %v9520 = vpack.c.bf16 %v9456, %v9456
        %v9521 = vpack.c.bf16 %v9457, %v9457
        %v9522 = vpack.c.bf16 %v9458, %v9458
        %v9523 = vpack.c.bf16 %v9459, %v9459
        %v9524 = vpack.c.bf16 %v9460, %v9460
        %v9525 = vpack.c.bf16 %v9461, %v9461
        %v9526 = vpack.c.bf16 %v9462, %v9462
        %v9527 = vpack.c.bf16 %v9463, %v9463
        %v9528 = vpack.c.bf16 %v9464, %v9464
        %v9529 = vpack.c.bf16 %v9465, %v9465
        %v9530 = vpack.c.bf16 %v9466, %v9466
        %v9531 = vpack.c.bf16 %v9467, %v9467
        %v9532 = vpack.c.bf16 %v9468, %v9468
        %v9535 = vpack.i.b16 %v9485, %v9469
        %v9536 = vshrl.u32 %v9469, 16
        %v9537 = vshrl.u32 %v9485, 16
        %v9538 = vpack.i.b16 %v9537, %v9536
        %v9541 = vpack.i.b16 %v9517, %v9501
        %v9542 = vshrl.u32 %v9501, 16
        %v9543 = vshrl.u32 %v9517, 16
        %v9544 = vpack.i.b16 %v9543, %v9542
        %v9547 = vpack.i.b16 %v9486, %v9470
        %v9548 = vshrl.u32 %v9470, 16
        %v9549 = vshrl.u32 %v9486, 16
        %v9550 = vpack.i.b16 %v9549, %v9548
        %v9553 = vpack.i.b16 %v9518, %v9502
        %v9554 = vshrl.u32 %v9502, 16
        %v9555 = vshrl.u32 %v9518, 16
        %v9556 = vpack.i.b16 %v9555, %v9554
        %v9559 = vpack.i.b16 %v9487, %v9471
        %v9560 = vshrl.u32 %v9471, 16
        %v9561 = vshrl.u32 %v9487, 16
        %v9562 = vpack.i.b16 %v9561, %v9560
        %v9565 = vpack.i.b16 %v9519, %v9503
        %v9566 = vshrl.u32 %v9503, 16
        %v9567 = vshrl.u32 %v9519, 16
        %v9568 = vpack.i.b16 %v9567, %v9566
        %v9571 = vpack.i.b16 %v9488, %v9472
        %v9572 = vshrl.u32 %v9472, 16
        %v9573 = vshrl.u32 %v9488, 16
        %v9574 = vpack.i.b16 %v9573, %v9572
        %v9577 = vpack.i.b16 %v9520, %v9504
        %v9578 = vshrl.u32 %v9504, 16
        %v9579 = vshrl.u32 %v9520, 16
        %v9580 = vpack.i.b16 %v9579, %v9578
        %v9583 = vpack.i.b16 %v9489, %v9473
        %v9584 = vshrl.u32 %v9473, 16
        %v9585 = vshrl.u32 %v9489, 16
        %v9586 = vpack.i.b16 %v9585, %v9584
        %v9589 = vpack.i.b16 %v9521, %v9505
        %v9590 = vshrl.u32 %v9505, 16
        %v9591 = vshrl.u32 %v9521, 16
        %v9592 = vpack.i.b16 %v9591, %v9590
        %v9595 = vpack.i.b16 %v9490, %v9474
        %v9596 = vshrl.u32 %v9474, 16
        %v9597 = vshrl.u32 %v9490, 16
        %v9598 = vpack.i.b16 %v9597, %v9596
        %v9601 = vpack.i.b16 %v9522, %v9506
        %v9602 = vshrl.u32 %v9506, 16
        %v9603 = vshrl.u32 %v9522, 16
        %v9604 = vpack.i.b16 %v9603, %v9602
        %v9607 = vpack.i.b16 %v9491, %v9475
        %v9608 = vshrl.u32 %v9475, 16
        %v9609 = vshrl.u32 %v9491, 16
        %v9610 = vpack.i.b16 %v9609, %v9608
        %v9613 = vpack.i.b16 %v9523, %v9507
        %v9614 = vshrl.u32 %v9507, 16
        %v9615 = vshrl.u32 %v9523, 16
        %v9616 = vpack.i.b16 %v9615, %v9614
        %v9619 = vpack.i.b16 %v9492, %v9476
        %v9620 = vshrl.u32 %v9476, 16
        %v9621 = vshrl.u32 %v9492, 16
        %v9622 = vpack.i.b16 %v9621, %v9620
        %v9625 = vpack.i.b16 %v9524, %v9508
        %v9626 = vshrl.u32 %v9508, 16
        %v9627 = vshrl.u32 %v9524, 16
        %v9628 = vpack.i.b16 %v9627, %v9626
        %v9631 = vpack.i.b16 %v9493, %v9477
        %v9632 = vshrl.u32 %v9477, 16
        %v9633 = vshrl.u32 %v9493, 16
        %v9634 = vpack.i.b16 %v9633, %v9632
        %v9637 = vpack.i.b16 %v9525, %v9509
        %v9638 = vshrl.u32 %v9509, 16
        %v9639 = vshrl.u32 %v9525, 16
        %v9640 = vpack.i.b16 %v9639, %v9638
        %v9643 = vpack.i.b16 %v9494, %v9478
        %v9644 = vshrl.u32 %v9478, 16
        %v9645 = vshrl.u32 %v9494, 16
        %v9646 = vpack.i.b16 %v9645, %v9644
        %v9649 = vpack.i.b16 %v9526, %v9510
        %v9650 = vshrl.u32 %v9510, 16
        %v9651 = vshrl.u32 %v9526, 16
        %v9652 = vpack.i.b16 %v9651, %v9650
        %v9655 = vpack.i.b16 %v9495, %v9479
        %v9656 = vshrl.u32 %v9479, 16
        %v9657 = vshrl.u32 %v9495, 16
        %v9658 = vpack.i.b16 %v9657, %v9656
        %v9661 = vpack.i.b16 %v9527, %v9511
        %v9662 = vshrl.u32 %v9511, 16
        %v9663 = vshrl.u32 %v9527, 16
        %v9664 = vpack.i.b16 %v9663, %v9662
        %v9667 = vpack.i.b16 %v9496, %v9480
        %v9668 = vshrl.u32 %v9480, 16
        %v9669 = vshrl.u32 %v9496, 16
        %v9670 = vpack.i.b16 %v9669, %v9668
        %v9673 = vpack.i.b16 %v9528, %v9512
        %v9674 = vshrl.u32 %v9512, 16
        %v9675 = vshrl.u32 %v9528, 16
        %v9676 = vpack.i.b16 %v9675, %v9674
        %v9679 = vpack.i.b16 %v9497, %v9481
        %v9680 = vshrl.u32 %v9481, 16
        %v9681 = vshrl.u32 %v9497, 16
        %v9682 = vpack.i.b16 %v9681, %v9680
        %v9685 = vpack.i.b16 %v9529, %v9513
        %v9686 = vshrl.u32 %v9513, 16
        %v9687 = vshrl.u32 %v9529, 16
        %v9688 = vpack.i.b16 %v9687, %v9686
        %v9691 = vpack.i.b16 %v9498, %v9482
        %v9692 = vshrl.u32 %v9482, 16
        %v9693 = vshrl.u32 %v9498, 16
        %v9694 = vpack.i.b16 %v9693, %v9692
        %v9697 = vpack.i.b16 %v9530, %v9514
        %v9698 = vshrl.u32 %v9514, 16
        %v9699 = vshrl.u32 %v9530, 16
        %v9700 = vpack.i.b16 %v9699, %v9698
        %v9703 = vpack.i.b16 %v9499, %v9483
        %v9704 = vshrl.u32 %v9483, 16
        %v9705 = vshrl.u32 %v9499, 16
        %v9706 = vpack.i.b16 %v9705, %v9704
        %v9709 = vpack.i.b16 %v9531, %v9515
        %v9710 = vshrl.u32 %v9515, 16
        %v9711 = vshrl.u32 %v9531, 16
        %v9712 = vpack.i.b16 %v9711, %v9710
        %v9715 = vpack.i.b16 %v9500, %v9484
        %v9716 = vshrl.u32 %v9484, 16
        %v9717 = vshrl.u32 %v9500, 16
        %v9718 = vpack.i.b16 %v9717, %v9716
        %v9721 = vpack.i.b16 %v9532, %v9516
        %v9722 = vshrl.u32 %v9516, 16
        %v9723 = vshrl.u32 %v9532, 16
        %v9724 = vpack.i.b16 %v9723, %v9722
        %v9727 = vunpack.c.l.s4 1983009808
        %v9728 = vunpack.c.0.s8 %v9727
        %v9729 = vperm.slane %v9535, %v9728
        %v9732 = vunpack.c.l.s4 1983009808
        %v9733 = vunpack.c.0.s8 %v9732
        %v9734 = vperm.slane %v9541, %v9733
        %v9735 = vrot.slane %v9734, 4
        %v9736 = vsel %vm1846, %v9735, %v9729
        %v9737 = vrot.slane %v9729, 4
        %v9738 = vsel %vm1846, %v9734, %v9737
        %v9740 = vunpack.c.l.s4 1934713408
        %v9741 = vunpack.c.0.s8 %v9740
        %v9742 = vperm.slane %v9736, %v9741
        %v9744 = vunpack.c.l.s4 1934713408
        %v9745 = vunpack.c.0.s8 %v9744
        %v9746 = vperm.slane %v9738, %v9745
        %v9747 = vrot.slane %v9742, 4
        %v9748 = vsel %vm1846, 0, %v9747
        %v9749 = vrot.slane %v9746, 4
        %v9750 = vsel %vm1846, 0, %v9749
        %v9753 = vunpack.c.l.s4 1983009808
        %v9754 = vunpack.c.0.s8 %v9753
        %v9755 = vperm.slane %v9538, %v9754
        %v9758 = vunpack.c.l.s4 1983009808
        %v9759 = vunpack.c.0.s8 %v9758
        %v9760 = vperm.slane %v9544, %v9759
        %v9761 = vrot.slane %v9760, 4
        %v9762 = vsel %vm1846, %v9761, %v9755
        %v9763 = vrot.slane %v9755, 4
        %v9764 = vsel %vm1846, %v9760, %v9763
        %v9766 = vunpack.c.l.s4 1934713408
        %v9767 = vunpack.c.0.s8 %v9766
        %v9768 = vperm.slane %v9762, %v9767
        %v9770 = vunpack.c.l.s4 1934713408
        %v9771 = vunpack.c.0.s8 %v9770
        %v9772 = vperm.slane %v9764, %v9771
        %v9773 = vrot.slane %v9768, 4
        %v9774 = vsel %vm1846, 0, %v9773
        %v9775 = vrot.slane %v9772, 4
        %v9776 = vsel %vm1846, 0, %v9775
        %v9779 = vunpack.c.l.s4 1983009808
        %v9780 = vunpack.c.0.s8 %v9779
        %v9781 = vperm.slane %v9547, %v9780
        %v9784 = vunpack.c.l.s4 1983009808
        %v9785 = vunpack.c.0.s8 %v9784
        %v9786 = vperm.slane %v9553, %v9785
        %v9787 = vrot.slane %v9786, 4
        %v9788 = vsel %vm1846, %v9787, %v9781
        %v9789 = vrot.slane %v9781, 4
        %v9790 = vsel %vm1846, %v9786, %v9789
        %v9792 = vunpack.c.l.s4 1934713408
        %v9793 = vunpack.c.0.s8 %v9792
        %v9794 = vperm.slane %v9788, %v9793
        %v9796 = vunpack.c.l.s4 1934713408
        %v9797 = vunpack.c.0.s8 %v9796
        %v9798 = vperm.slane %v9790, %v9797
        %v9799 = vrot.slane %v9794, 4
        %v9800 = vsel %vm1846, 0, %v9799
        %v9801 = vrot.slane %v9798, 4
        %v9802 = vsel %vm1846, 0, %v9801
        %v9805 = vunpack.c.l.s4 1983009808
        %v9806 = vunpack.c.0.s8 %v9805
        %v9807 = vperm.slane %v9550, %v9806
        %v9810 = vunpack.c.l.s4 1983009808
        %v9811 = vunpack.c.0.s8 %v9810
        %v9812 = vperm.slane %v9556, %v9811
        %v9813 = vrot.slane %v9812, 4
        %v9814 = vsel %vm1846, %v9813, %v9807
        %v9815 = vrot.slane %v9807, 4
        %v9816 = vsel %vm1846, %v9812, %v9815
        %v9818 = vunpack.c.l.s4 1934713408
        %v9819 = vunpack.c.0.s8 %v9818
        %v9820 = vperm.slane %v9814, %v9819
        %v9822 = vunpack.c.l.s4 1934713408
        %v9823 = vunpack.c.0.s8 %v9822
        %v9824 = vperm.slane %v9816, %v9823
        %v9825 = vrot.slane %v9820, 4
        %v9826 = vsel %vm1846, 0, %v9825
        %v9827 = vrot.slane %v9824, 4
        %v9828 = vsel %vm1846, 0, %v9827
        %v9831 = vunpack.c.l.s4 1983009808
        %v9832 = vunpack.c.0.s8 %v9831
        %v9833 = vperm.slane %v9559, %v9832
        %v9836 = vunpack.c.l.s4 1983009808
        %v9837 = vunpack.c.0.s8 %v9836
        %v9838 = vperm.slane %v9565, %v9837
        %v9839 = vrot.slane %v9838, 4
        %v9840 = vsel %vm1846, %v9839, %v9833
        %v9841 = vrot.slane %v9833, 4
        %v9842 = vsel %vm1846, %v9838, %v9841
        %v9844 = vunpack.c.l.s4 1934713408
        %v9845 = vunpack.c.0.s8 %v9844
        %v9846 = vperm.slane %v9840, %v9845
        %v9848 = vunpack.c.l.s4 1934713408
        %v9849 = vunpack.c.0.s8 %v9848
        %v9850 = vperm.slane %v9842, %v9849
        %v9851 = vrot.slane %v9846, 4
        %v9852 = vsel %vm1846, 0, %v9851
        %v9853 = vrot.slane %v9850, 4
        %v9854 = vsel %vm1846, 0, %v9853
        %v9857 = vunpack.c.l.s4 1983009808
        %v9858 = vunpack.c.0.s8 %v9857
        %v9859 = vperm.slane %v9562, %v9858
        %v9862 = vunpack.c.l.s4 1983009808
        %v9863 = vunpack.c.0.s8 %v9862
        %v9864 = vperm.slane %v9568, %v9863
        %v9865 = vrot.slane %v9864, 4
        %v9866 = vsel %vm1846, %v9865, %v9859
        %v9867 = vrot.slane %v9859, 4
        %v9868 = vsel %vm1846, %v9864, %v9867
        %v9870 = vunpack.c.l.s4 1934713408
        %v9871 = vunpack.c.0.s8 %v9870
        %v9872 = vperm.slane %v9866, %v9871
        %v9874 = vunpack.c.l.s4 1934713408
        %v9875 = vunpack.c.0.s8 %v9874
        %v9876 = vperm.slane %v9868, %v9875
        %v9877 = vrot.slane %v9872, 4
        %v9878 = vsel %vm1846, 0, %v9877
        %v9879 = vrot.slane %v9876, 4
        %v9880 = vsel %vm1846, 0, %v9879
        %v9883 = vunpack.c.l.s4 1983009808
        %v9884 = vunpack.c.0.s8 %v9883
        %v9885 = vperm.slane %v9571, %v9884
        %v9888 = vunpack.c.l.s4 1983009808
        %v9889 = vunpack.c.0.s8 %v9888
        %v9890 = vperm.slane %v9577, %v9889
        %v9891 = vrot.slane %v9890, 4
        %v9892 = vsel %vm1846, %v9891, %v9885
        %v9893 = vrot.slane %v9885, 4
        %v9894 = vsel %vm1846, %v9890, %v9893
        %v9896 = vunpack.c.l.s4 1934713408
        %v9897 = vunpack.c.0.s8 %v9896
        %v9898 = vperm.slane %v9892, %v9897
        %v9900 = vunpack.c.l.s4 1934713408
        %v9901 = vunpack.c.0.s8 %v9900
        %v9902 = vperm.slane %v9894, %v9901
        %v9903 = vrot.slane %v9898, 4
        %v9904 = vsel %vm1846, 0, %v9903
        %v9905 = vrot.slane %v9902, 4
        %v9906 = vsel %vm1846, 0, %v9905
        %v9909 = vunpack.c.l.s4 1983009808
        %v9910 = vunpack.c.0.s8 %v9909
        %v9911 = vperm.slane %v9574, %v9910
        %v9914 = vunpack.c.l.s4 1983009808
        %v9915 = vunpack.c.0.s8 %v9914
        %v9916 = vperm.slane %v9580, %v9915
        %v9917 = vrot.slane %v9916, 4
        %v9918 = vsel %vm1846, %v9917, %v9911
        %v9919 = vrot.slane %v9911, 4
        %v9920 = vsel %vm1846, %v9916, %v9919
        %v9922 = vunpack.c.l.s4 1934713408
        %v9923 = vunpack.c.0.s8 %v9922
        %v9924 = vperm.slane %v9918, %v9923
        %v9926 = vunpack.c.l.s4 1934713408
        %v9927 = vunpack.c.0.s8 %v9926
        %v9928 = vperm.slane %v9920, %v9927
        %v9929 = vrot.slane %v9924, 4
        %v9930 = vsel %vm1846, 0, %v9929
        %v9931 = vrot.slane %v9928, 4
        %v9932 = vsel %vm1846, 0, %v9931
        %v9935 = vunpack.c.l.s4 1983009808
        %v9936 = vunpack.c.0.s8 %v9935
        %v9937 = vperm.slane %v9583, %v9936
        %v9940 = vunpack.c.l.s4 1983009808
        %v9941 = vunpack.c.0.s8 %v9940
        %v9942 = vperm.slane %v9589, %v9941
        %v9943 = vrot.slane %v9942, 4
        %v9944 = vsel %vm1846, %v9943, %v9937
        %v9945 = vrot.slane %v9937, 4
        %v9946 = vsel %vm1846, %v9942, %v9945
        %v9948 = vunpack.c.l.s4 1934713408
        %v9949 = vunpack.c.0.s8 %v9948
        %v9950 = vperm.slane %v9944, %v9949
        %v9952 = vunpack.c.l.s4 1934713408
        %v9953 = vunpack.c.0.s8 %v9952
        %v9954 = vperm.slane %v9946, %v9953
        %v9955 = vrot.slane %v9950, 4
        %v9956 = vsel %vm1846, 0, %v9955
        %v9957 = vrot.slane %v9954, 4
        %v9958 = vsel %vm1846, 0, %v9957
        %v9961 = vunpack.c.l.s4 1983009808
        %v9962 = vunpack.c.0.s8 %v9961
        %v9963 = vperm.slane %v9586, %v9962
        %v9966 = vunpack.c.l.s4 1983009808
        %v9967 = vunpack.c.0.s8 %v9966
        %v9968 = vperm.slane %v9592, %v9967
        %v9969 = vrot.slane %v9968, 4
        %v9970 = vsel %vm1846, %v9969, %v9963
        %v9971 = vrot.slane %v9963, 4
        %v9972 = vsel %vm1846, %v9968, %v9971
        %v9974 = vunpack.c.l.s4 1934713408
        %v9975 = vunpack.c.0.s8 %v9974
        %v9976 = vperm.slane %v9970, %v9975
        %v9978 = vunpack.c.l.s4 1934713408
        %v9979 = vunpack.c.0.s8 %v9978
        %v9980 = vperm.slane %v9972, %v9979
        %v9981 = vrot.slane %v9976, 4
        %v9982 = vsel %vm1846, 0, %v9981
        %v9983 = vrot.slane %v9980, 4
        %v9984 = vsel %vm1846, 0, %v9983
        %v9987 = vunpack.c.l.s4 1983009808
        %v9988 = vunpack.c.0.s8 %v9987
        %v9989 = vperm.slane %v9595, %v9988
        %v9992 = vunpack.c.l.s4 1983009808
        %v9993 = vunpack.c.0.s8 %v9992
        %v9994 = vperm.slane %v9601, %v9993
        %v9995 = vrot.slane %v9994, 4
        %v9996 = vsel %vm1846, %v9995, %v9989
        %v9997 = vrot.slane %v9989, 4
        %v9998 = vsel %vm1846, %v9994, %v9997
        %v10000 = vunpack.c.l.s4 1934713408
        %v10001 = vunpack.c.0.s8 %v10000
        %v10002 = vperm.slane %v9996, %v10001
        %v10004 = vunpack.c.l.s4 1934713408
        %v10005 = vunpack.c.0.s8 %v10004
        %v10006 = vperm.slane %v9998, %v10005
        %v10007 = vrot.slane %v10002, 4
        %v10008 = vsel %vm1846, 0, %v10007
        %v10009 = vrot.slane %v10006, 4
        %v10010 = vsel %vm1846, 0, %v10009
        %v10013 = vunpack.c.l.s4 1983009808
        %v10014 = vunpack.c.0.s8 %v10013
        %v10015 = vperm.slane %v9598, %v10014
        %v10018 = vunpack.c.l.s4 1983009808
        %v10019 = vunpack.c.0.s8 %v10018
        %v10020 = vperm.slane %v9604, %v10019
        %v10021 = vrot.slane %v10020, 4
        %v10022 = vsel %vm1846, %v10021, %v10015
        %v10023 = vrot.slane %v10015, 4
        %v10024 = vsel %vm1846, %v10020, %v10023
        %v10026 = vunpack.c.l.s4 1934713408
        %v10027 = vunpack.c.0.s8 %v10026
        %v10028 = vperm.slane %v10022, %v10027
        %v10030 = vunpack.c.l.s4 1934713408
        %v10031 = vunpack.c.0.s8 %v10030
        %v10032 = vperm.slane %v10024, %v10031
        %v10033 = vrot.slane %v10028, 4
        %v10034 = vsel %vm1846, 0, %v10033
        %v10035 = vrot.slane %v10032, 4
        %v10036 = vsel %vm1846, 0, %v10035
        %v10039 = vunpack.c.l.s4 1983009808
        %v10040 = vunpack.c.0.s8 %v10039
        %v10041 = vperm.slane %v9607, %v10040
        %v10044 = vunpack.c.l.s4 1983009808
        %v10045 = vunpack.c.0.s8 %v10044
        %v10046 = vperm.slane %v9613, %v10045
        %v10047 = vrot.slane %v10046, 4
        %v10048 = vsel %vm1846, %v10047, %v10041
        %v10049 = vrot.slane %v10041, 4
        %v10050 = vsel %vm1846, %v10046, %v10049
        %v10052 = vunpack.c.l.s4 1934713408
        %v10053 = vunpack.c.0.s8 %v10052
        %v10054 = vperm.slane %v10048, %v10053
        %v10056 = vunpack.c.l.s4 1934713408
        %v10057 = vunpack.c.0.s8 %v10056
        %v10058 = vperm.slane %v10050, %v10057
        %v10059 = vrot.slane %v10054, 4
        %v10060 = vsel %vm1846, 0, %v10059
        %v10061 = vrot.slane %v10058, 4
        %v10062 = vsel %vm1846, 0, %v10061
        %v10065 = vunpack.c.l.s4 1983009808
        %v10066 = vunpack.c.0.s8 %v10065
        %v10067 = vperm.slane %v9610, %v10066
        %v10070 = vunpack.c.l.s4 1983009808
        %v10071 = vunpack.c.0.s8 %v10070
        %v10072 = vperm.slane %v9616, %v10071
        %v10073 = vrot.slane %v10072, 4
        %v10074 = vsel %vm1846, %v10073, %v10067
        %v10075 = vrot.slane %v10067, 4
        %v10076 = vsel %vm1846, %v10072, %v10075
        %v10078 = vunpack.c.l.s4 1934713408
        %v10079 = vunpack.c.0.s8 %v10078
        %v10080 = vperm.slane %v10074, %v10079
        %v10082 = vunpack.c.l.s4 1934713408
        %v10083 = vunpack.c.0.s8 %v10082
        %v10084 = vperm.slane %v10076, %v10083
        %v10085 = vrot.slane %v10080, 4
        %v10086 = vsel %vm1846, 0, %v10085
        %v10087 = vrot.slane %v10084, 4
        %v10088 = vsel %vm1846, 0, %v10087
        %v10091 = vunpack.c.l.s4 1983009808
        %v10092 = vunpack.c.0.s8 %v10091
        %v10093 = vperm.slane %v9619, %v10092
        %v10096 = vunpack.c.l.s4 1983009808
        %v10097 = vunpack.c.0.s8 %v10096
        %v10098 = vperm.slane %v9625, %v10097
        %v10099 = vrot.slane %v10098, 4
        %v10100 = vsel %vm1846, %v10099, %v10093
        %v10101 = vrot.slane %v10093, 4
        %v10102 = vsel %vm1846, %v10098, %v10101
        %v10104 = vunpack.c.l.s4 1934713408
        %v10105 = vunpack.c.0.s8 %v10104
        %v10106 = vperm.slane %v10100, %v10105
        %v10108 = vunpack.c.l.s4 1934713408
        %v10109 = vunpack.c.0.s8 %v10108
        %v10110 = vperm.slane %v10102, %v10109
        %v10111 = vrot.slane %v10106, 4
        %v10112 = vsel %vm1846, 0, %v10111
        %v10113 = vrot.slane %v10110, 4
        %v10114 = vsel %vm1846, 0, %v10113
        %v10117 = vunpack.c.l.s4 1983009808
        %v10118 = vunpack.c.0.s8 %v10117
        %v10119 = vperm.slane %v9622, %v10118
        %v10122 = vunpack.c.l.s4 1983009808
        %v10123 = vunpack.c.0.s8 %v10122
        %v10124 = vperm.slane %v9628, %v10123
        %v10125 = vrot.slane %v10124, 4
        %v10126 = vsel %vm1846, %v10125, %v10119
        %v10127 = vrot.slane %v10119, 4
        %v10128 = vsel %vm1846, %v10124, %v10127
        %v10130 = vunpack.c.l.s4 1934713408
        %v10131 = vunpack.c.0.s8 %v10130
        %v10132 = vperm.slane %v10126, %v10131
        %v10134 = vunpack.c.l.s4 1934713408
        %v10135 = vunpack.c.0.s8 %v10134
        %v10136 = vperm.slane %v10128, %v10135
        %v10137 = vrot.slane %v10132, 4
        %v10138 = vsel %vm1846, 0, %v10137
        %v10139 = vrot.slane %v10136, 4
        %v10140 = vsel %vm1846, 0, %v10139
        %v10143 = vunpack.c.l.s4 1983009808
        %v10144 = vunpack.c.0.s8 %v10143
        %v10145 = vperm.slane %v9631, %v10144
        %v10148 = vunpack.c.l.s4 1983009808
        %v10149 = vunpack.c.0.s8 %v10148
        %v10150 = vperm.slane %v9637, %v10149
        %v10151 = vrot.slane %v10150, 4
        %v10152 = vsel %vm1846, %v10151, %v10145
        %v10153 = vrot.slane %v10145, 4
        %v10154 = vsel %vm1846, %v10150, %v10153
        %v10156 = vunpack.c.l.s4 1934713408
        %v10157 = vunpack.c.0.s8 %v10156
        %v10158 = vperm.slane %v10152, %v10157
        %v10160 = vunpack.c.l.s4 1934713408
        %v10161 = vunpack.c.0.s8 %v10160
        %v10162 = vperm.slane %v10154, %v10161
        %v10163 = vrot.slane %v10158, 4
        %v10164 = vsel %vm1846, 0, %v10163
        %v10165 = vrot.slane %v10162, 4
        %v10166 = vsel %vm1846, 0, %v10165
        %v10169 = vunpack.c.l.s4 1983009808
        %v10170 = vunpack.c.0.s8 %v10169
        %v10171 = vperm.slane %v9634, %v10170
        %v10174 = vunpack.c.l.s4 1983009808
        %v10175 = vunpack.c.0.s8 %v10174
        %v10176 = vperm.slane %v9640, %v10175
        %v10177 = vrot.slane %v10176, 4
        %v10178 = vsel %vm1846, %v10177, %v10171
        %v10179 = vrot.slane %v10171, 4
        %v10180 = vsel %vm1846, %v10176, %v10179
        %v10182 = vunpack.c.l.s4 1934713408
        %v10183 = vunpack.c.0.s8 %v10182
        %v10184 = vperm.slane %v10178, %v10183
        %v10186 = vunpack.c.l.s4 1934713408
        %v10187 = vunpack.c.0.s8 %v10186
        %v10188 = vperm.slane %v10180, %v10187
        %v10189 = vrot.slane %v10184, 4
        %v10190 = vsel %vm1846, 0, %v10189
        %v10191 = vrot.slane %v10188, 4
        %v10192 = vsel %vm1846, 0, %v10191
        %v10195 = vunpack.c.l.s4 1983009808
        %v10196 = vunpack.c.0.s8 %v10195
        %v10197 = vperm.slane %v9643, %v10196
        %v10200 = vunpack.c.l.s4 1983009808
        %v10201 = vunpack.c.0.s8 %v10200
        %v10202 = vperm.slane %v9649, %v10201
        %v10203 = vrot.slane %v10202, 4
        %v10204 = vsel %vm1846, %v10203, %v10197
        %v10205 = vrot.slane %v10197, 4
        %v10206 = vsel %vm1846, %v10202, %v10205
        %v10208 = vunpack.c.l.s4 1934713408
        %v10209 = vunpack.c.0.s8 %v10208
        %v10210 = vperm.slane %v10204, %v10209
        %v10212 = vunpack.c.l.s4 1934713408
        %v10213 = vunpack.c.0.s8 %v10212
        %v10214 = vperm.slane %v10206, %v10213
        %v10215 = vrot.slane %v10210, 4
        %v10216 = vsel %vm1846, 0, %v10215
        %v10217 = vrot.slane %v10214, 4
        %v10218 = vsel %vm1846, 0, %v10217
        %v10221 = vunpack.c.l.s4 1983009808
        %v10222 = vunpack.c.0.s8 %v10221
        %v10223 = vperm.slane %v9646, %v10222
        %v10226 = vunpack.c.l.s4 1983009808
        %v10227 = vunpack.c.0.s8 %v10226
        %v10228 = vperm.slane %v9652, %v10227
        %v10229 = vrot.slane %v10228, 4
        %v10230 = vsel %vm1846, %v10229, %v10223
        %v10231 = vrot.slane %v10223, 4
        %v10232 = vsel %vm1846, %v10228, %v10231
        %v10234 = vunpack.c.l.s4 1934713408
        %v10235 = vunpack.c.0.s8 %v10234
        %v10236 = vperm.slane %v10230, %v10235
        %v10238 = vunpack.c.l.s4 1934713408
        %v10239 = vunpack.c.0.s8 %v10238
        %v10240 = vperm.slane %v10232, %v10239
        %v10241 = vrot.slane %v10236, 4
        %v10242 = vsel %vm1846, 0, %v10241
        %v10243 = vrot.slane %v10240, 4
        %v10244 = vsel %vm1846, 0, %v10243
        %v10247 = vunpack.c.l.s4 1983009808
        %v10248 = vunpack.c.0.s8 %v10247
        %v10249 = vperm.slane %v9655, %v10248
        %v10252 = vunpack.c.l.s4 1983009808
        %v10253 = vunpack.c.0.s8 %v10252
        %v10254 = vperm.slane %v9661, %v10253
        %v10255 = vrot.slane %v10254, 4
        %v10256 = vsel %vm1846, %v10255, %v10249
        %v10257 = vrot.slane %v10249, 4
        %v10258 = vsel %vm1846, %v10254, %v10257
        %v10260 = vunpack.c.l.s4 1934713408
        %v10261 = vunpack.c.0.s8 %v10260
        %v10262 = vperm.slane %v10256, %v10261
        %v10264 = vunpack.c.l.s4 1934713408
        %v10265 = vunpack.c.0.s8 %v10264
        %v10266 = vperm.slane %v10258, %v10265
        %v10267 = vrot.slane %v10262, 4
        %v10268 = vsel %vm1846, 0, %v10267
        %v10269 = vrot.slane %v10266, 4
        %v10270 = vsel %vm1846, 0, %v10269
        %v10273 = vunpack.c.l.s4 1983009808
        %v10274 = vunpack.c.0.s8 %v10273
        %v10275 = vperm.slane %v9658, %v10274
        %v10278 = vunpack.c.l.s4 1983009808
        %v10279 = vunpack.c.0.s8 %v10278
        %v10280 = vperm.slane %v9664, %v10279
        %v10281 = vrot.slane %v10280, 4
        %v10282 = vsel %vm1846, %v10281, %v10275
        %v10283 = vrot.slane %v10275, 4
        %v10284 = vsel %vm1846, %v10280, %v10283
        %v10286 = vunpack.c.l.s4 1934713408
        %v10287 = vunpack.c.0.s8 %v10286
        %v10288 = vperm.slane %v10282, %v10287
        %v10290 = vunpack.c.l.s4 1934713408
        %v10291 = vunpack.c.0.s8 %v10290
        %v10292 = vperm.slane %v10284, %v10291
        %v10293 = vrot.slane %v10288, 4
        %v10294 = vsel %vm1846, 0, %v10293
        %v10295 = vrot.slane %v10292, 4
        %v10296 = vsel %vm1846, 0, %v10295
        %v10299 = vunpack.c.l.s4 1983009808
        %v10300 = vunpack.c.0.s8 %v10299
        %v10301 = vperm.slane %v9667, %v10300
        %v10304 = vunpack.c.l.s4 1983009808
        %v10305 = vunpack.c.0.s8 %v10304
        %v10306 = vperm.slane %v9673, %v10305
        %v10307 = vrot.slane %v10306, 4
        %v10308 = vsel %vm1846, %v10307, %v10301
        %v10309 = vrot.slane %v10301, 4
        %v10310 = vsel %vm1846, %v10306, %v10309
        %v10312 = vunpack.c.l.s4 1934713408
        %v10313 = vunpack.c.0.s8 %v10312
        %v10314 = vperm.slane %v10308, %v10313
        %v10316 = vunpack.c.l.s4 1934713408
        %v10317 = vunpack.c.0.s8 %v10316
        %v10318 = vperm.slane %v10310, %v10317
        %v10319 = vrot.slane %v10314, 4
        %v10320 = vsel %vm1846, 0, %v10319
        %v10321 = vrot.slane %v10318, 4
        %v10322 = vsel %vm1846, 0, %v10321
        %v10325 = vunpack.c.l.s4 1983009808
        %v10326 = vunpack.c.0.s8 %v10325
        %v10327 = vperm.slane %v9670, %v10326
        %v10330 = vunpack.c.l.s4 1983009808
        %v10331 = vunpack.c.0.s8 %v10330
        %v10332 = vperm.slane %v9676, %v10331
        %v10333 = vrot.slane %v10332, 4
        %v10334 = vsel %vm1846, %v10333, %v10327
        %v10335 = vrot.slane %v10327, 4
        %v10336 = vsel %vm1846, %v10332, %v10335
        %v10338 = vunpack.c.l.s4 1934713408
        %v10339 = vunpack.c.0.s8 %v10338
        %v10340 = vperm.slane %v10334, %v10339
        %v10342 = vunpack.c.l.s4 1934713408
        %v10343 = vunpack.c.0.s8 %v10342
        %v10344 = vperm.slane %v10336, %v10343
        %v10345 = vrot.slane %v10340, 4
        %v10346 = vsel %vm1846, 0, %v10345
        %v10347 = vrot.slane %v10344, 4
        %v10348 = vsel %vm1846, 0, %v10347
        %v10351 = vunpack.c.l.s4 1983009808
        %v10352 = vunpack.c.0.s8 %v10351
        %v10353 = vperm.slane %v9679, %v10352
        %v10356 = vunpack.c.l.s4 1983009808
        %v10357 = vunpack.c.0.s8 %v10356
        %v10358 = vperm.slane %v9685, %v10357
        %v10359 = vrot.slane %v10358, 4
        %v10360 = vsel %vm1846, %v10359, %v10353
        %v10361 = vrot.slane %v10353, 4
        %v10362 = vsel %vm1846, %v10358, %v10361
        %v10364 = vunpack.c.l.s4 1934713408
        %v10365 = vunpack.c.0.s8 %v10364
        %v10366 = vperm.slane %v10360, %v10365
        %v10368 = vunpack.c.l.s4 1934713408
        %v10369 = vunpack.c.0.s8 %v10368
        %v10370 = vperm.slane %v10362, %v10369
        %v10371 = vrot.slane %v10366, 4
        %v10372 = vsel %vm1846, 0, %v10371
        %v10373 = vrot.slane %v10370, 4
        %v10374 = vsel %vm1846, 0, %v10373
        %v10377 = vunpack.c.l.s4 1983009808
        %v10378 = vunpack.c.0.s8 %v10377
        %v10379 = vperm.slane %v9682, %v10378
        %v10382 = vunpack.c.l.s4 1983009808
        %v10383 = vunpack.c.0.s8 %v10382
        %v10384 = vperm.slane %v9688, %v10383
        %v10385 = vrot.slane %v10384, 4
        %v10386 = vsel %vm1846, %v10385, %v10379
        %v10387 = vrot.slane %v10379, 4
        %v10388 = vsel %vm1846, %v10384, %v10387
        %v10390 = vunpack.c.l.s4 1934713408
        %v10391 = vunpack.c.0.s8 %v10390
        %v10392 = vperm.slane %v10386, %v10391
        %v10394 = vunpack.c.l.s4 1934713408
        %v10395 = vunpack.c.0.s8 %v10394
        %v10396 = vperm.slane %v10388, %v10395
        %v10397 = vrot.slane %v10392, 4
        %v10398 = vsel %vm1846, 0, %v10397
        %v10399 = vrot.slane %v10396, 4
        %v10400 = vsel %vm1846, 0, %v10399
        %v10403 = vunpack.c.l.s4 1983009808
        %v10404 = vunpack.c.0.s8 %v10403
        %v10405 = vperm.slane %v9691, %v10404
        %v10408 = vunpack.c.l.s4 1983009808
        %v10409 = vunpack.c.0.s8 %v10408
        %v10410 = vperm.slane %v9697, %v10409
        %v10411 = vrot.slane %v10410, 4
        %v10412 = vsel %vm1846, %v10411, %v10405
        %v10413 = vrot.slane %v10405, 4
        %v10414 = vsel %vm1846, %v10410, %v10413
        %v10416 = vunpack.c.l.s4 1934713408
        %v10417 = vunpack.c.0.s8 %v10416
        %v10418 = vperm.slane %v10412, %v10417
        %v10420 = vunpack.c.l.s4 1934713408
        %v10421 = vunpack.c.0.s8 %v10420
        %v10422 = vperm.slane %v10414, %v10421
        %v10423 = vrot.slane %v10418, 4
        %v10424 = vsel %vm1846, 0, %v10423
        %v10425 = vrot.slane %v10422, 4
        %v10426 = vsel %vm1846, 0, %v10425
        %v10429 = vunpack.c.l.s4 1983009808
        %v10430 = vunpack.c.0.s8 %v10429
        %v10431 = vperm.slane %v9694, %v10430
        %v10434 = vunpack.c.l.s4 1983009808
        %v10435 = vunpack.c.0.s8 %v10434
        %v10436 = vperm.slane %v9700, %v10435
        %v10437 = vrot.slane %v10436, 4
        %v10438 = vsel %vm1846, %v10437, %v10431
        %v10439 = vrot.slane %v10431, 4
        %v10440 = vsel %vm1846, %v10436, %v10439
        %v10442 = vunpack.c.l.s4 1934713408
        %v10443 = vunpack.c.0.s8 %v10442
        %v10444 = vperm.slane %v10438, %v10443
        %v10446 = vunpack.c.l.s4 1934713408
        %v10447 = vunpack.c.0.s8 %v10446
        %v10448 = vperm.slane %v10440, %v10447
        %v10449 = vrot.slane %v10444, 4
        %v10450 = vsel %vm1846, 0, %v10449
        %v10451 = vrot.slane %v10448, 4
        %v10452 = vsel %vm1846, 0, %v10451
        %v10455 = vunpack.c.l.s4 1983009808
        %v10456 = vunpack.c.0.s8 %v10455
        %v10457 = vperm.slane %v9703, %v10456
        %v10460 = vunpack.c.l.s4 1983009808
        %v10461 = vunpack.c.0.s8 %v10460
        %v10462 = vperm.slane %v9709, %v10461
        %v10463 = vrot.slane %v10462, 4
        %v10464 = vsel %vm1846, %v10463, %v10457
        %v10465 = vrot.slane %v10457, 4
        %v10466 = vsel %vm1846, %v10462, %v10465
        %v10468 = vunpack.c.l.s4 1934713408
        %v10469 = vunpack.c.0.s8 %v10468
        %v10470 = vperm.slane %v10464, %v10469
        %v10472 = vunpack.c.l.s4 1934713408
        %v10473 = vunpack.c.0.s8 %v10472
        %v10474 = vperm.slane %v10466, %v10473
        %v10475 = vrot.slane %v10470, 4
        %v10476 = vsel %vm1846, 0, %v10475
        %v10477 = vrot.slane %v10474, 4
        %v10478 = vsel %vm1846, 0, %v10477
        %v10481 = vunpack.c.l.s4 1983009808
        %v10482 = vunpack.c.0.s8 %v10481
        %v10483 = vperm.slane %v9706, %v10482
        %v10486 = vunpack.c.l.s4 1983009808
        %v10487 = vunpack.c.0.s8 %v10486
        %v10488 = vperm.slane %v9712, %v10487
        %v10489 = vrot.slane %v10488, 4
        %v10490 = vsel %vm1846, %v10489, %v10483
        %v10491 = vrot.slane %v10483, 4
        %v10492 = vsel %vm1846, %v10488, %v10491
        %v10494 = vunpack.c.l.s4 1934713408
        %v10495 = vunpack.c.0.s8 %v10494
        %v10496 = vperm.slane %v10490, %v10495
        %v10498 = vunpack.c.l.s4 1934713408
        %v10499 = vunpack.c.0.s8 %v10498
        %v10500 = vperm.slane %v10492, %v10499
        %v10501 = vrot.slane %v10496, 4
        %v10502 = vsel %vm1846, 0, %v10501
        %v10503 = vrot.slane %v10500, 4
        %v10504 = vsel %vm1846, 0, %v10503
        %v10507 = vunpack.c.l.s4 1983009808
        %v10508 = vunpack.c.0.s8 %v10507
        %v10509 = vperm.slane %v9715, %v10508
        %v10512 = vunpack.c.l.s4 1983009808
        %v10513 = vunpack.c.0.s8 %v10512
        %v10514 = vperm.slane %v9721, %v10513
        %v10515 = vrot.slane %v10514, 4
        %v10516 = vsel %vm1846, %v10515, %v10509
        %v10517 = vrot.slane %v10509, 4
        %v10518 = vsel %vm1846, %v10514, %v10517
        %v10520 = vunpack.c.l.s4 1934713408
        %v10521 = vunpack.c.0.s8 %v10520
        %v10522 = vperm.slane %v10516, %v10521
        %v10524 = vunpack.c.l.s4 1934713408
        %v10525 = vunpack.c.0.s8 %v10524
        %v10526 = vperm.slane %v10518, %v10525
        %v10527 = vrot.slane %v10522, 4
        %v10528 = vsel %vm1846, 0, %v10527
        %v10529 = vrot.slane %v10526, 4
        %v10530 = vsel %vm1846, 0, %v10529
        %v10533 = vunpack.c.l.s4 1983009808
        %v10534 = vunpack.c.0.s8 %v10533
        %v10535 = vperm.slane %v9718, %v10534
        %v10538 = vunpack.c.l.s4 1983009808
        %v10539 = vunpack.c.0.s8 %v10538
        %v10540 = vperm.slane %v9724, %v10539
        %v10541 = vrot.slane %v10540, 4
        %v10542 = vsel %vm1846, %v10541, %v10535
        %v10543 = vrot.slane %v10535, 4
        %v10544 = vsel %vm1846, %v10540, %v10543
        %v10546 = vunpack.c.l.s4 1934713408
        %v10547 = vunpack.c.0.s8 %v10546
        %v10548 = vperm.slane %v10542, %v10547
        %v10550 = vunpack.c.l.s4 1934713408
        %v10551 = vunpack.c.0.s8 %v10550
        %v10552 = vperm.slane %v10544, %v10551
        %v10553 = vrot.slane %v10548, 4
        %v10554 = vsel %vm1846, 0, %v10553
        %v10555 = vrot.slane %v10552, 4
        %v10556 = vsel %vm1846, 0, %v10555
        %v10557 = vsel %vm1846, %v9749, %v9742
        %v10559 = vunpack.c.l.s4 1983009808
        %v10560 = vunpack.c.0.s8 %v10559
        %v10561 = vperm.slane %v10557, %v10560
        %v10562 = vrot.slane %v9750, 4
        %v10563 = vsel %vm1846, %v10562, %v9748
        %v10565 = vunpack.c.l.s4 1983009808
        %v10566 = vunpack.c.0.s8 %v10565
        %v10567 = vperm.slane %v10563, %v10566
        %v10568 = vrot.slane %v10567, 4
        %v10569 = vsel %vm1846, %v10568, %v10561
        %v10571 = vunpack.c.l.s4 1934713408
        %v10572 = vunpack.c.0.s8 %v10571
        %v10573 = vperm.slane %v10569, %v10572
        %v10574 = vrot.slane %v10573, 4
        %v10575 = vsel %vm1846, 0, %v10574
        %v10576 = vsel %vm1846, %v9775, %v9768
        %v10578 = vunpack.c.l.s4 1983009808
        %v10579 = vunpack.c.0.s8 %v10578
        %v10580 = vperm.slane %v10576, %v10579
        %v10581 = vrot.slane %v9776, 4
        %v10582 = vsel %vm1846, %v10581, %v9774
        %v10584 = vunpack.c.l.s4 1983009808
        %v10585 = vunpack.c.0.s8 %v10584
        %v10586 = vperm.slane %v10582, %v10585
        %v10587 = vrot.slane %v10586, 4
        %v10588 = vsel %vm1846, %v10587, %v10580
        %v10590 = vunpack.c.l.s4 1934713408
        %v10591 = vunpack.c.0.s8 %v10590
        %v10592 = vperm.slane %v10588, %v10591
        %v10593 = vrot.slane %v10592, 4
        %v10594 = vsel %vm1846, 0, %v10593
        %v10595 = vsel %vm1846, %v9801, %v9794
        %v10597 = vunpack.c.l.s4 1983009808
        %v10598 = vunpack.c.0.s8 %v10597
        %v10599 = vperm.slane %v10595, %v10598
        %v10600 = vrot.slane %v9802, 4
        %v10601 = vsel %vm1846, %v10600, %v9800
        %v10603 = vunpack.c.l.s4 1983009808
        %v10604 = vunpack.c.0.s8 %v10603
        %v10605 = vperm.slane %v10601, %v10604
        %v10606 = vrot.slane %v10605, 4
        %v10607 = vsel %vm1846, %v10606, %v10599
        %v10609 = vunpack.c.l.s4 1934713408
        %v10610 = vunpack.c.0.s8 %v10609
        %v10611 = vperm.slane %v10607, %v10610
        %v10612 = vrot.slane %v10611, 4
        %v10613 = vsel %vm1846, 0, %v10612
        %v10614 = vsel %vm1846, %v9827, %v9820
        %v10616 = vunpack.c.l.s4 1983009808
        %v10617 = vunpack.c.0.s8 %v10616
        %v10618 = vperm.slane %v10614, %v10617
        %v10619 = vrot.slane %v9828, 4
        %v10620 = vsel %vm1846, %v10619, %v9826
        %v10622 = vunpack.c.l.s4 1983009808
        %v10623 = vunpack.c.0.s8 %v10622
        %v10624 = vperm.slane %v10620, %v10623
        %v10625 = vrot.slane %v10624, 4
        %v10626 = vsel %vm1846, %v10625, %v10618
        %v10628 = vunpack.c.l.s4 1934713408
        %v10629 = vunpack.c.0.s8 %v10628
        %v10630 = vperm.slane %v10626, %v10629
        %v10631 = vrot.slane %v10630, 4
        %v10632 = vsel %vm1846, 0, %v10631
        %v10633 = vsel %vm1846, %v9853, %v9846
        %v10635 = vunpack.c.l.s4 1983009808
        %v10636 = vunpack.c.0.s8 %v10635
        %v10637 = vperm.slane %v10633, %v10636
        %v10638 = vrot.slane %v9854, 4
        %v10639 = vsel %vm1846, %v10638, %v9852
        %v10641 = vunpack.c.l.s4 1983009808
        %v10642 = vunpack.c.0.s8 %v10641
        %v10643 = vperm.slane %v10639, %v10642
        %v10644 = vrot.slane %v10643, 4
        %v10645 = vsel %vm1846, %v10644, %v10637
        %v10647 = vunpack.c.l.s4 1934713408
        %v10648 = vunpack.c.0.s8 %v10647
        %v10649 = vperm.slane %v10645, %v10648
        %v10650 = vrot.slane %v10649, 4
        %v10651 = vsel %vm1846, 0, %v10650
        %v10652 = vsel %vm1846, %v9879, %v9872
        %v10654 = vunpack.c.l.s4 1983009808
        %v10655 = vunpack.c.0.s8 %v10654
        %v10656 = vperm.slane %v10652, %v10655
        %v10657 = vrot.slane %v9880, 4
        %v10658 = vsel %vm1846, %v10657, %v9878
        %v10660 = vunpack.c.l.s4 1983009808
        %v10661 = vunpack.c.0.s8 %v10660
        %v10662 = vperm.slane %v10658, %v10661
        %v10663 = vrot.slane %v10662, 4
        %v10664 = vsel %vm1846, %v10663, %v10656
        %v10666 = vunpack.c.l.s4 1934713408
        %v10667 = vunpack.c.0.s8 %v10666
        %v10668 = vperm.slane %v10664, %v10667
        %v10669 = vrot.slane %v10668, 4
        %v10670 = vsel %vm1846, 0, %v10669
        %v10671 = vsel %vm1846, %v9905, %v9898
        %v10673 = vunpack.c.l.s4 1983009808
        %v10674 = vunpack.c.0.s8 %v10673
        %v10675 = vperm.slane %v10671, %v10674
        %v10676 = vrot.slane %v9906, 4
        %v10677 = vsel %vm1846, %v10676, %v9904
        %v10679 = vunpack.c.l.s4 1983009808
        %v10680 = vunpack.c.0.s8 %v10679
        %v10681 = vperm.slane %v10677, %v10680
        %v10682 = vrot.slane %v10681, 4
        %v10683 = vsel %vm1846, %v10682, %v10675
        %v10685 = vunpack.c.l.s4 1934713408
        %v10686 = vunpack.c.0.s8 %v10685
        %v10687 = vperm.slane %v10683, %v10686
        %v10688 = vrot.slane %v10687, 4
        %v10689 = vsel %vm1846, 0, %v10688
        %v10690 = vsel %vm1846, %v9931, %v9924
        %v10692 = vunpack.c.l.s4 1983009808
        %v10693 = vunpack.c.0.s8 %v10692
        %v10694 = vperm.slane %v10690, %v10693
        %v10695 = vrot.slane %v9932, 4
        %v10696 = vsel %vm1846, %v10695, %v9930
        %v10698 = vunpack.c.l.s4 1983009808
        %v10699 = vunpack.c.0.s8 %v10698
        %v10700 = vperm.slane %v10696, %v10699
        %v10701 = vrot.slane %v10700, 4
        %v10702 = vsel %vm1846, %v10701, %v10694
        %v10704 = vunpack.c.l.s4 1934713408
        %v10705 = vunpack.c.0.s8 %v10704
        %v10706 = vperm.slane %v10702, %v10705
        %v10707 = vrot.slane %v10706, 4
        %v10708 = vsel %vm1846, 0, %v10707
        %v10709 = vsel %vm1846, %v9957, %v9950
        %v10711 = vunpack.c.l.s4 1983009808
        %v10712 = vunpack.c.0.s8 %v10711
        %v10713 = vperm.slane %v10709, %v10712
        %v10714 = vrot.slane %v9958, 4
        %v10715 = vsel %vm1846, %v10714, %v9956
        %v10717 = vunpack.c.l.s4 1983009808
        %v10718 = vunpack.c.0.s8 %v10717
        %v10719 = vperm.slane %v10715, %v10718
        %v10720 = vrot.slane %v10719, 4
        %v10721 = vsel %vm1846, %v10720, %v10713
        %v10723 = vunpack.c.l.s4 1934713408
        %v10724 = vunpack.c.0.s8 %v10723
        %v10725 = vperm.slane %v10721, %v10724
        %v10726 = vrot.slane %v10725, 4
        %v10727 = vsel %vm1846, 0, %v10726
        %v10728 = vsel %vm1846, %v9983, %v9976
        %v10730 = vunpack.c.l.s4 1983009808
        %v10731 = vunpack.c.0.s8 %v10730
        %v10732 = vperm.slane %v10728, %v10731
        %v10733 = vrot.slane %v9984, 4
        %v10734 = vsel %vm1846, %v10733, %v9982
        %v10736 = vunpack.c.l.s4 1983009808
        %v10737 = vunpack.c.0.s8 %v10736
        %v10738 = vperm.slane %v10734, %v10737
        %v10739 = vrot.slane %v10738, 4
        %v10740 = vsel %vm1846, %v10739, %v10732
        %v10742 = vunpack.c.l.s4 1934713408
        %v10743 = vunpack.c.0.s8 %v10742
        %v10744 = vperm.slane %v10740, %v10743
        %v10745 = vrot.slane %v10744, 4
        %v10746 = vsel %vm1846, 0, %v10745
        %v10747 = vsel %vm1846, %v10009, %v10002
        %v10749 = vunpack.c.l.s4 1983009808
        %v10750 = vunpack.c.0.s8 %v10749
        %v10751 = vperm.slane %v10747, %v10750
        %v10752 = vrot.slane %v10010, 4
        %v10753 = vsel %vm1846, %v10752, %v10008
        %v10755 = vunpack.c.l.s4 1983009808
        %v10756 = vunpack.c.0.s8 %v10755
        %v10757 = vperm.slane %v10753, %v10756
        %v10758 = vrot.slane %v10757, 4
        %v10759 = vsel %vm1846, %v10758, %v10751
        %v10761 = vunpack.c.l.s4 1934713408
        %v10762 = vunpack.c.0.s8 %v10761
        %v10763 = vperm.slane %v10759, %v10762
        %v10764 = vrot.slane %v10763, 4
        %v10765 = vsel %vm1846, 0, %v10764
        %v10766 = vsel %vm1846, %v10035, %v10028
        %v10768 = vunpack.c.l.s4 1983009808
        %v10769 = vunpack.c.0.s8 %v10768
        %v10770 = vperm.slane %v10766, %v10769
        %v10771 = vrot.slane %v10036, 4
        %v10772 = vsel %vm1846, %v10771, %v10034
        %v10774 = vunpack.c.l.s4 1983009808
        %v10775 = vunpack.c.0.s8 %v10774
        %v10776 = vperm.slane %v10772, %v10775
        %v10777 = vrot.slane %v10776, 4
        %v10778 = vsel %vm1846, %v10777, %v10770
        %v10780 = vunpack.c.l.s4 1934713408
        %v10781 = vunpack.c.0.s8 %v10780
        %v10782 = vperm.slane %v10778, %v10781
        %v10783 = vrot.slane %v10782, 4
        %v10784 = vsel %vm1846, 0, %v10783
        %v10785 = vsel %vm1846, %v10061, %v10054
        %v10787 = vunpack.c.l.s4 1983009808
        %v10788 = vunpack.c.0.s8 %v10787
        %v10789 = vperm.slane %v10785, %v10788
        %v10790 = vrot.slane %v10062, 4
        %v10791 = vsel %vm1846, %v10790, %v10060
        %v10793 = vunpack.c.l.s4 1983009808
        %v10794 = vunpack.c.0.s8 %v10793
        %v10795 = vperm.slane %v10791, %v10794
        %v10796 = vrot.slane %v10795, 4
        %v10797 = vsel %vm1846, %v10796, %v10789
        %v10799 = vunpack.c.l.s4 1934713408
        %v10800 = vunpack.c.0.s8 %v10799
        %v10801 = vperm.slane %v10797, %v10800
        %v10802 = vrot.slane %v10801, 4
        %v10803 = vsel %vm1846, 0, %v10802
        %v10804 = vsel %vm1846, %v10087, %v10080
        %v10806 = vunpack.c.l.s4 1983009808
        %v10807 = vunpack.c.0.s8 %v10806
        %v10808 = vperm.slane %v10804, %v10807
        %v10809 = vrot.slane %v10088, 4
        %v10810 = vsel %vm1846, %v10809, %v10086
        %v10812 = vunpack.c.l.s4 1983009808
        %v10813 = vunpack.c.0.s8 %v10812
        %v10814 = vperm.slane %v10810, %v10813
        %v10815 = vrot.slane %v10814, 4
        %v10816 = vsel %vm1846, %v10815, %v10808
        %v10818 = vunpack.c.l.s4 1934713408
        %v10819 = vunpack.c.0.s8 %v10818
        %v10820 = vperm.slane %v10816, %v10819
        %v10821 = vrot.slane %v10820, 4
        %v10822 = vsel %vm1846, 0, %v10821
        %v10823 = vsel %vm1846, %v10113, %v10106
        %v10825 = vunpack.c.l.s4 1983009808
        %v10826 = vunpack.c.0.s8 %v10825
        %v10827 = vperm.slane %v10823, %v10826
        %v10828 = vrot.slane %v10114, 4
        %v10829 = vsel %vm1846, %v10828, %v10112
        %v10831 = vunpack.c.l.s4 1983009808
        %v10832 = vunpack.c.0.s8 %v10831
        %v10833 = vperm.slane %v10829, %v10832
        %v10834 = vrot.slane %v10833, 4
        %v10835 = vsel %vm1846, %v10834, %v10827
        %v10837 = vunpack.c.l.s4 1934713408
        %v10838 = vunpack.c.0.s8 %v10837
        %v10839 = vperm.slane %v10835, %v10838
        %v10840 = vrot.slane %v10839, 4
        %v10841 = vsel %vm1846, 0, %v10840
        %v10842 = vsel %vm1846, %v10139, %v10132
        %v10844 = vunpack.c.l.s4 1983009808
        %v10845 = vunpack.c.0.s8 %v10844
        %v10846 = vperm.slane %v10842, %v10845
        %v10847 = vrot.slane %v10140, 4
        %v10848 = vsel %vm1846, %v10847, %v10138
        %v10850 = vunpack.c.l.s4 1983009808
        %v10851 = vunpack.c.0.s8 %v10850
        %v10852 = vperm.slane %v10848, %v10851
        %v10853 = vrot.slane %v10852, 4
        %v10854 = vsel %vm1846, %v10853, %v10846
        %v10856 = vunpack.c.l.s4 1934713408
        %v10857 = vunpack.c.0.s8 %v10856
        %v10858 = vperm.slane %v10854, %v10857
        %v10859 = vrot.slane %v10858, 4
        %v10860 = vsel %vm1846, 0, %v10859
        %v10861 = vsel %vm1846, %v10165, %v10158
        %v10863 = vunpack.c.l.s4 1983009808
        %v10864 = vunpack.c.0.s8 %v10863
        %v10865 = vperm.slane %v10861, %v10864
        %v10866 = vrot.slane %v10166, 4
        %v10867 = vsel %vm1846, %v10866, %v10164
        %v10869 = vunpack.c.l.s4 1983009808
        %v10870 = vunpack.c.0.s8 %v10869
        %v10871 = vperm.slane %v10867, %v10870
        %v10872 = vrot.slane %v10871, 4
        %v10873 = vsel %vm1846, %v10872, %v10865
        %v10875 = vunpack.c.l.s4 1934713408
        %v10876 = vunpack.c.0.s8 %v10875
        %v10877 = vperm.slane %v10873, %v10876
        %v10878 = vrot.slane %v10877, 4
        %v10879 = vsel %vm1846, 0, %v10878
        %v10880 = vsel %vm1846, %v10191, %v10184
        %v10882 = vunpack.c.l.s4 1983009808
        %v10883 = vunpack.c.0.s8 %v10882
        %v10884 = vperm.slane %v10880, %v10883
        %v10885 = vrot.slane %v10192, 4
        %v10886 = vsel %vm1846, %v10885, %v10190
        %v10888 = vunpack.c.l.s4 1983009808
        %v10889 = vunpack.c.0.s8 %v10888
        %v10890 = vperm.slane %v10886, %v10889
        %v10891 = vrot.slane %v10890, 4
        %v10892 = vsel %vm1846, %v10891, %v10884
        %v10894 = vunpack.c.l.s4 1934713408
        %v10895 = vunpack.c.0.s8 %v10894
        %v10896 = vperm.slane %v10892, %v10895
        %v10897 = vrot.slane %v10896, 4
        %v10898 = vsel %vm1846, 0, %v10897
        %v10899 = vsel %vm1846, %v10217, %v10210
        %v10901 = vunpack.c.l.s4 1983009808
        %v10902 = vunpack.c.0.s8 %v10901
        %v10903 = vperm.slane %v10899, %v10902
        %v10904 = vrot.slane %v10218, 4
        %v10905 = vsel %vm1846, %v10904, %v10216
        %v10907 = vunpack.c.l.s4 1983009808
        %v10908 = vunpack.c.0.s8 %v10907
        %v10909 = vperm.slane %v10905, %v10908
        %v10910 = vrot.slane %v10909, 4
        %v10911 = vsel %vm1846, %v10910, %v10903
        %v10913 = vunpack.c.l.s4 1934713408
        %v10914 = vunpack.c.0.s8 %v10913
        %v10915 = vperm.slane %v10911, %v10914
        %v10916 = vrot.slane %v10915, 4
        %v10917 = vsel %vm1846, 0, %v10916
        %v10918 = vsel %vm1846, %v10243, %v10236
        %v10920 = vunpack.c.l.s4 1983009808
        %v10921 = vunpack.c.0.s8 %v10920
        %v10922 = vperm.slane %v10918, %v10921
        %v10923 = vrot.slane %v10244, 4
        %v10924 = vsel %vm1846, %v10923, %v10242
        %v10926 = vunpack.c.l.s4 1983009808
        %v10927 = vunpack.c.0.s8 %v10926
        %v10928 = vperm.slane %v10924, %v10927
        %v10929 = vrot.slane %v10928, 4
        %v10930 = vsel %vm1846, %v10929, %v10922
        %v10932 = vunpack.c.l.s4 1934713408
        %v10933 = vunpack.c.0.s8 %v10932
        %v10934 = vperm.slane %v10930, %v10933
        %v10935 = vrot.slane %v10934, 4
        %v10936 = vsel %vm1846, 0, %v10935
        %v10937 = vsel %vm1846, %v10269, %v10262
        %v10939 = vunpack.c.l.s4 1983009808
        %v10940 = vunpack.c.0.s8 %v10939
        %v10941 = vperm.slane %v10937, %v10940
        %v10942 = vrot.slane %v10270, 4
        %v10943 = vsel %vm1846, %v10942, %v10268
        %v10945 = vunpack.c.l.s4 1983009808
        %v10946 = vunpack.c.0.s8 %v10945
        %v10947 = vperm.slane %v10943, %v10946
        %v10948 = vrot.slane %v10947, 4
        %v10949 = vsel %vm1846, %v10948, %v10941
        %v10951 = vunpack.c.l.s4 1934713408
        %v10952 = vunpack.c.0.s8 %v10951
        %v10953 = vperm.slane %v10949, %v10952
        %v10954 = vrot.slane %v10953, 4
        %v10955 = vsel %vm1846, 0, %v10954
        %v10956 = vsel %vm1846, %v10295, %v10288
        %v10958 = vunpack.c.l.s4 1983009808
        %v10959 = vunpack.c.0.s8 %v10958
        %v10960 = vperm.slane %v10956, %v10959
        %v10961 = vrot.slane %v10296, 4
        %v10962 = vsel %vm1846, %v10961, %v10294
        %v10964 = vunpack.c.l.s4 1983009808
        %v10965 = vunpack.c.0.s8 %v10964
        %v10966 = vperm.slane %v10962, %v10965
        %v10967 = vrot.slane %v10966, 4
        %v10968 = vsel %vm1846, %v10967, %v10960
        %v10970 = vunpack.c.l.s4 1934713408
        %v10971 = vunpack.c.0.s8 %v10970
        %v10972 = vperm.slane %v10968, %v10971
        %v10973 = vrot.slane %v10972, 4
        %v10974 = vsel %vm1846, 0, %v10973
        %v10975 = vsel %vm1846, %v10321, %v10314
        %v10977 = vunpack.c.l.s4 1983009808
        %v10978 = vunpack.c.0.s8 %v10977
        %v10979 = vperm.slane %v10975, %v10978
        %v10980 = vrot.slane %v10322, 4
        %v10981 = vsel %vm1846, %v10980, %v10320
        %v10983 = vunpack.c.l.s4 1983009808
        %v10984 = vunpack.c.0.s8 %v10983
        %v10985 = vperm.slane %v10981, %v10984
        %v10986 = vrot.slane %v10985, 4
        %v10987 = vsel %vm1846, %v10986, %v10979
        %v10989 = vunpack.c.l.s4 1934713408
        %v10990 = vunpack.c.0.s8 %v10989
        %v10991 = vperm.slane %v10987, %v10990
        %v10992 = vrot.slane %v10991, 4
        %v10993 = vsel %vm1846, 0, %v10992
        %v10994 = vsel %vm1846, %v10347, %v10340
        %v10996 = vunpack.c.l.s4 1983009808
        %v10997 = vunpack.c.0.s8 %v10996
        %v10998 = vperm.slane %v10994, %v10997
        %v10999 = vrot.slane %v10348, 4
        %v11000 = vsel %vm1846, %v10999, %v10346
        %v11002 = vunpack.c.l.s4 1983009808
        %v11003 = vunpack.c.0.s8 %v11002
        %v11004 = vperm.slane %v11000, %v11003
        %v11005 = vrot.slane %v11004, 4
        %v11006 = vsel %vm1846, %v11005, %v10998
        %v11008 = vunpack.c.l.s4 1934713408
        %v11009 = vunpack.c.0.s8 %v11008
        %v11010 = vperm.slane %v11006, %v11009
        %v11011 = vrot.slane %v11010, 4
        %v11012 = vsel %vm1846, 0, %v11011
        %v11013 = vsel %vm1846, %v10373, %v10366
        %v11015 = vunpack.c.l.s4 1983009808
        %v11016 = vunpack.c.0.s8 %v11015
        %v11017 = vperm.slane %v11013, %v11016
        %v11018 = vrot.slane %v10374, 4
        %v11019 = vsel %vm1846, %v11018, %v10372
        %v11021 = vunpack.c.l.s4 1983009808
        %v11022 = vunpack.c.0.s8 %v11021
        %v11023 = vperm.slane %v11019, %v11022
        %v11024 = vrot.slane %v11023, 4
        %v11025 = vsel %vm1846, %v11024, %v11017
        %v11027 = vunpack.c.l.s4 1934713408
        %v11028 = vunpack.c.0.s8 %v11027
        %v11029 = vperm.slane %v11025, %v11028
        %v11030 = vrot.slane %v11029, 4
        %v11031 = vsel %vm1846, 0, %v11030
        %v11032 = vsel %vm1846, %v10399, %v10392
        %v11034 = vunpack.c.l.s4 1983009808
        %v11035 = vunpack.c.0.s8 %v11034
        %v11036 = vperm.slane %v11032, %v11035
        %v11037 = vrot.slane %v10400, 4
        %v11038 = vsel %vm1846, %v11037, %v10398
        %v11040 = vunpack.c.l.s4 1983009808
        %v11041 = vunpack.c.0.s8 %v11040
        %v11042 = vperm.slane %v11038, %v11041
        %v11043 = vrot.slane %v11042, 4
        %v11044 = vsel %vm1846, %v11043, %v11036
        %v11046 = vunpack.c.l.s4 1934713408
        %v11047 = vunpack.c.0.s8 %v11046
        %v11048 = vperm.slane %v11044, %v11047
        %v11049 = vrot.slane %v11048, 4
        %v11050 = vsel %vm1846, 0, %v11049
        %v11051 = vsel %vm1846, %v10425, %v10418
        %v11053 = vunpack.c.l.s4 1983009808
        %v11054 = vunpack.c.0.s8 %v11053
        %v11055 = vperm.slane %v11051, %v11054
        %v11056 = vrot.slane %v10426, 4
        %v11057 = vsel %vm1846, %v11056, %v10424
        %v11059 = vunpack.c.l.s4 1983009808
        %v11060 = vunpack.c.0.s8 %v11059
        %v11061 = vperm.slane %v11057, %v11060
        %v11062 = vrot.slane %v11061, 4
        %v11063 = vsel %vm1846, %v11062, %v11055
        %v11065 = vunpack.c.l.s4 1934713408
        %v11066 = vunpack.c.0.s8 %v11065
        %v11067 = vperm.slane %v11063, %v11066
        %v11068 = vrot.slane %v11067, 4
        %v11069 = vsel %vm1846, 0, %v11068
        %v11070 = vsel %vm1846, %v10451, %v10444
        %v11072 = vunpack.c.l.s4 1983009808
        %v11073 = vunpack.c.0.s8 %v11072
        %v11074 = vperm.slane %v11070, %v11073
        %v11075 = vrot.slane %v10452, 4
        %v11076 = vsel %vm1846, %v11075, %v10450
        %v11078 = vunpack.c.l.s4 1983009808
        %v11079 = vunpack.c.0.s8 %v11078
        %v11080 = vperm.slane %v11076, %v11079
        %v11081 = vrot.slane %v11080, 4
        %v11082 = vsel %vm1846, %v11081, %v11074
        %v11084 = vunpack.c.l.s4 1934713408
        %v11085 = vunpack.c.0.s8 %v11084
        %v11086 = vperm.slane %v11082, %v11085
        %v11087 = vrot.slane %v11086, 4
        %v11088 = vsel %vm1846, 0, %v11087
        %v11089 = vsel %vm1846, %v10477, %v10470
        %v11091 = vunpack.c.l.s4 1983009808
        %v11092 = vunpack.c.0.s8 %v11091
        %v11093 = vperm.slane %v11089, %v11092
        %v11094 = vrot.slane %v10478, 4
        %v11095 = vsel %vm1846, %v11094, %v10476
        %v11097 = vunpack.c.l.s4 1983009808
        %v11098 = vunpack.c.0.s8 %v11097
        %v11099 = vperm.slane %v11095, %v11098
        %v11100 = vrot.slane %v11099, 4
        %v11101 = vsel %vm1846, %v11100, %v11093
        %v11103 = vunpack.c.l.s4 1934713408
        %v11104 = vunpack.c.0.s8 %v11103
        %v11105 = vperm.slane %v11101, %v11104
        %v11106 = vrot.slane %v11105, 4
        %v11107 = vsel %vm1846, 0, %v11106
        %v11108 = vsel %vm1846, %v10503, %v10496
        %v11110 = vunpack.c.l.s4 1983009808
        %v11111 = vunpack.c.0.s8 %v11110
        %v11112 = vperm.slane %v11108, %v11111
        %v11113 = vrot.slane %v10504, 4
        %v11114 = vsel %vm1846, %v11113, %v10502
        %v11116 = vunpack.c.l.s4 1983009808
        %v11117 = vunpack.c.0.s8 %v11116
        %v11118 = vperm.slane %v11114, %v11117
        %v11119 = vrot.slane %v11118, 4
        %v11120 = vsel %vm1846, %v11119, %v11112
        %v11122 = vunpack.c.l.s4 1934713408
        %v11123 = vunpack.c.0.s8 %v11122
        %v11124 = vperm.slane %v11120, %v11123
        %v11125 = vrot.slane %v11124, 4
        %v11126 = vsel %vm1846, 0, %v11125
        %v11127 = vsel %vm1846, %v10529, %v10522
        %v11129 = vunpack.c.l.s4 1983009808
        %v11130 = vunpack.c.0.s8 %v11129
        %v11131 = vperm.slane %v11127, %v11130
        %v11132 = vrot.slane %v10530, 4
        %v11133 = vsel %vm1846, %v11132, %v10528
        %v11135 = vunpack.c.l.s4 1983009808
        %v11136 = vunpack.c.0.s8 %v11135
        %v11137 = vperm.slane %v11133, %v11136
        %v11138 = vrot.slane %v11137, 4
        %v11139 = vsel %vm1846, %v11138, %v11131
        %v11141 = vunpack.c.l.s4 1934713408
        %v11142 = vunpack.c.0.s8 %v11141
        %v11143 = vperm.slane %v11139, %v11142
        %v11144 = vrot.slane %v11143, 4
        %v11145 = vsel %vm1846, 0, %v11144
        %v11146 = vsel %vm1846, %v10555, %v10548
        %v11148 = vunpack.c.l.s4 1983009808
        %v11149 = vunpack.c.0.s8 %v11148
        %v11150 = vperm.slane %v11146, %v11149
        %v11151 = vrot.slane %v10556, 4
        %v11152 = vsel %vm1846, %v11151, %v10554
        %v11154 = vunpack.c.l.s4 1983009808
        %v11155 = vunpack.c.0.s8 %v11154
        %v11156 = vperm.slane %v11152, %v11155
        %v11157 = vrot.slane %v11156, 4
        %v11158 = vsel %vm1846, %v11157, %v11150
        %v11160 = vunpack.c.l.s4 1934713408
        %v11161 = vunpack.c.0.s8 %v11160
        %v11162 = vperm.slane %v11158, %v11161
        %v11163 = vrot.slane %v11162, 4
        %v11164 = vsel %vm1846, 0, %v11163
        %v11167 = vpack.i.b16 %v10592, %v10573
        %v11168 = vshrl.u32 %v10573, 16
        %v11169 = vshrl.u32 %v10592, 16
        %v11170 = vpack.i.b16 %v11169, %v11168
        %v11173 = vpack.i.b16 %v10594, %v10575
        %v11174 = vshrl.u32 %v10575, 16
        %v11175 = vshrl.u32 %v10594, 16
        %v11176 = vpack.i.b16 %v11175, %v11174
        %v11179 = vpack.i.b16 %v10630, %v10611
        %v11180 = vshrl.u32 %v10611, 16
        %v11181 = vshrl.u32 %v10630, 16
        %v11182 = vpack.i.b16 %v11181, %v11180
        %v11185 = vpack.i.b16 %v10632, %v10613
        %v11186 = vshrl.u32 %v10613, 16
        %v11187 = vshrl.u32 %v10632, 16
        %v11188 = vpack.i.b16 %v11187, %v11186
        %v11191 = vpack.i.b16 %v10668, %v10649
        %v11192 = vshrl.u32 %v10649, 16
        %v11193 = vshrl.u32 %v10668, 16
        %v11194 = vpack.i.b16 %v11193, %v11192
        %v11197 = vpack.i.b16 %v10670, %v10651
        %v11198 = vshrl.u32 %v10651, 16
        %v11199 = vshrl.u32 %v10670, 16
        %v11200 = vpack.i.b16 %v11199, %v11198
        %v11203 = vpack.i.b16 %v10706, %v10687
        %v11204 = vshrl.u32 %v10687, 16
        %v11205 = vshrl.u32 %v10706, 16
        %v11206 = vpack.i.b16 %v11205, %v11204
        %v11209 = vpack.i.b16 %v10708, %v10689
        %v11210 = vshrl.u32 %v10689, 16
        %v11211 = vshrl.u32 %v10708, 16
        %v11212 = vpack.i.b16 %v11211, %v11210
        %v11215 = vpack.i.b16 %v10744, %v10725
        %v11216 = vshrl.u32 %v10725, 16
        %v11217 = vshrl.u32 %v10744, 16
        %v11218 = vpack.i.b16 %v11217, %v11216
        %v11221 = vpack.i.b16 %v10746, %v10727
        %v11222 = vshrl.u32 %v10727, 16
        %v11223 = vshrl.u32 %v10746, 16
        %v11224 = vpack.i.b16 %v11223, %v11222
        %v11227 = vpack.i.b16 %v10782, %v10763
        %v11228 = vshrl.u32 %v10763, 16
        %v11229 = vshrl.u32 %v10782, 16
        %v11230 = vpack.i.b16 %v11229, %v11228
        %v11233 = vpack.i.b16 %v10784, %v10765
        %v11234 = vshrl.u32 %v10765, 16
        %v11235 = vshrl.u32 %v10784, 16
        %v11236 = vpack.i.b16 %v11235, %v11234
        %v11239 = vpack.i.b16 %v10820, %v10801
        %v11240 = vshrl.u32 %v10801, 16
        %v11241 = vshrl.u32 %v10820, 16
        %v11242 = vpack.i.b16 %v11241, %v11240
        %v11245 = vpack.i.b16 %v10822, %v10803
        %v11246 = vshrl.u32 %v10803, 16
        %v11247 = vshrl.u32 %v10822, 16
        %v11248 = vpack.i.b16 %v11247, %v11246
        %v11251 = vpack.i.b16 %v10858, %v10839
        %v11252 = vshrl.u32 %v10839, 16
        %v11253 = vshrl.u32 %v10858, 16
        %v11254 = vpack.i.b16 %v11253, %v11252
        %v11257 = vpack.i.b16 %v10860, %v10841
        %v11258 = vshrl.u32 %v10841, 16
        %v11259 = vshrl.u32 %v10860, 16
        %v11260 = vpack.i.b16 %v11259, %v11258
        %v11263 = vpack.i.b16 %v10896, %v10877
        %v11264 = vshrl.u32 %v10877, 16
        %v11265 = vshrl.u32 %v10896, 16
        %v11266 = vpack.i.b16 %v11265, %v11264
        %v11269 = vpack.i.b16 %v10898, %v10879
        %v11270 = vshrl.u32 %v10879, 16
        %v11271 = vshrl.u32 %v10898, 16
        %v11272 = vpack.i.b16 %v11271, %v11270
        %v11275 = vpack.i.b16 %v10934, %v10915
        %v11276 = vshrl.u32 %v10915, 16
        %v11277 = vshrl.u32 %v10934, 16
        %v11278 = vpack.i.b16 %v11277, %v11276
        %v11281 = vpack.i.b16 %v10936, %v10917
        %v11282 = vshrl.u32 %v10917, 16
        %v11283 = vshrl.u32 %v10936, 16
        %v11284 = vpack.i.b16 %v11283, %v11282
        %v11287 = vpack.i.b16 %v10972, %v10953
        %v11288 = vshrl.u32 %v10953, 16
        %v11289 = vshrl.u32 %v10972, 16
        %v11290 = vpack.i.b16 %v11289, %v11288
        %v11293 = vpack.i.b16 %v10974, %v10955
        %v11294 = vshrl.u32 %v10955, 16
        %v11295 = vshrl.u32 %v10974, 16
        %v11296 = vpack.i.b16 %v11295, %v11294
        %v11299 = vpack.i.b16 %v11010, %v10991
        %v11300 = vshrl.u32 %v10991, 16
        %v11301 = vshrl.u32 %v11010, 16
        %v11302 = vpack.i.b16 %v11301, %v11300
        %v11305 = vpack.i.b16 %v11012, %v10993
        %v11306 = vshrl.u32 %v10993, 16
        %v11307 = vshrl.u32 %v11012, 16
        %v11308 = vpack.i.b16 %v11307, %v11306
        %v11311 = vpack.i.b16 %v11048, %v11029
        %v11312 = vshrl.u32 %v11029, 16
        %v11313 = vshrl.u32 %v11048, 16
        %v11314 = vpack.i.b16 %v11313, %v11312
        %v11317 = vpack.i.b16 %v11050, %v11031
        %v11318 = vshrl.u32 %v11031, 16
        %v11319 = vshrl.u32 %v11050, 16
        %v11320 = vpack.i.b16 %v11319, %v11318
        %v11323 = vpack.i.b16 %v11086, %v11067
        %v11324 = vshrl.u32 %v11067, 16
        %v11325 = vshrl.u32 %v11086, 16
        %v11326 = vpack.i.b16 %v11325, %v11324
        %v11329 = vpack.i.b16 %v11088, %v11069
        %v11330 = vshrl.u32 %v11069, 16
        %v11331 = vshrl.u32 %v11088, 16
        %v11332 = vpack.i.b16 %v11331, %v11330
        %v11335 = vpack.i.b16 %v11124, %v11105
        %v11336 = vshrl.u32 %v11105, 16
        %v11337 = vshrl.u32 %v11124, 16
        %v11338 = vpack.i.b16 %v11337, %v11336
        %v11341 = vpack.i.b16 %v11126, %v11107
        %v11342 = vshrl.u32 %v11107, 16
        %v11343 = vshrl.u32 %v11126, 16
        %v11344 = vpack.i.b16 %v11343, %v11342
        %v11347 = vpack.i.b16 %v11162, %v11143
        %v11348 = vshrl.u32 %v11143, 16
        %v11349 = vshrl.u32 %v11162, 16
        %v11350 = vpack.i.b16 %v11349, %v11348
        %v11353 = vpack.i.b16 %v11164, %v11145
        %v11354 = vshrl.u32 %v11145, 16
        %v11355 = vshrl.u32 %v11164, 16
        %v11356 = vpack.i.b16 %v11355, %v11354
        %v11357 = vunpack.c.l.b16 %v11167
        %v11358 = vunpack.c.l.b16 %v11179
        %v11359 = vunpack.c.l.b16 %v11191
        %v11360 = vunpack.c.l.b16 %v11203
        %v11361 = vunpack.c.l.b16 %v11215
        %v11362 = vunpack.c.l.b16 %v11227
        %v11363 = vunpack.c.l.b16 %v11239
        %v11364 = vunpack.c.l.b16 %v11251
        %v11365 = vunpack.c.l.b16 %v11263
        %v11366 = vunpack.c.l.b16 %v11275
        %v11367 = vunpack.c.l.b16 %v11287
        %v11368 = vunpack.c.l.b16 %v11299
        %v11369 = vunpack.c.l.b16 %v11311
        %v11370 = vunpack.c.l.b16 %v11323
        %v11371 = vunpack.c.l.b16 %v11335
        %v11372 = vunpack.c.l.b16 %v11347
        %v11373 = vpack.c.b16 %v11358, %v11357
        %v11374 = vpack.c.b16 %v11360, %v11359
        %v11375 = vpack.c.b16 %v11362, %v11361
        %v11376 = vpack.c.b16 %v11364, %v11363
        %v11377 = vpack.c.b16 %v11366, %v11365
        %v11378 = vpack.c.b16 %v11368, %v11367
        %v11379 = vpack.c.b16 %v11370, %v11369
        %v11380 = vpack.c.b16 %v11372, %v11371
        %v11381 = vunpack.c.l.b16 %v11170
        %v11382 = vunpack.c.l.b16 %v11182
        %v11383 = vunpack.c.l.b16 %v11194
        %v11384 = vunpack.c.l.b16 %v11206
        %v11385 = vunpack.c.l.b16 %v11218
        %v11386 = vunpack.c.l.b16 %v11230
        %v11387 = vunpack.c.l.b16 %v11242
        %v11388 = vunpack.c.l.b16 %v11254
        %v11389 = vunpack.c.l.b16 %v11266
        %v11390 = vunpack.c.l.b16 %v11278
        %v11391 = vunpack.c.l.b16 %v11290
        %v11392 = vunpack.c.l.b16 %v11302
        %v11393 = vunpack.c.l.b16 %v11314
        %v11394 = vunpack.c.l.b16 %v11326
        %v11395 = vunpack.c.l.b16 %v11338
        %v11396 = vunpack.c.l.b16 %v11350
        %v11397 = vpack.c.b16 %v11382, %v11381
        %v11398 = vpack.c.b16 %v11384, %v11383
        %v11399 = vpack.c.b16 %v11386, %v11385
        %v11400 = vpack.c.b16 %v11388, %v11387
        %v11401 = vpack.c.b16 %v11390, %v11389
        %v11402 = vpack.c.b16 %v11392, %v11391
        %v11403 = vpack.c.b16 %v11394, %v11393
        %v11404 = vpack.c.b16 %v11396, %v11395
        %11405 = vrot.lane.b32.xlu0 %v11397, 64
        %v11406 = vpop.permute.xlu0 %11405
        %11407 = vrot.lane.b32.xlu0 %v11398, 64
        %v11408 = vpop.permute.xlu0 %11407
        %11409 = vrot.lane.b32.xlu0 %v11399, 64
        %v11410 = vpop.permute.xlu0 %11409
        %11411 = vrot.lane.b32.xlu0 %v11400, 64
        %v11412 = vpop.permute.xlu0 %11411
        %11413 = vrot.lane.b32.xlu0 %v11401, 64
        %v11414 = vpop.permute.xlu0 %11413
        %11415 = vrot.lane.b32.xlu0 %v11402, 64
        %v11416 = vpop.permute.xlu0 %11415
        %11417 = vrot.lane.b32.xlu0 %v11403, 64
        %v11418 = vpop.permute.xlu0 %11417
        %11419 = vrot.lane.b32.xlu0 %v11404, 64
        %v11420 = vpop.permute.xlu0 %11419
        %v11421 = vunpack.c.l.b16 %v11173
        %v11422 = vunpack.c.l.b16 %v11185
        %v11423 = vunpack.c.l.b16 %v11197
        %v11424 = vunpack.c.l.b16 %v11209
        %v11425 = vunpack.c.l.b16 %v11221
        %v11426 = vunpack.c.l.b16 %v11233
        %v11427 = vunpack.c.l.b16 %v11245
        %v11428 = vunpack.c.l.b16 %v11257
        %v11429 = vunpack.c.l.b16 %v11269
        %v11430 = vunpack.c.l.b16 %v11281
        %v11431 = vunpack.c.l.b16 %v11293
        %v11432 = vunpack.c.l.b16 %v11305
        %v11433 = vunpack.c.l.b16 %v11317
        %v11434 = vunpack.c.l.b16 %v11329
        %v11435 = vunpack.c.l.b16 %v11341
        %v11436 = vunpack.c.l.b16 %v11353
        %v11437 = vpack.c.b16 %v11422, %v11421
        %v11438 = vpack.c.b16 %v11424, %v11423
        %v11439 = vpack.c.b16 %v11426, %v11425
        %v11440 = vpack.c.b16 %v11428, %v11427
        %v11441 = vpack.c.b16 %v11430, %v11429
        %v11442 = vpack.c.b16 %v11432, %v11431
        %v11443 = vpack.c.b16 %v11434, %v11433
        %v11444 = vpack.c.b16 %v11436, %v11435
        %v11445 = vunpack.c.l.b16 %v11176
        %v11446 = vunpack.c.l.b16 %v11188
        %v11447 = vunpack.c.l.b16 %v11200
        %v11448 = vunpack.c.l.b16 %v11212
        %v11449 = vunpack.c.l.b16 %v11224
        %v11450 = vunpack.c.l.b16 %v11236
        %v11451 = vunpack.c.l.b16 %v11248
        %v11452 = vunpack.c.l.b16 %v11260
        %v11453 = vunpack.c.l.b16 %v11272
        %v11454 = vunpack.c.l.b16 %v11284
        %v11455 = vunpack.c.l.b16 %v11296
        %v11456 = vunpack.c.l.b16 %v11308
        %v11457 = vunpack.c.l.b16 %v11320
        %v11458 = vunpack.c.l.b16 %v11332
        %v11459 = vunpack.c.l.b16 %v11344
        %v11460 = vunpack.c.l.b16 %v11356
        %v11461 = vpack.c.b16 %v11446, %v11445
        %v11462 = vpack.c.b16 %v11448, %v11447
        %v11463 = vpack.c.b16 %v11450, %v11449
        %v11464 = vpack.c.b16 %v11452, %v11451
        %v11465 = vpack.c.b16 %v11454, %v11453
        %v11466 = vpack.c.b16 %v11456, %v11455
        %v11467 = vpack.c.b16 %v11458, %v11457
        %v11468 = vpack.c.b16 %v11460, %v11459
        %11469 = vrot.lane.b32.xlu0 %v11461, 64
        %v11470 = vpop.permute.xlu0 %11469
        %11471 = vrot.lane.b32.xlu0 %v11462, 64
        %v11472 = vpop.permute.xlu0 %11471
        %11473 = vrot.lane.b32.xlu0 %v11463, 64
        %v11474 = vpop.permute.xlu0 %11473
        %11475 = vrot.lane.b32.xlu0 %v11464, 64
        %v11476 = vpop.permute.xlu0 %11475
        %11477 = vrot.lane.b32.xlu0 %v11465, 64
        %v11478 = vpop.permute.xlu0 %11477
        %11479 = vrot.lane.b32.xlu0 %v11466, 64
        %v11480 = vpop.permute.xlu0 %11479
        %11481 = vrot.lane.b32.xlu0 %v11467, 64
        %v11482 = vpop.permute.xlu0 %11481
        %11483 = vrot.lane.b32.xlu0 %v11468, 64
        %v11484 = vpop.permute.xlu0 %11483
        %v11487 = vsel %vm7300, %v11373, %v11406
        %v11491 = vsel %vm7300, %v11374, %v11408
        %v11495 = vsel %vm7300, %v11375, %v11410
        %v11499 = vsel %vm7300, %v11376, %v11412
        %v11503 = vsel %vm7300, %v11377, %v11414
        %v11507 = vsel %vm7300, %v11378, %v11416
        %v11511 = vsel %vm7300, %v11379, %v11418
        %v11515 = vsel %vm7300, %v11380, %v11420
        %v11519 = vsel %vm7300, %v11437, %v11470
        %v11523 = vsel %vm7300, %v11438, %v11472
        %v11527 = vsel %vm7300, %v11439, %v11474
        %v11531 = vsel %vm7300, %v11440, %v11476
        %v11535 = vsel %vm7300, %v11441, %v11478
        %v11539 = vsel %vm7300, %v11442, %v11480
        %v11543 = vsel %vm7300, %v11443, %v11482
        %v11547 = vsel %vm7300, %v11444, %v11484
        %v11549 = vld [vmem:[#allocation7] sm:$0xff]
        %v11550 = vld [vmem:[#allocation7 + $0x8] sm:$0xff]
        %v11551 = vld [vmem:[#allocation7 + $0x10] sm:$0xff]
        %v11552 = vld [vmem:[#allocation7 + $0x18] sm:$0xff]
        %v11553 = vld [vmem:[#allocation7 + $0x20] sm:$0xff]
        %v11554 = vld [vmem:[#allocation7 + $0x28] sm:$0xff]
        %v11555 = vld [vmem:[#allocation7 + $0x30] sm:$0xff]
        %v11556 = vld [vmem:[#allocation7 + $0x38] sm:$0xff]
        %v11557 = vld [vmem:[#allocation7 + $0x40] sm:$0xff]
        %v11558 = vld [vmem:[#allocation7 + $0x48] sm:$0xff]
        %v11559 = vld [vmem:[#allocation7 + $0x50] sm:$0xff]
        %v11560 = vld [vmem:[#allocation7 + $0x58] sm:$0xff]
        %v11561 = vld [vmem:[#allocation7 + $0x60] sm:$0xff]
        %v11562 = vld [vmem:[#allocation7 + $0x68] sm:$0xff]
        %v11563 = vld [vmem:[#allocation7 + $0x70] sm:$0xff]
        %v11564 = vld [vmem:[#allocation7 + $0x78] sm:$0xff]
        %v11565 = vld [vmem:[#allocation7 + $0x80] sm:$0xff]
        %v11566 = vld [vmem:[#allocation7 + $0x88] sm:$0xff]
        %v11567 = vld [vmem:[#allocation7 + $0x90] sm:$0xff]
        %v11568 = vld [vmem:[#allocation7 + $0x98] sm:$0xff]
        %v11569 = vld [vmem:[#allocation7 + $0xa0] sm:$0xff]
        %v11570 = vld [vmem:[#allocation7 + $0xa8] sm:$0xff]
        %v11571 = vld [vmem:[#allocation7 + $0xb0] sm:$0xff]
        %v11572 = vld [vmem:[#allocation7 + $0xb8] sm:$0xff]
        %v11573 = vld [vmem:[#allocation7 + $0xc0] sm:$0xff]
        %v11574 = vld [vmem:[#allocation7 + $0xc8] sm:$0xff]
        %v11575 = vld [vmem:[#allocation7 + $0xd0] sm:$0xff]
        %v11576 = vld [vmem:[#allocation7 + $0xd8] sm:$0xff]
        %v11577 = vld [vmem:[#allocation7 + $0xe0] sm:$0xff]
        %v11578 = vld [vmem:[#allocation7 + $0xe8] sm:$0xff]
        %v11579 = vld [vmem:[#allocation7 + $0xf0] sm:$0xff]
        %v11580 = vld [vmem:[#allocation7 + $0xf8] sm:$0xff]
        %v11581 = vld [vmem:[%s3] sm:$0x3]
        %v11583 = vperm.slane %v11581, 0
        %v11584 = vperm.slane %v11581, 1
        %v11619 = vunpack.c.l.b16 %v11549
        %v11620 = vunpack.c.h.b16 %v11549
        %v11621 = vunpack.c.l.b16 %v11550
        %v11622 = vunpack.c.h.b16 %v11550
        %v11623 = vunpack.c.l.b16 %v11551
        %v11624 = vunpack.c.h.b16 %v11551
        %v11625 = vunpack.c.l.b16 %v11552
        %v11626 = vunpack.c.h.b16 %v11552
        %v11627 = vunpack.c.l.b16 %v11553
        %v11628 = vunpack.c.h.b16 %v11553
        %v11629 = vunpack.c.l.b16 %v11554
        %v11630 = vunpack.c.h.b16 %v11554
        %v11631 = vunpack.c.l.b16 %v11555
        %v11632 = vunpack.c.h.b16 %v11555
        %v11633 = vunpack.c.l.b16 %v11556
        %v11634 = vunpack.c.h.b16 %v11556
        %v11635 = vunpack.c.l.b16 %v11557
        %v11636 = vunpack.c.h.b16 %v11557
        %v11637 = vunpack.c.l.b16 %v11558
        %v11638 = vunpack.c.h.b16 %v11558
        %v11639 = vunpack.c.l.b16 %v11559
        %v11640 = vunpack.c.h.b16 %v11559
        %v11641 = vunpack.c.l.b16 %v11560
        %v11642 = vunpack.c.h.b16 %v11560
        %v11643 = vunpack.c.l.b16 %v11561
        %v11644 = vunpack.c.h.b16 %v11561
        %v11645 = vunpack.c.l.b16 %v11562
        %v11646 = vunpack.c.h.b16 %v11562
        %v11647 = vunpack.c.l.b16 %v11563
        %v11648 = vunpack.c.h.b16 %v11563
        %v11649 = vunpack.c.l.b16 %v11564
        %v11650 = vunpack.c.h.b16 %v11564
        %v11651 = vunpack.c.l.b16 %v11565
        %v11652 = vunpack.c.h.b16 %v11565
        %v11653 = vunpack.c.l.b16 %v11566
        %v11654 = vunpack.c.h.b16 %v11566
        %v11655 = vunpack.c.l.b16 %v11567
        %v11656 = vunpack.c.h.b16 %v11567
        %v11657 = vunpack.c.l.b16 %v11568
        %v11658 = vunpack.c.h.b16 %v11568
        %v11659 = vunpack.c.l.b16 %v11569
        %v11660 = vunpack.c.h.b16 %v11569
        %v11661 = vunpack.c.l.b16 %v11570
        %v11662 = vunpack.c.h.b16 %v11570
        %v11663 = vunpack.c.l.b16 %v11571
        %v11664 = vunpack.c.h.b16 %v11571
        %v11665 = vunpack.c.l.b16 %v11572
        %v11666 = vunpack.c.h.b16 %v11572
        %v11667 = vunpack.c.l.b16 %v11573
        %v11668 = vunpack.c.h.b16 %v11573
        %v11669 = vunpack.c.l.b16 %v11574
        %v11670 = vunpack.c.h.b16 %v11574
        %v11671 = vunpack.c.l.b16 %v11575
        %v11672 = vunpack.c.h.b16 %v11575
        %v11673 = vunpack.c.l.b16 %v11576
        %v11674 = vunpack.c.h.b16 %v11576
        %v11675 = vunpack.c.l.b16 %v11577
        %v11676 = vunpack.c.h.b16 %v11577
        %v11677 = vunpack.c.l.b16 %v11578
        %v11678 = vunpack.c.h.b16 %v11578
        %v11679 = vunpack.c.l.b16 %v11579
        %v11680 = vunpack.c.h.b16 %v11579
        %v11681 = vunpack.c.l.b16 %v11580
        %v11682 = vunpack.c.h.b16 %v11580
        %v11683 = vpack.c.b16 %v11621, %v11619
        %v11684 = vpack.c.b16 %v11622, %v11620
        %v11685 = vpack.c.b16 %v11625, %v11623
        %v11686 = vpack.c.b16 %v11626, %v11624
        %v11687 = vpack.c.b16 %v11629, %v11627
        %v11688 = vpack.c.b16 %v11630, %v11628
        %v11689 = vpack.c.b16 %v11633, %v11631
        %v11690 = vpack.c.b16 %v11634, %v11632
        %v11691 = vpack.c.b16 %v11637, %v11635
        %v11692 = vpack.c.b16 %v11638, %v11636
        %v11693 = vpack.c.b16 %v11641, %v11639
        %v11694 = vpack.c.b16 %v11642, %v11640
        %v11695 = vpack.c.b16 %v11645, %v11643
        %v11696 = vpack.c.b16 %v11646, %v11644
        %v11697 = vpack.c.b16 %v11649, %v11647
        %v11698 = vpack.c.b16 %v11650, %v11648
        %v11699 = vpack.c.b16 %v11653, %v11651
        %v11700 = vpack.c.b16 %v11654, %v11652
        %v11701 = vpack.c.b16 %v11657, %v11655
        %v11702 = vpack.c.b16 %v11658, %v11656
        %v11703 = vpack.c.b16 %v11661, %v11659
        %v11704 = vpack.c.b16 %v11662, %v11660
        %v11705 = vpack.c.b16 %v11665, %v11663
        %v11706 = vpack.c.b16 %v11666, %v11664
        %v11707 = vpack.c.b16 %v11669, %v11667
        %v11708 = vpack.c.b16 %v11670, %v11668
        %v11709 = vpack.c.b16 %v11673, %v11671
        %v11710 = vpack.c.b16 %v11674, %v11672
        %v11711 = vpack.c.b16 %v11677, %v11675
        %v11712 = vpack.c.b16 %v11678, %v11676
        %v11713 = vpack.c.b16 %v11681, %v11679
        %v11714 = vpack.c.b16 %v11682, %v11680
        %11747 = vmatpush.bf16.msra.mxu0 %v11697
        %11748 = vmatpush.bf16.msra.mxu0 %v11695
        %11749 = vmatpush.bf16.msra.mxu0 %v11693
        %11750 = vmatpush.bf16.msra.mxu0 %v11691
        %11751 = vmatpush.bf16.msra.mxu0 %v11689
        %11752 = vmatpush.bf16.msra.mxu0 %v11687
        %11753 = vmatpush.bf16.msra.mxu0 %v11685
        %11754 = vmatpush.bf16.msra.mxu0 %v11683
        %11755 = vmatmul.bf16.gmra.mxu0 %v11487
        %v11756 = vpop.f32.mrf.mxu0
        %v11757 = vadd.f32 %v11583, %v11756
        %v11758 = vpop.f32.mrf.mxu0
        %v11759 = vadd.f32 %v11583, %v11758
        %11760 = vmatmul.bf16.gmra.mxu0 %v11491
        %v11761 = vpop.f32.mrf.mxu0
        %v11762 = vadd.f32 %v11583, %v11761
        %v11763 = vpop.f32.mrf.mxu0
        %v11764 = vadd.f32 %v11583, %v11763
        %11765 = vmatmul.bf16.gmra.mxu0 %v11495
        %v11766 = vpop.f32.mrf.mxu0
        %v11767 = vadd.f32 %v11583, %v11766
        %v11768 = vpop.f32.mrf.mxu0
        %v11769 = vadd.f32 %v11583, %v11768
        %11770 = vmatmul.bf16.gmra.mxu0 %v11499
        %v11771 = vpop.f32.mrf.mxu0
        %v11772 = vadd.f32 %v11583, %v11771
        %v11773 = vpop.f32.mrf.mxu0
        %v11774 = vadd.f32 %v11583, %v11773
        %11775 = vmatmul.bf16.gmra.mxu0 %v11503
        %v11776 = vpop.f32.mrf.mxu0
        %v11777 = vadd.f32 %v11583, %v11776
        %v11778 = vpop.f32.mrf.mxu0
        %v11779 = vadd.f32 %v11583, %v11778
        %11780 = vmatmul.bf16.gmra.mxu0 %v11507
        %v11781 = vpop.f32.mrf.mxu0
        %v11782 = vadd.f32 %v11583, %v11781
        %v11783 = vpop.f32.mrf.mxu0
        %v11784 = vadd.f32 %v11583, %v11783
        %11785 = vmatmul.bf16.gmra.mxu0 %v11511
        %v11786 = vpop.f32.mrf.mxu0
        %v11787 = vadd.f32 %v11583, %v11786
        %v11788 = vpop.f32.mrf.mxu0
        %v11789 = vadd.f32 %v11583, %v11788
        %11790 = vmatmul.bf16.gmra.mxu0 %v11515
        %v11791 = vpop.f32.mrf.mxu0
        %v11792 = vadd.f32 %v11583, %v11791
        %v11793 = vpop.f32.mrf.mxu0
        %v11794 = vadd.f32 %v11583, %v11793
        %11795 = vdwg.mxu0
        %11796 = vmatpush.bf16.msra.mxu0 %v11713
        %11797 = vmatpush.bf16.msra.mxu0 %v11711
        %11798 = vmatpush.bf16.msra.mxu0 %v11709
        %11799 = vmatpush.bf16.msra.mxu0 %v11707
        %11800 = vmatpush.bf16.msra.mxu0 %v11705
        %11801 = vmatpush.bf16.msra.mxu0 %v11703
        %11802 = vmatpush.bf16.msra.mxu0 %v11701
        %11803 = vmatpush.bf16.msra.mxu0 %v11699
        %11804 = vmatmul.bf16.gmra.mxu0 %v11519
        %v11805 = vpop.f32.mrf.mxu0
        %v11806 = vadd.f32 %v11757, %v11805
        %v11807 = vpop.f32.mrf.mxu0
        %v11808 = vadd.f32 %v11759, %v11807
        %11809 = vmatmul.bf16.gmra.mxu0 %v11523
        %v11810 = vpop.f32.mrf.mxu0
        %v11811 = vadd.f32 %v11762, %v11810
        %v11812 = vpop.f32.mrf.mxu0
        %v11813 = vadd.f32 %v11764, %v11812
        %11814 = vmatmul.bf16.gmra.mxu0 %v11527
        %v11815 = vpop.f32.mrf.mxu0
        %v11816 = vadd.f32 %v11767, %v11815
        %v11817 = vpop.f32.mrf.mxu0
        %v11818 = vadd.f32 %v11769, %v11817
        %11819 = vmatmul.bf16.gmra.mxu0 %v11531
        %v11820 = vpop.f32.mrf.mxu0
        %v11821 = vadd.f32 %v11772, %v11820
        %v11822 = vpop.f32.mrf.mxu0
        %v11823 = vadd.f32 %v11774, %v11822
        %11824 = vmatmul.bf16.gmra.mxu0 %v11535
        %v11825 = vpop.f32.mrf.mxu0
        %v11826 = vadd.f32 %v11777, %v11825
        %v11827 = vpop.f32.mrf.mxu0
        %v11828 = vadd.f32 %v11779, %v11827
        %11829 = vmatmul.bf16.gmra.mxu0 %v11539
        %v11830 = vpop.f32.mrf.mxu0
        %v11831 = vadd.f32 %v11782, %v11830
        %v11832 = vpop.f32.mrf.mxu0
        %v11833 = vadd.f32 %v11784, %v11832
        %11834 = vmatmul.bf16.gmra.mxu0 %v11543
        %v11835 = vpop.f32.mrf.mxu0
        %v11836 = vadd.f32 %v11787, %v11835
        %v11837 = vpop.f32.mrf.mxu0
        %v11838 = vadd.f32 %v11789, %v11837
        %11839 = vmatmul.bf16.gmra.mxu0 %v11547
        %v11840 = vpop.f32.mrf.mxu0
        %v11841 = vadd.f32 %v11792, %v11840
        %v11842 = vpop.f32.mrf.mxu0
        %v11843 = vadd.f32 %v11794, %v11842
        %11844 = vdwg.mxu0
        %11845 = vmatpush.bf16.msra.mxu0 %v11698
        %11846 = vmatpush.bf16.msra.mxu0 %v11696
        %11847 = vmatpush.bf16.msra.mxu0 %v11694
        %11848 = vmatpush.bf16.msra.mxu0 %v11692
        %11849 = vmatpush.bf16.msra.mxu0 %v11690
        %11850 = vmatpush.bf16.msra.mxu0 %v11688
        %11851 = vmatpush.bf16.msra.mxu0 %v11686
        %11852 = vmatpush.bf16.msra.mxu0 %v11684
        %11853 = vmatmul.bf16.gmra.mxu0 %v11487
        %v11854 = vpop.f32.mrf.mxu0
        %v11855 = vadd.f32 %v11584, %v11854
        %v11856 = vpop.f32.mrf.mxu0
        %v11857 = vadd.f32 %v11584, %v11856
        %11858 = vmatmul.bf16.gmra.mxu0 %v11491
        %v11859 = vpop.f32.mrf.mxu0
        %v11860 = vadd.f32 %v11584, %v11859
        %v11861 = vpop.f32.mrf.mxu0
        %v11862 = vadd.f32 %v11584, %v11861
        %11863 = vmatmul.bf16.gmra.mxu0 %v11495
        %v11864 = vpop.f32.mrf.mxu0
        %v11865 = vadd.f32 %v11584, %v11864
        %v11866 = vpop.f32.mrf.mxu0
        %v11867 = vadd.f32 %v11584, %v11866
        %11868 = vmatmul.bf16.gmra.mxu0 %v11499
        %v11869 = vpop.f32.mrf.mxu0
        %v11870 = vadd.f32 %v11584, %v11869
        %v11871 = vpop.f32.mrf.mxu0
        %v11872 = vadd.f32 %v11584, %v11871
        %11873 = vmatmul.bf16.gmra.mxu0 %v11503
        %v11874 = vpop.f32.mrf.mxu0
        %v11875 = vadd.f32 %v11584, %v11874
        %v11876 = vpop.f32.mrf.mxu0
        %v11877 = vadd.f32 %v11584, %v11876
        %11878 = vmatmul.bf16.gmra.mxu0 %v11507
        %v11879 = vpop.f32.mrf.mxu0
        %v11880 = vadd.f32 %v11584, %v11879
        %v11881 = vpop.f32.mrf.mxu0
        %v11882 = vadd.f32 %v11584, %v11881
        %11883 = vmatmul.bf16.gmra.mxu0 %v11511
        %v11884 = vpop.f32.mrf.mxu0
        %v11885 = vadd.f32 %v11584, %v11884
        %v11886 = vpop.f32.mrf.mxu0
        %v11887 = vadd.f32 %v11584, %v11886
        %11888 = vmatmul.bf16.gmra.mxu0 %v11515
        %v11889 = vpop.f32.mrf.mxu0
        %v11890 = vadd.f32 %v11584, %v11889
        %v11891 = vpop.f32.mrf.mxu0
        %v11892 = vadd.f32 %v11584, %v11891
        %11893 = vdwg.mxu0
        %11894 = vmatpush.bf16.msra.mxu0 %v11714
        %11895 = vmatpush.bf16.msra.mxu0 %v11712
        %11896 = vmatpush.bf16.msra.mxu0 %v11710
        %11897 = vmatpush.bf16.msra.mxu0 %v11708
        %11898 = vmatpush.bf16.msra.mxu0 %v11706
        %11899 = vmatpush.bf16.msra.mxu0 %v11704
        %11900 = vmatpush.bf16.msra.mxu0 %v11702
        %11901 = vmatpush.bf16.msra.mxu0 %v11700
        %11902 = vmatmul.bf16.gmra.mxu0 %v11519
        %v11903 = vpop.f32.mrf.mxu0
        %v11904 = vadd.f32 %v11855, %v11903
        %v11905 = vpop.f32.mrf.mxu0
        %v11906 = vadd.f32 %v11857, %v11905
        %11907 = vmatmul.bf16.gmra.mxu0 %v11523
        %v11908 = vpop.f32.mrf.mxu0
        %v11909 = vadd.f32 %v11860, %v11908
        %v11910 = vpop.f32.mrf.mxu0
        %v11911 = vadd.f32 %v11862, %v11910
        %11912 = vmatmul.bf16.gmra.mxu0 %v11527
        %v11913 = vpop.f32.mrf.mxu0
        %v11914 = vadd.f32 %v11865, %v11913
        %v11915 = vpop.f32.mrf.mxu0
        %v11916 = vadd.f32 %v11867, %v11915
        %11917 = vmatmul.bf16.gmra.mxu0 %v11531
        %v11918 = vpop.f32.mrf.mxu0
        %v11919 = vadd.f32 %v11870, %v11918
        %v11920 = vpop.f32.mrf.mxu0
        %v11921 = vadd.f32 %v11872, %v11920
        %11922 = vmatmul.bf16.gmra.mxu0 %v11535
        %v11923 = vpop.f32.mrf.mxu0
        %v11924 = vadd.f32 %v11875, %v11923
        %v11925 = vpop.f32.mrf.mxu0
        %v11926 = vadd.f32 %v11877, %v11925
        %11927 = vmatmul.bf16.gmra.mxu0 %v11539
        %v11928 = vpop.f32.mrf.mxu0
        %v11929 = vadd.f32 %v11880, %v11928
        %v11930 = vpop.f32.mrf.mxu0
        %v11931 = vadd.f32 %v11882, %v11930
        %11932 = vmatmul.bf16.gmra.mxu0 %v11543
        %v11933 = vpop.f32.mrf.mxu0
        %v11934 = vadd.f32 %v11885, %v11933
        %v11935 = vpop.f32.mrf.mxu0
        %v11936 = vadd.f32 %v11887, %v11935
        %11937 = vmatmul.bf16.gmra.mxu0 %v11547
        %v11938 = vpop.f32.mrf.mxu0
        %v11939 = vadd.f32 %v11890, %v11938
        %v11940 = vpop.f32.mrf.mxu0
        %v11941 = vadd.f32 %v11892, %v11940
        %11942 = vdwg.mxu0
        %11943 = vst [vmem:[%s251] sm:$0xff] %v11806
        %11944 = vst [vmem:[%s251 + $0x8] sm:$0xff] %v11904
        %11945 = vst [vmem:[%s251 + $0x10] sm:$0xff] %v11808
        %11946 = vst [vmem:[%s251 + $0x18] sm:$0xff] %v11906
        %11947 = vst [vmem:[%s251 + $0x20] sm:$0xff] %v11811
        %11948 = vst [vmem:[%s251 + $0x28] sm:$0xff] %v11909
        %11949 = vst [vmem:[%s251 + $0x30] sm:$0xff] %v11813
        %11950 = vst [vmem:[%s251 + $0x38] sm:$0xff] %v11911
        %11951 = vst [vmem:[%s251 + $0x40] sm:$0xff] %v11816
        %11952 = vst [vmem:[%s251 + $0x48] sm:$0xff] %v11914
        %11953 = vst [vmem:[%s251 + $0x50] sm:$0xff] %v11818
        %11954 = vst [vmem:[%s251 + $0x58] sm:$0xff] %v11916
        %11955 = vst [vmem:[%s251 + $0x60] sm:$0xff] %v11821
        %11956 = vst [vmem:[%s251 + $0x68] sm:$0xff] %v11919
        %11957 = vst [vmem:[%s251 + $0x70] sm:$0xff] %v11823
        %11958 = vst [vmem:[%s251 + $0x78] sm:$0xff] %v11921
        %11959 = vst [vmem:[%s251 + $0x80] sm:$0xff] %v11826
        %11960 = vst [vmem:[%s251 + $0x88] sm:$0xff] %v11924
        %11961 = vst [vmem:[%s251 + $0x90] sm:$0xff] %v11828
        %11962 = vst [vmem:[%s251 + $0x98] sm:$0xff] %v11926
        %11963 = vst [vmem:[%s251 + $0xa0] sm:$0xff] %v11831
        %11964 = vst [vmem:[%s251 + $0xa8] sm:$0xff] %v11929
        %11965 = vst [vmem:[%s251 + $0xb0] sm:$0xff] %v11833
        %11966 = vst [vmem:[%s251 + $0xb8] sm:$0xff] %v11931
        %11967 = vst [vmem:[%s251 + $0xc0] sm:$0xff] %v11836
        %11968 = vst [vmem:[%s251 + $0xc8] sm:$0xff] %v11934
        %11969 = vst [vmem:[%s251 + $0xd0] sm:$0xff] %v11838
        %11970 = vst [vmem:[%s251 + $0xd8] sm:$0xff] %v11936
        %11971 = vst [vmem:[%s251 + $0xe0] sm:$0xff] %v11841
        %11972 = vst [vmem:[%s251 + $0xe8] sm:$0xff] %v11939
        %11973 = vst [vmem:[%s251 + $0xf0] sm:$0xff] %v11843
        %11974 = vst [vmem:[%s251 + $0xf8] sm:$0xff] %v11941
        %s11975 = sand.u32 %s119, 1
        %s11976 = scalar_lea.sflag [#allocation4], %s11975
        %s11977 = sand.u32 %s119, 1
        %s11978 = smul.addr %s11977, 256
        %s11979 = scalar_lea.vmem [#allocation8], %s11978
        // Predicated region
        $region49: #{tpu_custom_call.1} parent=35 // pred_check
          %p11980 = pneg %p129
        $region50: #{tpu_custom_call.1} parent=35 // pred_check_branch
          %11982 = sbr.rel (%p11980) target = $region52
        $region51: #{tpu_custom_call.1} parent=35 // pred_region
          %s11983 = smul.u32 2, %s22
          %11985 = vsyncadd %s11976, 0
          %s11986 = smul.addr %s11983, 16
          %s11987 = smul.addr %s11986, 8
          %s11988 = scalar_lea.hbm %s4, %s11987
          %s11989 = sshll.u32 %s11979, 4
          %s11990 = int_to_ptr.vmem [resolvable:$true] %s11989
          %s11991 = sshll.u32 %s11988, 4
          %s11992 = int_to_ptr.hbm [resolvable:$true] %s11991
          %11997 = dma.vmem_to_hbm [thread:$0]  %s11990, 4096, %s11992, %s11976, 256, 256, 16
        $region52: #{tpu_custom_call.1} parent=35 // pred_fallthru
          _
      $region36: #{tpu_custom_call.1} parent=5 // pred_fallthru
        _
      %p11998 = scmp.le.s32.totalorder 2, %s17
      // Predicated region
      $region53: #{tpu_custom_call.1} parent=5 // pred_check
        %p11999 = pneg %p11998
      $region54: #{tpu_custom_call.1} parent=5 // pred_check_branch
        %12001 = sbr.rel (%p11999) target = $region56
      $region55: #{tpu_custom_call.1} parent=5 // pred_region
        %s12002 = ssub.s32 %s17, 2
        // Predicated region
        $region57: #{tpu_custom_call.1} parent=55 // pred_check
          %p12003 = pneg %p135
        $region58: #{tpu_custom_call.1} parent=55 // pred_check_branch
          %12005 = sbr.rel (%p12003) target = $region60
        $region59: #{tpu_custom_call.1} parent=55 // pred_region
          %s12006 = sand.u32 %s120, 1
          %s12007 = scalar_lea.sflag [#allocation4], %s12006
          %s12008 = sand.u32 %s120, 1
          %s12009 = smul.addr %s12008, 256
          %s12010 = scalar_lea.vmem [#allocation8], %s12009
          %12012 = dma.done %s12007, 4096
        $region60: #{tpu_custom_call.1} parent=55 // pred_fallthru
          _
      $region56: #{tpu_custom_call.1} parent=5 // pred_fallthru
        _
    $region6: #{tpu_custom_call.1} parent=1 // loop_footer
      %s21 = sadd.s32 1, %s17
    $region7: #{tpu_custom_call.1} parent=1 // loop_footer_branch
      %16 = sbr.rel target = $region3
    $region8: #{tpu_custom_call.1} parent=1 // loop_exit
      _
    %12013 = vsyncpa [#allocation3], 1
    %s12014 = scalar_lea.sflag [#allocation3], 1
    %12015 = vsyncpa %s12014, 1
    %12016 = vsyncpa [#allocation6], 1
    %12017 = vsyncpa [#allocation4], 1
    %s12018 = scalar_lea.sflag [#allocation4], 1
    %12019 = vsyncpa %s12018, 1

</llo_original>
